<compile_context>
chip_gen: v6e
topology: v6e:2x2x1
jax: 0.10.0
libtpu: 0.0.40
codegen_flags: <defaults>
</compile_context>

<pallas_src>
import functools

import jax
import jax.numpy as jnp
from jax import lax
from jax.experimental import pallas as pl
from jax.experimental.pallas import tpu as pltpu


def _silu(x, approx):
    """SiLU on the f32 epilogue. approx=True -> EUP approximate reciprocal."""
    e = jnp.exp(-x)
    if approx:
        return x * pl.reciprocal(1.0 + e, approx=True)
    return x / (1.0 + e)


# ------------------------------ kernel 1: cv1 ------------------------------- #

def _cv1_kernel(x_ref, w_ref, b_ref, o_ref, *, approx):
    """3x3 SAME conv + folded-BN bias + SiLU, taps folded into K.

    x_ref: (H, W, Cin) unpadded input.   w_ref: (9*Cin, Cout) tap-major weights.
    b_ref: (1, Cout) f32.                o_ref: (H, W, Cout).
    """
    H, W, cin = x_ref.shape
    cout = o_ref.shape[-1]
    x = x_ref[...]
    zc = jnp.zeros((H, 1, cin), x.dtype)
    xl = jnp.concatenate([zc, x[:, : W - 1, :]], axis=1)     # value at (i,j) = x[i, j-1]
    xr = jnp.concatenate([x[:, 1:, :], zc], axis=1)          # x[i, j+1]
    pw = jnp.concatenate([xl, x, xr], axis=-1)               # kx = -1,0,+1 -> (H, W, 3*Cin)
    zr = jnp.zeros((1, W, 3 * cin), x.dtype)
    pu = jnp.concatenate([zr, pw[: H - 1]], axis=0)          # row i-1 (zero at top edge)
    pd = jnp.concatenate([pw[1:], zr], axis=0)               # row i+1 (zero at bottom edge)
    patches = jnp.concatenate([pu, pw, pd], axis=-1)         # (H, W, 9*Cin), tap-major
    acc = jnp.dot(patches.reshape(H * W, 9 * cin), w_ref[...],
                  preferred_element_type=jnp.float32)        # single K = 9*Cin MXU matmul
    y = _silu(acc + b_ref[...], approx)
    o_ref[...] = y.reshape(H, W, cout).astype(o_ref.dtype)


def _cv1(x, w, b, *, approx):
    N, H, W, cin = x.shape
    cout = w.shape[-1]
    cost = pl.CostEstimate(
        flops=2 * N * H * W * 9 * cin * cout,
        transcendentals=N * H * W * cout,
        bytes_accessed=(x.size * x.dtype.itemsize + w.size * w.dtype.itemsize
                        + b.size * b.dtype.itemsize
                        + N * H * W * cout * x.dtype.itemsize))
    return pl.pallas_call(
        functools.partial(_cv1_kernel, approx=approx),
        out_shape=jax.ShapeDtypeStruct((N, H, W, cout), x.dtype),
        grid=(N,),
        in_specs=[
            pl.BlockSpec((None, H, W, cin), lambda n: (n, 0, 0, 0)),
            pl.BlockSpec((9 * cin, cout), lambda n: (0, 0)),
            pl.BlockSpec((1, cout), lambda n: (0, 0)),
        ],
        out_specs=pl.BlockSpec((None, H, W, cout), lambda n: (n, 0, 0, 0)),
        compiler_params=pltpu.CompilerParams(
            dimension_semantics=("parallel",),
            vmem_limit_bytes=48 * 1024 * 1024),
        cost_estimate=cost,
    )(x, w, b)


# --------------------- kernel 2: upsample + cv2 + cv3 ----------------------- #

def _cv23_kernel(y_ref, w2_ref, b2_ref, w3_ref, b3_ref, o_ref, *, approx):
    """Fused 2x-nearest-upsample + cv2 (3x3) + SiLU + cv3 (1x1) + SiLU (subpixel).

    cv2 on the 2x-upsampled map equals, for each output phase (di, dj) in {0,1}^2,
    a 2x2 conv on the LOW-RES map y1 with per-phase folded weights; the 4 phases
    interleave into the (2H, 2W) output.

    y_ref : (H, W, Cmid) cv1 output (unpadded, low resolution).
    w2_ref: (4, 4*Cmid, Cmid) per-phase folded 2x2 weights (phase = 2*di+dj).
    b2_ref: (1, Cmid) f32.   w3_ref: (Cmid, C2).   b3_ref: (1, C2) f32.
    o_ref : (4, H, W, C2) phase-separated output.
    """
    H, W, cmid = y_ref.shape
    c2 = o_ref.shape[-1]
    y = y_ref[...]
    zc = jnp.zeros((H, 1, cmid), y.dtype)
    y_m1 = jnp.concatenate([zc, y[:, : W - 1, :]], axis=1)   # col j-1
    y_p1 = jnp.concatenate([y[:, 1:, :], zc], axis=1)        # col j+1
    ycols = (y_m1, y, y_p1)                                   # indexed by col offset + 1
    zr = jnp.zeros((1, W, cmid), y.dtype)

    def row_shift(a, dy):                                     # value at row i = a[i+dy]
        if dy == 0:
            return a
        if dy == -1:
            return jnp.concatenate([zr, a[: H - 1]], axis=0)
        return jnp.concatenate([a[1:], zr], axis=0)

    for di in range(2):
        for dj in range(2):
            # 2x2 window for phase (di, dj): rows {i-1+di, i+di}, cols {j-1+dj, j+dj}
            pieces = [row_shift(ycols[dj + b], di - 1 + a)
                      for a in range(2) for b in range(2)]
            patches = jnp.concatenate(pieces, axis=-1).reshape(H * W, 4 * cmid)
            acc = jnp.dot(patches, w2_ref[2 * di + dj],
                          preferred_element_type=jnp.float32)  # K = 4*Cmid (>= 256)
            h = _silu(acc + b2_ref[...], approx)                # cv2 epilogue (f32)
            # Intentional downcast of the cv2 activation to the MXU dtype for cv3.
            z = jnp.dot(h.astype(w3_ref.dtype), w3_ref[...],
                        preferred_element_type=jnp.float32) + b3_ref[...]
            z = _silu(z, approx)                                # cv3 epilogue
            o_ref[2 * di + dj] = z.reshape(H, W, c2).astype(o_ref.dtype)


def _cv2_cv3_up(y1, w2p, b2, w3, b3, *, approx):
    N, H, W, cmid = y1.shape
    c2 = w3.shape[-1]
    cost = pl.CostEstimate(
        flops=2 * N * H * W * 4 * (4 * cmid * cmid + cmid * c2),
        transcendentals=N * 4 * H * W * (cmid + c2),
        bytes_accessed=(y1.size * y1.dtype.itemsize + w2p.size * w2p.dtype.itemsize
                        + w3.size * w3.dtype.itemsize
                        + b2.size * b2.dtype.itemsize + b3.size * b3.dtype.itemsize
                        + N * 4 * H * W * c2 * 4))
    return pl.pallas_call(
        functools.partial(_cv23_kernel, approx=approx),
        out_shape=jax.ShapeDtypeStruct((N, 4, H, W, c2), jnp.float32),
        grid=(N,),
        in_specs=[
            pl.BlockSpec((None, H, W, cmid), lambda n: (n, 0, 0, 0)),
            pl.BlockSpec((4, 4 * cmid, cmid), lambda n: (0, 0, 0)),
            pl.BlockSpec((1, cmid), lambda n: (0, 0)),
            pl.BlockSpec((cmid, c2), lambda n: (0, 0)),
            pl.BlockSpec((1, c2), lambda n: (0, 0)),
        ],
        out_specs=pl.BlockSpec((None, 4, H, W, c2), lambda n: (n, 0, 0, 0, 0)),
        compiler_params=pltpu.CompilerParams(
            dimension_semantics=("parallel",),
            vmem_limit_bytes=48 * 1024 * 1024),
        cost_estimate=cost,
    )(y1, w2p, b2, w3, b3)


# ------------------------------- Proto module -------------------------------- #

def _fold_bn(w, gamma, beta, mean, var, eps=1e-5):
    """Fold BatchNorm into conv weights (output channels on the LAST axis of w)."""
    scale = gamma / jnp.sqrt(var + eps)
    return w * scale, beta - mean * scale


def _upsample_phase_weights(w2):
    """Fold the 2x nearest upsample into cv2's 3x3 kernel (subpixel trick).

    w2: (3, 3, Cin, Cout) with taps (ky, kx) in {-1,0,+1}.  Returns (4, 4*Cin, Cout):
    for each upsampled-output phase (di, dj), the 2x2 kernel acting on the low-res
    map at window rows {i-1+di, i+di} / cols {j-1+dj, j+dj}, stacked (row, col)
    row-major along the contraction axis.  Phase index = 2*di + dj.
    """
    def combine(taps, d):   # taps indexed -1,0,+1 along axis 0
        return [taps[0], taps[1] + taps[2]] if d == 0 else [taps[0] + taps[1], taps[2]]

    phases = []
    for di in range(2):
        rows = combine(w2, di)                       # 2 x (3, Cin, Cout), indexed by kx
        for dj in range(2):
            blocks = []
            for a in range(2):
                blocks.extend(combine(rows[a], dj))  # window cols b = 0, 1
            phases.append(jnp.concatenate(blocks, axis=0))      # (4*Cin, Cout)
    return jnp.stack(phases, axis=0)


def _rand_bn(key, c):
    k1, k2, k3, k4 = jax.random.split(key, 4)
    gamma = 1.0 + 0.1 * jax.random.normal(k1, (c,), jnp.float32)
    beta = 0.1 * jax.random.normal(k2, (c,), jnp.float32)
    mean = 0.1 * jax.random.normal(k3, (c,), jnp.float32)
    var = 0.5 + jax.random.uniform(k4, (c,), jnp.float32)
    return gamma, beta, mean, var


def proto_forward(x, params):
    """x: (N, C1, H, W) NCHW (PyTorch layout) -> (N, C2, 2H, 2W)."""
    mxu_dtype = params["W1"].dtype
    approx = mxu_dtype == jnp.bfloat16
    x_nhwc = jnp.transpose(x, (0, 2, 3, 1)).astype(mxu_dtype)   # channels -> lanes
    y1 = _cv1(x_nhwc, params["W1"], params["b1"], approx=approx)
    out_ph = _cv2_cv3_up(y1, params["W2"], params["b2"],
                         params["W3"], params["b3"], approx=approx)
    # Interleave the 4 upsample phases and go back to NCHW (pure layout, XLA).
    N, _, H, W, c2 = out_ph.shape
    out = out_ph.reshape(N, 2, 2, H, W, c2)                     # (n, di, dj, i, j, c)
    out = jnp.transpose(out, (0, 5, 3, 1, 4, 2))                # (n, c, i, di, j, dj)
    return out.reshape(N, c2, 2 * H, 2 * W).astype(x.dtype)


class Proto:
    """JAX/Pallas (inference-mode) equivalent of yolov5 Proto."""

    def __init__(self, c1, c_=256, c2=32, *, key, compute_dtype=jnp.bfloat16, eps=1e-5):
        kw1, kb1, kw2, kb2, kw3, kb3 = jax.random.split(key, 6)
        w1 = jax.random.normal(kw1, (3, 3, c1, c_), jnp.float32) * (9 * c1) ** -0.5
        w2 = jax.random.normal(kw2, (3, 3, c_, c_), jnp.float32) * (9 * c_) ** -0.5
        w3 = jax.random.normal(kw3, (c_, c2), jnp.float32) * c_ ** -0.5
        w1, b1 = _fold_bn(w1, *_rand_bn(kb1, c_), eps=eps)
        w2, b2 = _fold_bn(w2, *_rand_bn(kb2, c_), eps=eps)
        w3, b3 = _fold_bn(w3, *_rand_bn(kb3, c2), eps=eps)
        # Canonical folded (f32) weights, used by the XLA reference.
        self.ref_params = dict(w1=w1, b1=b1, w2=w2, b2=b2, w3=w3, b3=b3)
        # Pallas-format weights: taps folded into the contraction (K) dimension,
        # MXU operands in compute_dtype, f32 biases for the epilogue.
        self.params = dict(
            W1=w1.reshape(9 * c1, c_).astype(compute_dtype),
            b1=b1.reshape(1, c_).astype(jnp.float32),
            W2=_upsample_phase_weights(w2).astype(compute_dtype),
            b2=b2.reshape(1, c_).astype(jnp.float32),
            W3=w3.astype(compute_dtype),
            b3=b3.reshape(1, c2).astype(jnp.float32),
        )
        self._fwd = jax.jit(proto_forward)

    def __call__(self, x):
        return self._fwd(x, self.params)


# ------------------------------- XLA reference ------------------------------- #

def _reference_proto(x, p):
    """Independent XLA implementation (NCHW convs) for numerical validation."""
    def conv_bias_silu(x, w, b, k):
        if k == 1:
            cin, cout = w.shape
            w_oihw = jnp.transpose(w, (1, 0)).reshape(cout, cin, 1, 1)
        else:
            w_oihw = jnp.transpose(w, (3, 2, 0, 1))              # (cout, cin, kh, kw)
        y = lax.conv_general_dilated(
            x, w_oihw, window_strides=(1, 1),
            padding=((k // 2, k // 2), (k // 2, k // 2)),
            dimension_numbers=("NCHW", "OIHW", "NCHW"),
            precision=lax.Precision.HIGHEST)
        y = y + b.reshape(1, -1, 1, 1)
        return y / (1.0 + jnp.exp(-y))

    y = conv_bias_silu(x, p["w1"], p["b1"], 3)
    y = jnp.repeat(jnp.repeat(y, 2, axis=2), 2, axis=3)          # nearest 2x upsample
    y = conv_bias_silu(y, p["w2"], p["b2"], 3)
    y = conv_bias_silu(y, p["w3"], p["b3"], 1)
    return y


if __name__ == "__main__":
    key = jax.random.PRNGKey(0)
    k_x, k_p = jax.random.split(key)

    # batch=2, c1=16, c_=128 (lane-dense mid channels), c2=32, spatial 16x16 -> 32x32.
    N, c1, c_, c2, H, W = 2, 16, 128, 32, 16, 16
    x = jax.random.normal(k_x, (N, c1, H, W), dtype=jnp.float32)

    ref = None

    # f32 path: tight numerical check (validates tap folding into K, the subpixel
    # upsample fusion and the phase interleave).
    proto_f32 = Proto(c1, c_, c2, key=k_p, compute_dtype=jnp.float32)
    out_f32 = jax.block_until_ready(proto_f32(x))
    assert out_f32.shape == (N, c2, 2 * H, 2 * W), out_f32.shape
    ref = jax.block_until_ready(_reference_proto(x, proto_f32.ref_params))
    err = float(jnp.max(jnp.abs(out_f32 - ref)) / (jnp.max(jnp.abs(ref)) + 1e-6))
    assert err < 1e-4, f"f32 mismatch vs XLA reference: rel-max-err={err}"

    # bf16 path (production config: bf16 MXU operands, approx-reciprocal SiLU).
    proto_bf16 = Proto(c1, c_, c2, key=k_p, compute_dtype=jnp.bfloat16)
    out_bf16 = jax.block_until_ready(proto_bf16(x))
    assert out_bf16.shape == (N, c2, 2 * H, 2 * W), out_bf16.shape
    err16 = float(jnp.max(jnp.abs(out_bf16 - ref)) / (jnp.max(jnp.abs(ref)) + 1e-6))
    assert err16 < 4e-2, f"bf16 mismatch vs XLA reference: rel-max-err={err16}"

    print("KERNEL_OK")
</pallas_src>

<mosaic_0001>
module attributes {stable_mosaic.version = 11 : i64} {
  func.func @_cv1_kernel(%arg0: i32, %arg1: memref<1x16x16x16xf32, #tpu.memory_space<vmem>>, %arg2: memref<144x128xf32, #tpu.memory_space<vmem>>, %arg3: memref<1x128xf32, #tpu.memory_space<vmem>>, %arg4: memref<1x16x16x128xf32, #tpu.memory_space<vmem>>) attributes {dimension_semantics = [#tpu.dimension_semantics<parallel>], iteration_bounds = array<i64: 2>, scalar_prefetch = 0 : i64, scratch_operands = 0 : i64, tpu.core_type = #tpu.core_type<tc>, window_params = [{transform_indices = @transform_0, window_bounds = array<i64: 1, 16, 16, 16>}, {pipeline_mode = #tpu.pipeline_mode<synchronous>, transform_indices = @transform_1, window_bounds = array<i64: 144, 128>}, {pipeline_mode = #tpu.pipeline_mode<synchronous>, transform_indices = @transform_2, window_bounds = array<i64: 1, 128>}, {transform_indices = @transform_3, window_bounds = array<i64: 1, 16, 16, 128>}]} {
    %c0 = arith.constant 0 : index
    %c0_0 = arith.constant 0 : index
    %c0_1 = arith.constant 0 : index
    %c0_2 = arith.constant 0 : index
    %0 = vector.load %arg1[%c0, %c0_0, %c0_1, %c0_2] : memref<1x16x16x16xf32, #tpu.memory_space<vmem>>, vector<1x16x16x16xf32>
    %1 = vector.shape_cast %0 : vector<1x16x16x16xf32> to vector<16x16x16xf32>
    %cst = arith.constant 0.000000e+00 : f32
    %2 = vector.broadcast %cst : f32 to vector<16x1x16xf32>
    %3 = vector.extract_strided_slice %1 {offsets = [0, 0, 0], sizes = [16, 15, 16], strides = [1, 1, 1]} : vector<16x16x16xf32> to vector<16x15x16xf32>
    %4 = tpu.concatenate %2, %3 in 1 : vector<16x1x16xf32>, vector<16x15x16xf32> -> vector<16x16x16xf32>
    %5 = vector.extract_strided_slice %1 {offsets = [0, 1, 0], sizes = [16, 15, 16], strides = [1, 1, 1]} : vector<16x16x16xf32> to vector<16x15x16xf32>
    %6 = tpu.concatenate %5, %2 in 1 : vector<16x15x16xf32>, vector<16x1x16xf32> -> vector<16x16x16xf32>
    %7 = tpu.concatenate %4, %1, %6 in 2 : vector<16x16x16xf32>, vector<16x16x16xf32>, vector<16x16x16xf32> -> vector<16x16x48xf32>
    %cst_3 = arith.constant 0.000000e+00 : f32
    %8 = vector.broadcast %cst_3 : f32 to vector<1x16x48xf32>
    %9 = vector.extract_strided_slice %7 {offsets = [0, 0, 0], sizes = [15, 16, 48], strides = [1, 1, 1]} : vector<16x16x48xf32> to vector<15x16x48xf32>
    %10 = tpu.concatenate %8, %9 in 0 : vector<1x16x48xf32>, vector<15x16x48xf32> -> vector<16x16x48xf32>
    %11 = vector.extract_strided_slice %7 {offsets = [1, 0, 0], sizes = [15, 16, 48], strides = [1, 1, 1]} : vector<16x16x48xf32> to vector<15x16x48xf32>
    %12 = tpu.concatenate %11, %8 in 0 : vector<15x16x48xf32>, vector<1x16x48xf32> -> vector<16x16x48xf32>
    %13 = tpu.concatenate %10, %7, %12 in 2 : vector<16x16x48xf32>, vector<16x16x48xf32>, vector<16x16x48xf32> -> vector<16x16x144xf32>
    %14 = vector.shape_cast %13 : vector<16x16x144xf32> to vector<256x144xf32>
    %c0_4 = arith.constant 0 : index
    %c0_5 = arith.constant 0 : index
    %15 = vector.load %arg2[%c0_4, %c0_5] : memref<144x128xf32, #tpu.memory_space<vmem>>, vector<144x128xf32>
    %cst_6 = arith.constant dense<0.000000e+00> : vector<256x128xf32>
    %16 = tpu.matmul %14, %15, %cst_6 {dimension_numbers = #tpu.dot_dimension_numbers<[1], [0], [0], [1], [0, 0, 1, 1], [], []>} : vector<256x144xf32>, vector<144x128xf32>, vector<256x128xf32> -> vector<256x128xf32>
    %c0_7 = arith.constant 0 : index
    %c0_8 = arith.constant 0 : index
    %17 = vector.load %arg3[%c0_7, %c0_8] : memref<1x128xf32, #tpu.memory_space<vmem>>, vector<1x128xf32>
    %18 = vector.broadcast %17 : vector<1x128xf32> to vector<256x128xf32>
    %19 = arith.addf %16, %18 : vector<256x128xf32>
    %cst_9 = arith.constant 0.000000e+00 : f32
    %20 = vector.broadcast %cst_9 : f32 to vector<256x128xf32>
    %21 = arith.subf %20, %19 : vector<256x128xf32>
    %22 = math.exp %21 : vector<256x128xf32>
    %cst_10 = arith.constant 1.000000e+00 : f32
    %23 = vector.broadcast %cst_10 : f32 to vector<256x128xf32>
    %24 = arith.addf %23, %22 : vector<256x128xf32>
    %25 = arith.divf %19, %24 : vector<256x128xf32>
    %26 = vector.shape_cast %25 : vector<256x128xf32> to vector<16x16x128xf32>
    %c0_11 = arith.constant 0 : index
    %c0_12 = arith.constant 0 : index
    %c0_13 = arith.constant 0 : index
    %c0_14 = arith.constant 0 : index
    %27 = vector.load %arg4[%c0_11, %c0_12, %c0_13, %c0_14] : memref<1x16x16x128xf32, #tpu.memory_space<vmem>>, vector<1x16x16x128xf32>
    %28 = vector.shape_cast %27 : vector<1x16x16x128xf32> to vector<16x16x128xf32>
    %29 = vector.shape_cast %26 : vector<16x16x128xf32> to vector<1x16x16x128xf32>
    tpu.vector_store %arg4[%c0_11, %c0_12, %c0_13, %c0_14], %29 {strides = array<i32>} : memref<1x16x16x128xf32, #tpu.memory_space<vmem>>, vector<1x16x16x128xf32>,
    return
  }
  func.func @transform_0(%arg0: i32) -> (i32, i32, i32, i32) {
    %c0_i32 = arith.constant 0 : i32
    %c0_i32_0 = arith.constant 0 : i32
    %c0_i32_1 = arith.constant 0 : i32
    %c0_i32_2 = arith.constant 0 : i32
    return %arg0, %c0_i32, %c0_i32_0, %c0_i32_1 : i32, i32, i32, i32
  }
  func.func @transform_1(%arg0: i32) -> (i32, i32) {
    %c0_i32 = arith.constant 0 : i32
    %c0_i32_0 = arith.constant 0 : i32
    %c0_i32_1 = arith.constant 0 : i32
    return %c0_i32, %c0_i32_0 : i32, i32
  }
  func.func @transform_2(%arg0: i32) -> (i32, i32) {
    %c0_i32 = arith.constant 0 : i32
    %c0_i32_0 = arith.constant 0 : i32
    %c0_i32_1 = arith.constant 0 : i32
    return %c0_i32, %c0_i32_0 : i32, i32
  }
  func.func @transform_3(%arg0: i32) -> (i32, i32, i32, i32) {
    %c0_i32 = arith.constant 0 : i32
    %c0_i32_0 = arith.constant 0 : i32
    %c0_i32_1 = arith.constant 0 : i32
    %c0_i32_2 = arith.constant 0 : i32
    return %arg0, %c0_i32, %c0_i32_0, %c0_i32_1 : i32, i32, i32, i32
  }
}

module attributes {stable_mosaic.version = 11 : i64} {
  func.func @_cv23_kernel(%arg0: i32, %arg1: memref<1x16x16x128xf32, #tpu.memory_space<vmem>>, %arg2: memref<4x512x128xf32, #tpu.memory_space<vmem>>, %arg3: memref<1x128xf32, #tpu.memory_space<vmem>>, %arg4: memref<128x32xf32, #tpu.memory_space<vmem>>, %arg5: memref<1x32xf32, #tpu.memory_space<vmem>>, %arg6: memref<1x4x16x16x32xf32, #tpu.memory_space<vmem>>) attributes {dimension_semantics = [#tpu.dimension_semantics<parallel>], iteration_bounds = array<i64: 2>, scalar_prefetch = 0 : i64, scratch_operands = 0 : i64, tpu.core_type = #tpu.core_type<tc>, window_params = [{transform_indices = @transform_0, window_bounds = array<i64: 1, 16, 16, 128>}, {pipeline_mode = #tpu.pipeline_mode<synchronous>, transform_indices = @transform_1, window_bounds = array<i64: 4, 512, 128>}, {pipeline_mode = #tpu.pipeline_mode<synchronous>, transform_indices = @transform_2, window_bounds = array<i64: 1, 128>}, {pipeline_mode = #tpu.pipeline_mode<synchronous>, transform_indices = @transform_3, window_bounds = array<i64: 128, 32>}, {pipeline_mode = #tpu.pipeline_mode<synchronous>, transform_indices = @transform_4, window_bounds = array<i64: 1, 32>}, {transform_indices = @transform_5, window_bounds = array<i64: 1, 4, 16, 16, 32>}]} {
    %c0 = arith.constant 0 : index
    %c0_0 = arith.constant 0 : index
    %c0_1 = arith.constant 0 : index
    %c0_2 = arith.constant 0 : index
    %0 = vector.load %arg1[%c0, %c0_0, %c0_1, %c0_2] : memref<1x16x16x128xf32, #tpu.memory_space<vmem>>, vector<1x16x16x128xf32>
    %1 = vector.shape_cast %0 : vector<1x16x16x128xf32> to vector<16x16x128xf32>
    %cst = arith.constant 0.000000e+00 : f32
    %2 = vector.broadcast %cst : f32 to vector<16x1x128xf32>
    %3 = vector.extract_strided_slice %1 {offsets = [0, 0, 0], sizes = [16, 15, 128], strides = [1, 1, 1]} : vector<16x16x128xf32> to vector<16x15x128xf32>
    %4 = tpu.concatenate %2, %3 in 1 : vector<16x1x128xf32>, vector<16x15x128xf32> -> vector<16x16x128xf32>
    %5 = vector.extract_strided_slice %1 {offsets = [0, 1, 0], sizes = [16, 15, 128], strides = [1, 1, 1]} : vector<16x16x128xf32> to vector<16x15x128xf32>
    %6 = tpu.concatenate %5, %2 in 1 : vector<16x15x128xf32>, vector<16x1x128xf32> -> vector<16x16x128xf32>
    %cst_3 = arith.constant 0.000000e+00 : f32
    %7 = vector.broadcast %cst_3 : f32 to vector<1x16x128xf32>
    %8 = vector.extract_strided_slice %4 {offsets = [0, 0, 0], sizes = [15, 16, 128], strides = [1, 1, 1]} : vector<16x16x128xf32> to vector<15x16x128xf32>
    %9 = tpu.concatenate %7, %8 in 0 : vector<1x16x128xf32>, vector<15x16x128xf32> -> vector<16x16x128xf32>
    %10 = vector.extract_strided_slice %1 {offsets = [0, 0, 0], sizes = [15, 16, 128], strides = [1, 1, 1]} : vector<16x16x128xf32> to vector<15x16x128xf32>
    %11 = tpu.concatenate %7, %10 in 0 : vector<1x16x128xf32>, vector<15x16x128xf32> -> vector<16x16x128xf32>
    %12 = tpu.concatenate %9, %11, %4, %1 in 2 : vector<16x16x128xf32>, vector<16x16x128xf32>, vector<16x16x128xf32>, vector<16x16x128xf32> -> vector<16x16x512xf32>
    %13 = vector.shape_cast %12 : vector<16x16x512xf32> to vector<256x512xf32>
    %c0_4 = arith.constant 0 : index
    %c0_5 = arith.constant 0 : index
    %c0_6 = arith.constant 0 : index
    %14 = vector.load %arg2[%c0_4, %c0_5, %c0_6] : memref<4x512x128xf32, #tpu.memory_space<vmem>>, vector<1x512x128xf32>
    %15 = vector.shape_cast %14 : vector<1x512x128xf32> to vector<512x128xf32>
    %cst_7 = arith.constant dense<0.000000e+00> : vector<256x128xf32>
    %16 = tpu.matmul %13, %15, %cst_7 {dimension_numbers = #tpu.dot_dimension_numbers<[1], [0], [0], [1], [0, 0, 1, 1], [], []>} : vector<256x512xf32>, vector<512x128xf32>, vector<256x128xf32> -> vector<256x128xf32>
    %c0_8 = arith.constant 0 : index
    %c0_9 = arith.constant 0 : index
    %17 = vector.load %arg3[%c0_8, %c0_9] : memref<1x128xf32, #tpu.memory_space<vmem>>, vector<1x128xf32>
    %18 = vector.broadcast %17 : vector<1x128xf32> to vector<256x128xf32>
    %19 = arith.addf %16, %18 : vector<256x128xf32>
    %cst_10 = arith.constant 0.000000e+00 : f32
    %20 = vector.broadcast %cst_10 : f32 to vector<256x128xf32>
    %21 = arith.subf %20, %19 : vector<256x128xf32>
    %22 = math.exp %21 : vector<256x128xf32>
    %cst_11 = arith.constant 1.000000e+00 : f32
    %23 = vector.broadcast %cst_11 : f32 to vector<256x128xf32>
    %24 = arith.addf %23, %22 : vector<256x128xf32>
    %25 = arith.divf %19, %24 : vector<256x128xf32>
    %c0_12 = arith.constant 0 : index
    %c0_13 = arith.constant 0 : index
    %26 = vector.load %arg4[%c0_12, %c0_13] : memref<128x32xf32, #tpu.memory_space<vmem>>, vector<128x32xf32>
    %cst_14 = arith.constant dense<0.000000e+00> : vector<256x32xf32>
    %27 = tpu.matmul %25, %26, %cst_14 {dimension_numbers = #tpu.dot_dimension_numbers<[1], [0], [0], [1], [0, 0, 1, 1], [], []>} : vector<256x128xf32>, vector<128x32xf32>, vector<256x32xf32> -> vector<256x32xf32>
    %c0_15 = arith.constant 0 : index
    %c0_16 = arith.constant 0 : index
    %28 = vector.load %arg5[%c0_15, %c0_16] : memref<1x32xf32, #tpu.memory_space<vmem>>, vector<1x32xf32>
    %29 = vector.broadcast %28 : vector<1x32xf32> to vector<256x32xf32>
    %30 = arith.addf %27, %29 : vector<256x32xf32>
    %cst_17 = arith.constant 0.000000e+00 : f32
    %31 = vector.broadcast %cst_17 : f32 to vector<256x32xf32>
    %32 = arith.subf %31, %30 : vector<256x32xf32>
    %33 = math.exp %32 : vector<256x32xf32>
    %cst_18 = arith.constant 1.000000e+00 : f32
    %34 = vector.broadcast %cst_18 : f32 to vector<256x32xf32>
    %35 = arith.addf %34, %33 : vector<256x32xf32>
    %36 = arith.divf %30, %35 : vector<256x32xf32>
    %37 = vector.shape_cast %36 : vector<256x32xf32> to vector<16x16x32xf32>
    %c0_19 = arith.constant 0 : index
    %c0_20 = arith.constant 0 : index
    %c0_21 = arith.constant 0 : index
    %c0_22 = arith.constant 0 : index
    %c0_23 = arith.constant 0 : index
    %38 = vector.load %arg6[%c0_19, %c0_20, %c0_21, %c0_22, %c0_23] : memref<1x4x16x16x32xf32, #tpu.memory_space<vmem>>, vector<1x1x16x16x32xf32>
    %39 = vector.shape_cast %38 : vector<1x1x16x16x32xf32> to vector<16x16x32xf32>
    %40 = vector.shape_cast %37 : vector<16x16x32xf32> to vector<1x1x16x16x32xf32>
    tpu.vector_store %arg6[%c0_19, %c0_20, %c0_21, %c0_22, %c0_23], %40 {strides = array<i32>} : memref<1x4x16x16x32xf32, #tpu.memory_space<vmem>>, vector<1x1x16x16x32xf32>,
    %41 = vector.extract_strided_slice %1 {offsets = [0, 0, 0], sizes = [15, 16, 128], strides = [1, 1, 1]} : vector<16x16x128xf32> to vector<15x16x128xf32>
    %42 = tpu.concatenate %7, %41 in 0 : vector<1x16x128xf32>, vector<15x16x128xf32> -> vector<16x16x128xf32>
    %43 = vector.extract_strided_slice %6 {offsets = [0, 0, 0], sizes = [15, 16, 128], strides = [1, 1, 1]} : vector<16x16x128xf32> to vector<15x16x128xf32>
    %44 = tpu.concatenate %7, %43 in 0 : vector<1x16x128xf32>, vector<15x16x128xf32> -> vector<16x16x128xf32>
    %45 = tpu.concatenate %42, %44, %1, %6 in 2 : vector<16x16x128xf32>, vector<16x16x128xf32>, vector<16x16x128xf32>, vector<16x16x128xf32> -> vector<16x16x512xf32>
    %46 = vector.shape_cast %45 : vector<16x16x512xf32> to vector<256x512xf32>
    %c1 = arith.constant 1 : index
    %c0_24 = arith.constant 0 : index
    %c0_25 = arith.constant 0 : index
    %47 = vector.load %arg2[%c1, %c0_24, %c0_25] : memref<4x512x128xf32, #tpu.memory_space<vmem>>, vector<1x512x128xf32>
    %48 = vector.shape_cast %47 : vector<1x512x128xf32> to vector<512x128xf32>
    %cst_26 = arith.constant dense<0.000000e+00> : vector<256x128xf32>
    %49 = tpu.matmul %46, %48, %cst_26 {dimension_numbers = #tpu.dot_dimension_numbers<[1], [0], [0], [1], [0, 0, 1, 1], [], []>} : vector<256x512xf32>, vector<512x128xf32>, vector<256x128xf32> -> vector<256x128xf32>
    %c0_27 = arith.constant 0 : index
    %c0_28 = arith.constant 0 : index
    %50 = vector.load %arg3[%c0_27, %c0_28] : memref<1x128xf32, #tpu.memory_space<vmem>>, vector<1x128xf32>
    %51 = vector.broadcast %50 : vector<1x128xf32> to vector<256x128xf32>
    %52 = arith.addf %49, %51 : vector<256x128xf32>
    %cst_29 = arith.constant 0.000000e+00 : f32
    %53 = vector.broadcast %cst_29 : f32 to vector<256x128xf32>
    %54 = arith.subf %53, %52 : vector<256x128xf32>
    %55 = math.exp %54 : vector<256x128xf32>
    %cst_30 = arith.constant 1.000000e+00 : f32
    %56 = vector.broadcast %cst_30 : f32 to vector<256x128xf32>
    %57 = arith.addf %56, %55 : vector<256x128xf32>
    %58 = arith.divf %52, %57 : vector<256x128xf32>
    %c0_31 = arith.constant 0 : index
    %c0_32 = arith.constant 0 : index
    %59 = vector.load %arg4[%c0_31, %c0_32] : memref<128x32xf32, #tpu.memory_space<vmem>>, vector<128x32xf32>
    %cst_33 = arith.constant dense<0.000000e+00> : vector<256x32xf32>
    %60 = tpu.matmul %58, %59, %cst_33 {dimension_numbers = #tpu.dot_dimension_numbers<[1], [0], [0], [1], [0, 0, 1, 1], [], []>} : vector<256x128xf32>, vector<128x32xf32>, vector<256x32xf32> -> vector<256x32xf32>
    %c0_34 = arith.constant 0 : index
    %c0_35 = arith.constant 0 : index
    %61 = vector.load %arg5[%c0_34, %c0_35] : memref<1x32xf32, #tpu.memory_space<vmem>>, vector<1x32xf32>
    %62 = vector.broadcast %61 : vector<1x32xf32> to vector<256x32xf32>
    %63 = arith.addf %60, %62 : vector<256x32xf32>
    %cst_36 = arith.constant 0.000000e+00 : f32
    %64 = vector.broadcast %cst_36 : f32 to vector<256x32xf32>
    %65 = arith.subf %64, %63 : vector<256x32xf32>
    %66 = math.exp %65 : vector<256x32xf32>
    %cst_37 = arith.constant 1.000000e+00 : f32
    %67 = vector.broadcast %cst_37 : f32 to vector<256x32xf32>
    %68 = arith.addf %67, %66 : vector<256x32xf32>
    %69 = arith.divf %63, %68 : vector<256x32xf32>
    %70 = vector.shape_cast %69 : vector<256x32xf32> to vector<16x16x32xf32>
    %c0_38 = arith.constant 0 : index
    %c1_39 = arith.constant 1 : index
    %c0_40 = arith.constant 0 : index
    %c0_41 = arith.constant 0 : index
    %c0_42 = arith.constant 0 : index
    %71 = vector.load %arg6[%c0_38, %c1_39, %c0_40, %c0_41, %c0_42] : memref<1x4x16x16x32xf32, #tpu.memory_space<vmem>>, vector<1x1x16x16x32xf32>
    %72 = vector.shape_cast %71 : vector<1x1x16x16x32xf32> to vector<16x16x32xf32>
    %73 = vector.shape_cast %70 : vector<16x16x32xf32> to vector<1x1x16x16x32xf32>
    tpu.vector_store %arg6[%c0_38, %c1_39, %c0_40, %c0_41, %c0_42], %73 {strides = array<i32>} : memref<1x4x16x16x32xf32, #tpu.memory_space<vmem>>, vector<1x1x16x16x32xf32>,
    %74 = vector.extract_strided_slice %4 {offsets = [1, 0, 0], sizes = [15, 16, 128], strides = [1, 1, 1]} : vector<16x16x128xf32> to vector<15x16x128xf32>
    %75 = tpu.concatenate %74, %7 in 0 : vector<15x16x128xf32>, vector<1x16x128xf32> -> vector<16x16x128xf32>
    %76 = vector.extract_strided_slice %1 {offsets = [1, 0, 0], sizes = [15, 16, 128], strides = [1, 1, 1]} : vector<16x16x128xf32> to vector<15x16x128xf32>
    %77 = tpu.concatenate %76, %7 in 0 : vector<15x16x128xf32>, vector<1x16x128xf32> -> vector<16x16x128xf32>
    %78 = tpu.concatenate %4, %1, %75, %77 in 2 : vector<16x16x128xf32>, vector<16x16x128xf32>, vector<16x16x128xf32>, vector<16x16x128xf32> -> vector<16x16x512xf32>
    %79 = vector.shape_cast %78 : vector<16x16x512xf32> to vector<256x512xf32>
    %c2 = arith.constant 2 : index
    %c0_43 = arith.constant 0 : index
    %c0_44 = arith.constant 0 : index
    %80 = vector.load %arg2[%c2, %c0_43, %c0_44] : memref<4x512x128xf32, #tpu.memory_space<vmem>>, vector<1x512x128xf32>
    %81 = vector.shape_cast %80 : vector<1x512x128xf32> to vector<512x128xf32>
    %cst_45 = arith.constant dense<0.000000e+00> : vector<256x128xf32>
    %82 = tpu.matmul %79, %81, %cst_45 {dimension_numbers = #tpu.dot_dimension_numbers<[1], [0], [0], [1], [0, 0, 1, 1], [], []>} : vector<256x512xf32>, vector<512x128xf32>, vector<256x128xf32> -> vector<256x128xf32>
    %c0_46 = arith.constant 0 : index
    %c0_47 = arith.constant 0 : index
    %83 = vector.load %arg3[%c0_46, %c0_47] : memref<1x128xf32, #tpu.memory_space<vmem>>, vector<1x128xf32>
    %84 = vector.broadcast %83 : vector<1x128xf32> to vector<256x128xf32>
    %85 = arith.addf %82, %84 : vector<256x128xf32>
    %cst_48 = arith.constant 0.000000e+00 : f32
    %86 = vector.broadcast %cst_48 : f32 to vector<256x128xf32>
    %87 = arith.subf %86, %85 : vector<256x128xf32>
    %88 = math.exp %87 : vector<256x128xf32>
    %cst_49 = arith.constant 1.000000e+00 : f32
    %89 = vector.broadcast %cst_49 : f32 to vector<256x128xf32>
    %90 = arith.addf %89, %88 : vector<256x128xf32>
    %91 = arith.divf %85, %90 : vector<256x128xf32>
    %c0_50 = arith.constant 0 : index
    %c0_51 = arith.constant 0 : index
    %92 = vector.load %arg4[%c0_50, %c0_51] : memref<128x32xf32, #tpu.memory_space<vmem>>, vector<128x32xf32>
    %cst_52 = arith.constant dense<0.000000e+00> : vector<256x32xf32>
    %93 = tpu.matmul %91, %92, %cst_52 {dimension_numbers = #tpu.dot_dimension_numbers<[1], [0], [0], [1], [0, 0, 1, 1], [], []>} : vector<256x128xf32>, vector<128x32xf32>, vector<256x32xf32> -> vector<256x32xf32>
    %c0_53 = arith.constant 0 : index
    %c0_54 = arith.constant 0 : index
    %94 = vector.load %arg5[%c0_53, %c0_54] : memref<1x32xf32, #tpu.memory_space<vmem>>, vector<1x32xf32>
    %95 = vector.broadcast %94 : vector<1x32xf32> to vector<256x32xf32>
    %96 = arith.addf %93, %95 : vector<256x32xf32>
    %cst_55 = arith.constant 0.000000e+00 : f32
    %97 = vector.broadcast %cst_55 : f32 to vector<256x32xf32>
    %98 = arith.subf %97, %96 : vector<256x32xf32>
    %99 = math.exp %98 : vector<256x32xf32>
    %cst_56 = arith.constant 1.000000e+00 : f32
    %100 = vector.broadcast %cst_56 : f32 to vector<256x32xf32>
    %101 = arith.addf %100, %99 : vector<256x32xf32>
    %102 = arith.divf %96, %101 : vector<256x32xf32>
    %103 = vector.shape_cast %102 : vector<256x32xf32> to vector<16x16x32xf32>
    %c0_57 = arith.constant 0 : index
    %c2_58 = arith.constant 2 : index
    %c0_59 = arith.constant 0 : index
    %c0_60 = arith.constant 0 : index
    %c0_61 = arith.constant 0 : index
    %104 = vector.load %arg6[%c0_57, %c2_58, %c0_59, %c0_60, %c0_61] : memref<1x4x16x16x32xf32, #tpu.memory_space<vmem>>, vector<1x1x16x16x32xf32>
    %105 = vector.shape_cast %104 : vector<1x1x16x16x32xf32> to vector<16x16x32xf32>
    %106 = vector.shape_cast %103 : vector<16x16x32xf32> to vector<1x1x16x16x32xf32>
    tpu.vector_store %arg6[%c0_57, %c2_58, %c0_59, %c0_60, %c0_61], %106 {strides = array<i32>} : memref<1x4x16x16x32xf32, #tpu.memory_space<vmem>>, vector<1x1x16x16x32xf32>,
    %107 = vector.extract_strided_slice %1 {offsets = [1, 0, 0], sizes = [15, 16, 128], strides = [1, 1, 1]} : vector<16x16x128xf32> to vector<15x16x128xf32>
    %108 = tpu.concatenate %107, %7 in 0 : vector<15x16x128xf32>, vector<1x16x128xf32> -> vector<16x16x128xf32>
    %109 = vector.extract_strided_slice %6 {offsets = [1, 0, 0], sizes = [15, 16, 128], strides = [1, 1, 1]} : vector<16x16x128xf32> to vector<15x16x128xf32>
    %110 = tpu.concatenate %109, %7 in 0 : vector<15x16x128xf32>, vector<1x16x128xf32> -> vector<16x16x128xf32>
    %111 = tpu.concatenate %1, %6, %108, %110 in 2 : vector<16x16x128xf32>, vector<16x16x128xf32>, vector<16x16x128xf32>, vector<16x16x128xf32> -> vector<16x16x512xf32>
    %112 = vector.shape_cast %111 : vector<16x16x512xf32> to vector<256x512xf32>
    %c3 = arith.constant 3 : index
    %c0_62 = arith.constant 0 : index
    %c0_63 = arith.constant 0 : index
    %113 = vector.load %arg2[%c3, %c0_62, %c0_63] : memref<4x512x128xf32, #tpu.memory_space<vmem>>, vector<1x512x128xf32>
    %114 = vector.shape_cast %113 : vector<1x512x128xf32> to vector<512x128xf32>
    %cst_64 = arith.constant dense<0.000000e+00> : vector<256x128xf32>
    %115 = tpu.matmul %112, %114, %cst_64 {dimension_numbers = #tpu.dot_dimension_numbers<[1], [0], [0], [1], [0, 0, 1, 1], [], []>} : vector<256x512xf32>, vector<512x128xf32>, vector<256x128xf32> -> vector<256x128xf32>
    %c0_65 = arith.constant 0 : index
    %c0_66 = arith.constant 0 : index
    %116 = vector.load %arg3[%c0_65, %c0_66] : memref<1x128xf32, #tpu.memory_space<vmem>>, vector<1x128xf32>
    %117 = vector.broadcast %116 : vector<1x128xf32> to vector<256x128xf32>
    %118 = arith.addf %115, %117 : vector<256x128xf32>
    %cst_67 = arith.constant 0.000000e+00 : f32
    %119 = vector.broadcast %cst_67 : f32 to vector<256x128xf32>
    %120 = arith.subf %119, %118 : vector<256x128xf32>
    %121 = math.exp %120 : vector<256x128xf32>
    %cst_68 = arith.constant 1.000000e+00 : f32
    %122 = vector.broadcast %cst_68 : f32 to vector<256x128xf32>
    %123 = arith.addf %122, %121 : vector<256x128xf32>
    %124 = arith.divf %118, %123 : vector<256x128xf32>
    %c0_69 = arith.constant 0 : index
    %c0_70 = arith.constant 0 : index
    %125 = vector.load %arg4[%c0_69, %c0_70] : memref<128x32xf32, #tpu.memory_space<vmem>>, vector<128x32xf32>
    %cst_71 = arith.constant dense<0.000000e+00> : vector<256x32xf32>
    %126 = tpu.matmul %124, %125, %cst_71 {dimension_numbers = #tpu.dot_dimension_numbers<[1], [0], [0], [1], [0, 0, 1, 1], [], []>} : vector<256x128xf32>, vector<128x32xf32>, vector<256x32xf32> -> vector<256x32xf32>
    %c0_72 = arith.constant 0 : index
    %c0_73 = arith.constant 0 : index
    %127 = vector.load %arg5[%c0_72, %c0_73] : memref<1x32xf32, #tpu.memory_space<vmem>>, vector<1x32xf32>
    %128 = vector.broadcast %127 : vector<1x32xf32> to vector<256x32xf32>
    %129 = arith.addf %126, %128 : vector<256x32xf32>
    %cst_74 = arith.constant 0.000000e+00 : f32
    %130 = vector.broadcast %cst_74 : f32 to vector<256x32xf32>
    %131 = arith.subf %130, %129 : vector<256x32xf32>
    %132 = math.exp %131 : vector<256x32xf32>
    %cst_75 = arith.constant 1.000000e+00 : f32
    %133 = vector.broadcast %cst_75 : f32 to vector<256x32xf32>
    %134 = arith.addf %133, %132 : vector<256x32xf32>
    %135 = arith.divf %129, %134 : vector<256x32xf32>
    %136 = vector.shape_cast %135 : vector<256x32xf32> to vector<16x16x32xf32>
    %c0_76 = arith.constant 0 : index
    %c3_77 = arith.constant 3 : index
    %c0_78 = arith.constant 0 : index
    %c0_79 = arith.constant 0 : index
    %c0_80 = arith.constant 0 : index
    %137 = vector.load %arg6[%c0_76, %c3_77, %c0_78, %c0_79, %c0_80] : memref<1x4x16x16x32xf32, #tpu.memory_space<vmem>>, vector<1x1x16x16x32xf32>
    %138 = vector.shape_cast %137 : vector<1x1x16x16x32xf32> to vector<16x16x32xf32>
    %139 = vector.shape_cast %136 : vector<16x16x32xf32> to vector<1x1x16x16x32xf32>
    tpu.vector_store %arg6[%c0_76, %c3_77, %c0_78, %c0_79, %c0_80], %139 {strides = array<i32>} : memref<1x4x16x16x32xf32, #tpu.memory_space<vmem>>, vector<1x1x16x16x32xf32>,
    return
  }
  func.func @transform_0(%arg0: i32) -> (i32, i32, i32, i32) {
    %c0_i32 = arith.constant 0 : i32
    %c0_i32_0 = arith.constant 0 : i32
    %c0_i32_1 = arith.constant 0 : i32
    %c0_i32_2 = arith.constant 0 : i32
    return %arg0, %c0_i32, %c0_i32_0, %c0_i32_1 : i32, i32, i32, i32
  }
  func.func @transform_1(%arg0: i32) -> (i32, i32, i32) {
    %c0_i32 = arith.constant 0 : i32
    %c0_i32_0 = arith.constant 0 : i32
    %c0_i32_1 = arith.constant 0 : i32
    %c0_i32_2 = arith.constant 0 : i32
    return %c0_i32, %c0_i32_0, %c0_i32_1 : i32, i32, i32
  }
  func.func @transform_2(%arg0: i32) -> (i32, i32) {
    %c0_i32 = arith.constant 0 : i32
    %c0_i32_0 = arith.constant 0 : i32
    %c0_i32_1 = arith.constant 0 : i32
    return %c0_i32, %c0_i32_0 : i32, i32
  }
  func.func @transform_3(%arg0: i32) -> (i32, i32) {
    %c0_i32 = arith.constant 0 : i32
    %c0_i32_0 = arith.constant 0 : i32
    %c0_i32_1 = arith.constant 0 : i32
    return %c0_i32, %c0_i32_0 : i32, i32
  }
  func.func @transform_4(%arg0: i32) -> (i32, i32) {
    %c0_i32 = arith.constant 0 : i32
    %c0_i32_0 = arith.constant 0 : i32
    %c0_i32_1 = arith.constant 0 : i32
    return %c0_i32, %c0_i32_0 : i32, i32
  }
  func.func @transform_5(%arg0: i32) -> (i32, i32, i32, i32, i32) {
    %c0_i32 = arith.constant 0 : i32
    %c0_i32_0 = arith.constant 0 : i32
    %c0_i32_1 = arith.constant 0 : i32
    %c0_i32_2 = arith.constant 0 : i32
    %c0_i32_3 = arith.constant 0 : i32
    return %arg0, %c0_i32, %c0_i32_0, %c0_i32_1, %c0_i32_2 : i32, i32, i32, i32, i32
  }
}

</mosaic_0001>

<llo_original>
// kernel: proto_forward.2
$region0: #{proto_forward.2}
  #allocation0 [shape = 'u32[]', space=smem, size = 0x4, offset = 0x4, fixed_abs, tag = 'smem constant byte address 0x4 - core index']
  #allocation1 [shape = 'u32[144,128]{1,0:T(1,128)}', space=vmem, size = 0x12000, scoped, tag = 'internal scratch']
  %s0 = inlined_call_operand.vmem [shape: f32[2,16,16,16], index: 0, kind: input, shape index: {}]
  %s1 = inlined_call_operand.hbm [shape: f32[144,128], index: 1, kind: input, shape index: {}]
  %s2 = inlined_call_operand.hbm [shape: f32[1,128], index: 2, kind: input, shape index: {}]
  %s3 = inlined_call_operand.vmem [shape: f32[2,16,16,128], index: 3, kind: output, shape index: {}]
  %s4 = sld [smem:[#allocation0]]
  $region53: #{proto_forward.2} parent=0
    _
  %s6 = ssub.s32 1, %s4
  %s7 = scalar_select 0, %s6, %s4
  $region1: #{proto_forward.2} parent=0
    #allocation2 [shape = 'u8[73728]{0}', space=vmem, size = 0x12000, scoped, tag = 'input window, operand 1, single buffered']
    #allocation3 [shape = 's32[2]{0}', space=sflag, size = 0x8, scoped, tag = 'scoped memory for proto_forward.2']
    #allocation4 [shape = 'u8[512]{0}', space=vmem, size = 0x400, scoped, tag = 'input window, operand 2, single buffered']
    #allocation5 [shape = 's32[1]{0}', space=sflag, size = 0x4, scoped, tag = 'scoped memory for proto_forward.2']
    %8 = vsyncpa [#allocation3], 0
    %9 = vsyncpa [#allocation5], 0
    loop: start=0, step=1, limit=4
    $region2: #{proto_forward.2} parent=1 // loop_pre_header
      _
    $region3: #{proto_forward.2} parent=1 // loop_header
      %s11 = sphi 0, %s15
      %p12 = scmp.ge.s32.totalorder %s11, 4
      %s21 = sphi 0, %s23
      %s24 = sphi 0, %s21
      %s25 = sphi 0, %s24
      %s41 = sphi 0, %s25
      %s45 = sphi 0, %s45
      %s47 = sphi 0, %s45
      %s48 = sphi 0, %s47
      %s62 = sphi 0, %s48
      %s66 = sphi 0, %s66
      %s68 = sphi 0, %s66
      %s69 = sphi 0, %s68
      %s83 = sphi 0, %s69
      %s89 = sphi 0, %s91
      %s92 = sphi 0, %s89
      %s93 = sphi 0, %s92
      %s109 = sphi 0, %s93
    $region4: #{proto_forward.2} parent=1 // loop_header_branch
      %14 = sbr.rel (%p12) target = $region8
    $region5: #{proto_forward.2} parent=1 // loop_body
      %s16 = ssub.s32 %s11, 1
      %s17 = ssub.s32 %s11, 2
      %s18 = sadd.s32 %s11, 1
      %s19 = ssub.s32 %s11, %s18
      %p20 = scmp.eq.s32.totalorder %s19, 0
      %s22 = sadd.s32 %s21, 1
      %s23 = scalar_select %p20, %s21, %s22
      %p26 = pneg %p20
      %p27 = scmp.eq.s32.totalorder %s11, 1
      %p28 = por %p26, %p27
      %p29 = scmp.ne.s32.totalorder %s21, %s24
      %p30 = scmp.eq.s32.totalorder %s11, 0
      %p31 = por %p29, %p30
      %p32 = scmp.ne.s32.totalorder %s21, %s24
      %p33 = scmp.eq.s32.totalorder %s16, 1
      %p34 = por %p32, %p33
      %p35 = scmp.ne.s32.totalorder %s24, %s25
      %p36 = scmp.eq.s32.totalorder %s16, 0
      %p37 = por %p35, %p36
      %p38 = scmp.ne.s32.totalorder %s24, %s25
      %p39 = scmp.eq.s32.totalorder %s17, 1
      %p40 = por %p38, %p39
      %p42 = scmp.ne.s32.totalorder %s25, %s41
      %p43 = scmp.eq.s32.totalorder %s17, 0
      %p44 = por %p42, %p43
      %s46 = sadd.s32 %s45, 1
      %p49 = scmp.eq.s32.totalorder %s11, 1
      %p50 = scmp.ne.s32.totalorder %s45, %s47
      %p51 = scmp.eq.s32.totalorder %s11, 0
      %p52 = por %p50, %p51
      %p53 = scmp.ne.s32.totalorder %s45, %s47
      %p54 = scmp.eq.s32.totalorder %s16, 1
      %p55 = por %p53, %p54
      %p56 = scmp.ne.s32.totalorder %s47, %s48
      %p57 = scmp.eq.s32.totalorder %s16, 0
      %p58 = por %p56, %p57
      %p59 = scmp.ne.s32.totalorder %s47, %s48
      %p60 = scmp.eq.s32.totalorder %s17, 1
      %p61 = por %p59, %p60
      %p63 = scmp.ne.s32.totalorder %s48, %s62
      %p64 = scmp.eq.s32.totalorder %s17, 0
      %p65 = por %p63, %p64
      %s67 = sadd.s32 %s66, 1
      %p70 = scmp.eq.s32.totalorder %s11, 1
      %p71 = scmp.ne.s32.totalorder %s66, %s68
      %p72 = scmp.eq.s32.totalorder %s11, 0
      %p73 = por %p71, %p72
      %p74 = scmp.ne.s32.totalorder %s66, %s68
      %p75 = scmp.eq.s32.totalorder %s16, 1
      %p76 = por %p74, %p75
      %p77 = scmp.ne.s32.totalorder %s68, %s69
      %p78 = scmp.eq.s32.totalorder %s16, 0
      %p79 = por %p77, %p78
      %p80 = scmp.ne.s32.totalorder %s68, %s69
      %p81 = scmp.eq.s32.totalorder %s17, 1
      %p82 = por %p80, %p81
      %p84 = scmp.ne.s32.totalorder %s69, %s83
      %p85 = scmp.eq.s32.totalorder %s17, 0
      %p86 = por %p84, %p85
      %s87 = ssub.s32 %s11, %s18
      %p88 = scmp.eq.s32.totalorder %s87, 0
      %s90 = sadd.s32 %s89, 1
      %s91 = scalar_select %p88, %s89, %s90
      %p94 = pneg %p88
      %p95 = scmp.eq.s32.totalorder %s11, 1
      %p96 = por %p94, %p95
      %p97 = scmp.ne.s32.totalorder %s89, %s92
      %p98 = scmp.eq.s32.totalorder %s11, 0
      %p99 = por %p97, %p98
      %p100 = scmp.ne.s32.totalorder %s89, %s92
      %p101 = scmp.eq.s32.totalorder %s16, 1
      %p102 = por %p100, %p101
      %p103 = scmp.ne.s32.totalorder %s92, %s93
      %p104 = scmp.eq.s32.totalorder %s16, 0
      %p105 = por %p103, %p104
      %p106 = scmp.ne.s32.totalorder %s92, %s93
      %p107 = scmp.eq.s32.totalorder %s17, 1
      %p108 = por %p106, %p107
      %p110 = scmp.ne.s32.totalorder %s93, %s109
      %p111 = scmp.eq.s32.totalorder %s17, 0
      %p112 = por %p110, %p111
      %p113 = scmp.le.s32.totalorder 1, %s11
      %p114 = scmp.lt.s32.totalorder %s11, 3
      %p115 = pnand %p113, %p114
      %p116 = pneg %p115
      // Predicated region
      $region9: #{proto_forward.2} parent=5 // pred_check
        _
      $region10: #{proto_forward.2} parent=5 // pred_check_branch
        %118 = sbr.rel (%p115) target = $region12
      $region11: #{proto_forward.2} parent=5 // pred_region
        %s119 = ssub.s32 %s11, 1
        // Predicated region
        $region13: #{proto_forward.2} parent=11 // pred_check
          %p120 = pneg %p58
        $region14: #{proto_forward.2} parent=11 // pred_check_branch
          %122 = sbr.rel (%p120) target = $region16
        $region15: #{proto_forward.2} parent=11 // pred_region
          %s124 = ssub.s32 2304, 2304
          %125 = vsyncadd [#allocation3], %s124
          %s126 = sshll.u32 [#allocation2], 4
          %s127 = int_to_ptr.vmem [resolvable:$true] %s126
          %132 = dma.hbm_to_vmem [thread:$0]  %s1, 2304, %s127, [#allocation3], 128, 128, 8
        $region16: #{proto_forward.2} parent=11 // pred_fallthru
          _
        // Predicated region
        $region17: #{proto_forward.2} parent=11 // pred_check
          %p133 = pneg %p79
        $region18: #{proto_forward.2} parent=11 // pred_check_branch
          %135 = sbr.rel (%p133) target = $region20
        $region19: #{proto_forward.2} parent=11 // pred_region
          %s137 = ssub.s32 16, 16
          %138 = vsyncadd [#allocation5], %s137
          %s140 = sshll.u32 [#allocation4], 4
          %s141 = int_to_ptr.vmem [resolvable:$true] %s140
          %143 = dma.hbm_to_vmem [thread:$0]  %s2, 16, %s141, [#allocation5]
        $region20: #{proto_forward.2} parent=11 // pred_fallthru
          _
      $region12: #{proto_forward.2} parent=5 // pred_fallthru
        _
      %p144 = scmp.lt.s32.totalorder %s11, 2
      // Predicated region
      $region21: #{proto_forward.2} parent=5 // pred_check
        %p145 = pneg %p144
      $region22: #{proto_forward.2} parent=5 // pred_check_branch
        %147 = sbr.rel (%p145) target = $region24
      $region23: #{proto_forward.2} parent=5 // pred_region
        // Predicated region
        $region25: #{proto_forward.2} parent=23 // pred_check
          %p148 = pneg %p31
        $region26: #{proto_forward.2} parent=23 // pred_check_branch
          %150 = sbr.rel (%p148) target = $region28
        $region27: #{proto_forward.2} parent=23 // pred_region
          %p151 = scmp.lt.s32.totalorder %s11, 1
          %s152 = scalar_select %p151, %s11, 1
          %s153 = smul.addr %s152, 32
          %s154 = smul.addr %s153, 8
          %s155 = scalar_lea.vmem %s0, %s154
        $region28: #{proto_forward.2} parent=23 // pred_fallthru
          _
      $region24: #{proto_forward.2} parent=5 // pred_fallthru
        _
      %p156 = scmp.le.s32.totalorder 1, %s11
      %p157 = scmp.lt.s32.totalorder %s11, 3
      %p158 = pnand %p156, %p157
      %p159 = pneg %p158
      // Predicated region
      $region29: #{proto_forward.2} parent=5 // pred_check
        _
      $region30: #{proto_forward.2} parent=5 // pred_check_branch
        %161 = sbr.rel (%p158) target = $region32
      $region31: #{proto_forward.2} parent=5 // pred_region
        %s162 = ssub.s32 %s11, 1
        // Predicated region
        $region33: #{proto_forward.2} parent=31 // pred_check
          %p163 = pneg %p58
        $region34: #{proto_forward.2} parent=31 // pred_check_branch
          %165 = sbr.rel (%p163) target = $region36
        $region35: #{proto_forward.2} parent=31 // pred_region
          %166 = dma.done [#allocation3], 2304
        $region36: #{proto_forward.2} parent=31 // pred_fallthru
          _
        // Predicated region
        $region37: #{proto_forward.2} parent=31 // pred_check
          %p167 = pneg %p79
        $region38: #{proto_forward.2} parent=31 // pred_check_branch
          %169 = sbr.rel (%p167) target = $region40
        $region39: #{proto_forward.2} parent=31 // pred_region
          %170 = dma.done [#allocation5], 16
        $region40: #{proto_forward.2} parent=31 // pred_fallthru
          _
        %p171 = scmp.lt.s32.totalorder %s16, 1
        %s172 = scalar_select %p171, %s16, 1
        %s173 = smul.addr %s172, 32
        %s174 = smul.addr %s173, 8
        %s175 = scalar_lea.vmem %s0, %s174
        %p176 = pneg %p37
        %p177 = pneg %p34
        %p178 = pneg %p58
        %p179 = pneg %p55
        %p180 = pneg %p79
        %p181 = pneg %p76
        %p182 = pneg %p105
        %p183 = pneg %p102
        %p184 = scmp.lt.s32.totalorder %s16, 1
        %s185 = scalar_select %p184, %s16, 1
        %s186 = smul.addr %s185, 32
        %s187 = smul.addr %s186, 8
        %s188 = scalar_lea.vmem %s3, %s187
        %p189 = scmp.lt.s32.totalorder %s16, 1
        %s190 = scalar_select %p189, %s16, 1
        %s191 = smul.addr %s190, 32
        %s192 = smul.addr %s191, 8
        %s193 = scalar_lea.vmem %s0, %s192
        %p194 = scmp.lt.s32.totalorder %s16, 1
        %s195 = scalar_select %p194, %s16, 1
        %s196 = smul.addr %s195, 32
        %s197 = smul.addr %s196, 8
        %s198 = scalar_lea.vmem %s3, %s197
        %v199 = vld [vmem:[%s193] sm:$0xff]
        %v200 = vld [vmem:[%s193 + $0x8] sm:$0xff]
        %v201 = vld [vmem:[%s193 + $0x10] sm:$0xff]
        %v202 = vld [vmem:[%s193 + $0x18] sm:$0xff]
        %v203 = vld [vmem:[%s193 + $0x20] sm:$0xff]
        %v204 = vld [vmem:[%s193 + $0x28] sm:$0xff]
        %v205 = vld [vmem:[%s193 + $0x30] sm:$0xff]
        %v206 = vld [vmem:[%s193 + $0x38] sm:$0xff]
        %v207 = vld [vmem:[%s193 + $0x40] sm:$0xff]
        %v208 = vld [vmem:[%s193 + $0x48] sm:$0xff]
        %v209 = vld [vmem:[%s193 + $0x50] sm:$0xff]
        %v210 = vld [vmem:[%s193 + $0x58] sm:$0xff]
        %v211 = vld [vmem:[%s193 + $0x60] sm:$0xff]
        %v212 = vld [vmem:[%s193 + $0x68] sm:$0xff]
        %v213 = vld [vmem:[%s193 + $0x70] sm:$0xff]
        %v214 = vld [vmem:[%s193 + $0x78] sm:$0xff]
        %v215 = vld [vmem:[%s193 + $0x80] sm:$0xff]
        %v216 = vld [vmem:[%s193 + $0x88] sm:$0xff]
        %v217 = vld [vmem:[%s193 + $0x90] sm:$0xff]
        %v218 = vld [vmem:[%s193 + $0x98] sm:$0xff]
        %v219 = vld [vmem:[%s193 + $0xa0] sm:$0xff]
        %v220 = vld [vmem:[%s193 + $0xa8] sm:$0xff]
        %v221 = vld [vmem:[%s193 + $0xb0] sm:$0xff]
        %v222 = vld [vmem:[%s193 + $0xb8] sm:$0xff]
        %v223 = vld [vmem:[%s193 + $0xc0] sm:$0xff]
        %v224 = vld [vmem:[%s193 + $0xc8] sm:$0xff]
        %v225 = vld [vmem:[%s193 + $0xd0] sm:$0xff]
        %v226 = vld [vmem:[%s193 + $0xd8] sm:$0xff]
        %v227 = vld [vmem:[%s193 + $0xe0] sm:$0xff]
        %v228 = vld [vmem:[%s193 + $0xe8] sm:$0xff]
        %v229 = vld [vmem:[%s193 + $0xf0] sm:$0xff]
        %v230 = vld [vmem:[%s193 + $0xf8] sm:$0xff]
        %vm263 = vcmask 1040384
        %v264 = vrot.slane %v199, 7
        %v265 = vrot.slane %v200, 7
        %v266 = vsel %vm263, %v264, %v265
        %v267 = vrot.slane %v201, 7
        %v268 = vrot.slane %v202, 7
        %v269 = vsel %vm263, %v267, %v268
        %v270 = vrot.slane %v203, 7
        %v271 = vrot.slane %v204, 7
        %v272 = vsel %vm263, %v270, %v271
        %v273 = vrot.slane %v205, 7
        %v274 = vrot.slane %v206, 7
        %v275 = vsel %vm263, %v273, %v274
        %v276 = vrot.slane %v207, 7
        %v277 = vrot.slane %v208, 7
        %v278 = vsel %vm263, %v276, %v277
        %v279 = vrot.slane %v209, 7
        %v280 = vrot.slane %v210, 7
        %v281 = vsel %vm263, %v279, %v280
        %v282 = vrot.slane %v211, 7
        %v283 = vrot.slane %v212, 7
        %v284 = vsel %vm263, %v282, %v283
        %v285 = vrot.slane %v213, 7
        %v286 = vrot.slane %v214, 7
        %v287 = vsel %vm263, %v285, %v286
        %v288 = vrot.slane %v215, 7
        %v289 = vrot.slane %v216, 7
        %v290 = vsel %vm263, %v288, %v289
        %v291 = vrot.slane %v217, 7
        %v292 = vrot.slane %v218, 7
        %v293 = vsel %vm263, %v291, %v292
        %v294 = vrot.slane %v219, 7
        %v295 = vrot.slane %v220, 7
        %v296 = vsel %vm263, %v294, %v295
        %v297 = vrot.slane %v221, 7
        %v298 = vrot.slane %v222, 7
        %v299 = vsel %vm263, %v297, %v298
        %v300 = vrot.slane %v223, 7
        %v301 = vrot.slane %v224, 7
        %v302 = vsel %vm263, %v300, %v301
        %v303 = vrot.slane %v225, 7
        %v304 = vrot.slane %v226, 7
        %v305 = vsel %vm263, %v303, %v304
        %v306 = vrot.slane %v227, 7
        %v307 = vrot.slane %v228, 7
        %v308 = vsel %vm263, %v306, %v307
        %v309 = vrot.slane %v229, 7
        %v310 = vrot.slane %v230, 7
        %v311 = vsel %vm263, %v309, %v310
        %v344 = vsel %vm263, 0.0, %v264
        %v345 = vsel %vm263, 0.0, %v267
        %v346 = vsel %vm263, 0.0, %v270
        %v347 = vsel %vm263, 0.0, %v273
        %v348 = vsel %vm263, 0.0, %v276
        %v349 = vsel %vm263, 0.0, %v279
        %v350 = vsel %vm263, 0.0, %v282
        %v351 = vsel %vm263, 0.0, %v285
        %v352 = vsel %vm263, 0.0, %v288
        %v353 = vsel %vm263, 0.0, %v291
        %v354 = vsel %vm263, 0.0, %v294
        %v355 = vsel %vm263, 0.0, %v297
        %v356 = vsel %vm263, 0.0, %v300
        %v357 = vsel %vm263, 0.0, %v303
        %v358 = vsel %vm263, 0.0, %v306
        %v359 = vsel %vm263, 0.0, %v309
        %vm360 = vcmask 1046528
        %v361 = vrot.slane %v199, 1
        %v362 = vrot.slane %v200, 1
        %v363 = vsel %vm360, %v361, %v362
        %v364 = vrot.slane %v201, 1
        %v365 = vrot.slane %v202, 1
        %v366 = vsel %vm360, %v364, %v365
        %v367 = vrot.slane %v203, 1
        %v368 = vrot.slane %v204, 1
        %v369 = vsel %vm360, %v367, %v368
        %v370 = vrot.slane %v205, 1
        %v371 = vrot.slane %v206, 1
        %v372 = vsel %vm360, %v370, %v371
        %v373 = vrot.slane %v207, 1
        %v374 = vrot.slane %v208, 1
        %v375 = vsel %vm360, %v373, %v374
        %v376 = vrot.slane %v209, 1
        %v377 = vrot.slane %v210, 1
        %v378 = vsel %vm360, %v376, %v377
        %v379 = vrot.slane %v211, 1
        %v380 = vrot.slane %v212, 1
        %v381 = vsel %vm360, %v379, %v380
        %v382 = vrot.slane %v213, 1
        %v383 = vrot.slane %v214, 1
        %v384 = vsel %vm360, %v382, %v383
        %v385 = vrot.slane %v215, 1
        %v386 = vrot.slane %v216, 1
        %v387 = vsel %vm360, %v385, %v386
        %v388 = vrot.slane %v217, 1
        %v389 = vrot.slane %v218, 1
        %v390 = vsel %vm360, %v388, %v389
        %v391 = vrot.slane %v219, 1
        %v392 = vrot.slane %v220, 1
        %v393 = vsel %vm360, %v391, %v392
        %v394 = vrot.slane %v221, 1
        %v395 = vrot.slane %v222, 1
        %v396 = vsel %vm360, %v394, %v395
        %v397 = vrot.slane %v223, 1
        %v398 = vrot.slane %v224, 1
        %v399 = vsel %vm360, %v397, %v398
        %v400 = vrot.slane %v225, 1
        %v401 = vrot.slane %v226, 1
        %v402 = vsel %vm360, %v400, %v401
        %v403 = vrot.slane %v227, 1
        %v404 = vrot.slane %v228, 1
        %v405 = vsel %vm360, %v403, %v404
        %v406 = vrot.slane %v229, 1
        %v407 = vrot.slane %v230, 1
        %v408 = vsel %vm360, %v406, %v407
        %v425 = vsel %vm360, %v362, 0.0
        %v426 = vsel %vm360, %v365, 0.0
        %v427 = vsel %vm360, %v368, 0.0
        %v428 = vsel %vm360, %v371, 0.0
        %v429 = vsel %vm360, %v374, 0.0
        %v430 = vsel %vm360, %v377, 0.0
        %v431 = vsel %vm360, %v380, 0.0
        %v432 = vsel %vm360, %v383, 0.0
        %v433 = vsel %vm360, %v386, 0.0
        %v434 = vsel %vm360, %v389, 0.0
        %v435 = vsel %vm360, %v392, 0.0
        %v436 = vsel %vm360, %v395, 0.0
        %v437 = vsel %vm360, %v398, 0.0
        %v438 = vsel %vm360, %v401, 0.0
        %v439 = vsel %vm360, %v404, 0.0
        %v440 = vsel %vm360, %v407, 0.0
        %441 = vrot.lane.b32.xlu0 %v199, 16
        %v442 = vpop.permute.xlu0 %441
        %443 = vrot.lane.b32.xlu0 %v200, 16
        %v444 = vpop.permute.xlu0 %443
        %445 = vrot.lane.b32.xlu0 %v201, 16
        %v446 = vpop.permute.xlu0 %445
        %447 = vrot.lane.b32.xlu0 %v202, 16
        %v448 = vpop.permute.xlu0 %447
        %449 = vrot.lane.b32.xlu0 %v203, 16
        %v450 = vpop.permute.xlu0 %449
        %451 = vrot.lane.b32.xlu0 %v204, 16
        %v452 = vpop.permute.xlu0 %451
        %453 = vrot.lane.b32.xlu0 %v205, 16
        %v454 = vpop.permute.xlu0 %453
        %455 = vrot.lane.b32.xlu0 %v206, 16
        %v456 = vpop.permute.xlu0 %455
        %457 = vrot.lane.b32.xlu0 %v207, 16
        %v458 = vpop.permute.xlu0 %457
        %459 = vrot.lane.b32.xlu0 %v208, 16
        %v460 = vpop.permute.xlu0 %459
        %461 = vrot.lane.b32.xlu0 %v209, 16
        %v462 = vpop.permute.xlu0 %461
        %463 = vrot.lane.b32.xlu0 %v210, 16
        %v464 = vpop.permute.xlu0 %463
        %465 = vrot.lane.b32.xlu0 %v211, 16
        %v466 = vpop.permute.xlu0 %465
        %467 = vrot.lane.b32.xlu0 %v212, 16
        %v468 = vpop.permute.xlu0 %467
        %469 = vrot.lane.b32.xlu0 %v213, 16
        %v470 = vpop.permute.xlu0 %469
        %471 = vrot.lane.b32.xlu0 %v214, 16
        %v472 = vpop.permute.xlu0 %471
        %473 = vrot.lane.b32.xlu0 %v215, 16
        %v474 = vpop.permute.xlu0 %473
        %475 = vrot.lane.b32.xlu0 %v216, 16
        %v476 = vpop.permute.xlu0 %475
        %477 = vrot.lane.b32.xlu0 %v217, 16
        %v478 = vpop.permute.xlu0 %477
        %479 = vrot.lane.b32.xlu0 %v218, 16
        %v480 = vpop.permute.xlu0 %479
        %481 = vrot.lane.b32.xlu0 %v219, 16
        %v482 = vpop.permute.xlu0 %481
        %483 = vrot.lane.b32.xlu0 %v220, 16
        %v484 = vpop.permute.xlu0 %483
        %485 = vrot.lane.b32.xlu0 %v221, 16
        %v486 = vpop.permute.xlu0 %485
        %487 = vrot.lane.b32.xlu0 %v222, 16
        %v488 = vpop.permute.xlu0 %487
        %489 = vrot.lane.b32.xlu0 %v223, 16
        %v490 = vpop.permute.xlu0 %489
        %491 = vrot.lane.b32.xlu0 %v224, 16
        %v492 = vpop.permute.xlu0 %491
        %493 = vrot.lane.b32.xlu0 %v225, 16
        %v494 = vpop.permute.xlu0 %493
        %495 = vrot.lane.b32.xlu0 %v226, 16
        %v496 = vpop.permute.xlu0 %495
        %497 = vrot.lane.b32.xlu0 %v227, 16
        %v498 = vpop.permute.xlu0 %497
        %499 = vrot.lane.b32.xlu0 %v228, 16
        %v500 = vpop.permute.xlu0 %499
        %501 = vrot.lane.b32.xlu0 %v229, 16
        %v502 = vpop.permute.xlu0 %501
        %503 = vrot.lane.b32.xlu0 %v230, 16
        %v504 = vpop.permute.xlu0 %503
        %553 = vrot.lane.b32.xlu0 %v363, 32
        %v554 = vpop.permute.xlu0 %553
        %555 = vrot.lane.b32.xlu0 %v425, 32
        %v556 = vpop.permute.xlu0 %555
        %557 = vrot.lane.b32.xlu0 %v366, 32
        %v558 = vpop.permute.xlu0 %557
        %559 = vrot.lane.b32.xlu0 %v426, 32
        %v560 = vpop.permute.xlu0 %559
        %561 = vrot.lane.b32.xlu0 %v369, 32
        %v562 = vpop.permute.xlu0 %561
        %563 = vrot.lane.b32.xlu0 %v427, 32
        %v564 = vpop.permute.xlu0 %563
        %565 = vrot.lane.b32.xlu0 %v372, 32
        %v566 = vpop.permute.xlu0 %565
        %567 = vrot.lane.b32.xlu0 %v428, 32
        %v568 = vpop.permute.xlu0 %567
        %569 = vrot.lane.b32.xlu0 %v375, 32
        %v570 = vpop.permute.xlu0 %569
        %571 = vrot.lane.b32.xlu0 %v429, 32
        %v572 = vpop.permute.xlu0 %571
        %573 = vrot.lane.b32.xlu0 %v378, 32
        %v574 = vpop.permute.xlu0 %573
        %575 = vrot.lane.b32.xlu0 %v430, 32
        %v576 = vpop.permute.xlu0 %575
        %577 = vrot.lane.b32.xlu0 %v381, 32
        %v578 = vpop.permute.xlu0 %577
        %579 = vrot.lane.b32.xlu0 %v431, 32
        %v580 = vpop.permute.xlu0 %579
        %581 = vrot.lane.b32.xlu0 %v384, 32
        %v582 = vpop.permute.xlu0 %581
        %583 = vrot.lane.b32.xlu0 %v432, 32
        %v584 = vpop.permute.xlu0 %583
        %585 = vrot.lane.b32.xlu0 %v387, 32
        %v586 = vpop.permute.xlu0 %585
        %587 = vrot.lane.b32.xlu0 %v433, 32
        %v588 = vpop.permute.xlu0 %587
        %589 = vrot.lane.b32.xlu0 %v390, 32
        %v590 = vpop.permute.xlu0 %589
        %591 = vrot.lane.b32.xlu0 %v434, 32
        %v592 = vpop.permute.xlu0 %591
        %593 = vrot.lane.b32.xlu0 %v393, 32
        %v594 = vpop.permute.xlu0 %593
        %595 = vrot.lane.b32.xlu0 %v435, 32
        %v596 = vpop.permute.xlu0 %595
        %597 = vrot.lane.b32.xlu0 %v396, 32
        %v598 = vpop.permute.xlu0 %597
        %599 = vrot.lane.b32.xlu0 %v436, 32
        %v600 = vpop.permute.xlu0 %599
        %601 = vrot.lane.b32.xlu0 %v399, 32
        %v602 = vpop.permute.xlu0 %601
        %603 = vrot.lane.b32.xlu0 %v437, 32
        %v604 = vpop.permute.xlu0 %603
        %605 = vrot.lane.b32.xlu0 %v402, 32
        %v606 = vpop.permute.xlu0 %605
        %607 = vrot.lane.b32.xlu0 %v438, 32
        %v608 = vpop.permute.xlu0 %607
        %609 = vrot.lane.b32.xlu0 %v405, 32
        %v610 = vpop.permute.xlu0 %609
        %611 = vrot.lane.b32.xlu0 %v439, 32
        %v612 = vpop.permute.xlu0 %611
        %613 = vrot.lane.b32.xlu0 %v408, 32
        %v614 = vpop.permute.xlu0 %613
        %615 = vrot.lane.b32.xlu0 %v440, 32
        %v616 = vpop.permute.xlu0 %615
        %vm649 = vcmask 130048
        %v650 = vsel %vm649, %v344, %v442
        %v651 = vsel %vm649, %v266, %v444
        %v652 = vsel %vm649, %v345, %v446
        %v653 = vsel %vm649, %v269, %v448
        %v654 = vsel %vm649, %v346, %v450
        %v655 = vsel %vm649, %v272, %v452
        %v656 = vsel %vm649, %v347, %v454
        %v657 = vsel %vm649, %v275, %v456
        %v658 = vsel %vm649, %v348, %v458
        %v659 = vsel %vm649, %v278, %v460
        %v660 = vsel %vm649, %v349, %v462
        %v661 = vsel %vm649, %v281, %v464
        %v662 = vsel %vm649, %v350, %v466
        %v663 = vsel %vm649, %v284, %v468
        %v664 = vsel %vm649, %v351, %v470
        %v665 = vsel %vm649, %v287, %v472
        %v666 = vsel %vm649, %v352, %v474
        %v667 = vsel %vm649, %v290, %v476
        %v668 = vsel %vm649, %v353, %v478
        %v669 = vsel %vm649, %v293, %v480
        %v670 = vsel %vm649, %v354, %v482
        %v671 = vsel %vm649, %v296, %v484
        %v672 = vsel %vm649, %v355, %v486
        %v673 = vsel %vm649, %v299, %v488
        %v674 = vsel %vm649, %v356, %v490
        %v675 = vsel %vm649, %v302, %v492
        %v676 = vsel %vm649, %v357, %v494
        %v677 = vsel %vm649, %v305, %v496
        %v678 = vsel %vm649, %v358, %v498
        %v679 = vsel %vm649, %v308, %v500
        %v680 = vsel %vm649, %v359, %v502
        %v681 = vsel %vm649, %v311, %v504
        %vm682 = vcmask 261120
        %v683 = vsel %vm682, %v650, %v554
        %v684 = vsel %vm682, %v651, %v556
        %v685 = vsel %vm682, %v652, %v558
        %v686 = vsel %vm682, %v653, %v560
        %v687 = vsel %vm682, %v654, %v562
        %v688 = vsel %vm682, %v655, %v564
        %v689 = vsel %vm682, %v656, %v566
        %v690 = vsel %vm682, %v657, %v568
        %v691 = vsel %vm682, %v658, %v570
        %v692 = vsel %vm682, %v659, %v572
        %v693 = vsel %vm682, %v660, %v574
        %v694 = vsel %vm682, %v661, %v576
        %v695 = vsel %vm682, %v662, %v578
        %v696 = vsel %vm682, %v663, %v580
        %v697 = vsel %vm682, %v664, %v582
        %v698 = vsel %vm682, %v665, %v584
        %v699 = vsel %vm682, %v666, %v586
        %v700 = vsel %vm682, %v667, %v588
        %v701 = vsel %vm682, %v668, %v590
        %v702 = vsel %vm682, %v669, %v592
        %v703 = vsel %vm682, %v670, %v594
        %v704 = vsel %vm682, %v671, %v596
        %v705 = vsel %vm682, %v672, %v598
        %v706 = vsel %vm682, %v673, %v600
        %v707 = vsel %vm682, %v674, %v602
        %v708 = vsel %vm682, %v675, %v604
        %v709 = vsel %vm682, %v676, %v606
        %v710 = vsel %vm682, %v677, %v608
        %v711 = vsel %vm682, %v678, %v610
        %v712 = vsel %vm682, %v679, %v612
        %v713 = vsel %vm682, %v680, %v614
        %v714 = vsel %vm682, %v681, %v616
        %747 = vrot.lane.b32.xlu0 %v683, 48
        %v748 = vpop.permute.xlu0 %747
        %749 = vrot.lane.b32.xlu0 %v684, 48
        %v750 = vpop.permute.xlu0 %749
        %751 = vrot.lane.b32.xlu0 %v685, 48
        %v752 = vpop.permute.xlu0 %751
        %753 = vrot.lane.b32.xlu0 %v686, 48
        %v754 = vpop.permute.xlu0 %753
        %755 = vrot.lane.b32.xlu0 %v687, 48
        %v756 = vpop.permute.xlu0 %755
        %757 = vrot.lane.b32.xlu0 %v688, 48
        %v758 = vpop.permute.xlu0 %757
        %759 = vrot.lane.b32.xlu0 %v689, 48
        %v760 = vpop.permute.xlu0 %759
        %761 = vrot.lane.b32.xlu0 %v690, 48
        %v762 = vpop.permute.xlu0 %761
        %763 = vrot.lane.b32.xlu0 %v691, 48
        %v764 = vpop.permute.xlu0 %763
        %765 = vrot.lane.b32.xlu0 %v692, 48
        %v766 = vpop.permute.xlu0 %765
        %767 = vrot.lane.b32.xlu0 %v693, 48
        %v768 = vpop.permute.xlu0 %767
        %769 = vrot.lane.b32.xlu0 %v694, 48
        %v770 = vpop.permute.xlu0 %769
        %771 = vrot.lane.b32.xlu0 %v695, 48
        %v772 = vpop.permute.xlu0 %771
        %773 = vrot.lane.b32.xlu0 %v696, 48
        %v774 = vpop.permute.xlu0 %773
        %775 = vrot.lane.b32.xlu0 %v697, 48
        %v776 = vpop.permute.xlu0 %775
        %777 = vrot.lane.b32.xlu0 %v698, 48
        %v778 = vpop.permute.xlu0 %777
        %779 = vrot.lane.b32.xlu0 %v699, 48
        %v780 = vpop.permute.xlu0 %779
        %781 = vrot.lane.b32.xlu0 %v700, 48
        %v782 = vpop.permute.xlu0 %781
        %783 = vrot.lane.b32.xlu0 %v701, 48
        %v784 = vpop.permute.xlu0 %783
        %785 = vrot.lane.b32.xlu0 %v702, 48
        %v786 = vpop.permute.xlu0 %785
        %787 = vrot.lane.b32.xlu0 %v703, 48
        %v788 = vpop.permute.xlu0 %787
        %789 = vrot.lane.b32.xlu0 %v704, 48
        %v790 = vpop.permute.xlu0 %789
        %791 = vrot.lane.b32.xlu0 %v705, 48
        %v792 = vpop.permute.xlu0 %791
        %793 = vrot.lane.b32.xlu0 %v706, 48
        %v794 = vpop.permute.xlu0 %793
        %795 = vrot.lane.b32.xlu0 %v707, 48
        %v796 = vpop.permute.xlu0 %795
        %797 = vrot.lane.b32.xlu0 %v708, 48
        %v798 = vpop.permute.xlu0 %797
        %799 = vrot.lane.b32.xlu0 %v709, 48
        %v800 = vpop.permute.xlu0 %799
        %801 = vrot.lane.b32.xlu0 %v710, 48
        %v802 = vpop.permute.xlu0 %801
        %803 = vrot.lane.b32.xlu0 %v711, 48
        %v804 = vpop.permute.xlu0 %803
        %805 = vrot.lane.b32.xlu0 %v712, 48
        %v806 = vpop.permute.xlu0 %805
        %807 = vrot.lane.b32.xlu0 %v713, 48
        %v808 = vpop.permute.xlu0 %807
        %809 = vrot.lane.b32.xlu0 %v714, 48
        %v810 = vpop.permute.xlu0 %809
        %844 = vrot.lane.b32.xlu0 %v685, 96
        %v845 = vpop.permute.xlu0 %844
        %846 = vrot.lane.b32.xlu0 %v686, 96
        %v847 = vpop.permute.xlu0 %846
        %848 = vrot.lane.b32.xlu0 %v687, 96
        %v849 = vpop.permute.xlu0 %848
        %850 = vrot.lane.b32.xlu0 %v688, 96
        %v851 = vpop.permute.xlu0 %850
        %852 = vrot.lane.b32.xlu0 %v689, 96
        %v853 = vpop.permute.xlu0 %852
        %854 = vrot.lane.b32.xlu0 %v690, 96
        %v855 = vpop.permute.xlu0 %854
        %856 = vrot.lane.b32.xlu0 %v691, 96
        %v857 = vpop.permute.xlu0 %856
        %858 = vrot.lane.b32.xlu0 %v692, 96
        %v859 = vpop.permute.xlu0 %858
        %860 = vrot.lane.b32.xlu0 %v693, 96
        %v861 = vpop.permute.xlu0 %860
        %862 = vrot.lane.b32.xlu0 %v694, 96
        %v863 = vpop.permute.xlu0 %862
        %864 = vrot.lane.b32.xlu0 %v695, 96
        %v865 = vpop.permute.xlu0 %864
        %866 = vrot.lane.b32.xlu0 %v696, 96
        %v867 = vpop.permute.xlu0 %866
        %868 = vrot.lane.b32.xlu0 %v697, 96
        %v869 = vpop.permute.xlu0 %868
        %870 = vrot.lane.b32.xlu0 %v698, 96
        %v871 = vpop.permute.xlu0 %870
        %872 = vrot.lane.b32.xlu0 %v699, 96
        %v873 = vpop.permute.xlu0 %872
        %874 = vrot.lane.b32.xlu0 %v700, 96
        %v875 = vpop.permute.xlu0 %874
        %876 = vrot.lane.b32.xlu0 %v701, 96
        %v877 = vpop.permute.xlu0 %876
        %878 = vrot.lane.b32.xlu0 %v702, 96
        %v879 = vpop.permute.xlu0 %878
        %880 = vrot.lane.b32.xlu0 %v703, 96
        %v881 = vpop.permute.xlu0 %880
        %882 = vrot.lane.b32.xlu0 %v704, 96
        %v883 = vpop.permute.xlu0 %882
        %884 = vrot.lane.b32.xlu0 %v705, 96
        %v885 = vpop.permute.xlu0 %884
        %886 = vrot.lane.b32.xlu0 %v706, 96
        %v887 = vpop.permute.xlu0 %886
        %888 = vrot.lane.b32.xlu0 %v707, 96
        %v889 = vpop.permute.xlu0 %888
        %890 = vrot.lane.b32.xlu0 %v708, 96
        %v891 = vpop.permute.xlu0 %890
        %892 = vrot.lane.b32.xlu0 %v709, 96
        %v893 = vpop.permute.xlu0 %892
        %894 = vrot.lane.b32.xlu0 %v710, 96
        %v895 = vpop.permute.xlu0 %894
        %896 = vrot.lane.b32.xlu0 %v711, 96
        %v897 = vpop.permute.xlu0 %896
        %898 = vrot.lane.b32.xlu0 %v712, 96
        %v899 = vpop.permute.xlu0 %898
        %900 = vrot.lane.b32.xlu0 %v713, 96
        %v901 = vpop.permute.xlu0 %900
        %902 = vrot.lane.b32.xlu0 %v714, 96
        %v903 = vpop.permute.xlu0 %902
        %904 = vrot.lane.b32.xlu0 0.0, 96
        %v905 = vpop.permute.xlu0 %904
        %vm937 = vcmask 392192
        %v938 = vsel %vm937, 0.0, %v748
        %v939 = vsel %vm937, 0.0, %v750
        %v940 = vsel %vm937, %v683, %v752
        %v941 = vsel %vm937, %v684, %v754
        %v942 = vsel %vm937, %v685, %v756
        %v943 = vsel %vm937, %v686, %v758
        %v944 = vsel %vm937, %v687, %v760
        %v945 = vsel %vm937, %v688, %v762
        %v946 = vsel %vm937, %v689, %v764
        %v947 = vsel %vm937, %v690, %v766
        %v948 = vsel %vm937, %v691, %v768
        %v949 = vsel %vm937, %v692, %v770
        %v950 = vsel %vm937, %v693, %v772
        %v951 = vsel %vm937, %v694, %v774
        %v952 = vsel %vm937, %v695, %v776
        %v953 = vsel %vm937, %v696, %v778
        %v954 = vsel %vm937, %v697, %v780
        %v955 = vsel %vm937, %v698, %v782
        %v956 = vsel %vm937, %v699, %v784
        %v957 = vsel %vm937, %v700, %v786
        %v958 = vsel %vm937, %v701, %v788
        %v959 = vsel %vm937, %v702, %v790
        %v960 = vsel %vm937, %v703, %v792
        %v961 = vsel %vm937, %v704, %v794
        %v962 = vsel %vm937, %v705, %v796
        %v963 = vsel %vm937, %v706, %v798
        %v964 = vsel %vm937, %v707, %v800
        %v965 = vsel %vm937, %v708, %v802
        %v966 = vsel %vm937, %v709, %v804
        %v967 = vsel %vm937, %v710, %v806
        %v968 = vsel %vm937, %v711, %v808
        %v969 = vsel %vm937, %v712, %v810
        %vm970 = vcmask 785408
        %v971 = vsel %vm970, %v938, %v845
        %v972 = vsel %vm970, %v939, %v847
        %v973 = vsel %vm970, %v940, %v849
        %v974 = vsel %vm970, %v941, %v851
        %v975 = vsel %vm970, %v942, %v853
        %v976 = vsel %vm970, %v943, %v855
        %v977 = vsel %vm970, %v944, %v857
        %v978 = vsel %vm970, %v945, %v859
        %v979 = vsel %vm970, %v946, %v861
        %v980 = vsel %vm970, %v947, %v863
        %v981 = vsel %vm970, %v948, %v865
        %v982 = vsel %vm970, %v949, %v867
        %v983 = vsel %vm970, %v950, %v869
        %v984 = vsel %vm970, %v951, %v871
        %v985 = vsel %vm970, %v952, %v873
        %v986 = vsel %vm970, %v953, %v875
        %v987 = vsel %vm970, %v954, %v877
        %v988 = vsel %vm970, %v955, %v879
        %v989 = vsel %vm970, %v956, %v881
        %v990 = vsel %vm970, %v957, %v883
        %v991 = vsel %vm970, %v958, %v885
        %v992 = vsel %vm970, %v959, %v887
        %v993 = vsel %vm970, %v960, %v889
        %v994 = vsel %vm970, %v961, %v891
        %v995 = vsel %vm970, %v962, %v893
        %v996 = vsel %vm970, %v963, %v895
        %v997 = vsel %vm970, %v964, %v897
        %v998 = vsel %vm970, %v965, %v899
        %v999 = vsel %vm970, %v966, %v901
        %v1000 = vsel %vm970, %v967, %v903
        %v1001 = vsel %vm970, %v968, %v905
        %v1002 = vsel %vm970, %v969, %v905
        %v1003 = vld [vmem:[#allocation2] sm:$0xff]
        %v1004 = vld [vmem:[#allocation2 + $0x8] sm:$0xff]
        %v1005 = vld [vmem:[#allocation2 + $0x10] sm:$0xff]
        %v1006 = vld [vmem:[#allocation2 + $0x18] sm:$0xff]
        %v1007 = vld [vmem:[#allocation2 + $0x20] sm:$0xff]
        %v1008 = vld [vmem:[#allocation2 + $0x28] sm:$0xff]
        %v1009 = vld [vmem:[#allocation2 + $0x30] sm:$0xff]
        %v1010 = vld [vmem:[#allocation2 + $0x38] sm:$0xff]
        %v1011 = vld [vmem:[#allocation2 + $0x40] sm:$0xff]
        %v1012 = vld [vmem:[#allocation2 + $0x48] sm:$0xff]
        %v1013 = vld [vmem:[#allocation2 + $0x50] sm:$0xff]
        %v1014 = vld [vmem:[#allocation2 + $0x58] sm:$0xff]
        %v1015 = vld [vmem:[#allocation2 + $0x60] sm:$0xff]
        %v1016 = vld [vmem:[#allocation2 + $0x68] sm:$0xff]
        %v1017 = vld [vmem:[#allocation2 + $0x70] sm:$0xff]
        %v1018 = vld [vmem:[#allocation2 + $0x78] sm:$0xff]
        %v1019 = vld [vmem:[#allocation2 + $0x80] sm:$0xff]
        %v1020 = vld [vmem:[#allocation2 + $0x88] sm:$0xff]
        %v1021 = vld [vmem:[#allocation4] sm:$0x1]
        %v1023 = vlaneseq
        %v1024 = vshrl.u32 %v1023, 7
        %v1025 = vsub.s32 0, %v1024
        %v1026 = vrot.slane %v1021, %v1025
        %v1028 = vsel %vm649, %v845, 0
        %v1030 = vsel %vm649, %v847, 0
        %v1032 = vsel %vm649, %v849, 0
        %v1034 = vsel %vm649, %v851, 0
        %v1036 = vsel %vm649, %v853, 0
        %v1038 = vsel %vm649, %v855, 0
        %v1040 = vsel %vm649, %v857, 0
        %v1042 = vsel %vm649, %v859, 0
        %v1044 = vsel %vm649, %v861, 0
        %v1046 = vsel %vm649, %v863, 0
        %v1048 = vsel %vm649, %v865, 0
        %v1050 = vsel %vm649, %v867, 0
        %v1052 = vsel %vm649, %v869, 0
        %v1054 = vsel %vm649, %v871, 0
        %v1056 = vsel %vm649, %v873, 0
        %v1058 = vsel %vm649, %v875, 0
        %v1060 = vsel %vm649, %v877, 0
        %v1062 = vsel %vm649, %v879, 0
        %v1064 = vsel %vm649, %v881, 0
        %v1066 = vsel %vm649, %v883, 0
        %v1068 = vsel %vm649, %v885, 0
        %v1070 = vsel %vm649, %v887, 0
        %v1072 = vsel %vm649, %v889, 0
        %v1074 = vsel %vm649, %v891, 0
        %v1076 = vsel %vm649, %v893, 0
        %v1078 = vsel %vm649, %v895, 0
        %v1080 = vsel %vm649, %v897, 0
        %v1082 = vsel %vm649, %v899, 0
        %v1084 = vsel %vm649, %v901, 0
        %v1086 = vsel %vm649, %v903, 0
        %v1088 = vsel %vm649, %v905, 0
        %1090 = vmatprep.subr.mxu0 0.0
        %1091 = vmatpush1.msra.mxu0 %v1018
        %1092 = vmatprep.subr.mxu0 0.0
        %1093 = vmatpush1.msra.mxu0 %v1017
        %1094 = vmatprep.subr.mxu0 0.0
        %1095 = vmatpush1.msra.mxu0 %v1016
        %1096 = vmatprep.subr.mxu0 0.0
        %1097 = vmatpush1.msra.mxu0 %v1015
        %1098 = vmatprep.subr.mxu0 0.0
        %1099 = vmatpush1.msra.mxu0 %v1014
        %1100 = vmatprep.subr.mxu0 0.0
        %1101 = vmatpush1.msra.mxu0 %v1013
        %1102 = vmatprep.subr.mxu0 0.0
        %1103 = vmatpush1.msra.mxu0 %v1012
        %1104 = vmatprep.subr.mxu0 0.0
        %1105 = vmatpush1.msra.mxu0 %v1011
        %1106 = vmatprep.subr.mxu0 0.0
        %1107 = vmatpush1.msra.mxu0 %v1010
        %1108 = vmatprep.subr.mxu0 0.0
        %1109 = vmatpush1.msra.mxu0 %v1009
        %1110 = vmatprep.subr.mxu0 0.0
        %1111 = vmatpush1.msra.mxu0 %v1008
        %1112 = vmatprep.subr.mxu0 0.0
        %1113 = vmatpush1.msra.mxu0 %v1007
        %1114 = vmatprep.subr.mxu0 0.0
        %1115 = vmatpush1.msra.mxu0 %v1006
        %1116 = vmatprep.subr.mxu0 0.0
        %1117 = vmatpush1.msra.mxu0 %v1005
        %1118 = vmatprep.subr.mxu0 0.0
        %1119 = vmatpush1.msra.mxu0 %v1004
        %1120 = vmatprep.subr.mxu0 0.0
        %1121 = vmatpush1.msra.mxu0 %v1003
        %1122 = vmatprep.subr.mxu0 0.0
        %1123 = vmatpush2.msra.mxu0 0.0
        %1124 = vmatprep.subr.mxu0 0.0
        %1125 = vmatpush2.msra.mxu0 0.0
        %1126 = vmatprep.subr.mxu0 0.0
        %1127 = vmatpush2.msra.mxu0 0.0
        %1128 = vmatprep.subr.mxu0 0.0
        %1129 = vmatpush2.msra.mxu0 0.0
        %1130 = vmatprep.subr.mxu0 0.0
        %1131 = vmatpush2.msra.mxu0 0.0
        %1132 = vmatprep.subr.mxu0 0.0
        %1133 = vmatpush2.msra.mxu0 0.0
        %1134 = vmatprep.subr.mxu0 0.0
        %1135 = vmatpush2.msra.mxu0 0.0
        %1136 = vmatprep.subr.mxu0 0.0
        %1137 = vmatpush2.msra.mxu0 0.0
        %1138 = vmatprep.subr.mxu0 0.0
        %1139 = vmatpush2.msra.mxu0 0.0
        %1140 = vmatprep.subr.mxu0 0.0
        %1141 = vmatpush2.msra.mxu0 0.0
        %1142 = vmatprep.subr.mxu0 0.0
        %1143 = vmatpush2.msra.mxu0 0.0
        %1144 = vmatprep.subr.mxu0 0.0
        %1145 = vmatpush2.msra.mxu0 0.0
        %1146 = vmatprep.subr.mxu0 0.0
        %1147 = vmatpush2.msra.mxu0 0.0
        %1148 = vmatprep.subr.mxu0 0.0
        %1149 = vmatpush2.msra.mxu0 0.0
        %1150 = vmatprep.subr.mxu0 0.0
        %1151 = vmatpush2.msra.mxu0 %v1020
        %1152 = vmatprep.subr.mxu0 0.0
        %1153 = vmatpush2.msra.mxu0 %v1019
        %1154 = vmatprep.mubr.f32.mxu0 %v1028
        %1155 = vmatmul.mubr.f32.gmra.mxu0 %v971
        %v1156 = vpop.f32.mrf.mxu0
        %v1157 = vadd.f32 %v1026, %v1156
        %v1158 = vpop.f32.mrf.mxu0
        %1159 = vmatprep.mubr.f32.mxu0 %v1030
        %1160 = vmatmul.mubr.f32.gmra.mxu0 %v972
        %v1161 = vpop.f32.mrf.mxu0
        %v1162 = vadd.f32 %v1026, %v1161
        %v1163 = vpop.f32.mrf.mxu0
        %1164 = vmatprep.mubr.f32.mxu0 %v1032
        %1165 = vmatmul.mubr.f32.gmra.mxu0 %v973
        %v1166 = vpop.f32.mrf.mxu0
        %v1167 = vadd.f32 %v1026, %v1166
        %v1168 = vpop.f32.mrf.mxu0
        %1169 = vmatprep.mubr.f32.mxu0 %v1034
        %1170 = vmatmul.mubr.f32.gmra.mxu0 %v974
        %v1171 = vpop.f32.mrf.mxu0
        %v1172 = vadd.f32 %v1026, %v1171
        %v1173 = vpop.f32.mrf.mxu0
        %1174 = vmatprep.mubr.f32.mxu0 %v1036
        %1175 = vmatmul.mubr.f32.gmra.mxu0 %v975
        %v1176 = vpop.f32.mrf.mxu0
        %v1177 = vadd.f32 %v1026, %v1176
        %v1178 = vpop.f32.mrf.mxu0
        %1179 = vmatprep.mubr.f32.mxu0 %v1038
        %1180 = vmatmul.mubr.f32.gmra.mxu0 %v976
        %v1181 = vpop.f32.mrf.mxu0
        %v1182 = vadd.f32 %v1026, %v1181
        %v1183 = vpop.f32.mrf.mxu0
        %1184 = vmatprep.mubr.f32.mxu0 %v1040
        %1185 = vmatmul.mubr.f32.gmra.mxu0 %v977
        %v1186 = vpop.f32.mrf.mxu0
        %v1187 = vadd.f32 %v1026, %v1186
        %v1188 = vpop.f32.mrf.mxu0
        %1189 = vmatprep.mubr.f32.mxu0 %v1042
        %1190 = vmatmul.mubr.f32.gmra.mxu0 %v978
        %v1191 = vpop.f32.mrf.mxu0
        %v1192 = vadd.f32 %v1026, %v1191
        %v1193 = vpop.f32.mrf.mxu0
        %1194 = vmatprep.mubr.f32.mxu0 %v1044
        %1195 = vmatmul.mubr.f32.gmra.mxu0 %v979
        %v1196 = vpop.f32.mrf.mxu0
        %v1197 = vadd.f32 %v1026, %v1196
        %v1198 = vpop.f32.mrf.mxu0
        %1199 = vmatprep.mubr.f32.mxu0 %v1046
        %1200 = vmatmul.mubr.f32.gmra.mxu0 %v980
        %v1201 = vpop.f32.mrf.mxu0
        %v1202 = vadd.f32 %v1026, %v1201
        %v1203 = vpop.f32.mrf.mxu0
        %1204 = vmatprep.mubr.f32.mxu0 %v1048
        %1205 = vmatmul.mubr.f32.gmra.mxu0 %v981
        %v1206 = vpop.f32.mrf.mxu0
        %v1207 = vadd.f32 %v1026, %v1206
        %v1208 = vpop.f32.mrf.mxu0
        %1209 = vmatprep.mubr.f32.mxu0 %v1050
        %1210 = vmatmul.mubr.f32.gmra.mxu0 %v982
        %v1211 = vpop.f32.mrf.mxu0
        %v1212 = vadd.f32 %v1026, %v1211
        %v1213 = vpop.f32.mrf.mxu0
        %1214 = vmatprep.mubr.f32.mxu0 %v1052
        %1215 = vmatmul.mubr.f32.gmra.mxu0 %v983
        %v1216 = vpop.f32.mrf.mxu0
        %v1217 = vadd.f32 %v1026, %v1216
        %v1218 = vpop.f32.mrf.mxu0
        %1219 = vmatprep.mubr.f32.mxu0 %v1054
        %1220 = vmatmul.mubr.f32.gmra.mxu0 %v984
        %v1221 = vpop.f32.mrf.mxu0
        %v1222 = vadd.f32 %v1026, %v1221
        %v1223 = vpop.f32.mrf.mxu0
        %1224 = vmatprep.mubr.f32.mxu0 %v1056
        %1225 = vmatmul.mubr.f32.gmra.mxu0 %v985
        %v1226 = vpop.f32.mrf.mxu0
        %v1227 = vadd.f32 %v1026, %v1226
        %v1228 = vpop.f32.mrf.mxu0
        %1229 = vmatprep.mubr.f32.mxu0 %v1058
        %1230 = vmatmul.mubr.f32.gmra.mxu0 %v986
        %v1231 = vpop.f32.mrf.mxu0
        %v1232 = vadd.f32 %v1026, %v1231
        %v1233 = vpop.f32.mrf.mxu0
        %1234 = vmatprep.mubr.f32.mxu0 %v1060
        %1235 = vmatmul.mubr.f32.gmra.mxu0 %v987
        %v1236 = vpop.f32.mrf.mxu0
        %v1237 = vadd.f32 %v1026, %v1236
        %v1238 = vpop.f32.mrf.mxu0
        %1239 = vmatprep.mubr.f32.mxu0 %v1062
        %1240 = vmatmul.mubr.f32.gmra.mxu0 %v988
        %v1241 = vpop.f32.mrf.mxu0
        %v1242 = vadd.f32 %v1026, %v1241
        %v1243 = vpop.f32.mrf.mxu0
        %1244 = vmatprep.mubr.f32.mxu0 %v1064
        %1245 = vmatmul.mubr.f32.gmra.mxu0 %v989
        %v1246 = vpop.f32.mrf.mxu0
        %v1247 = vadd.f32 %v1026, %v1246
        %v1248 = vpop.f32.mrf.mxu0
        %1249 = vmatprep.mubr.f32.mxu0 %v1066
        %1250 = vmatmul.mubr.f32.gmra.mxu0 %v990
        %v1251 = vpop.f32.mrf.mxu0
        %v1252 = vadd.f32 %v1026, %v1251
        %v1253 = vpop.f32.mrf.mxu0
        %1254 = vmatprep.mubr.f32.mxu0 %v1068
        %1255 = vmatmul.mubr.f32.gmra.mxu0 %v991
        %v1256 = vpop.f32.mrf.mxu0
        %v1257 = vadd.f32 %v1026, %v1256
        %v1258 = vpop.f32.mrf.mxu0
        %1259 = vmatprep.mubr.f32.mxu0 %v1070
        %1260 = vmatmul.mubr.f32.gmra.mxu0 %v992
        %v1261 = vpop.f32.mrf.mxu0
        %v1262 = vadd.f32 %v1026, %v1261
        %v1263 = vpop.f32.mrf.mxu0
        %1264 = vmatprep.mubr.f32.mxu0 %v1072
        %1265 = vmatmul.mubr.f32.gmra.mxu0 %v993
        %v1266 = vpop.f32.mrf.mxu0
        %v1267 = vadd.f32 %v1026, %v1266
        %v1268 = vpop.f32.mrf.mxu0
        %1269 = vmatprep.mubr.f32.mxu0 %v1074
        %1270 = vmatmul.mubr.f32.gmra.mxu0 %v994
        %v1271 = vpop.f32.mrf.mxu0
        %v1272 = vadd.f32 %v1026, %v1271
        %v1273 = vpop.f32.mrf.mxu0
        %1274 = vmatprep.mubr.f32.mxu0 %v1076
        %1275 = vmatmul.mubr.f32.gmra.mxu0 %v995
        %v1276 = vpop.f32.mrf.mxu0
        %v1277 = vadd.f32 %v1026, %v1276
        %v1278 = vpop.f32.mrf.mxu0
        %1279 = vmatprep.mubr.f32.mxu0 %v1078
        %1280 = vmatmul.mubr.f32.gmra.mxu0 %v996
        %v1281 = vpop.f32.mrf.mxu0
        %v1282 = vadd.f32 %v1026, %v1281
        %v1283 = vpop.f32.mrf.mxu0
        %1284 = vmatprep.mubr.f32.mxu0 %v1080
        %1285 = vmatmul.mubr.f32.gmra.mxu0 %v997
        %v1286 = vpop.f32.mrf.mxu0
        %v1287 = vadd.f32 %v1026, %v1286
        %v1288 = vpop.f32.mrf.mxu0
        %1289 = vmatprep.mubr.f32.mxu0 %v1082
        %1290 = vmatmul.mubr.f32.gmra.mxu0 %v998
        %v1291 = vpop.f32.mrf.mxu0
        %v1292 = vadd.f32 %v1026, %v1291
        %v1293 = vpop.f32.mrf.mxu0
        %1294 = vmatprep.mubr.f32.mxu0 %v1084
        %1295 = vmatmul.mubr.f32.gmra.mxu0 %v999
        %v1296 = vpop.f32.mrf.mxu0
        %v1297 = vadd.f32 %v1026, %v1296
        %v1298 = vpop.f32.mrf.mxu0
        %1299 = vmatprep.mubr.f32.mxu0 %v1086
        %1300 = vmatmul.mubr.f32.gmra.mxu0 %v1000
        %v1301 = vpop.f32.mrf.mxu0
        %v1302 = vadd.f32 %v1026, %v1301
        %v1303 = vpop.f32.mrf.mxu0
        %1304 = vmatprep.mubr.f32.mxu0 %v1088
        %1305 = vmatmul.mubr.f32.gmra.mxu0 %v1001
        %v1306 = vpop.f32.mrf.mxu0
        %v1307 = vadd.f32 %v1026, %v1306
        %v1308 = vpop.f32.mrf.mxu0
        %1309 = vmatprep.mubr.f32.mxu0 %v1088
        %1310 = vmatmul.mubr.f32.gmra.mxu0 %v1002
        %v1311 = vpop.f32.mrf.mxu0
        %v1312 = vadd.f32 %v1026, %v1311
        %v1313 = vpop.f32.mrf.mxu0
        %1314 = vdwg.mxu0
        %v1315 = vsub.f32 0.0, %v1157
        %v1316 = vsub.f32 0.0, %v1162
        %v1317 = vsub.f32 0.0, %v1167
        %v1318 = vsub.f32 0.0, %v1172
        %v1319 = vsub.f32 0.0, %v1177
        %v1320 = vsub.f32 0.0, %v1182
        %v1321 = vsub.f32 0.0, %v1187
        %v1322 = vsub.f32 0.0, %v1192
        %v1323 = vsub.f32 0.0, %v1197
        %v1324 = vsub.f32 0.0, %v1202
        %v1325 = vsub.f32 0.0, %v1207
        %v1326 = vsub.f32 0.0, %v1212
        %v1327 = vsub.f32 0.0, %v1217
        %v1328 = vsub.f32 0.0, %v1222
        %v1329 = vsub.f32 0.0, %v1227
        %v1330 = vsub.f32 0.0, %v1232
        %v1331 = vsub.f32 0.0, %v1237
        %v1332 = vsub.f32 0.0, %v1242
        %v1333 = vsub.f32 0.0, %v1247
        %v1334 = vsub.f32 0.0, %v1252
        %v1335 = vsub.f32 0.0, %v1257
        %v1336 = vsub.f32 0.0, %v1262
        %v1337 = vsub.f32 0.0, %v1267
        %v1338 = vsub.f32 0.0, %v1272
        %v1339 = vsub.f32 0.0, %v1277
        %v1340 = vsub.f32 0.0, %v1282
        %v1341 = vsub.f32 0.0, %v1287
        %v1342 = vsub.f32 0.0, %v1292
        %v1343 = vsub.f32 0.0, %v1297
        %v1344 = vsub.f32 0.0, %v1302
        %v1345 = vsub.f32 0.0, %v1307
        %v1346 = vsub.f32 0.0, %v1312
        %v1347 = vmul.f32 %v1315, 1.442695
        %v1348 = vpow.pop %v1347
        %v1349 = vmul.f32 %v1316, 1.442695
        %v1350 = vpow.pop %v1349
        %v1351 = vmul.f32 %v1317, 1.442695
        %v1352 = vpow.pop %v1351
        %v1353 = vmul.f32 %v1318, 1.442695
        %v1354 = vpow.pop %v1353
        %v1355 = vmul.f32 %v1319, 1.442695
        %v1356 = vpow.pop %v1355
        %v1357 = vmul.f32 %v1320, 1.442695
        %v1358 = vpow.pop %v1357
        %v1359 = vmul.f32 %v1321, 1.442695
        %v1360 = vpow.pop %v1359
        %v1361 = vmul.f32 %v1322, 1.442695
        %v1362 = vpow.pop %v1361
        %v1363 = vmul.f32 %v1323, 1.442695
        %v1364 = vpow.pop %v1363
        %v1365 = vmul.f32 %v1324, 1.442695
        %v1366 = vpow.pop %v1365
        %v1367 = vmul.f32 %v1325, 1.442695
        %v1368 = vpow.pop %v1367
        %v1369 = vmul.f32 %v1326, 1.442695
        %v1370 = vpow.pop %v1369
        %v1371 = vmul.f32 %v1327, 1.442695
        %v1372 = vpow.pop %v1371
        %v1373 = vmul.f32 %v1328, 1.442695
        %v1374 = vpow.pop %v1373
        %v1375 = vmul.f32 %v1329, 1.442695
        %v1376 = vpow.pop %v1375
        %v1377 = vmul.f32 %v1330, 1.442695
        %v1378 = vpow.pop %v1377
        %v1379 = vmul.f32 %v1331, 1.442695
        %v1380 = vpow.pop %v1379
        %v1381 = vmul.f32 %v1332, 1.442695
        %v1382 = vpow.pop %v1381
        %v1383 = vmul.f32 %v1333, 1.442695
        %v1384 = vpow.pop %v1383
        %v1385 = vmul.f32 %v1334, 1.442695
        %v1386 = vpow.pop %v1385
        %v1387 = vmul.f32 %v1335, 1.442695
        %v1388 = vpow.pop %v1387
        %v1389 = vmul.f32 %v1336, 1.442695
        %v1390 = vpow.pop %v1389
        %v1391 = vmul.f32 %v1337, 1.442695
        %v1392 = vpow.pop %v1391
        %v1393 = vmul.f32 %v1338, 1.442695
        %v1394 = vpow.pop %v1393
        %v1395 = vmul.f32 %v1339, 1.442695
        %v1396 = vpow.pop %v1395
        %v1397 = vmul.f32 %v1340, 1.442695
        %v1398 = vpow.pop %v1397
        %v1399 = vmul.f32 %v1341, 1.442695
        %v1400 = vpow.pop %v1399
        %v1401 = vmul.f32 %v1342, 1.442695
        %v1402 = vpow.pop %v1401
        %v1403 = vmul.f32 %v1343, 1.442695
        %v1404 = vpow.pop %v1403
        %v1405 = vmul.f32 %v1344, 1.442695
        %v1406 = vpow.pop %v1405
        %v1407 = vmul.f32 %v1345, 1.442695
        %v1408 = vpow.pop %v1407
        %v1409 = vmul.f32 %v1346, 1.442695
        %v1410 = vpow.pop %v1409
        %v1411 = vadd.f32 %v1348, 1.0
        %v1412 = vadd.f32 %v1350, 1.0
        %v1413 = vadd.f32 %v1352, 1.0
        %v1414 = vadd.f32 %v1354, 1.0
        %v1415 = vadd.f32 %v1356, 1.0
        %v1416 = vadd.f32 %v1358, 1.0
        %v1417 = vadd.f32 %v1360, 1.0
        %v1418 = vadd.f32 %v1362, 1.0
        %v1419 = vadd.f32 %v1364, 1.0
        %v1420 = vadd.f32 %v1366, 1.0
        %v1421 = vadd.f32 %v1368, 1.0
        %v1422 = vadd.f32 %v1370, 1.0
        %v1423 = vadd.f32 %v1372, 1.0
        %v1424 = vadd.f32 %v1374, 1.0
        %v1425 = vadd.f32 %v1376, 1.0
        %v1426 = vadd.f32 %v1378, 1.0
        %v1427 = vadd.f32 %v1380, 1.0
        %v1428 = vadd.f32 %v1382, 1.0
        %v1429 = vadd.f32 %v1384, 1.0
        %v1430 = vadd.f32 %v1386, 1.0
        %v1431 = vadd.f32 %v1388, 1.0
        %v1432 = vadd.f32 %v1390, 1.0
        %v1433 = vadd.f32 %v1392, 1.0
        %v1434 = vadd.f32 %v1394, 1.0
        %v1435 = vadd.f32 %v1396, 1.0
        %v1436 = vadd.f32 %v1398, 1.0
        %v1437 = vadd.f32 %v1400, 1.0
        %v1438 = vadd.f32 %v1402, 1.0
        %v1439 = vadd.f32 %v1404, 1.0
        %v1440 = vadd.f32 %v1406, 1.0
        %v1441 = vadd.f32 %v1408, 1.0
        %v1442 = vadd.f32 %v1410, 1.0
        %v1443 = vrcp.pop %v1411
        %v1444 = vmul.f32 %v1157, %v1443
        %v1445 = vrcp.pop %v1412
        %v1446 = vmul.f32 %v1162, %v1445
        %v1447 = vrcp.pop %v1413
        %v1448 = vmul.f32 %v1167, %v1447
        %v1449 = vrcp.pop %v1414
        %v1450 = vmul.f32 %v1172, %v1449
        %v1451 = vrcp.pop %v1415
        %v1452 = vmul.f32 %v1177, %v1451
        %v1453 = vrcp.pop %v1416
        %v1454 = vmul.f32 %v1182, %v1453
        %v1455 = vrcp.pop %v1417
        %v1456 = vmul.f32 %v1187, %v1455
        %v1457 = vrcp.pop %v1418
        %v1458 = vmul.f32 %v1192, %v1457
        %v1459 = vrcp.pop %v1419
        %v1460 = vmul.f32 %v1197, %v1459
        %v1461 = vrcp.pop %v1420
        %v1462 = vmul.f32 %v1202, %v1461
        %v1463 = vrcp.pop %v1421
        %v1464 = vmul.f32 %v1207, %v1463
        %v1465 = vrcp.pop %v1422
        %v1466 = vmul.f32 %v1212, %v1465
        %v1467 = vrcp.pop %v1423
        %v1468 = vmul.f32 %v1217, %v1467
        %v1469 = vrcp.pop %v1424
        %v1470 = vmul.f32 %v1222, %v1469
        %v1471 = vrcp.pop %v1425
        %v1472 = vmul.f32 %v1227, %v1471
        %v1473 = vrcp.pop %v1426
        %v1474 = vmul.f32 %v1232, %v1473
        %v1475 = vrcp.pop %v1427
        %v1476 = vmul.f32 %v1237, %v1475
        %v1477 = vrcp.pop %v1428
        %v1478 = vmul.f32 %v1242, %v1477
        %v1479 = vrcp.pop %v1429
        %v1480 = vmul.f32 %v1247, %v1479
        %v1481 = vrcp.pop %v1430
        %v1482 = vmul.f32 %v1252, %v1481
        %v1483 = vrcp.pop %v1431
        %v1484 = vmul.f32 %v1257, %v1483
        %v1485 = vrcp.pop %v1432
        %v1486 = vmul.f32 %v1262, %v1485
        %v1487 = vrcp.pop %v1433
        %v1488 = vmul.f32 %v1267, %v1487
        %v1489 = vrcp.pop %v1434
        %v1490 = vmul.f32 %v1272, %v1489
        %v1491 = vrcp.pop %v1435
        %v1492 = vmul.f32 %v1277, %v1491
        %v1493 = vrcp.pop %v1436
        %v1494 = vmul.f32 %v1282, %v1493
        %v1495 = vrcp.pop %v1437
        %v1496 = vmul.f32 %v1287, %v1495
        %v1497 = vrcp.pop %v1438
        %v1498 = vmul.f32 %v1292, %v1497
        %v1499 = vrcp.pop %v1439
        %v1500 = vmul.f32 %v1297, %v1499
        %v1501 = vrcp.pop %v1440
        %v1502 = vmul.f32 %v1302, %v1501
        %v1503 = vrcp.pop %v1441
        %v1504 = vmul.f32 %v1307, %v1503
        %v1505 = vrcp.pop %v1442
        %v1506 = vmul.f32 %v1312, %v1505
        %1507 = vst [vmem:[%s198] sm:$0xff] %v1444
        %1508 = vst [vmem:[%s198 + $0x8] sm:$0xff] %v1446
        %1509 = vst [vmem:[%s198 + $0x10] sm:$0xff] %v1448
        %1510 = vst [vmem:[%s198 + $0x18] sm:$0xff] %v1450
        %1511 = vst [vmem:[%s198 + $0x20] sm:$0xff] %v1452
        %1512 = vst [vmem:[%s198 + $0x28] sm:$0xff] %v1454
        %1513 = vst [vmem:[%s198 + $0x30] sm:$0xff] %v1456
        %1514 = vst [vmem:[%s198 + $0x38] sm:$0xff] %v1458
        %1515 = vst [vmem:[%s198 + $0x40] sm:$0xff] %v1460
        %1516 = vst [vmem:[%s198 + $0x48] sm:$0xff] %v1462
        %1517 = vst [vmem:[%s198 + $0x50] sm:$0xff] %v1464
        %1518 = vst [vmem:[%s198 + $0x58] sm:$0xff] %v1466
        %1519 = vst [vmem:[%s198 + $0x60] sm:$0xff] %v1468
        %1520 = vst [vmem:[%s198 + $0x68] sm:$0xff] %v1470
        %1521 = vst [vmem:[%s198 + $0x70] sm:$0xff] %v1472
        %1522 = vst [vmem:[%s198 + $0x78] sm:$0xff] %v1474
        %1523 = vst [vmem:[%s198 + $0x80] sm:$0xff] %v1476
        %1524 = vst [vmem:[%s198 + $0x88] sm:$0xff] %v1478
        %1525 = vst [vmem:[%s198 + $0x90] sm:$0xff] %v1480
        %1526 = vst [vmem:[%s198 + $0x98] sm:$0xff] %v1482
        %1527 = vst [vmem:[%s198 + $0xa0] sm:$0xff] %v1484
        %1528 = vst [vmem:[%s198 + $0xa8] sm:$0xff] %v1486
        %1529 = vst [vmem:[%s198 + $0xb0] sm:$0xff] %v1488
        %1530 = vst [vmem:[%s198 + $0xb8] sm:$0xff] %v1490
        %1531 = vst [vmem:[%s198 + $0xc0] sm:$0xff] %v1492
        %1532 = vst [vmem:[%s198 + $0xc8] sm:$0xff] %v1494
        %1533 = vst [vmem:[%s198 + $0xd0] sm:$0xff] %v1496
        %1534 = vst [vmem:[%s198 + $0xd8] sm:$0xff] %v1498
        %1535 = vst [vmem:[%s198 + $0xe0] sm:$0xff] %v1500
        %1536 = vst [vmem:[%s198 + $0xe8] sm:$0xff] %v1502
        %1537 = vst [vmem:[%s198 + $0xf0] sm:$0xff] %v1504
        %1538 = vst [vmem:[%s198 + $0xf8] sm:$0xff] %v1506
        %p1539 = scmp.lt.s32.totalorder %s16, 1
        %s1540 = scalar_select %p1539, %s16, 1
        %s1541 = smul.addr %s1540, 32
        %s1542 = smul.addr %s1541, 8
        %s1543 = scalar_lea.vmem %s3, %s1542
        // Predicated region
        $region41: #{proto_forward.2} parent=31 // pred_check
          %p1544 = pneg %p102
        $region42: #{proto_forward.2} parent=31 // pred_check_branch
          %1546 = sbr.rel (%p1544) target = $region44
        $region43: #{proto_forward.2} parent=31 // pred_region
          _
        $region44: #{proto_forward.2} parent=31 // pred_fallthru
          _
      $region32: #{proto_forward.2} parent=5 // pred_fallthru
        _
      %p1547 = scmp.le.s32.totalorder 2, %s11
      // Predicated region
      $region45: #{proto_forward.2} parent=5 // pred_check
        %p1548 = pneg %p1547
      $region46: #{proto_forward.2} parent=5 // pred_check_branch
        %1550 = sbr.rel (%p1548) target = $region48
      $region47: #{proto_forward.2} parent=5 // pred_region
        %s1551 = ssub.s32 %s11, 2
        // Predicated region
        $region49: #{proto_forward.2} parent=47 // pred_check
          %p1552 = pneg %p108
        $region50: #{proto_forward.2} parent=47 // pred_check_branch
          %1554 = sbr.rel (%p1552) target = $region52
        $region51: #{proto_forward.2} parent=47 // pred_region
          %p1555 = scmp.lt.s32.totalorder %s17, 1
          %s1556 = scalar_select %p1555, %s17, 1
          %s1557 = smul.addr %s1556, 32
          %s1558 = smul.addr %s1557, 8
          %s1559 = scalar_lea.vmem %s3, %s1558
        $region52: #{proto_forward.2} parent=47 // pred_fallthru
          _
      $region48: #{proto_forward.2} parent=5 // pred_fallthru
        _
    $region6: #{proto_forward.2} parent=1 // loop_footer
      %s15 = sadd.s32 1, %s11
    $region7: #{proto_forward.2} parent=1 // loop_footer_branch
      %10 = sbr.rel target = $region3
    $region8: #{proto_forward.2} parent=1 // loop_exit
      _
    %1560 = vsyncpa [#allocation3], 1
    %s1561 = scalar_lea.sflag [#allocation3], 1
    %1562 = vsyncpa %s1561, 1
    %1563 = vsyncpa [#allocation5], 1

// kernel: proto_forward.3
$region0: #{proto_forward.3}
  #allocation0 [shape = 'u32[]', space=smem, size = 0x4, offset = 0x4, fixed_abs, tag = 'smem constant byte address 0x4 - core index']
  #allocation1 [shape = 'u32[144,128]{1,0:T(1,128)}', space=vmem, size = 0x12000, scoped, tag = 'internal scratch']
  %s0 = inlined_call_operand.vmem [shape: f32[2,16,16,128], index: 0, kind: input, shape index: {}]
  %s1 = inlined_call_operand.vmem [shape: f32[4,512,128], index: 1, kind: input, shape index: {}]
  %s2 = inlined_call_operand.vmem [shape: f32[1,128], index: 2, kind: input, shape index: {}]
  %s3 = inlined_call_operand.vmem [shape: f32[128,32], index: 3, kind: input, shape index: {}]
  %s4 = inlined_call_operand.vmem [shape: f32[1,32], index: 4, kind: input, shape index: {}]
  %s5 = inlined_call_operand.vmem [shape: f32[2,4,16,16,32], index: 5, kind: output, shape index: {}]
  %s6 = sld [smem:[#allocation0]]
  $region53: #{proto_forward.3} parent=0
    _
  %s8 = ssub.s32 1, %s6
  %s9 = scalar_select 0, %s8, %s6
  loop: start=0, step=1, limit=4
  $region2: #{proto_forward.3} parent=0 // loop_pre_header
    _
  $region3: #{proto_forward.3} parent=0 // loop_header
    %s11 = sphi 0, %s15
    %p12 = scmp.ge.s32.totalorder %s11, 4
    %s21 = sphi 0, %s23
    %s24 = sphi 0, %s21
    %s25 = sphi 0, %s24
    %s41 = sphi 0, %s25
    %s45 = sphi 0, %s45
    %s47 = sphi 0, %s45
    %s48 = sphi 0, %s47
    %s62 = sphi 0, %s48
    %s66 = sphi 0, %s66
    %s68 = sphi 0, %s66
    %s69 = sphi 0, %s68
    %s83 = sphi 0, %s69
    %s87 = sphi 0, %s87
    %s89 = sphi 0, %s87
    %s90 = sphi 0, %s89
    %s104 = sphi 0, %s90
    %s108 = sphi 0, %s108
    %s110 = sphi 0, %s108
    %s111 = sphi 0, %s110
    %s125 = sphi 0, %s111
    %s131 = sphi 0, %s133
    %s134 = sphi 0, %s131
    %s135 = sphi 0, %s134
    %s151 = sphi 0, %s135
  $region4: #{proto_forward.3} parent=0 // loop_header_branch
    %14 = sbr.rel (%p12) target = $region8
  $region5: #{proto_forward.3} parent=0 // loop_body
    %s16 = ssub.s32 %s11, 1
    %s17 = ssub.s32 %s11, 2
    %s18 = sadd.s32 %s11, 1
    %s19 = ssub.s32 %s11, %s18
    %p20 = scmp.eq.s32.totalorder %s19, 0
    %s22 = sadd.s32 %s21, 1
    %s23 = scalar_select %p20, %s21, %s22
    %p26 = pneg %p20
    %p27 = scmp.eq.s32.totalorder %s11, 1
    %p28 = por %p26, %p27
    %p29 = scmp.ne.s32.totalorder %s21, %s24
    %p30 = scmp.eq.s32.totalorder %s11, 0
    %p31 = por %p29, %p30
    %p32 = scmp.ne.s32.totalorder %s21, %s24
    %p33 = scmp.eq.s32.totalorder %s16, 1
    %p34 = por %p32, %p33
    %p35 = scmp.ne.s32.totalorder %s24, %s25
    %p36 = scmp.eq.s32.totalorder %s16, 0
    %p37 = por %p35, %p36
    %p38 = scmp.ne.s32.totalorder %s24, %s25
    %p39 = scmp.eq.s32.totalorder %s17, 1
    %p40 = por %p38, %p39
    %p42 = scmp.ne.s32.totalorder %s25, %s41
    %p43 = scmp.eq.s32.totalorder %s17, 0
    %p44 = por %p42, %p43
    %s46 = sadd.s32 %s45, 1
    %p49 = scmp.eq.s32.totalorder %s11, 1
    %p50 = scmp.ne.s32.totalorder %s45, %s47
    %p51 = scmp.eq.s32.totalorder %s11, 0
    %p52 = por %p50, %p51
    %p53 = scmp.ne.s32.totalorder %s45, %s47
    %p54 = scmp.eq.s32.totalorder %s16, 1
    %p55 = por %p53, %p54
    %p56 = scmp.ne.s32.totalorder %s47, %s48
    %p57 = scmp.eq.s32.totalorder %s16, 0
    %p58 = por %p56, %p57
    %p59 = scmp.ne.s32.totalorder %s47, %s48
    %p60 = scmp.eq.s32.totalorder %s17, 1
    %p61 = por %p59, %p60
    %p63 = scmp.ne.s32.totalorder %s48, %s62
    %p64 = scmp.eq.s32.totalorder %s17, 0
    %p65 = por %p63, %p64
    %s67 = sadd.s32 %s66, 1
    %p70 = scmp.eq.s32.totalorder %s11, 1
    %p71 = scmp.ne.s32.totalorder %s66, %s68
    %p72 = scmp.eq.s32.totalorder %s11, 0
    %p73 = por %p71, %p72
    %p74 = scmp.ne.s32.totalorder %s66, %s68
    %p75 = scmp.eq.s32.totalorder %s16, 1
    %p76 = por %p74, %p75
    %p77 = scmp.ne.s32.totalorder %s68, %s69
    %p78 = scmp.eq.s32.totalorder %s16, 0
    %p79 = por %p77, %p78
    %p80 = scmp.ne.s32.totalorder %s68, %s69
    %p81 = scmp.eq.s32.totalorder %s17, 1
    %p82 = por %p80, %p81
    %p84 = scmp.ne.s32.totalorder %s69, %s83
    %p85 = scmp.eq.s32.totalorder %s17, 0
    %p86 = por %p84, %p85
    %s88 = sadd.s32 %s87, 1
    %p91 = scmp.eq.s32.totalorder %s11, 1
    %p92 = scmp.ne.s32.totalorder %s87, %s89
    %p93 = scmp.eq.s32.totalorder %s11, 0
    %p94 = por %p92, %p93
    %p95 = scmp.ne.s32.totalorder %s87, %s89
    %p96 = scmp.eq.s32.totalorder %s16, 1
    %p97 = por %p95, %p96
    %p98 = scmp.ne.s32.totalorder %s89, %s90
    %p99 = scmp.eq.s32.totalorder %s16, 0
    %p100 = por %p98, %p99
    %p101 = scmp.ne.s32.totalorder %s89, %s90
    %p102 = scmp.eq.s32.totalorder %s17, 1
    %p103 = por %p101, %p102
    %p105 = scmp.ne.s32.totalorder %s90, %s104
    %p106 = scmp.eq.s32.totalorder %s17, 0
    %p107 = por %p105, %p106
    %s109 = sadd.s32 %s108, 1
    %p112 = scmp.eq.s32.totalorder %s11, 1
    %p113 = scmp.ne.s32.totalorder %s108, %s110
    %p114 = scmp.eq.s32.totalorder %s11, 0
    %p115 = por %p113, %p114
    %p116 = scmp.ne.s32.totalorder %s108, %s110
    %p117 = scmp.eq.s32.totalorder %s16, 1
    %p118 = por %p116, %p117
    %p119 = scmp.ne.s32.totalorder %s110, %s111
    %p120 = scmp.eq.s32.totalorder %s16, 0
    %p121 = por %p119, %p120
    %p122 = scmp.ne.s32.totalorder %s110, %s111
    %p123 = scmp.eq.s32.totalorder %s17, 1
    %p124 = por %p122, %p123
    %p126 = scmp.ne.s32.totalorder %s111, %s125
    %p127 = scmp.eq.s32.totalorder %s17, 0
    %p128 = por %p126, %p127
    %s129 = ssub.s32 %s11, %s18
    %p130 = scmp.eq.s32.totalorder %s129, 0
    %s132 = sadd.s32 %s131, 1
    %s133 = scalar_select %p130, %s131, %s132
    %p136 = pneg %p130
    %p137 = scmp.eq.s32.totalorder %s11, 1
    %p138 = por %p136, %p137
    %p139 = scmp.ne.s32.totalorder %s131, %s134
    %p140 = scmp.eq.s32.totalorder %s11, 0
    %p141 = por %p139, %p140
    %p142 = scmp.ne.s32.totalorder %s131, %s134
    %p143 = scmp.eq.s32.totalorder %s16, 1
    %p144 = por %p142, %p143
    %p145 = scmp.ne.s32.totalorder %s134, %s135
    %p146 = scmp.eq.s32.totalorder %s16, 0
    %p147 = por %p145, %p146
    %p148 = scmp.ne.s32.totalorder %s134, %s135
    %p149 = scmp.eq.s32.totalorder %s17, 1
    %p150 = por %p148, %p149
    %p152 = scmp.ne.s32.totalorder %s135, %s151
    %p153 = scmp.eq.s32.totalorder %s17, 0
    %p154 = por %p152, %p153
    %p155 = scmp.le.s32.totalorder 1, %s11
    %p156 = scmp.lt.s32.totalorder %s11, 3
    %p157 = pnand %p155, %p156
    %p158 = pneg %p157
    // Predicated region
    $region9: #{proto_forward.3} parent=5 // pred_check
      _
    $region10: #{proto_forward.3} parent=5 // pred_check_branch
      %160 = sbr.rel (%p157) target = $region12
    $region11: #{proto_forward.3} parent=5 // pred_region
      %s161 = ssub.s32 %s11, 1
      // Predicated region
      $region13: #{proto_forward.3} parent=11 // pred_check
        %p162 = pneg %p58
      $region14: #{proto_forward.3} parent=11 // pred_check_branch
        %164 = sbr.rel (%p162) target = $region16
      $region15: #{proto_forward.3} parent=11 // pred_region
        _
      $region16: #{proto_forward.3} parent=11 // pred_fallthru
        _
      // Predicated region
      $region17: #{proto_forward.3} parent=11 // pred_check
        %p165 = pneg %p79
      $region18: #{proto_forward.3} parent=11 // pred_check_branch
        %167 = sbr.rel (%p165) target = $region20
      $region19: #{proto_forward.3} parent=11 // pred_region
        _
      $region20: #{proto_forward.3} parent=11 // pred_fallthru
        _
      // Predicated region
      $region21: #{proto_forward.3} parent=11 // pred_check
        %p168 = pneg %p100
      $region22: #{proto_forward.3} parent=11 // pred_check_branch
        %170 = sbr.rel (%p168) target = $region24
      $region23: #{proto_forward.3} parent=11 // pred_region
        _
      $region24: #{proto_forward.3} parent=11 // pred_fallthru
        _
      // Predicated region
      $region25: #{proto_forward.3} parent=11 // pred_check
        %p171 = pneg %p121
      $region26: #{proto_forward.3} parent=11 // pred_check_branch
        %173 = sbr.rel (%p171) target = $region28
      $region27: #{proto_forward.3} parent=11 // pred_region
        _
      $region28: #{proto_forward.3} parent=11 // pred_fallthru
        _
    $region12: #{proto_forward.3} parent=5 // pred_fallthru
      _
    %p174 = scmp.lt.s32.totalorder %s11, 2
    // Predicated region
    $region29: #{proto_forward.3} parent=5 // pred_check
      %p175 = pneg %p174
    $region30: #{proto_forward.3} parent=5 // pred_check_branch
      %177 = sbr.rel (%p175) target = $region32
    $region31: #{proto_forward.3} parent=5 // pred_region
      // Predicated region
      $region33: #{proto_forward.3} parent=31 // pred_check
        %p178 = pneg %p31
      $region34: #{proto_forward.3} parent=31 // pred_check_branch
        %180 = sbr.rel (%p178) target = $region36
      $region35: #{proto_forward.3} parent=31 // pred_region
        %p181 = scmp.lt.s32.totalorder %s11, 1
        %s182 = scalar_select %p181, %s11, 1
        %s183 = smul.addr %s182, 32
        %s184 = smul.addr %s183, 8
        %s185 = scalar_lea.vmem %s0, %s184
      $region36: #{proto_forward.3} parent=31 // pred_fallthru
        _
    $region32: #{proto_forward.3} parent=5 // pred_fallthru
      _
    %p186 = scmp.le.s32.totalorder 1, %s11
    %p187 = scmp.lt.s32.totalorder %s11, 3
    %p188 = pnand %p186, %p187
    %p189 = pneg %p188
    // Predicated region
    $region37: #{proto_forward.3} parent=5 // pred_check
      _
    $region38: #{proto_forward.3} parent=5 // pred_check_branch
      %191 = sbr.rel (%p188) target = $region40
    $region39: #{proto_forward.3} parent=5 // pred_region
      %s192 = ssub.s32 %s11, 1
      %p193 = scmp.lt.s32.totalorder %s16, 1
      %s194 = scalar_select %p193, %s16, 1
      %s195 = smul.addr %s194, 32
      %s196 = smul.addr %s195, 8
      %s197 = scalar_lea.vmem %s0, %s196
      %p198 = pneg %p37
      %p199 = pneg %p34
      %p200 = pneg %p58
      %p201 = pneg %p55
      %p202 = pneg %p79
      %p203 = pneg %p76
      %p204 = pneg %p100
      %p205 = pneg %p97
      %p206 = pneg %p121
      %p207 = pneg %p118
      %p208 = pneg %p147
      %p209 = pneg %p144
      %p210 = scmp.lt.s32.totalorder %s16, 1
      %s211 = scalar_select %p210, %s16, 1
      %s212 = smul.addr %s211, 128
      %s213 = smul.addr %s212, 8
      %s214 = scalar_lea.vmem %s5, %s213
      %p215 = scmp.lt.s32.totalorder %s16, 1
      %s216 = scalar_select %p215, %s16, 1
      %s217 = smul.addr %s216, 32
      %s218 = smul.addr %s217, 8
      %s219 = scalar_lea.vmem %s0, %s218
      %p220 = scmp.lt.s32.totalorder %s16, 1
      %s221 = scalar_select %p220, %s16, 1
      %s222 = smul.addr %s221, 128
      %s223 = smul.addr %s222, 8
      %s224 = scalar_lea.vmem %s5, %s223
      %v225 = vld [vmem:[%s219] sm:$0xff]
      %v226 = vld [vmem:[%s219 + $0x8] sm:$0xff]
      %v227 = vld [vmem:[%s219 + $0x10] sm:$0xff]
      %v228 = vld [vmem:[%s219 + $0x18] sm:$0xff]
      %v229 = vld [vmem:[%s219 + $0x20] sm:$0xff]
      %v230 = vld [vmem:[%s219 + $0x28] sm:$0xff]
      %v231 = vld [vmem:[%s219 + $0x30] sm:$0xff]
      %v232 = vld [vmem:[%s219 + $0x38] sm:$0xff]
      %v233 = vld [vmem:[%s219 + $0x40] sm:$0xff]
      %v234 = vld [vmem:[%s219 + $0x48] sm:$0xff]
      %v235 = vld [vmem:[%s219 + $0x50] sm:$0xff]
      %v236 = vld [vmem:[%s219 + $0x58] sm:$0xff]
      %v237 = vld [vmem:[%s219 + $0x60] sm:$0xff]
      %v238 = vld [vmem:[%s219 + $0x68] sm:$0xff]
      %v239 = vld [vmem:[%s219 + $0x70] sm:$0xff]
      %v240 = vld [vmem:[%s219 + $0x78] sm:$0xff]
      %v241 = vld [vmem:[%s219 + $0x80] sm:$0xff]
      %v242 = vld [vmem:[%s219 + $0x88] sm:$0xff]
      %v243 = vld [vmem:[%s219 + $0x90] sm:$0xff]
      %v244 = vld [vmem:[%s219 + $0x98] sm:$0xff]
      %v245 = vld [vmem:[%s219 + $0xa0] sm:$0xff]
      %v246 = vld [vmem:[%s219 + $0xa8] sm:$0xff]
      %v247 = vld [vmem:[%s219 + $0xb0] sm:$0xff]
      %v248 = vld [vmem:[%s219 + $0xb8] sm:$0xff]
      %v249 = vld [vmem:[%s219 + $0xc0] sm:$0xff]
      %v250 = vld [vmem:[%s219 + $0xc8] sm:$0xff]
      %v251 = vld [vmem:[%s219 + $0xd0] sm:$0xff]
      %v252 = vld [vmem:[%s219 + $0xd8] sm:$0xff]
      %v253 = vld [vmem:[%s219 + $0xe0] sm:$0xff]
      %v254 = vld [vmem:[%s219 + $0xe8] sm:$0xff]
      %v255 = vld [vmem:[%s219 + $0xf0] sm:$0xff]
      %v256 = vld [vmem:[%s219 + $0xf8] sm:$0xff]
      %vm289 = vcmask 1040384
      %v290 = vrot.slane %v225, 7
      %v291 = vrot.slane %v226, 7
      %v292 = vsel %vm289, %v290, %v291
      %v293 = vrot.slane %v227, 7
      %v294 = vrot.slane %v228, 7
      %v295 = vsel %vm289, %v293, %v294
      %v296 = vrot.slane %v229, 7
      %v297 = vrot.slane %v230, 7
      %v298 = vsel %vm289, %v296, %v297
      %v299 = vrot.slane %v231, 7
      %v300 = vrot.slane %v232, 7
      %v301 = vsel %vm289, %v299, %v300
      %v302 = vrot.slane %v233, 7
      %v303 = vrot.slane %v234, 7
      %v304 = vsel %vm289, %v302, %v303
      %v305 = vrot.slane %v235, 7
      %v306 = vrot.slane %v236, 7
      %v307 = vsel %vm289, %v305, %v306
      %v308 = vrot.slane %v237, 7
      %v309 = vrot.slane %v238, 7
      %v310 = vsel %vm289, %v308, %v309
      %v311 = vrot.slane %v239, 7
      %v312 = vrot.slane %v240, 7
      %v313 = vsel %vm289, %v311, %v312
      %v314 = vrot.slane %v241, 7
      %v315 = vrot.slane %v242, 7
      %v316 = vsel %vm289, %v314, %v315
      %v317 = vrot.slane %v243, 7
      %v318 = vrot.slane %v244, 7
      %v319 = vsel %vm289, %v317, %v318
      %v320 = vrot.slane %v245, 7
      %v321 = vrot.slane %v246, 7
      %v322 = vsel %vm289, %v320, %v321
      %v323 = vrot.slane %v247, 7
      %v324 = vrot.slane %v248, 7
      %v325 = vsel %vm289, %v323, %v324
      %v326 = vrot.slane %v249, 7
      %v327 = vrot.slane %v250, 7
      %v328 = vsel %vm289, %v326, %v327
      %v329 = vrot.slane %v251, 7
      %v330 = vrot.slane %v252, 7
      %v331 = vsel %vm289, %v329, %v330
      %v332 = vrot.slane %v253, 7
      %v333 = vrot.slane %v254, 7
      %v334 = vsel %vm289, %v332, %v333
      %v335 = vrot.slane %v255, 7
      %v336 = vrot.slane %v256, 7
      %v337 = vsel %vm289, %v335, %v336
      %v370 = vsel %vm289, 0.0, %v290
      %v371 = vsel %vm289, 0.0, %v293
      %v372 = vsel %vm289, 0.0, %v296
      %v373 = vsel %vm289, 0.0, %v299
      %v374 = vsel %vm289, 0.0, %v302
      %v375 = vsel %vm289, 0.0, %v305
      %v376 = vsel %vm289, 0.0, %v308
      %v377 = vsel %vm289, 0.0, %v311
      %v378 = vsel %vm289, 0.0, %v314
      %v379 = vsel %vm289, 0.0, %v317
      %v380 = vsel %vm289, 0.0, %v320
      %v381 = vsel %vm289, 0.0, %v323
      %v382 = vsel %vm289, 0.0, %v326
      %v383 = vsel %vm289, 0.0, %v329
      %v384 = vsel %vm289, 0.0, %v332
      %v385 = vsel %vm289, 0.0, %v335
      %vm386 = vcmask 1046528
      %v387 = vrot.slane %v225, 1
      %v388 = vrot.slane %v226, 1
      %v389 = vsel %vm386, %v387, %v388
      %v390 = vrot.slane %v227, 1
      %v391 = vrot.slane %v228, 1
      %v392 = vsel %vm386, %v390, %v391
      %v393 = vrot.slane %v229, 1
      %v394 = vrot.slane %v230, 1
      %v395 = vsel %vm386, %v393, %v394
      %v396 = vrot.slane %v231, 1
      %v397 = vrot.slane %v232, 1
      %v398 = vsel %vm386, %v396, %v397
      %v399 = vrot.slane %v233, 1
      %v400 = vrot.slane %v234, 1
      %v401 = vsel %vm386, %v399, %v400
      %v402 = vrot.slane %v235, 1
      %v403 = vrot.slane %v236, 1
      %v404 = vsel %vm386, %v402, %v403
      %v405 = vrot.slane %v237, 1
      %v406 = vrot.slane %v238, 1
      %v407 = vsel %vm386, %v405, %v406
      %v408 = vrot.slane %v239, 1
      %v409 = vrot.slane %v240, 1
      %v410 = vsel %vm386, %v408, %v409
      %v411 = vrot.slane %v241, 1
      %v412 = vrot.slane %v242, 1
      %v413 = vsel %vm386, %v411, %v412
      %v414 = vrot.slane %v243, 1
      %v415 = vrot.slane %v244, 1
      %v416 = vsel %vm386, %v414, %v415
      %v417 = vrot.slane %v245, 1
      %v418 = vrot.slane %v246, 1
      %v419 = vsel %vm386, %v417, %v418
      %v420 = vrot.slane %v247, 1
      %v421 = vrot.slane %v248, 1
      %v422 = vsel %vm386, %v420, %v421
      %v423 = vrot.slane %v249, 1
      %v424 = vrot.slane %v250, 1
      %v425 = vsel %vm386, %v423, %v424
      %v426 = vrot.slane %v251, 1
      %v427 = vrot.slane %v252, 1
      %v428 = vsel %vm386, %v426, %v427
      %v429 = vrot.slane %v253, 1
      %v430 = vrot.slane %v254, 1
      %v431 = vsel %vm386, %v429, %v430
      %v432 = vrot.slane %v255, 1
      %v433 = vrot.slane %v256, 1
      %v434 = vsel %vm386, %v432, %v433
      %v467 = vsel %vm386, %v388, 0.0
      %v468 = vsel %vm386, %v391, 0.0
      %v469 = vsel %vm386, %v394, 0.0
      %v470 = vsel %vm386, %v397, 0.0
      %v471 = vsel %vm386, %v400, 0.0
      %v472 = vsel %vm386, %v403, 0.0
      %v473 = vsel %vm386, %v406, 0.0
      %v474 = vsel %vm386, %v409, 0.0
      %v475 = vsel %vm386, %v412, 0.0
      %v476 = vsel %vm386, %v415, 0.0
      %v477 = vsel %vm386, %v418, 0.0
      %v478 = vsel %vm386, %v421, 0.0
      %v479 = vsel %vm386, %v424, 0.0
      %v480 = vsel %vm386, %v427, 0.0
      %v481 = vsel %vm386, %v430, 0.0
      %v482 = vsel %vm386, %v433, 0.0
      %v483 = vld [vmem:[%s1] sm:$0xff]
      %v484 = vld [vmem:[%s1 + $0x8] sm:$0xff]
      %v485 = vld [vmem:[%s1 + $0x10] sm:$0xff]
      %v486 = vld [vmem:[%s1 + $0x18] sm:$0xff]
      %v487 = vld [vmem:[%s1 + $0x20] sm:$0xff]
      %v488 = vld [vmem:[%s1 + $0x28] sm:$0xff]
      %v489 = vld [vmem:[%s1 + $0x30] sm:$0xff]
      %v490 = vld [vmem:[%s1 + $0x38] sm:$0xff]
      %v491 = vld [vmem:[%s1 + $0x40] sm:$0xff]
      %v492 = vld [vmem:[%s1 + $0x48] sm:$0xff]
      %v493 = vld [vmem:[%s1 + $0x50] sm:$0xff]
      %v494 = vld [vmem:[%s1 + $0x58] sm:$0xff]
      %v495 = vld [vmem:[%s1 + $0x60] sm:$0xff]
      %v496 = vld [vmem:[%s1 + $0x68] sm:$0xff]
      %v497 = vld [vmem:[%s1 + $0x70] sm:$0xff]
      %v498 = vld [vmem:[%s1 + $0x78] sm:$0xff]
      %v499 = vld [vmem:[%s1 + $0x80] sm:$0xff]
      %v500 = vld [vmem:[%s1 + $0x88] sm:$0xff]
      %v501 = vld [vmem:[%s1 + $0x90] sm:$0xff]
      %v502 = vld [vmem:[%s1 + $0x98] sm:$0xff]
      %v503 = vld [vmem:[%s1 + $0xa0] sm:$0xff]
      %v504 = vld [vmem:[%s1 + $0xa8] sm:$0xff]
      %v505 = vld [vmem:[%s1 + $0xb0] sm:$0xff]
      %v506 = vld [vmem:[%s1 + $0xb8] sm:$0xff]
      %v507 = vld [vmem:[%s1 + $0xc0] sm:$0xff]
      %v508 = vld [vmem:[%s1 + $0xc8] sm:$0xff]
      %v509 = vld [vmem:[%s1 + $0xd0] sm:$0xff]
      %v510 = vld [vmem:[%s1 + $0xd8] sm:$0xff]
      %v511 = vld [vmem:[%s1 + $0xe0] sm:$0xff]
      %v512 = vld [vmem:[%s1 + $0xe8] sm:$0xff]
      %v513 = vld [vmem:[%s1 + $0xf0] sm:$0xff]
      %v514 = vld [vmem:[%s1 + $0xf8] sm:$0xff]
      %v515 = vld [vmem:[%s1 + $0x100] sm:$0xff]
      %v516 = vld [vmem:[%s1 + $0x108] sm:$0xff]
      %v517 = vld [vmem:[%s1 + $0x110] sm:$0xff]
      %v518 = vld [vmem:[%s1 + $0x118] sm:$0xff]
      %v519 = vld [vmem:[%s1 + $0x120] sm:$0xff]
      %v520 = vld [vmem:[%s1 + $0x128] sm:$0xff]
      %v521 = vld [vmem:[%s1 + $0x130] sm:$0xff]
      %v522 = vld [vmem:[%s1 + $0x138] sm:$0xff]
      %v523 = vld [vmem:[%s1 + $0x140] sm:$0xff]
      %v524 = vld [vmem:[%s1 + $0x148] sm:$0xff]
      %v525 = vld [vmem:[%s1 + $0x150] sm:$0xff]
      %v526 = vld [vmem:[%s1 + $0x158] sm:$0xff]
      %v527 = vld [vmem:[%s1 + $0x160] sm:$0xff]
      %v528 = vld [vmem:[%s1 + $0x168] sm:$0xff]
      %v529 = vld [vmem:[%s1 + $0x170] sm:$0xff]
      %v530 = vld [vmem:[%s1 + $0x178] sm:$0xff]
      %v531 = vld [vmem:[%s1 + $0x180] sm:$0xff]
      %v532 = vld [vmem:[%s1 + $0x188] sm:$0xff]
      %v533 = vld [vmem:[%s1 + $0x190] sm:$0xff]
      %v534 = vld [vmem:[%s1 + $0x198] sm:$0xff]
      %v535 = vld [vmem:[%s1 + $0x1a0] sm:$0xff]
      %v536 = vld [vmem:[%s1 + $0x1a8] sm:$0xff]
      %v537 = vld [vmem:[%s1 + $0x1b0] sm:$0xff]
      %v538 = vld [vmem:[%s1 + $0x1b8] sm:$0xff]
      %v539 = vld [vmem:[%s1 + $0x1c0] sm:$0xff]
      %v540 = vld [vmem:[%s1 + $0x1c8] sm:$0xff]
      %v541 = vld [vmem:[%s1 + $0x1d0] sm:$0xff]
      %v542 = vld [vmem:[%s1 + $0x1d8] sm:$0xff]
      %v543 = vld [vmem:[%s1 + $0x1e0] sm:$0xff]
      %v544 = vld [vmem:[%s1 + $0x1e8] sm:$0xff]
      %v545 = vld [vmem:[%s1 + $0x1f0] sm:$0xff]
      %v546 = vld [vmem:[%s1 + $0x1f8] sm:$0xff]
      %v547 = vld [vmem:[%s2] sm:$0x1]
      %v549 = vlaneseq
      %v550 = vshrl.u32 %v549, 7
      %v551 = vsub.s32 0, %v550
      %v552 = vrot.slane %v547, %v551
      %554 = vmatprep.subr.mxu0 0.0
      %555 = vmatpush1.msra.mxu0 %v498
      %556 = vmatprep.subr.mxu0 0.0
      %557 = vmatpush1.msra.mxu0 %v497
      %558 = vmatprep.subr.mxu0 0.0
      %559 = vmatpush1.msra.mxu0 %v496
      %560 = vmatprep.subr.mxu0 0.0
      %561 = vmatpush1.msra.mxu0 %v495
      %562 = vmatprep.subr.mxu0 0.0
      %563 = vmatpush1.msra.mxu0 %v494
      %564 = vmatprep.subr.mxu0 0.0
      %565 = vmatpush1.msra.mxu0 %v493
      %566 = vmatprep.subr.mxu0 0.0
      %567 = vmatpush1.msra.mxu0 %v492
      %568 = vmatprep.subr.mxu0 0.0
      %569 = vmatpush1.msra.mxu0 %v491
      %570 = vmatprep.subr.mxu0 0.0
      %571 = vmatpush1.msra.mxu0 %v490
      %572 = vmatprep.subr.mxu0 0.0
      %573 = vmatpush1.msra.mxu0 %v489
      %574 = vmatprep.subr.mxu0 0.0
      %575 = vmatpush1.msra.mxu0 %v488
      %576 = vmatprep.subr.mxu0 0.0
      %577 = vmatpush1.msra.mxu0 %v487
      %578 = vmatprep.subr.mxu0 0.0
      %579 = vmatpush1.msra.mxu0 %v486
      %580 = vmatprep.subr.mxu0 0.0
      %581 = vmatpush1.msra.mxu0 %v485
      %582 = vmatprep.subr.mxu0 0.0
      %583 = vmatpush1.msra.mxu0 %v484
      %584 = vmatprep.subr.mxu0 0.0
      %585 = vmatpush1.msra.mxu0 %v483
      %586 = vmatprep.subr.mxu0 0.0
      %587 = vmatpush2.msra.mxu0 %v514
      %588 = vmatprep.subr.mxu0 0.0
      %589 = vmatpush2.msra.mxu0 %v513
      %590 = vmatprep.subr.mxu0 0.0
      %591 = vmatpush2.msra.mxu0 %v512
      %592 = vmatprep.subr.mxu0 0.0
      %593 = vmatpush2.msra.mxu0 %v511
      %594 = vmatprep.subr.mxu0 0.0
      %595 = vmatpush2.msra.mxu0 %v510
      %596 = vmatprep.subr.mxu0 0.0
      %597 = vmatpush2.msra.mxu0 %v509
      %598 = vmatprep.subr.mxu0 0.0
      %599 = vmatpush2.msra.mxu0 %v508
      %600 = vmatprep.subr.mxu0 0.0
      %601 = vmatpush2.msra.mxu0 %v507
      %602 = vmatprep.subr.mxu0 0.0
      %603 = vmatpush2.msra.mxu0 %v506
      %604 = vmatprep.subr.mxu0 0.0
      %605 = vmatpush2.msra.mxu0 %v505
      %606 = vmatprep.subr.mxu0 0.0
      %607 = vmatpush2.msra.mxu0 %v504
      %608 = vmatprep.subr.mxu0 0.0
      %609 = vmatpush2.msra.mxu0 %v503
      %610 = vmatprep.subr.mxu0 0.0
      %611 = vmatpush2.msra.mxu0 %v502
      %612 = vmatprep.subr.mxu0 0.0
      %613 = vmatpush2.msra.mxu0 %v501
      %614 = vmatprep.subr.mxu0 0.0
      %615 = vmatpush2.msra.mxu0 %v500
      %616 = vmatprep.subr.mxu0 0.0
      %617 = vmatpush2.msra.mxu0 %v499
      %618 = vmatprep.mubr.f32.mxu0 0.0
      %619 = vmatmul.mubr.f32.gmra.mxu0 0.0
      %v620 = vpop.f32.mrf.mxu0
      %v621 = vadd.f32 %v552, %v620
      %v622 = vpop.f32.mrf.mxu0
      %623 = vmatprep.mubr.f32.mxu0 0.0
      %624 = vmatmul.mubr.f32.gmra.mxu0 0.0
      %v625 = vpop.f32.mrf.mxu0
      %v626 = vadd.f32 %v552, %v625
      %v627 = vpop.f32.mrf.mxu0
      %628 = vmatprep.mubr.f32.mxu0 %v225
      %629 = vmatmul.mubr.f32.gmra.mxu0 %v370
      %v630 = vpop.f32.mrf.mxu0
      %v631 = vadd.f32 %v552, %v630
      %v632 = vpop.f32.mrf.mxu0
      %633 = vmatprep.mubr.f32.mxu0 %v226
      %634 = vmatmul.mubr.f32.gmra.mxu0 %v292
      %v635 = vpop.f32.mrf.mxu0
      %v636 = vadd.f32 %v552, %v635
      %v637 = vpop.f32.mrf.mxu0
      %638 = vmatprep.mubr.f32.mxu0 %v227
      %639 = vmatmul.mubr.f32.gmra.mxu0 %v371
      %v640 = vpop.f32.mrf.mxu0
      %v641 = vadd.f32 %v552, %v640
      %v642 = vpop.f32.mrf.mxu0
      %643 = vmatprep.mubr.f32.mxu0 %v228
      %644 = vmatmul.mubr.f32.gmra.mxu0 %v295
      %v645 = vpop.f32.mrf.mxu0
      %v646 = vadd.f32 %v552, %v645
      %v647 = vpop.f32.mrf.mxu0
      %648 = vmatprep.mubr.f32.mxu0 %v229
      %649 = vmatmul.mubr.f32.gmra.mxu0 %v372
      %v650 = vpop.f32.mrf.mxu0
      %v651 = vadd.f32 %v552, %v650
      %v652 = vpop.f32.mrf.mxu0
      %653 = vmatprep.mubr.f32.mxu0 %v230
      %654 = vmatmul.mubr.f32.gmra.mxu0 %v298
      %v655 = vpop.f32.mrf.mxu0
      %v656 = vadd.f32 %v552, %v655
      %v657 = vpop.f32.mrf.mxu0
      %658 = vmatprep.mubr.f32.mxu0 %v231
      %659 = vmatmul.mubr.f32.gmra.mxu0 %v373
      %v660 = vpop.f32.mrf.mxu0
      %v661 = vadd.f32 %v552, %v660
      %v662 = vpop.f32.mrf.mxu0
      %663 = vmatprep.mubr.f32.mxu0 %v232
      %664 = vmatmul.mubr.f32.gmra.mxu0 %v301
      %v665 = vpop.f32.mrf.mxu0
      %v666 = vadd.f32 %v552, %v665
      %v667 = vpop.f32.mrf.mxu0
      %668 = vmatprep.mubr.f32.mxu0 %v233
      %669 = vmatmul.mubr.f32.gmra.mxu0 %v374
      %v670 = vpop.f32.mrf.mxu0
      %v671 = vadd.f32 %v552, %v670
      %v672 = vpop.f32.mrf.mxu0
      %673 = vmatprep.mubr.f32.mxu0 %v234
      %674 = vmatmul.mubr.f32.gmra.mxu0 %v304
      %v675 = vpop.f32.mrf.mxu0
      %v676 = vadd.f32 %v552, %v675
      %v677 = vpop.f32.mrf.mxu0
      %678 = vmatprep.mubr.f32.mxu0 %v235
      %679 = vmatmul.mubr.f32.gmra.mxu0 %v375
      %v680 = vpop.f32.mrf.mxu0
      %v681 = vadd.f32 %v552, %v680
      %v682 = vpop.f32.mrf.mxu0
      %683 = vmatprep.mubr.f32.mxu0 %v236
      %684 = vmatmul.mubr.f32.gmra.mxu0 %v307
      %v685 = vpop.f32.mrf.mxu0
      %v686 = vadd.f32 %v552, %v685
      %v687 = vpop.f32.mrf.mxu0
      %688 = vmatprep.mubr.f32.mxu0 %v237
      %689 = vmatmul.mubr.f32.gmra.mxu0 %v376
      %v690 = vpop.f32.mrf.mxu0
      %v691 = vadd.f32 %v552, %v690
      %v692 = vpop.f32.mrf.mxu0
      %693 = vmatprep.mubr.f32.mxu0 %v238
      %694 = vmatmul.mubr.f32.gmra.mxu0 %v310
      %v695 = vpop.f32.mrf.mxu0
      %v696 = vadd.f32 %v552, %v695
      %v697 = vpop.f32.mrf.mxu0
      %698 = vmatprep.mubr.f32.mxu0 %v239
      %699 = vmatmul.mubr.f32.gmra.mxu0 %v377
      %v700 = vpop.f32.mrf.mxu0
      %v701 = vadd.f32 %v552, %v700
      %v702 = vpop.f32.mrf.mxu0
      %703 = vmatprep.mubr.f32.mxu0 %v240
      %704 = vmatmul.mubr.f32.gmra.mxu0 %v313
      %v705 = vpop.f32.mrf.mxu0
      %v706 = vadd.f32 %v552, %v705
      %v707 = vpop.f32.mrf.mxu0
      %708 = vmatprep.mubr.f32.mxu0 %v241
      %709 = vmatmul.mubr.f32.gmra.mxu0 %v378
      %v710 = vpop.f32.mrf.mxu0
      %v711 = vadd.f32 %v552, %v710
      %v712 = vpop.f32.mrf.mxu0
      %713 = vmatprep.mubr.f32.mxu0 %v242
      %714 = vmatmul.mubr.f32.gmra.mxu0 %v316
      %v715 = vpop.f32.mrf.mxu0
      %v716 = vadd.f32 %v552, %v715
      %v717 = vpop.f32.mrf.mxu0
      %718 = vmatprep.mubr.f32.mxu0 %v243
      %719 = vmatmul.mubr.f32.gmra.mxu0 %v379
      %v720 = vpop.f32.mrf.mxu0
      %v721 = vadd.f32 %v552, %v720
      %v722 = vpop.f32.mrf.mxu0
      %723 = vmatprep.mubr.f32.mxu0 %v244
      %724 = vmatmul.mubr.f32.gmra.mxu0 %v319
      %v725 = vpop.f32.mrf.mxu0
      %v726 = vadd.f32 %v552, %v725
      %v727 = vpop.f32.mrf.mxu0
      %728 = vmatprep.mubr.f32.mxu0 %v245
      %729 = vmatmul.mubr.f32.gmra.mxu0 %v380
      %v730 = vpop.f32.mrf.mxu0
      %v731 = vadd.f32 %v552, %v730
      %v732 = vpop.f32.mrf.mxu0
      %733 = vmatprep.mubr.f32.mxu0 %v246
      %734 = vmatmul.mubr.f32.gmra.mxu0 %v322
      %v735 = vpop.f32.mrf.mxu0
      %v736 = vadd.f32 %v552, %v735
      %v737 = vpop.f32.mrf.mxu0
      %738 = vmatprep.mubr.f32.mxu0 %v247
      %739 = vmatmul.mubr.f32.gmra.mxu0 %v381
      %v740 = vpop.f32.mrf.mxu0
      %v741 = vadd.f32 %v552, %v740
      %v742 = vpop.f32.mrf.mxu0
      %743 = vmatprep.mubr.f32.mxu0 %v248
      %744 = vmatmul.mubr.f32.gmra.mxu0 %v325
      %v745 = vpop.f32.mrf.mxu0
      %v746 = vadd.f32 %v552, %v745
      %v747 = vpop.f32.mrf.mxu0
      %748 = vmatprep.mubr.f32.mxu0 %v249
      %749 = vmatmul.mubr.f32.gmra.mxu0 %v382
      %v750 = vpop.f32.mrf.mxu0
      %v751 = vadd.f32 %v552, %v750
      %v752 = vpop.f32.mrf.mxu0
      %753 = vmatprep.mubr.f32.mxu0 %v250
      %754 = vmatmul.mubr.f32.gmra.mxu0 %v328
      %v755 = vpop.f32.mrf.mxu0
      %v756 = vadd.f32 %v552, %v755
      %v757 = vpop.f32.mrf.mxu0
      %758 = vmatprep.mubr.f32.mxu0 %v251
      %759 = vmatmul.mubr.f32.gmra.mxu0 %v383
      %v760 = vpop.f32.mrf.mxu0
      %v761 = vadd.f32 %v552, %v760
      %v762 = vpop.f32.mrf.mxu0
      %763 = vmatprep.mubr.f32.mxu0 %v252
      %764 = vmatmul.mubr.f32.gmra.mxu0 %v331
      %v765 = vpop.f32.mrf.mxu0
      %v766 = vadd.f32 %v552, %v765
      %v767 = vpop.f32.mrf.mxu0
      %768 = vmatprep.mubr.f32.mxu0 %v253
      %769 = vmatmul.mubr.f32.gmra.mxu0 %v384
      %v770 = vpop.f32.mrf.mxu0
      %v771 = vadd.f32 %v552, %v770
      %v772 = vpop.f32.mrf.mxu0
      %773 = vmatprep.mubr.f32.mxu0 %v254
      %774 = vmatmul.mubr.f32.gmra.mxu0 %v334
      %v775 = vpop.f32.mrf.mxu0
      %v776 = vadd.f32 %v552, %v775
      %v777 = vpop.f32.mrf.mxu0
      %778 = vdwg.mxu0
      %779 = vmatprep.subr.mxu0 0.0
      %780 = vmatpush1.msra.mxu0 %v530
      %781 = vmatprep.subr.mxu0 0.0
      %782 = vmatpush1.msra.mxu0 %v529
      %783 = vmatprep.subr.mxu0 0.0
      %784 = vmatpush1.msra.mxu0 %v528
      %785 = vmatprep.subr.mxu0 0.0
      %786 = vmatpush1.msra.mxu0 %v527
      %787 = vmatprep.subr.mxu0 0.0
      %788 = vmatpush1.msra.mxu0 %v526
      %789 = vmatprep.subr.mxu0 0.0
      %790 = vmatpush1.msra.mxu0 %v525
      %791 = vmatprep.subr.mxu0 0.0
      %792 = vmatpush1.msra.mxu0 %v524
      %793 = vmatprep.subr.mxu0 0.0
      %794 = vmatpush1.msra.mxu0 %v523
      %795 = vmatprep.subr.mxu0 0.0
      %796 = vmatpush1.msra.mxu0 %v522
      %797 = vmatprep.subr.mxu0 0.0
      %798 = vmatpush1.msra.mxu0 %v521
      %799 = vmatprep.subr.mxu0 0.0
      %800 = vmatpush1.msra.mxu0 %v520
      %801 = vmatprep.subr.mxu0 0.0
      %802 = vmatpush1.msra.mxu0 %v519
      %803 = vmatprep.subr.mxu0 0.0
      %804 = vmatpush1.msra.mxu0 %v518
      %805 = vmatprep.subr.mxu0 0.0
      %806 = vmatpush1.msra.mxu0 %v517
      %807 = vmatprep.subr.mxu0 0.0
      %808 = vmatpush1.msra.mxu0 %v516
      %809 = vmatprep.subr.mxu0 0.0
      %810 = vmatpush1.msra.mxu0 %v515
      %811 = vmatprep.subr.mxu0 0.0
      %812 = vmatpush2.msra.mxu0 %v546
      %813 = vmatprep.subr.mxu0 0.0
      %814 = vmatpush2.msra.mxu0 %v545
      %815 = vmatprep.subr.mxu0 0.0
      %816 = vmatpush2.msra.mxu0 %v544
      %817 = vmatprep.subr.mxu0 0.0
      %818 = vmatpush2.msra.mxu0 %v543
      %819 = vmatprep.subr.mxu0 0.0
      %820 = vmatpush2.msra.mxu0 %v542
      %821 = vmatprep.subr.mxu0 0.0
      %822 = vmatpush2.msra.mxu0 %v541
      %823 = vmatprep.subr.mxu0 0.0
      %824 = vmatpush2.msra.mxu0 %v540
      %825 = vmatprep.subr.mxu0 0.0
      %826 = vmatpush2.msra.mxu0 %v539
      %827 = vmatprep.subr.mxu0 0.0
      %828 = vmatpush2.msra.mxu0 %v538
      %829 = vmatprep.subr.mxu0 0.0
      %830 = vmatpush2.msra.mxu0 %v537
      %831 = vmatprep.subr.mxu0 0.0
      %832 = vmatpush2.msra.mxu0 %v536
      %833 = vmatprep.subr.mxu0 0.0
      %834 = vmatpush2.msra.mxu0 %v535
      %835 = vmatprep.subr.mxu0 0.0
      %836 = vmatpush2.msra.mxu0 %v534
      %837 = vmatprep.subr.mxu0 0.0
      %838 = vmatpush2.msra.mxu0 %v533
      %839 = vmatprep.subr.mxu0 0.0
      %840 = vmatpush2.msra.mxu0 %v532
      %841 = vmatprep.subr.mxu0 0.0
      %842 = vmatpush2.msra.mxu0 %v531
      %843 = vmatprep.mubr.f32.mxu0 %v225
      %844 = vmatmul.mubr.f32.gmra.mxu0 %v370
      %v845 = vpop.f32.mrf.mxu0
      %v846 = vadd.f32 %v621, %v845
      %v847 = vpop.f32.mrf.mxu0
      %848 = vmatprep.mubr.f32.mxu0 %v226
      %849 = vmatmul.mubr.f32.gmra.mxu0 %v292
      %v850 = vpop.f32.mrf.mxu0
      %v851 = vadd.f32 %v626, %v850
      %v852 = vpop.f32.mrf.mxu0
      %853 = vmatprep.mubr.f32.mxu0 %v227
      %854 = vmatmul.mubr.f32.gmra.mxu0 %v371
      %v855 = vpop.f32.mrf.mxu0
      %v856 = vadd.f32 %v631, %v855
      %v857 = vpop.f32.mrf.mxu0
      %858 = vmatprep.mubr.f32.mxu0 %v228
      %859 = vmatmul.mubr.f32.gmra.mxu0 %v295
      %v860 = vpop.f32.mrf.mxu0
      %v861 = vadd.f32 %v636, %v860
      %v862 = vpop.f32.mrf.mxu0
      %863 = vmatprep.mubr.f32.mxu0 %v229
      %864 = vmatmul.mubr.f32.gmra.mxu0 %v372
      %v865 = vpop.f32.mrf.mxu0
      %v866 = vadd.f32 %v641, %v865
      %v867 = vpop.f32.mrf.mxu0
      %868 = vmatprep.mubr.f32.mxu0 %v230
      %869 = vmatmul.mubr.f32.gmra.mxu0 %v298
      %v870 = vpop.f32.mrf.mxu0
      %v871 = vadd.f32 %v646, %v870
      %v872 = vpop.f32.mrf.mxu0
      %873 = vmatprep.mubr.f32.mxu0 %v231
      %874 = vmatmul.mubr.f32.gmra.mxu0 %v373
      %v875 = vpop.f32.mrf.mxu0
      %v876 = vadd.f32 %v651, %v875
      %v877 = vpop.f32.mrf.mxu0
      %878 = vmatprep.mubr.f32.mxu0 %v232
      %879 = vmatmul.mubr.f32.gmra.mxu0 %v301
      %v880 = vpop.f32.mrf.mxu0
      %v881 = vadd.f32 %v656, %v880
      %v882 = vpop.f32.mrf.mxu0
      %883 = vmatprep.mubr.f32.mxu0 %v233
      %884 = vmatmul.mubr.f32.gmra.mxu0 %v374
      %v885 = vpop.f32.mrf.mxu0
      %v886 = vadd.f32 %v661, %v885
      %v887 = vpop.f32.mrf.mxu0
      %888 = vmatprep.mubr.f32.mxu0 %v234
      %889 = vmatmul.mubr.f32.gmra.mxu0 %v304
      %v890 = vpop.f32.mrf.mxu0
      %v891 = vadd.f32 %v666, %v890
      %v892 = vpop.f32.mrf.mxu0
      %893 = vmatprep.mubr.f32.mxu0 %v235
      %894 = vmatmul.mubr.f32.gmra.mxu0 %v375
      %v895 = vpop.f32.mrf.mxu0
      %v896 = vadd.f32 %v671, %v895
      %v897 = vpop.f32.mrf.mxu0
      %898 = vmatprep.mubr.f32.mxu0 %v236
      %899 = vmatmul.mubr.f32.gmra.mxu0 %v307
      %v900 = vpop.f32.mrf.mxu0
      %v901 = vadd.f32 %v676, %v900
      %v902 = vpop.f32.mrf.mxu0
      %903 = vmatprep.mubr.f32.mxu0 %v237
      %904 = vmatmul.mubr.f32.gmra.mxu0 %v376
      %v905 = vpop.f32.mrf.mxu0
      %v906 = vadd.f32 %v681, %v905
      %v907 = vpop.f32.mrf.mxu0
      %908 = vmatprep.mubr.f32.mxu0 %v238
      %909 = vmatmul.mubr.f32.gmra.mxu0 %v310
      %v910 = vpop.f32.mrf.mxu0
      %v911 = vadd.f32 %v686, %v910
      %v912 = vpop.f32.mrf.mxu0
      %913 = vmatprep.mubr.f32.mxu0 %v239
      %914 = vmatmul.mubr.f32.gmra.mxu0 %v377
      %v915 = vpop.f32.mrf.mxu0
      %v916 = vadd.f32 %v691, %v915
      %v917 = vpop.f32.mrf.mxu0
      %918 = vmatprep.mubr.f32.mxu0 %v240
      %919 = vmatmul.mubr.f32.gmra.mxu0 %v313
      %v920 = vpop.f32.mrf.mxu0
      %v921 = vadd.f32 %v696, %v920
      %v922 = vpop.f32.mrf.mxu0
      %923 = vmatprep.mubr.f32.mxu0 %v241
      %924 = vmatmul.mubr.f32.gmra.mxu0 %v378
      %v925 = vpop.f32.mrf.mxu0
      %v926 = vadd.f32 %v701, %v925
      %v927 = vpop.f32.mrf.mxu0
      %928 = vmatprep.mubr.f32.mxu0 %v242
      %929 = vmatmul.mubr.f32.gmra.mxu0 %v316
      %v930 = vpop.f32.mrf.mxu0
      %v931 = vadd.f32 %v706, %v930
      %v932 = vpop.f32.mrf.mxu0
      %933 = vmatprep.mubr.f32.mxu0 %v243
      %934 = vmatmul.mubr.f32.gmra.mxu0 %v379
      %v935 = vpop.f32.mrf.mxu0
      %v936 = vadd.f32 %v711, %v935
      %v937 = vpop.f32.mrf.mxu0
      %938 = vmatprep.mubr.f32.mxu0 %v244
      %939 = vmatmul.mubr.f32.gmra.mxu0 %v319
      %v940 = vpop.f32.mrf.mxu0
      %v941 = vadd.f32 %v716, %v940
      %v942 = vpop.f32.mrf.mxu0
      %943 = vmatprep.mubr.f32.mxu0 %v245
      %944 = vmatmul.mubr.f32.gmra.mxu0 %v380
      %v945 = vpop.f32.mrf.mxu0
      %v946 = vadd.f32 %v721, %v945
      %v947 = vpop.f32.mrf.mxu0
      %948 = vmatprep.mubr.f32.mxu0 %v246
      %949 = vmatmul.mubr.f32.gmra.mxu0 %v322
      %v950 = vpop.f32.mrf.mxu0
      %v951 = vadd.f32 %v726, %v950
      %v952 = vpop.f32.mrf.mxu0
      %953 = vmatprep.mubr.f32.mxu0 %v247
      %954 = vmatmul.mubr.f32.gmra.mxu0 %v381
      %v955 = vpop.f32.mrf.mxu0
      %v956 = vadd.f32 %v731, %v955
      %v957 = vpop.f32.mrf.mxu0
      %958 = vmatprep.mubr.f32.mxu0 %v248
      %959 = vmatmul.mubr.f32.gmra.mxu0 %v325
      %v960 = vpop.f32.mrf.mxu0
      %v961 = vadd.f32 %v736, %v960
      %v962 = vpop.f32.mrf.mxu0
      %963 = vmatprep.mubr.f32.mxu0 %v249
      %964 = vmatmul.mubr.f32.gmra.mxu0 %v382
      %v965 = vpop.f32.mrf.mxu0
      %v966 = vadd.f32 %v741, %v965
      %v967 = vpop.f32.mrf.mxu0
      %968 = vmatprep.mubr.f32.mxu0 %v250
      %969 = vmatmul.mubr.f32.gmra.mxu0 %v328
      %v970 = vpop.f32.mrf.mxu0
      %v971 = vadd.f32 %v746, %v970
      %v972 = vpop.f32.mrf.mxu0
      %973 = vmatprep.mubr.f32.mxu0 %v251
      %974 = vmatmul.mubr.f32.gmra.mxu0 %v383
      %v975 = vpop.f32.mrf.mxu0
      %v976 = vadd.f32 %v751, %v975
      %v977 = vpop.f32.mrf.mxu0
      %978 = vmatprep.mubr.f32.mxu0 %v252
      %979 = vmatmul.mubr.f32.gmra.mxu0 %v331
      %v980 = vpop.f32.mrf.mxu0
      %v981 = vadd.f32 %v756, %v980
      %v982 = vpop.f32.mrf.mxu0
      %983 = vmatprep.mubr.f32.mxu0 %v253
      %984 = vmatmul.mubr.f32.gmra.mxu0 %v384
      %v985 = vpop.f32.mrf.mxu0
      %v986 = vadd.f32 %v761, %v985
      %v987 = vpop.f32.mrf.mxu0
      %988 = vmatprep.mubr.f32.mxu0 %v254
      %989 = vmatmul.mubr.f32.gmra.mxu0 %v334
      %v990 = vpop.f32.mrf.mxu0
      %v991 = vadd.f32 %v766, %v990
      %v992 = vpop.f32.mrf.mxu0
      %993 = vmatprep.mubr.f32.mxu0 %v255
      %994 = vmatmul.mubr.f32.gmra.mxu0 %v385
      %v995 = vpop.f32.mrf.mxu0
      %v996 = vadd.f32 %v771, %v995
      %v997 = vpop.f32.mrf.mxu0
      %998 = vmatprep.mubr.f32.mxu0 %v256
      %999 = vmatmul.mubr.f32.gmra.mxu0 %v337
      %v1000 = vpop.f32.mrf.mxu0
      %v1001 = vadd.f32 %v776, %v1000
      %v1002 = vpop.f32.mrf.mxu0
      %1003 = vdwg.mxu0
      %v1004 = vsub.f32 0.0, %v846
      %v1005 = vsub.f32 0.0, %v851
      %v1006 = vsub.f32 0.0, %v856
      %v1007 = vsub.f32 0.0, %v861
      %v1008 = vsub.f32 0.0, %v866
      %v1009 = vsub.f32 0.0, %v871
      %v1010 = vsub.f32 0.0, %v876
      %v1011 = vsub.f32 0.0, %v881
      %v1012 = vsub.f32 0.0, %v886
      %v1013 = vsub.f32 0.0, %v891
      %v1014 = vsub.f32 0.0, %v896
      %v1015 = vsub.f32 0.0, %v901
      %v1016 = vsub.f32 0.0, %v906
      %v1017 = vsub.f32 0.0, %v911
      %v1018 = vsub.f32 0.0, %v916
      %v1019 = vsub.f32 0.0, %v921
      %v1020 = vsub.f32 0.0, %v926
      %v1021 = vsub.f32 0.0, %v931
      %v1022 = vsub.f32 0.0, %v936
      %v1023 = vsub.f32 0.0, %v941
      %v1024 = vsub.f32 0.0, %v946
      %v1025 = vsub.f32 0.0, %v951
      %v1026 = vsub.f32 0.0, %v956
      %v1027 = vsub.f32 0.0, %v961
      %v1028 = vsub.f32 0.0, %v966
      %v1029 = vsub.f32 0.0, %v971
      %v1030 = vsub.f32 0.0, %v976
      %v1031 = vsub.f32 0.0, %v981
      %v1032 = vsub.f32 0.0, %v986
      %v1033 = vsub.f32 0.0, %v991
      %v1034 = vsub.f32 0.0, %v996
      %v1035 = vsub.f32 0.0, %v1001
      %v1036 = vmul.f32 %v1004, 1.442695
      %v1037 = vpow.pop %v1036
      %v1038 = vmul.f32 %v1005, 1.442695
      %v1039 = vpow.pop %v1038
      %v1040 = vmul.f32 %v1006, 1.442695
      %v1041 = vpow.pop %v1040
      %v1042 = vmul.f32 %v1007, 1.442695
      %v1043 = vpow.pop %v1042
      %v1044 = vmul.f32 %v1008, 1.442695
      %v1045 = vpow.pop %v1044
      %v1046 = vmul.f32 %v1009, 1.442695
      %v1047 = vpow.pop %v1046
      %v1048 = vmul.f32 %v1010, 1.442695
      %v1049 = vpow.pop %v1048
      %v1050 = vmul.f32 %v1011, 1.442695
      %v1051 = vpow.pop %v1050
      %v1052 = vmul.f32 %v1012, 1.442695
      %v1053 = vpow.pop %v1052
      %v1054 = vmul.f32 %v1013, 1.442695
      %v1055 = vpow.pop %v1054
      %v1056 = vmul.f32 %v1014, 1.442695
      %v1057 = vpow.pop %v1056
      %v1058 = vmul.f32 %v1015, 1.442695
      %v1059 = vpow.pop %v1058
      %v1060 = vmul.f32 %v1016, 1.442695
      %v1061 = vpow.pop %v1060
      %v1062 = vmul.f32 %v1017, 1.442695
      %v1063 = vpow.pop %v1062
      %v1064 = vmul.f32 %v1018, 1.442695
      %v1065 = vpow.pop %v1064
      %v1066 = vmul.f32 %v1019, 1.442695
      %v1067 = vpow.pop %v1066
      %v1068 = vmul.f32 %v1020, 1.442695
      %v1069 = vpow.pop %v1068
      %v1070 = vmul.f32 %v1021, 1.442695
      %v1071 = vpow.pop %v1070
      %v1072 = vmul.f32 %v1022, 1.442695
      %v1073 = vpow.pop %v1072
      %v1074 = vmul.f32 %v1023, 1.442695
      %v1075 = vpow.pop %v1074
      %v1076 = vmul.f32 %v1024, 1.442695
      %v1077 = vpow.pop %v1076
      %v1078 = vmul.f32 %v1025, 1.442695
      %v1079 = vpow.pop %v1078
      %v1080 = vmul.f32 %v1026, 1.442695
      %v1081 = vpow.pop %v1080
      %v1082 = vmul.f32 %v1027, 1.442695
      %v1083 = vpow.pop %v1082
      %v1084 = vmul.f32 %v1028, 1.442695
      %v1085 = vpow.pop %v1084
      %v1086 = vmul.f32 %v1029, 1.442695
      %v1087 = vpow.pop %v1086
      %v1088 = vmul.f32 %v1030, 1.442695
      %v1089 = vpow.pop %v1088
      %v1090 = vmul.f32 %v1031, 1.442695
      %v1091 = vpow.pop %v1090
      %v1092 = vmul.f32 %v1032, 1.442695
      %v1093 = vpow.pop %v1092
      %v1094 = vmul.f32 %v1033, 1.442695
      %v1095 = vpow.pop %v1094
      %v1096 = vmul.f32 %v1034, 1.442695
      %v1097 = vpow.pop %v1096
      %v1098 = vmul.f32 %v1035, 1.442695
      %v1099 = vpow.pop %v1098
      %v1100 = vadd.f32 %v1037, 1.0
      %v1101 = vadd.f32 %v1039, 1.0
      %v1102 = vadd.f32 %v1041, 1.0
      %v1103 = vadd.f32 %v1043, 1.0
      %v1104 = vadd.f32 %v1045, 1.0
      %v1105 = vadd.f32 %v1047, 1.0
      %v1106 = vadd.f32 %v1049, 1.0
      %v1107 = vadd.f32 %v1051, 1.0
      %v1108 = vadd.f32 %v1053, 1.0
      %v1109 = vadd.f32 %v1055, 1.0
      %v1110 = vadd.f32 %v1057, 1.0
      %v1111 = vadd.f32 %v1059, 1.0
      %v1112 = vadd.f32 %v1061, 1.0
      %v1113 = vadd.f32 %v1063, 1.0
      %v1114 = vadd.f32 %v1065, 1.0
      %v1115 = vadd.f32 %v1067, 1.0
      %v1116 = vadd.f32 %v1069, 1.0
      %v1117 = vadd.f32 %v1071, 1.0
      %v1118 = vadd.f32 %v1073, 1.0
      %v1119 = vadd.f32 %v1075, 1.0
      %v1120 = vadd.f32 %v1077, 1.0
      %v1121 = vadd.f32 %v1079, 1.0
      %v1122 = vadd.f32 %v1081, 1.0
      %v1123 = vadd.f32 %v1083, 1.0
      %v1124 = vadd.f32 %v1085, 1.0
      %v1125 = vadd.f32 %v1087, 1.0
      %v1126 = vadd.f32 %v1089, 1.0
      %v1127 = vadd.f32 %v1091, 1.0
      %v1128 = vadd.f32 %v1093, 1.0
      %v1129 = vadd.f32 %v1095, 1.0
      %v1130 = vadd.f32 %v1097, 1.0
      %v1131 = vadd.f32 %v1099, 1.0
      %v1132 = vrcp.pop %v1100
      %v1133 = vmul.f32 %v846, %v1132
      %v1134 = vrcp.pop %v1101
      %v1135 = vmul.f32 %v851, %v1134
      %v1136 = vrcp.pop %v1102
      %v1137 = vmul.f32 %v856, %v1136
      %v1138 = vrcp.pop %v1103
      %v1139 = vmul.f32 %v861, %v1138
      %v1140 = vrcp.pop %v1104
      %v1141 = vmul.f32 %v866, %v1140
      %v1142 = vrcp.pop %v1105
      %v1143 = vmul.f32 %v871, %v1142
      %v1144 = vrcp.pop %v1106
      %v1145 = vmul.f32 %v876, %v1144
      %v1146 = vrcp.pop %v1107
      %v1147 = vmul.f32 %v881, %v1146
      %v1148 = vrcp.pop %v1108
      %v1149 = vmul.f32 %v886, %v1148
      %v1150 = vrcp.pop %v1109
      %v1151 = vmul.f32 %v891, %v1150
      %v1152 = vrcp.pop %v1110
      %v1153 = vmul.f32 %v896, %v1152
      %v1154 = vrcp.pop %v1111
      %v1155 = vmul.f32 %v901, %v1154
      %v1156 = vrcp.pop %v1112
      %v1157 = vmul.f32 %v906, %v1156
      %v1158 = vrcp.pop %v1113
      %v1159 = vmul.f32 %v911, %v1158
      %v1160 = vrcp.pop %v1114
      %v1161 = vmul.f32 %v916, %v1160
      %v1162 = vrcp.pop %v1115
      %v1163 = vmul.f32 %v921, %v1162
      %v1164 = vrcp.pop %v1116
      %v1165 = vmul.f32 %v926, %v1164
      %v1166 = vrcp.pop %v1117
      %v1167 = vmul.f32 %v931, %v1166
      %v1168 = vrcp.pop %v1118
      %v1169 = vmul.f32 %v936, %v1168
      %v1170 = vrcp.pop %v1119
      %v1171 = vmul.f32 %v941, %v1170
      %v1172 = vrcp.pop %v1120
      %v1173 = vmul.f32 %v946, %v1172
      %v1174 = vrcp.pop %v1121
      %v1175 = vmul.f32 %v951, %v1174
      %v1176 = vrcp.pop %v1122
      %v1177 = vmul.f32 %v956, %v1176
      %v1178 = vrcp.pop %v1123
      %v1179 = vmul.f32 %v961, %v1178
      %v1180 = vrcp.pop %v1124
      %v1181 = vmul.f32 %v966, %v1180
      %v1182 = vrcp.pop %v1125
      %v1183 = vmul.f32 %v971, %v1182
      %v1184 = vrcp.pop %v1126
      %v1185 = vmul.f32 %v976, %v1184
      %v1186 = vrcp.pop %v1127
      %v1187 = vmul.f32 %v981, %v1186
      %v1188 = vrcp.pop %v1128
      %v1189 = vmul.f32 %v986, %v1188
      %v1190 = vrcp.pop %v1129
      %v1191 = vmul.f32 %v991, %v1190
      %v1192 = vrcp.pop %v1130
      %v1193 = vmul.f32 %v996, %v1192
      %v1194 = vrcp.pop %v1131
      %v1195 = vmul.f32 %v1001, %v1194
      %v1196 = vld [vmem:[%s3] sm:$0xff]
      %v1197 = vld [vmem:[%s3 + $0x8] sm:$0xff]
      %v1198 = vld [vmem:[%s3 + $0x10] sm:$0xff]
      %v1199 = vld [vmem:[%s3 + $0x18] sm:$0xff]
      %v1200 = vld [vmem:[%s3 + $0x20] sm:$0xff]
      %v1201 = vld [vmem:[%s3 + $0x28] sm:$0xff]
      %v1202 = vld [vmem:[%s3 + $0x30] sm:$0xff]
      %v1203 = vld [vmem:[%s3 + $0x38] sm:$0xff]
      %v1204 = vld [vmem:[%s3 + $0x40] sm:$0xff]
      %v1205 = vld [vmem:[%s3 + $0x48] sm:$0xff]
      %v1206 = vld [vmem:[%s3 + $0x50] sm:$0xff]
      %v1207 = vld [vmem:[%s3 + $0x58] sm:$0xff]
      %v1208 = vld [vmem:[%s3 + $0x60] sm:$0xff]
      %v1209 = vld [vmem:[%s3 + $0x68] sm:$0xff]
      %v1210 = vld [vmem:[%s3 + $0x70] sm:$0xff]
      %v1211 = vld [vmem:[%s3 + $0x78] sm:$0xff]
      %v1212 = vld [vmem:[%s4] sm:$0x1]
      %v1214 = vlaneseq
      %v1215 = vshrl.u32 %v1214, 7
      %v1216 = vsub.s32 0, %v1215
      %v1217 = vrot.slane %v1212, %v1216
      %1219 = vmatprep.subr.mxu0 0.0
      %1220 = vmatpush1.msra.mxu0 %v1211
      %1221 = vmatprep.subr.mxu0 0.0
      %1222 = vmatpush1.msra.mxu0 %v1210
      %1223 = vmatprep.subr.mxu0 0.0
      %1224 = vmatpush1.msra.mxu0 %v1209
      %1225 = vmatprep.subr.mxu0 0.0
      %1226 = vmatpush1.msra.mxu0 %v1208
      %1227 = vmatprep.subr.mxu0 0.0
      %1228 = vmatpush1.msra.mxu0 %v1207
      %1229 = vmatprep.subr.mxu0 0.0
      %1230 = vmatpush1.msra.mxu0 %v1206
      %1231 = vmatprep.subr.mxu0 0.0
      %1232 = vmatpush1.msra.mxu0 %v1205
      %1233 = vmatprep.subr.mxu0 0.0
      %1234 = vmatpush1.msra.mxu0 %v1204
      %1235 = vmatprep.subr.mxu0 0.0
      %1236 = vmatpush1.msra.mxu0 %v1203
      %1237 = vmatprep.subr.mxu0 0.0
      %1238 = vmatpush1.msra.mxu0 %v1202
      %1239 = vmatprep.subr.mxu0 0.0
      %1240 = vmatpush1.msra.mxu0 %v1201
      %1241 = vmatprep.subr.mxu0 0.0
      %1242 = vmatpush1.msra.mxu0 %v1200
      %1243 = vmatprep.subr.mxu0 0.0
      %1244 = vmatpush1.msra.mxu0 %v1199
      %1245 = vmatprep.subr.mxu0 0.0
      %1246 = vmatpush1.msra.mxu0 %v1198
      %1247 = vmatprep.subr.mxu0 0.0
      %1248 = vmatpush1.msra.mxu0 %v1197
      %1249 = vmatprep.subr.mxu0 0.0
      %1250 = vmatpush1.msra.mxu0 %v1196
      %1251 = vmatprep.subr.mxu0 0.0
      %1252 = vmatpush2.msra.mxu0 0.0
      %1253 = vmatprep.subr.mxu0 0.0
      %1254 = vmatpush2.msra.mxu0 0.0
      %1255 = vmatprep.subr.mxu0 0.0
      %1256 = vmatpush2.msra.mxu0 0.0
      %1257 = vmatprep.subr.mxu0 0.0
      %1258 = vmatpush2.msra.mxu0 0.0
      %1259 = vmatprep.subr.mxu0 0.0
      %1260 = vmatpush2.msra.mxu0 0.0
      %1261 = vmatprep.subr.mxu0 0.0
      %1262 = vmatpush2.msra.mxu0 0.0
      %1263 = vmatprep.subr.mxu0 0.0
      %1264 = vmatpush2.msra.mxu0 0.0
      %1265 = vmatprep.subr.mxu0 0.0
      %1266 = vmatpush2.msra.mxu0 0.0
      %1267 = vmatprep.subr.mxu0 0.0
      %1268 = vmatpush2.msra.mxu0 0.0
      %1269 = vmatprep.subr.mxu0 0.0
      %1270 = vmatpush2.msra.mxu0 0.0
      %1271 = vmatprep.subr.mxu0 0.0
      %1272 = vmatpush2.msra.mxu0 0.0
      %1273 = vmatprep.subr.mxu0 0.0
      %1274 = vmatpush2.msra.mxu0 0.0
      %1275 = vmatprep.subr.mxu0 0.0
      %1276 = vmatpush2.msra.mxu0 0.0
      %1277 = vmatprep.subr.mxu0 0.0
      %1278 = vmatpush2.msra.mxu0 0.0
      %1279 = vmatprep.subr.mxu0 0.0
      %1280 = vmatpush2.msra.mxu0 0.0
      %1281 = vmatprep.subr.mxu0 0.0
      %1282 = vmatpush2.msra.mxu0 0.0
      %1283 = vmatprep.mubr.f32.mxu0 0.0
      %1284 = vmatmul.mubr.f32.gmra.mxu0 %v1133
      %v1285 = vpop.f32.mrf.mxu0
      %v1286 = vadd.f32 %v1217, %v1285
      %v1287 = vpop.f32.mrf.mxu0
      %1288 = vmatprep.mubr.f32.mxu0 0.0
      %1289 = vmatmul.mubr.f32.gmra.mxu0 %v1135
      %v1290 = vpop.f32.mrf.mxu0
      %v1291 = vadd.f32 %v1217, %v1290
      %v1292 = vpop.f32.mrf.mxu0
      %1293 = vmatprep.mubr.f32.mxu0 0.0
      %1294 = vmatmul.mubr.f32.gmra.mxu0 %v1137
      %v1295 = vpop.f32.mrf.mxu0
      %v1296 = vadd.f32 %v1217, %v1295
      %v1297 = vpop.f32.mrf.mxu0
      %1298 = vmatprep.mubr.f32.mxu0 0.0
      %1299 = vmatmul.mubr.f32.gmra.mxu0 %v1139
      %v1300 = vpop.f32.mrf.mxu0
      %v1301 = vadd.f32 %v1217, %v1300
      %v1302 = vpop.f32.mrf.mxu0
      %1303 = vmatprep.mubr.f32.mxu0 0.0
      %1304 = vmatmul.mubr.f32.gmra.mxu0 %v1141
      %v1305 = vpop.f32.mrf.mxu0
      %v1306 = vadd.f32 %v1217, %v1305
      %v1307 = vpop.f32.mrf.mxu0
      %1308 = vmatprep.mubr.f32.mxu0 0.0
      %1309 = vmatmul.mubr.f32.gmra.mxu0 %v1143
      %v1310 = vpop.f32.mrf.mxu0
      %v1311 = vadd.f32 %v1217, %v1310
      %v1312 = vpop.f32.mrf.mxu0
      %1313 = vmatprep.mubr.f32.mxu0 0.0
      %1314 = vmatmul.mubr.f32.gmra.mxu0 %v1145
      %v1315 = vpop.f32.mrf.mxu0
      %v1316 = vadd.f32 %v1217, %v1315
      %v1317 = vpop.f32.mrf.mxu0
      %1318 = vmatprep.mubr.f32.mxu0 0.0
      %1319 = vmatmul.mubr.f32.gmra.mxu0 %v1147
      %v1320 = vpop.f32.mrf.mxu0
      %v1321 = vadd.f32 %v1217, %v1320
      %v1322 = vpop.f32.mrf.mxu0
      %1323 = vmatprep.mubr.f32.mxu0 0.0
      %1324 = vmatmul.mubr.f32.gmra.mxu0 %v1149
      %v1325 = vpop.f32.mrf.mxu0
      %v1326 = vadd.f32 %v1217, %v1325
      %v1327 = vpop.f32.mrf.mxu0
      %1328 = vmatprep.mubr.f32.mxu0 0.0
      %1329 = vmatmul.mubr.f32.gmra.mxu0 %v1151
      %v1330 = vpop.f32.mrf.mxu0
      %v1331 = vadd.f32 %v1217, %v1330
      %v1332 = vpop.f32.mrf.mxu0
      %1333 = vmatprep.mubr.f32.mxu0 0.0
      %1334 = vmatmul.mubr.f32.gmra.mxu0 %v1153
      %v1335 = vpop.f32.mrf.mxu0
      %v1336 = vadd.f32 %v1217, %v1335
      %v1337 = vpop.f32.mrf.mxu0
      %1338 = vmatprep.mubr.f32.mxu0 0.0
      %1339 = vmatmul.mubr.f32.gmra.mxu0 %v1155
      %v1340 = vpop.f32.mrf.mxu0
      %v1341 = vadd.f32 %v1217, %v1340
      %v1342 = vpop.f32.mrf.mxu0
      %1343 = vmatprep.mubr.f32.mxu0 0.0
      %1344 = vmatmul.mubr.f32.gmra.mxu0 %v1157
      %v1345 = vpop.f32.mrf.mxu0
      %v1346 = vadd.f32 %v1217, %v1345
      %v1347 = vpop.f32.mrf.mxu0
      %1348 = vmatprep.mubr.f32.mxu0 0.0
      %1349 = vmatmul.mubr.f32.gmra.mxu0 %v1159
      %v1350 = vpop.f32.mrf.mxu0
      %v1351 = vadd.f32 %v1217, %v1350
      %v1352 = vpop.f32.mrf.mxu0
      %1353 = vmatprep.mubr.f32.mxu0 0.0
      %1354 = vmatmul.mubr.f32.gmra.mxu0 %v1161
      %v1355 = vpop.f32.mrf.mxu0
      %v1356 = vadd.f32 %v1217, %v1355
      %v1357 = vpop.f32.mrf.mxu0
      %1358 = vmatprep.mubr.f32.mxu0 0.0
      %1359 = vmatmul.mubr.f32.gmra.mxu0 %v1163
      %v1360 = vpop.f32.mrf.mxu0
      %v1361 = vadd.f32 %v1217, %v1360
      %v1362 = vpop.f32.mrf.mxu0
      %1363 = vmatprep.mubr.f32.mxu0 0.0
      %1364 = vmatmul.mubr.f32.gmra.mxu0 %v1165
      %v1365 = vpop.f32.mrf.mxu0
      %v1366 = vadd.f32 %v1217, %v1365
      %v1367 = vpop.f32.mrf.mxu0
      %1368 = vmatprep.mubr.f32.mxu0 0.0
      %1369 = vmatmul.mubr.f32.gmra.mxu0 %v1167
      %v1370 = vpop.f32.mrf.mxu0
      %v1371 = vadd.f32 %v1217, %v1370
      %v1372 = vpop.f32.mrf.mxu0
      %1373 = vmatprep.mubr.f32.mxu0 0.0
      %1374 = vmatmul.mubr.f32.gmra.mxu0 %v1169
      %v1375 = vpop.f32.mrf.mxu0
      %v1376 = vadd.f32 %v1217, %v1375
      %v1377 = vpop.f32.mrf.mxu0
      %1378 = vmatprep.mubr.f32.mxu0 0.0
      %1379 = vmatmul.mubr.f32.gmra.mxu0 %v1171
      %v1380 = vpop.f32.mrf.mxu0
      %v1381 = vadd.f32 %v1217, %v1380
      %v1382 = vpop.f32.mrf.mxu0
      %1383 = vmatprep.mubr.f32.mxu0 0.0
      %1384 = vmatmul.mubr.f32.gmra.mxu0 %v1173
      %v1385 = vpop.f32.mrf.mxu0
      %v1386 = vadd.f32 %v1217, %v1385
      %v1387 = vpop.f32.mrf.mxu0
      %1388 = vmatprep.mubr.f32.mxu0 0.0
      %1389 = vmatmul.mubr.f32.gmra.mxu0 %v1175
      %v1390 = vpop.f32.mrf.mxu0
      %v1391 = vadd.f32 %v1217, %v1390
      %v1392 = vpop.f32.mrf.mxu0
      %1393 = vmatprep.mubr.f32.mxu0 0.0
      %1394 = vmatmul.mubr.f32.gmra.mxu0 %v1177
      %v1395 = vpop.f32.mrf.mxu0
      %v1396 = vadd.f32 %v1217, %v1395
      %v1397 = vpop.f32.mrf.mxu0
      %1398 = vmatprep.mubr.f32.mxu0 0.0
      %1399 = vmatmul.mubr.f32.gmra.mxu0 %v1179
      %v1400 = vpop.f32.mrf.mxu0
      %v1401 = vadd.f32 %v1217, %v1400
      %v1402 = vpop.f32.mrf.mxu0
      %1403 = vmatprep.mubr.f32.mxu0 0.0
      %1404 = vmatmul.mubr.f32.gmra.mxu0 %v1181
      %v1405 = vpop.f32.mrf.mxu0
      %v1406 = vadd.f32 %v1217, %v1405
      %v1407 = vpop.f32.mrf.mxu0
      %1408 = vmatprep.mubr.f32.mxu0 0.0
      %1409 = vmatmul.mubr.f32.gmra.mxu0 %v1183
      %v1410 = vpop.f32.mrf.mxu0
      %v1411 = vadd.f32 %v1217, %v1410
      %v1412 = vpop.f32.mrf.mxu0
      %1413 = vmatprep.mubr.f32.mxu0 0.0
      %1414 = vmatmul.mubr.f32.gmra.mxu0 %v1185
      %v1415 = vpop.f32.mrf.mxu0
      %v1416 = vadd.f32 %v1217, %v1415
      %v1417 = vpop.f32.mrf.mxu0
      %1418 = vmatprep.mubr.f32.mxu0 0.0
      %1419 = vmatmul.mubr.f32.gmra.mxu0 %v1187
      %v1420 = vpop.f32.mrf.mxu0
      %v1421 = vadd.f32 %v1217, %v1420
      %v1422 = vpop.f32.mrf.mxu0
      %1423 = vmatprep.mubr.f32.mxu0 0.0
      %1424 = vmatmul.mubr.f32.gmra.mxu0 %v1189
      %v1425 = vpop.f32.mrf.mxu0
      %v1426 = vadd.f32 %v1217, %v1425
      %v1427 = vpop.f32.mrf.mxu0
      %1428 = vmatprep.mubr.f32.mxu0 0.0
      %1429 = vmatmul.mubr.f32.gmra.mxu0 %v1191
      %v1430 = vpop.f32.mrf.mxu0
      %v1431 = vadd.f32 %v1217, %v1430
      %v1432 = vpop.f32.mrf.mxu0
      %1433 = vmatprep.mubr.f32.mxu0 0.0
      %1434 = vmatmul.mubr.f32.gmra.mxu0 %v1193
      %v1435 = vpop.f32.mrf.mxu0
      %v1436 = vadd.f32 %v1217, %v1435
      %v1437 = vpop.f32.mrf.mxu0
      %1438 = vmatprep.mubr.f32.mxu0 0.0
      %1439 = vmatmul.mubr.f32.gmra.mxu0 %v1195
      %v1440 = vpop.f32.mrf.mxu0
      %v1441 = vadd.f32 %v1217, %v1440
      %v1442 = vpop.f32.mrf.mxu0
      %1443 = vdwg.mxu0
      %v1444 = vsub.f32 0.0, %v1286
      %v1445 = vsub.f32 0.0, %v1291
      %v1446 = vsub.f32 0.0, %v1296
      %v1447 = vsub.f32 0.0, %v1301
      %v1448 = vsub.f32 0.0, %v1306
      %v1449 = vsub.f32 0.0, %v1311
      %v1450 = vsub.f32 0.0, %v1316
      %v1451 = vsub.f32 0.0, %v1321
      %v1452 = vsub.f32 0.0, %v1326
      %v1453 = vsub.f32 0.0, %v1331
      %v1454 = vsub.f32 0.0, %v1336
      %v1455 = vsub.f32 0.0, %v1341
      %v1456 = vsub.f32 0.0, %v1346
      %v1457 = vsub.f32 0.0, %v1351
      %v1458 = vsub.f32 0.0, %v1356
      %v1459 = vsub.f32 0.0, %v1361
      %v1460 = vsub.f32 0.0, %v1366
      %v1461 = vsub.f32 0.0, %v1371
      %v1462 = vsub.f32 0.0, %v1376
      %v1463 = vsub.f32 0.0, %v1381
      %v1464 = vsub.f32 0.0, %v1386
      %v1465 = vsub.f32 0.0, %v1391
      %v1466 = vsub.f32 0.0, %v1396
      %v1467 = vsub.f32 0.0, %v1401
      %v1468 = vsub.f32 0.0, %v1406
      %v1469 = vsub.f32 0.0, %v1411
      %v1470 = vsub.f32 0.0, %v1416
      %v1471 = vsub.f32 0.0, %v1421
      %v1472 = vsub.f32 0.0, %v1426
      %v1473 = vsub.f32 0.0, %v1431
      %v1474 = vsub.f32 0.0, %v1436
      %v1475 = vsub.f32 0.0, %v1441
      %v1476 = vmul.f32 %v1444, 1.442695
      %v1477 = vpow.pop %v1476
      %v1478 = vmul.f32 %v1445, 1.442695
      %v1479 = vpow.pop %v1478
      %v1480 = vmul.f32 %v1446, 1.442695
      %v1481 = vpow.pop %v1480
      %v1482 = vmul.f32 %v1447, 1.442695
      %v1483 = vpow.pop %v1482
      %v1484 = vmul.f32 %v1448, 1.442695
      %v1485 = vpow.pop %v1484
      %v1486 = vmul.f32 %v1449, 1.442695
      %v1487 = vpow.pop %v1486
      %v1488 = vmul.f32 %v1450, 1.442695
      %v1489 = vpow.pop %v1488
      %v1490 = vmul.f32 %v1451, 1.442695
      %v1491 = vpow.pop %v1490
      %v1492 = vmul.f32 %v1452, 1.442695
      %v1493 = vpow.pop %v1492
      %v1494 = vmul.f32 %v1453, 1.442695
      %v1495 = vpow.pop %v1494
      %v1496 = vmul.f32 %v1454, 1.442695
      %v1497 = vpow.pop %v1496
      %v1498 = vmul.f32 %v1455, 1.442695
      %v1499 = vpow.pop %v1498
      %v1500 = vmul.f32 %v1456, 1.442695
      %v1501 = vpow.pop %v1500
      %v1502 = vmul.f32 %v1457, 1.442695
      %v1503 = vpow.pop %v1502
      %v1504 = vmul.f32 %v1458, 1.442695
      %v1505 = vpow.pop %v1504
      %v1506 = vmul.f32 %v1459, 1.442695
      %v1507 = vpow.pop %v1506
      %v1508 = vmul.f32 %v1460, 1.442695
      %v1509 = vpow.pop %v1508
      %v1510 = vmul.f32 %v1461, 1.442695
      %v1511 = vpow.pop %v1510
      %v1512 = vmul.f32 %v1462, 1.442695
      %v1513 = vpow.pop %v1512
      %v1514 = vmul.f32 %v1463, 1.442695
      %v1515 = vpow.pop %v1514
      %v1516 = vmul.f32 %v1464, 1.442695
      %v1517 = vpow.pop %v1516
      %v1518 = vmul.f32 %v1465, 1.442695
      %v1519 = vpow.pop %v1518
      %v1520 = vmul.f32 %v1466, 1.442695
      %v1521 = vpow.pop %v1520
      %v1522 = vmul.f32 %v1467, 1.442695
      %v1523 = vpow.pop %v1522
      %v1524 = vmul.f32 %v1468, 1.442695
      %v1525 = vpow.pop %v1524
      %v1526 = vmul.f32 %v1469, 1.442695
      %v1527 = vpow.pop %v1526
      %v1528 = vmul.f32 %v1470, 1.442695
      %v1529 = vpow.pop %v1528
      %v1530 = vmul.f32 %v1471, 1.442695
      %v1531 = vpow.pop %v1530
      %v1532 = vmul.f32 %v1472, 1.442695
      %v1533 = vpow.pop %v1532
      %v1534 = vmul.f32 %v1473, 1.442695
      %v1535 = vpow.pop %v1534
      %v1536 = vmul.f32 %v1474, 1.442695
      %v1537 = vpow.pop %v1536
      %v1538 = vmul.f32 %v1475, 1.442695
      %v1539 = vpow.pop %v1538
      %v1540 = vadd.f32 %v1477, 1.0
      %v1541 = vadd.f32 %v1479, 1.0
      %v1542 = vadd.f32 %v1481, 1.0
      %v1543 = vadd.f32 %v1483, 1.0
      %v1544 = vadd.f32 %v1485, 1.0
      %v1545 = vadd.f32 %v1487, 1.0
      %v1546 = vadd.f32 %v1489, 1.0
      %v1547 = vadd.f32 %v1491, 1.0
      %v1548 = vadd.f32 %v1493, 1.0
      %v1549 = vadd.f32 %v1495, 1.0
      %v1550 = vadd.f32 %v1497, 1.0
      %v1551 = vadd.f32 %v1499, 1.0
      %v1552 = vadd.f32 %v1501, 1.0
      %v1553 = vadd.f32 %v1503, 1.0
      %v1554 = vadd.f32 %v1505, 1.0
      %v1555 = vadd.f32 %v1507, 1.0
      %v1556 = vadd.f32 %v1509, 1.0
      %v1557 = vadd.f32 %v1511, 1.0
      %v1558 = vadd.f32 %v1513, 1.0
      %v1559 = vadd.f32 %v1515, 1.0
      %v1560 = vadd.f32 %v1517, 1.0
      %v1561 = vadd.f32 %v1519, 1.0
      %v1562 = vadd.f32 %v1521, 1.0
      %v1563 = vadd.f32 %v1523, 1.0
      %v1564 = vadd.f32 %v1525, 1.0
      %v1565 = vadd.f32 %v1527, 1.0
      %v1566 = vadd.f32 %v1529, 1.0
      %v1567 = vadd.f32 %v1531, 1.0
      %v1568 = vadd.f32 %v1533, 1.0
      %v1569 = vadd.f32 %v1535, 1.0
      %v1570 = vadd.f32 %v1537, 1.0
      %v1571 = vadd.f32 %v1539, 1.0
      %v1572 = vrcp.pop %v1540
      %v1573 = vmul.f32 %v1286, %v1572
      %v1574 = vrcp.pop %v1541
      %v1575 = vmul.f32 %v1291, %v1574
      %v1576 = vrcp.pop %v1542
      %v1577 = vmul.f32 %v1296, %v1576
      %v1578 = vrcp.pop %v1543
      %v1579 = vmul.f32 %v1301, %v1578
      %v1580 = vrcp.pop %v1544
      %v1581 = vmul.f32 %v1306, %v1580
      %v1582 = vrcp.pop %v1545
      %v1583 = vmul.f32 %v1311, %v1582
      %v1584 = vrcp.pop %v1546
      %v1585 = vmul.f32 %v1316, %v1584
      %v1586 = vrcp.pop %v1547
      %v1587 = vmul.f32 %v1321, %v1586
      %v1588 = vrcp.pop %v1548
      %v1589 = vmul.f32 %v1326, %v1588
      %v1590 = vrcp.pop %v1549
      %v1591 = vmul.f32 %v1331, %v1590
      %v1592 = vrcp.pop %v1550
      %v1593 = vmul.f32 %v1336, %v1592
      %v1594 = vrcp.pop %v1551
      %v1595 = vmul.f32 %v1341, %v1594
      %v1596 = vrcp.pop %v1552
      %v1597 = vmul.f32 %v1346, %v1596
      %v1598 = vrcp.pop %v1553
      %v1599 = vmul.f32 %v1351, %v1598
      %v1600 = vrcp.pop %v1554
      %v1601 = vmul.f32 %v1356, %v1600
      %v1602 = vrcp.pop %v1555
      %v1603 = vmul.f32 %v1361, %v1602
      %v1604 = vrcp.pop %v1556
      %v1605 = vmul.f32 %v1366, %v1604
      %v1606 = vrcp.pop %v1557
      %v1607 = vmul.f32 %v1371, %v1606
      %v1608 = vrcp.pop %v1558
      %v1609 = vmul.f32 %v1376, %v1608
      %v1610 = vrcp.pop %v1559
      %v1611 = vmul.f32 %v1381, %v1610
      %v1612 = vrcp.pop %v1560
      %v1613 = vmul.f32 %v1386, %v1612
      %v1614 = vrcp.pop %v1561
      %v1615 = vmul.f32 %v1391, %v1614
      %v1616 = vrcp.pop %v1562
      %v1617 = vmul.f32 %v1396, %v1616
      %v1618 = vrcp.pop %v1563
      %v1619 = vmul.f32 %v1401, %v1618
      %v1620 = vrcp.pop %v1564
      %v1621 = vmul.f32 %v1406, %v1620
      %v1622 = vrcp.pop %v1565
      %v1623 = vmul.f32 %v1411, %v1622
      %v1624 = vrcp.pop %v1566
      %v1625 = vmul.f32 %v1416, %v1624
      %v1626 = vrcp.pop %v1567
      %v1627 = vmul.f32 %v1421, %v1626
      %v1628 = vrcp.pop %v1568
      %v1629 = vmul.f32 %v1426, %v1628
      %v1630 = vrcp.pop %v1569
      %v1631 = vmul.f32 %v1431, %v1630
      %v1632 = vrcp.pop %v1570
      %v1633 = vmul.f32 %v1436, %v1632
      %v1634 = vrcp.pop %v1571
      %v1635 = vmul.f32 %v1441, %v1634
      %vm1636 = vcmask 261120
      %1637 = vst.msk [vmem:[%s224] sm:$0xff] %vm1636, %v1573
      %1638 = vst.msk [vmem:[%s224 + $0x8] sm:$0xff] %vm1636, %v1575
      %1639 = vst.msk [vmem:[%s224 + $0x10] sm:$0xff] %vm1636, %v1577
      %1640 = vst.msk [vmem:[%s224 + $0x18] sm:$0xff] %vm1636, %v1579
      %1641 = vst.msk [vmem:[%s224 + $0x20] sm:$0xff] %vm1636, %v1581
      %1642 = vst.msk [vmem:[%s224 + $0x28] sm:$0xff] %vm1636, %v1583
      %1643 = vst.msk [vmem:[%s224 + $0x30] sm:$0xff] %vm1636, %v1585
      %1644 = vst.msk [vmem:[%s224 + $0x38] sm:$0xff] %vm1636, %v1587
      %1645 = vst.msk [vmem:[%s224 + $0x40] sm:$0xff] %vm1636, %v1589
      %1646 = vst.msk [vmem:[%s224 + $0x48] sm:$0xff] %vm1636, %v1591
      %1647 = vst.msk [vmem:[%s224 + $0x50] sm:$0xff] %vm1636, %v1593
      %1648 = vst.msk [vmem:[%s224 + $0x58] sm:$0xff] %vm1636, %v1595
      %1649 = vst.msk [vmem:[%s224 + $0x60] sm:$0xff] %vm1636, %v1597
      %1650 = vst.msk [vmem:[%s224 + $0x68] sm:$0xff] %vm1636, %v1599
      %1651 = vst.msk [vmem:[%s224 + $0x70] sm:$0xff] %vm1636, %v1601
      %1652 = vst.msk [vmem:[%s224 + $0x78] sm:$0xff] %vm1636, %v1603
      %1653 = vst.msk [vmem:[%s224 + $0x80] sm:$0xff] %vm1636, %v1605
      %1654 = vst.msk [vmem:[%s224 + $0x88] sm:$0xff] %vm1636, %v1607
      %1655 = vst.msk [vmem:[%s224 + $0x90] sm:$0xff] %vm1636, %v1609
      %1656 = vst.msk [vmem:[%s224 + $0x98] sm:$0xff] %vm1636, %v1611
      %1657 = vst.msk [vmem:[%s224 + $0xa0] sm:$0xff] %vm1636, %v1613
      %1658 = vst.msk [vmem:[%s224 + $0xa8] sm:$0xff] %vm1636, %v1615
      %1659 = vst.msk [vmem:[%s224 + $0xb0] sm:$0xff] %vm1636, %v1617
      %1660 = vst.msk [vmem:[%s224 + $0xb8] sm:$0xff] %vm1636, %v1619
      %1661 = vst.msk [vmem:[%s224 + $0xc0] sm:$0xff] %vm1636, %v1621
      %1662 = vst.msk [vmem:[%s224 + $0xc8] sm:$0xff] %vm1636, %v1623
      %1663 = vst.msk [vmem:[%s224 + $0xd0] sm:$0xff] %vm1636, %v1625
      %1664 = vst.msk [vmem:[%s224 + $0xd8] sm:$0xff] %vm1636, %v1627
      %1665 = vst.msk [vmem:[%s224 + $0xe0] sm:$0xff] %vm1636, %v1629
      %1666 = vst.msk [vmem:[%s224 + $0xe8] sm:$0xff] %vm1636, %v1631
      %1667 = vst.msk [vmem:[%s224 + $0xf0] sm:$0xff] %vm1636, %v1633
      %1668 = vst.msk [vmem:[%s224 + $0xf8] sm:$0xff] %vm1636, %v1635
      %s1669 = scalar_lea.vmem %s1, 512
      %v1670 = vld [vmem:[%s1669] sm:$0xff]
      %v1671 = vld [vmem:[%s1669 + $0x8] sm:$0xff]
      %v1672 = vld [vmem:[%s1669 + $0x10] sm:$0xff]
      %v1673 = vld [vmem:[%s1669 + $0x18] sm:$0xff]
      %v1674 = vld [vmem:[%s1669 + $0x20] sm:$0xff]
      %v1675 = vld [vmem:[%s1669 + $0x28] sm:$0xff]
      %v1676 = vld [vmem:[%s1669 + $0x30] sm:$0xff]
      %v1677 = vld [vmem:[%s1669 + $0x38] sm:$0xff]
      %v1678 = vld [vmem:[%s1669 + $0x40] sm:$0xff]
      %v1679 = vld [vmem:[%s1669 + $0x48] sm:$0xff]
      %v1680 = vld [vmem:[%s1669 + $0x50] sm:$0xff]
      %v1681 = vld [vmem:[%s1669 + $0x58] sm:$0xff]
      %v1682 = vld [vmem:[%s1669 + $0x60] sm:$0xff]
      %v1683 = vld [vmem:[%s1669 + $0x68] sm:$0xff]
      %v1684 = vld [vmem:[%s1669 + $0x70] sm:$0xff]
      %v1685 = vld [vmem:[%s1669 + $0x78] sm:$0xff]
      %v1686 = vld [vmem:[%s1669 + $0x80] sm:$0xff]
      %v1687 = vld [vmem:[%s1669 + $0x88] sm:$0xff]
      %v1688 = vld [vmem:[%s1669 + $0x90] sm:$0xff]
      %v1689 = vld [vmem:[%s1669 + $0x98] sm:$0xff]
      %v1690 = vld [vmem:[%s1669 + $0xa0] sm:$0xff]
      %v1691 = vld [vmem:[%s1669 + $0xa8] sm:$0xff]
      %v1692 = vld [vmem:[%s1669 + $0xb0] sm:$0xff]
      %v1693 = vld [vmem:[%s1669 + $0xb8] sm:$0xff]
      %v1694 = vld [vmem:[%s1669 + $0xc0] sm:$0xff]
      %v1695 = vld [vmem:[%s1669 + $0xc8] sm:$0xff]
      %v1696 = vld [vmem:[%s1669 + $0xd0] sm:$0xff]
      %v1697 = vld [vmem:[%s1669 + $0xd8] sm:$0xff]
      %v1698 = vld [vmem:[%s1669 + $0xe0] sm:$0xff]
      %v1699 = vld [vmem:[%s1669 + $0xe8] sm:$0xff]
      %v1700 = vld [vmem:[%s1669 + $0xf0] sm:$0xff]
      %v1701 = vld [vmem:[%s1669 + $0xf8] sm:$0xff]
      %v1702 = vld [vmem:[%s1669 + $0x100] sm:$0xff]
      %v1703 = vld [vmem:[%s1669 + $0x108] sm:$0xff]
      %v1704 = vld [vmem:[%s1669 + $0x110] sm:$0xff]
      %v1705 = vld [vmem:[%s1669 + $0x118] sm:$0xff]
      %v1706 = vld [vmem:[%s1669 + $0x120] sm:$0xff]
      %v1707 = vld [vmem:[%s1669 + $0x128] sm:$0xff]
      %v1708 = vld [vmem:[%s1669 + $0x130] sm:$0xff]
      %v1709 = vld [vmem:[%s1669 + $0x138] sm:$0xff]
      %v1710 = vld [vmem:[%s1669 + $0x140] sm:$0xff]
      %v1711 = vld [vmem:[%s1669 + $0x148] sm:$0xff]
      %v1712 = vld [vmem:[%s1669 + $0x150] sm:$0xff]
      %v1713 = vld [vmem:[%s1669 + $0x158] sm:$0xff]
      %v1714 = vld [vmem:[%s1669 + $0x160] sm:$0xff]
      %v1715 = vld [vmem:[%s1669 + $0x168] sm:$0xff]
      %v1716 = vld [vmem:[%s1669 + $0x170] sm:$0xff]
      %v1717 = vld [vmem:[%s1669 + $0x178] sm:$0xff]
      %v1718 = vld [vmem:[%s1669 + $0x180] sm:$0xff]
      %v1719 = vld [vmem:[%s1669 + $0x188] sm:$0xff]
      %v1720 = vld [vmem:[%s1669 + $0x190] sm:$0xff]
      %v1721 = vld [vmem:[%s1669 + $0x198] sm:$0xff]
      %v1722 = vld [vmem:[%s1669 + $0x1a0] sm:$0xff]
      %v1723 = vld [vmem:[%s1669 + $0x1a8] sm:$0xff]
      %v1724 = vld [vmem:[%s1669 + $0x1b0] sm:$0xff]
      %v1725 = vld [vmem:[%s1669 + $0x1b8] sm:$0xff]
      %v1726 = vld [vmem:[%s1669 + $0x1c0] sm:$0xff]
      %v1727 = vld [vmem:[%s1669 + $0x1c8] sm:$0xff]
      %v1728 = vld [vmem:[%s1669 + $0x1d0] sm:$0xff]
      %v1729 = vld [vmem:[%s1669 + $0x1d8] sm:$0xff]
      %v1730 = vld [vmem:[%s1669 + $0x1e0] sm:$0xff]
      %v1731 = vld [vmem:[%s1669 + $0x1e8] sm:$0xff]
      %v1732 = vld [vmem:[%s1669 + $0x1f0] sm:$0xff]
      %v1733 = vld [vmem:[%s1669 + $0x1f8] sm:$0xff]
      %v1734 = vld [vmem:[%s2] sm:$0x1]
      %v1736 = vlaneseq
      %v1737 = vshrl.u32 %v1736, 7
      %v1738 = vsub.s32 0, %v1737
      %v1739 = vrot.slane %v1734, %v1738
      %1741 = vmatprep.subr.mxu0 0.0
      %1742 = vmatpush1.msra.mxu0 %v1685
      %1743 = vmatprep.subr.mxu0 0.0
      %1744 = vmatpush1.msra.mxu0 %v1684
      %1745 = vmatprep.subr.mxu0 0.0
      %1746 = vmatpush1.msra.mxu0 %v1683
      %1747 = vmatprep.subr.mxu0 0.0
      %1748 = vmatpush1.msra.mxu0 %v1682
      %1749 = vmatprep.subr.mxu0 0.0
      %1750 = vmatpush1.msra.mxu0 %v1681
      %1751 = vmatprep.subr.mxu0 0.0
      %1752 = vmatpush1.msra.mxu0 %v1680
      %1753 = vmatprep.subr.mxu0 0.0
      %1754 = vmatpush1.msra.mxu0 %v1679
      %1755 = vmatprep.subr.mxu0 0.0
      %1756 = vmatpush1.msra.mxu0 %v1678
      %1757 = vmatprep.subr.mxu0 0.0
      %1758 = vmatpush1.msra.mxu0 %v1677
      %1759 = vmatprep.subr.mxu0 0.0
      %1760 = vmatpush1.msra.mxu0 %v1676
      %1761 = vmatprep.subr.mxu0 0.0
      %1762 = vmatpush1.msra.mxu0 %v1675
      %1763 = vmatprep.subr.mxu0 0.0
      %1764 = vmatpush1.msra.mxu0 %v1674
      %1765 = vmatprep.subr.mxu0 0.0
      %1766 = vmatpush1.msra.mxu0 %v1673
      %1767 = vmatprep.subr.mxu0 0.0
      %1768 = vmatpush1.msra.mxu0 %v1672
      %1769 = vmatprep.subr.mxu0 0.0
      %1770 = vmatpush1.msra.mxu0 %v1671
      %1771 = vmatprep.subr.mxu0 0.0
      %1772 = vmatpush1.msra.mxu0 %v1670
      %1773 = vmatprep.subr.mxu0 0.0
      %1774 = vmatpush2.msra.mxu0 %v1701
      %1775 = vmatprep.subr.mxu0 0.0
      %1776 = vmatpush2.msra.mxu0 %v1700
      %1777 = vmatprep.subr.mxu0 0.0
      %1778 = vmatpush2.msra.mxu0 %v1699
      %1779 = vmatprep.subr.mxu0 0.0
      %1780 = vmatpush2.msra.mxu0 %v1698
      %1781 = vmatprep.subr.mxu0 0.0
      %1782 = vmatpush2.msra.mxu0 %v1697
      %1783 = vmatprep.subr.mxu0 0.0
      %1784 = vmatpush2.msra.mxu0 %v1696
      %1785 = vmatprep.subr.mxu0 0.0
      %1786 = vmatpush2.msra.mxu0 %v1695
      %1787 = vmatprep.subr.mxu0 0.0
      %1788 = vmatpush2.msra.mxu0 %v1694
      %1789 = vmatprep.subr.mxu0 0.0
      %1790 = vmatpush2.msra.mxu0 %v1693
      %1791 = vmatprep.subr.mxu0 0.0
      %1792 = vmatpush2.msra.mxu0 %v1692
      %1793 = vmatprep.subr.mxu0 0.0
      %1794 = vmatpush2.msra.mxu0 %v1691
      %1795 = vmatprep.subr.mxu0 0.0
      %1796 = vmatpush2.msra.mxu0 %v1690
      %1797 = vmatprep.subr.mxu0 0.0
      %1798 = vmatpush2.msra.mxu0 %v1689
      %1799 = vmatprep.subr.mxu0 0.0
      %1800 = vmatpush2.msra.mxu0 %v1688
      %1801 = vmatprep.subr.mxu0 0.0
      %1802 = vmatpush2.msra.mxu0 %v1687
      %1803 = vmatprep.subr.mxu0 0.0
      %1804 = vmatpush2.msra.mxu0 %v1686
      %1805 = vmatprep.mubr.f32.mxu0 0.0
      %1806 = vmatmul.mubr.f32.gmra.mxu0 0.0
      %v1807 = vpop.f32.mrf.mxu0
      %v1808 = vadd.f32 %v1739, %v1807
      %v1809 = vpop.f32.mrf.mxu0
      %1810 = vmatprep.mubr.f32.mxu0 0.0
      %1811 = vmatmul.mubr.f32.gmra.mxu0 0.0
      %v1812 = vpop.f32.mrf.mxu0
      %v1813 = vadd.f32 %v1739, %v1812
      %v1814 = vpop.f32.mrf.mxu0
      %1815 = vmatprep.mubr.f32.mxu0 %v389
      %1816 = vmatmul.mubr.f32.gmra.mxu0 %v225
      %v1817 = vpop.f32.mrf.mxu0
      %v1818 = vadd.f32 %v1739, %v1817
      %v1819 = vpop.f32.mrf.mxu0
      %1820 = vmatprep.mubr.f32.mxu0 %v467
      %1821 = vmatmul.mubr.f32.gmra.mxu0 %v226
      %v1822 = vpop.f32.mrf.mxu0
      %v1823 = vadd.f32 %v1739, %v1822
      %v1824 = vpop.f32.mrf.mxu0
      %1825 = vmatprep.mubr.f32.mxu0 %v392
      %1826 = vmatmul.mubr.f32.gmra.mxu0 %v227
      %v1827 = vpop.f32.mrf.mxu0
      %v1828 = vadd.f32 %v1739, %v1827
      %v1829 = vpop.f32.mrf.mxu0
      %1830 = vmatprep.mubr.f32.mxu0 %v468
      %1831 = vmatmul.mubr.f32.gmra.mxu0 %v228
      %v1832 = vpop.f32.mrf.mxu0
      %v1833 = vadd.f32 %v1739, %v1832
      %v1834 = vpop.f32.mrf.mxu0
      %1835 = vmatprep.mubr.f32.mxu0 %v395
      %1836 = vmatmul.mubr.f32.gmra.mxu0 %v229
      %v1837 = vpop.f32.mrf.mxu0
      %v1838 = vadd.f32 %v1739, %v1837
      %v1839 = vpop.f32.mrf.mxu0
      %1840 = vmatprep.mubr.f32.mxu0 %v469
      %1841 = vmatmul.mubr.f32.gmra.mxu0 %v230
      %v1842 = vpop.f32.mrf.mxu0
      %v1843 = vadd.f32 %v1739, %v1842
      %v1844 = vpop.f32.mrf.mxu0
      %1845 = vmatprep.mubr.f32.mxu0 %v398
      %1846 = vmatmul.mubr.f32.gmra.mxu0 %v231
      %v1847 = vpop.f32.mrf.mxu0
      %v1848 = vadd.f32 %v1739, %v1847
      %v1849 = vpop.f32.mrf.mxu0
      %1850 = vmatprep.mubr.f32.mxu0 %v470
      %1851 = vmatmul.mubr.f32.gmra.mxu0 %v232
      %v1852 = vpop.f32.mrf.mxu0
      %v1853 = vadd.f32 %v1739, %v1852
      %v1854 = vpop.f32.mrf.mxu0
      %1855 = vmatprep.mubr.f32.mxu0 %v401
      %1856 = vmatmul.mubr.f32.gmra.mxu0 %v233
      %v1857 = vpop.f32.mrf.mxu0
      %v1858 = vadd.f32 %v1739, %v1857
      %v1859 = vpop.f32.mrf.mxu0
      %1860 = vmatprep.mubr.f32.mxu0 %v471
      %1861 = vmatmul.mubr.f32.gmra.mxu0 %v234
      %v1862 = vpop.f32.mrf.mxu0
      %v1863 = vadd.f32 %v1739, %v1862
      %v1864 = vpop.f32.mrf.mxu0
      %1865 = vmatprep.mubr.f32.mxu0 %v404
      %1866 = vmatmul.mubr.f32.gmra.mxu0 %v235
      %v1867 = vpop.f32.mrf.mxu0
      %v1868 = vadd.f32 %v1739, %v1867
      %v1869 = vpop.f32.mrf.mxu0
      %1870 = vmatprep.mubr.f32.mxu0 %v472
      %1871 = vmatmul.mubr.f32.gmra.mxu0 %v236
      %v1872 = vpop.f32.mrf.mxu0
      %v1873 = vadd.f32 %v1739, %v1872
      %v1874 = vpop.f32.mrf.mxu0
      %1875 = vmatprep.mubr.f32.mxu0 %v407
      %1876 = vmatmul.mubr.f32.gmra.mxu0 %v237
      %v1877 = vpop.f32.mrf.mxu0
      %v1878 = vadd.f32 %v1739, %v1877
      %v1879 = vpop.f32.mrf.mxu0
      %1880 = vmatprep.mubr.f32.mxu0 %v473
      %1881 = vmatmul.mubr.f32.gmra.mxu0 %v238
      %v1882 = vpop.f32.mrf.mxu0
      %v1883 = vadd.f32 %v1739, %v1882
      %v1884 = vpop.f32.mrf.mxu0
      %1885 = vmatprep.mubr.f32.mxu0 %v410
      %1886 = vmatmul.mubr.f32.gmra.mxu0 %v239
      %v1887 = vpop.f32.mrf.mxu0
      %v1888 = vadd.f32 %v1739, %v1887
      %v1889 = vpop.f32.mrf.mxu0
      %1890 = vmatprep.mubr.f32.mxu0 %v474
      %1891 = vmatmul.mubr.f32.gmra.mxu0 %v240
      %v1892 = vpop.f32.mrf.mxu0
      %v1893 = vadd.f32 %v1739, %v1892
      %v1894 = vpop.f32.mrf.mxu0
      %1895 = vmatprep.mubr.f32.mxu0 %v413
      %1896 = vmatmul.mubr.f32.gmra.mxu0 %v241
      %v1897 = vpop.f32.mrf.mxu0
      %v1898 = vadd.f32 %v1739, %v1897
      %v1899 = vpop.f32.mrf.mxu0
      %1900 = vmatprep.mubr.f32.mxu0 %v475
      %1901 = vmatmul.mubr.f32.gmra.mxu0 %v242
      %v1902 = vpop.f32.mrf.mxu0
      %v1903 = vadd.f32 %v1739, %v1902
      %v1904 = vpop.f32.mrf.mxu0
      %1905 = vmatprep.mubr.f32.mxu0 %v416
      %1906 = vmatmul.mubr.f32.gmra.mxu0 %v243
      %v1907 = vpop.f32.mrf.mxu0
      %v1908 = vadd.f32 %v1739, %v1907
      %v1909 = vpop.f32.mrf.mxu0
      %1910 = vmatprep.mubr.f32.mxu0 %v476
      %1911 = vmatmul.mubr.f32.gmra.mxu0 %v244
      %v1912 = vpop.f32.mrf.mxu0
      %v1913 = vadd.f32 %v1739, %v1912
      %v1914 = vpop.f32.mrf.mxu0
      %1915 = vmatprep.mubr.f32.mxu0 %v419
      %1916 = vmatmul.mubr.f32.gmra.mxu0 %v245
      %v1917 = vpop.f32.mrf.mxu0
      %v1918 = vadd.f32 %v1739, %v1917
      %v1919 = vpop.f32.mrf.mxu0
      %1920 = vmatprep.mubr.f32.mxu0 %v477
      %1921 = vmatmul.mubr.f32.gmra.mxu0 %v246
      %v1922 = vpop.f32.mrf.mxu0
      %v1923 = vadd.f32 %v1739, %v1922
      %v1924 = vpop.f32.mrf.mxu0
      %1925 = vmatprep.mubr.f32.mxu0 %v422
      %1926 = vmatmul.mubr.f32.gmra.mxu0 %v247
      %v1927 = vpop.f32.mrf.mxu0
      %v1928 = vadd.f32 %v1739, %v1927
      %v1929 = vpop.f32.mrf.mxu0
      %1930 = vmatprep.mubr.f32.mxu0 %v478
      %1931 = vmatmul.mubr.f32.gmra.mxu0 %v248
      %v1932 = vpop.f32.mrf.mxu0
      %v1933 = vadd.f32 %v1739, %v1932
      %v1934 = vpop.f32.mrf.mxu0
      %1935 = vmatprep.mubr.f32.mxu0 %v425
      %1936 = vmatmul.mubr.f32.gmra.mxu0 %v249
      %v1937 = vpop.f32.mrf.mxu0
      %v1938 = vadd.f32 %v1739, %v1937
      %v1939 = vpop.f32.mrf.mxu0
      %1940 = vmatprep.mubr.f32.mxu0 %v479
      %1941 = vmatmul.mubr.f32.gmra.mxu0 %v250
      %v1942 = vpop.f32.mrf.mxu0
      %v1943 = vadd.f32 %v1739, %v1942
      %v1944 = vpop.f32.mrf.mxu0
      %1945 = vmatprep.mubr.f32.mxu0 %v428
      %1946 = vmatmul.mubr.f32.gmra.mxu0 %v251
      %v1947 = vpop.f32.mrf.mxu0
      %v1948 = vadd.f32 %v1739, %v1947
      %v1949 = vpop.f32.mrf.mxu0
      %1950 = vmatprep.mubr.f32.mxu0 %v480
      %1951 = vmatmul.mubr.f32.gmra.mxu0 %v252
      %v1952 = vpop.f32.mrf.mxu0
      %v1953 = vadd.f32 %v1739, %v1952
      %v1954 = vpop.f32.mrf.mxu0
      %1955 = vmatprep.mubr.f32.mxu0 %v431
      %1956 = vmatmul.mubr.f32.gmra.mxu0 %v253
      %v1957 = vpop.f32.mrf.mxu0
      %v1958 = vadd.f32 %v1739, %v1957
      %v1959 = vpop.f32.mrf.mxu0
      %1960 = vmatprep.mubr.f32.mxu0 %v481
      %1961 = vmatmul.mubr.f32.gmra.mxu0 %v254
      %v1962 = vpop.f32.mrf.mxu0
      %v1963 = vadd.f32 %v1739, %v1962
      %v1964 = vpop.f32.mrf.mxu0
      %1965 = vdwg.mxu0
      %1966 = vmatprep.subr.mxu0 0.0
      %1967 = vmatpush1.msra.mxu0 %v1717
      %1968 = vmatprep.subr.mxu0 0.0
      %1969 = vmatpush1.msra.mxu0 %v1716
      %1970 = vmatprep.subr.mxu0 0.0
      %1971 = vmatpush1.msra.mxu0 %v1715
      %1972 = vmatprep.subr.mxu0 0.0
      %1973 = vmatpush1.msra.mxu0 %v1714
      %1974 = vmatprep.subr.mxu0 0.0
      %1975 = vmatpush1.msra.mxu0 %v1713
      %1976 = vmatprep.subr.mxu0 0.0
      %1977 = vmatpush1.msra.mxu0 %v1712
      %1978 = vmatprep.subr.mxu0 0.0
      %1979 = vmatpush1.msra.mxu0 %v1711
      %1980 = vmatprep.subr.mxu0 0.0
      %1981 = vmatpush1.msra.mxu0 %v1710
      %1982 = vmatprep.subr.mxu0 0.0
      %1983 = vmatpush1.msra.mxu0 %v1709
      %1984 = vmatprep.subr.mxu0 0.0
      %1985 = vmatpush1.msra.mxu0 %v1708
      %1986 = vmatprep.subr.mxu0 0.0
      %1987 = vmatpush1.msra.mxu0 %v1707
      %1988 = vmatprep.subr.mxu0 0.0
      %1989 = vmatpush1.msra.mxu0 %v1706
      %1990 = vmatprep.subr.mxu0 0.0
      %1991 = vmatpush1.msra.mxu0 %v1705
      %1992 = vmatprep.subr.mxu0 0.0
      %1993 = vmatpush1.msra.mxu0 %v1704
      %1994 = vmatprep.subr.mxu0 0.0
      %1995 = vmatpush1.msra.mxu0 %v1703
      %1996 = vmatprep.subr.mxu0 0.0
      %1997 = vmatpush1.msra.mxu0 %v1702
      %1998 = vmatprep.subr.mxu0 0.0
      %1999 = vmatpush2.msra.mxu0 %v1733
      %2000 = vmatprep.subr.mxu0 0.0
      %2001 = vmatpush2.msra.mxu0 %v1732
      %2002 = vmatprep.subr.mxu0 0.0
      %2003 = vmatpush2.msra.mxu0 %v1731
      %2004 = vmatprep.subr.mxu0 0.0
      %2005 = vmatpush2.msra.mxu0 %v1730
      %2006 = vmatprep.subr.mxu0 0.0
      %2007 = vmatpush2.msra.mxu0 %v1729
      %2008 = vmatprep.subr.mxu0 0.0
      %2009 = vmatpush2.msra.mxu0 %v1728
      %2010 = vmatprep.subr.mxu0 0.0
      %2011 = vmatpush2.msra.mxu0 %v1727
      %2012 = vmatprep.subr.mxu0 0.0
      %2013 = vmatpush2.msra.mxu0 %v1726
      %2014 = vmatprep.subr.mxu0 0.0
      %2015 = vmatpush2.msra.mxu0 %v1725
      %2016 = vmatprep.subr.mxu0 0.0
      %2017 = vmatpush2.msra.mxu0 %v1724
      %2018 = vmatprep.subr.mxu0 0.0
      %2019 = vmatpush2.msra.mxu0 %v1723
      %2020 = vmatprep.subr.mxu0 0.0
      %2021 = vmatpush2.msra.mxu0 %v1722
      %2022 = vmatprep.subr.mxu0 0.0
      %2023 = vmatpush2.msra.mxu0 %v1721
      %2024 = vmatprep.subr.mxu0 0.0
      %2025 = vmatpush2.msra.mxu0 %v1720
      %2026 = vmatprep.subr.mxu0 0.0
      %2027 = vmatpush2.msra.mxu0 %v1719
      %2028 = vmatprep.subr.mxu0 0.0
      %2029 = vmatpush2.msra.mxu0 %v1718
      %2030 = vmatprep.mubr.f32.mxu0 %v389
      %2031 = vmatmul.mubr.f32.gmra.mxu0 %v225
      %v2032 = vpop.f32.mrf.mxu0
      %v2033 = vadd.f32 %v1808, %v2032
      %v2034 = vpop.f32.mrf.mxu0
      %2035 = vmatprep.mubr.f32.mxu0 %v467
      %2036 = vmatmul.mubr.f32.gmra.mxu0 %v226
      %v2037 = vpop.f32.mrf.mxu0
      %v2038 = vadd.f32 %v1813, %v2037
      %v2039 = vpop.f32.mrf.mxu0
      %2040 = vmatprep.mubr.f32.mxu0 %v392
      %2041 = vmatmul.mubr.f32.gmra.mxu0 %v227
      %v2042 = vpop.f32.mrf.mxu0
      %v2043 = vadd.f32 %v1818, %v2042
      %v2044 = vpop.f32.mrf.mxu0
      %2045 = vmatprep.mubr.f32.mxu0 %v468
      %2046 = vmatmul.mubr.f32.gmra.mxu0 %v228
      %v2047 = vpop.f32.mrf.mxu0
      %v2048 = vadd.f32 %v1823, %v2047
      %v2049 = vpop.f32.mrf.mxu0
      %2050 = vmatprep.mubr.f32.mxu0 %v395
      %2051 = vmatmul.mubr.f32.gmra.mxu0 %v229
      %v2052 = vpop.f32.mrf.mxu0
      %v2053 = vadd.f32 %v1828, %v2052
      %v2054 = vpop.f32.mrf.mxu0
      %2055 = vmatprep.mubr.f32.mxu0 %v469
      %2056 = vmatmul.mubr.f32.gmra.mxu0 %v230
      %v2057 = vpop.f32.mrf.mxu0
      %v2058 = vadd.f32 %v1833, %v2057
      %v2059 = vpop.f32.mrf.mxu0
      %2060 = vmatprep.mubr.f32.mxu0 %v398
      %2061 = vmatmul.mubr.f32.gmra.mxu0 %v231
      %v2062 = vpop.f32.mrf.mxu0
      %v2063 = vadd.f32 %v1838, %v2062
      %v2064 = vpop.f32.mrf.mxu0
      %2065 = vmatprep.mubr.f32.mxu0 %v470
      %2066 = vmatmul.mubr.f32.gmra.mxu0 %v232
      %v2067 = vpop.f32.mrf.mxu0
      %v2068 = vadd.f32 %v1843, %v2067
      %v2069 = vpop.f32.mrf.mxu0
      %2070 = vmatprep.mubr.f32.mxu0 %v401
      %2071 = vmatmul.mubr.f32.gmra.mxu0 %v233
      %v2072 = vpop.f32.mrf.mxu0
      %v2073 = vadd.f32 %v1848, %v2072
      %v2074 = vpop.f32.mrf.mxu0
      %2075 = vmatprep.mubr.f32.mxu0 %v471
      %2076 = vmatmul.mubr.f32.gmra.mxu0 %v234
      %v2077 = vpop.f32.mrf.mxu0
      %v2078 = vadd.f32 %v1853, %v2077
      %v2079 = vpop.f32.mrf.mxu0
      %2080 = vmatprep.mubr.f32.mxu0 %v404
      %2081 = vmatmul.mubr.f32.gmra.mxu0 %v235
      %v2082 = vpop.f32.mrf.mxu0
      %v2083 = vadd.f32 %v1858, %v2082
      %v2084 = vpop.f32.mrf.mxu0
      %2085 = vmatprep.mubr.f32.mxu0 %v472
      %2086 = vmatmul.mubr.f32.gmra.mxu0 %v236
      %v2087 = vpop.f32.mrf.mxu0
      %v2088 = vadd.f32 %v1863, %v2087
      %v2089 = vpop.f32.mrf.mxu0
      %2090 = vmatprep.mubr.f32.mxu0 %v407
      %2091 = vmatmul.mubr.f32.gmra.mxu0 %v237
      %v2092 = vpop.f32.mrf.mxu0
      %v2093 = vadd.f32 %v1868, %v2092
      %v2094 = vpop.f32.mrf.mxu0
      %2095 = vmatprep.mubr.f32.mxu0 %v473
      %2096 = vmatmul.mubr.f32.gmra.mxu0 %v238
      %v2097 = vpop.f32.mrf.mxu0
      %v2098 = vadd.f32 %v1873, %v2097
      %v2099 = vpop.f32.mrf.mxu0
      %2100 = vmatprep.mubr.f32.mxu0 %v410
      %2101 = vmatmul.mubr.f32.gmra.mxu0 %v239
      %v2102 = vpop.f32.mrf.mxu0
      %v2103 = vadd.f32 %v1878, %v2102
      %v2104 = vpop.f32.mrf.mxu0
      %2105 = vmatprep.mubr.f32.mxu0 %v474
      %2106 = vmatmul.mubr.f32.gmra.mxu0 %v240
      %v2107 = vpop.f32.mrf.mxu0
      %v2108 = vadd.f32 %v1883, %v2107
      %v2109 = vpop.f32.mrf.mxu0
      %2110 = vmatprep.mubr.f32.mxu0 %v413
      %2111 = vmatmul.mubr.f32.gmra.mxu0 %v241
      %v2112 = vpop.f32.mrf.mxu0
      %v2113 = vadd.f32 %v1888, %v2112
      %v2114 = vpop.f32.mrf.mxu0
      %2115 = vmatprep.mubr.f32.mxu0 %v475
      %2116 = vmatmul.mubr.f32.gmra.mxu0 %v242
      %v2117 = vpop.f32.mrf.mxu0
      %v2118 = vadd.f32 %v1893, %v2117
      %v2119 = vpop.f32.mrf.mxu0
      %2120 = vmatprep.mubr.f32.mxu0 %v416
      %2121 = vmatmul.mubr.f32.gmra.mxu0 %v243
      %v2122 = vpop.f32.mrf.mxu0
      %v2123 = vadd.f32 %v1898, %v2122
      %v2124 = vpop.f32.mrf.mxu0
      %2125 = vmatprep.mubr.f32.mxu0 %v476
      %2126 = vmatmul.mubr.f32.gmra.mxu0 %v244
      %v2127 = vpop.f32.mrf.mxu0
      %v2128 = vadd.f32 %v1903, %v2127
      %v2129 = vpop.f32.mrf.mxu0
      %2130 = vmatprep.mubr.f32.mxu0 %v419
      %2131 = vmatmul.mubr.f32.gmra.mxu0 %v245
      %v2132 = vpop.f32.mrf.mxu0
      %v2133 = vadd.f32 %v1908, %v2132
      %v2134 = vpop.f32.mrf.mxu0
      %2135 = vmatprep.mubr.f32.mxu0 %v477
      %2136 = vmatmul.mubr.f32.gmra.mxu0 %v246
      %v2137 = vpop.f32.mrf.mxu0
      %v2138 = vadd.f32 %v1913, %v2137
      %v2139 = vpop.f32.mrf.mxu0
      %2140 = vmatprep.mubr.f32.mxu0 %v422
      %2141 = vmatmul.mubr.f32.gmra.mxu0 %v247
      %v2142 = vpop.f32.mrf.mxu0
      %v2143 = vadd.f32 %v1918, %v2142
      %v2144 = vpop.f32.mrf.mxu0
      %2145 = vmatprep.mubr.f32.mxu0 %v478
      %2146 = vmatmul.mubr.f32.gmra.mxu0 %v248
      %v2147 = vpop.f32.mrf.mxu0
      %v2148 = vadd.f32 %v1923, %v2147
      %v2149 = vpop.f32.mrf.mxu0
      %2150 = vmatprep.mubr.f32.mxu0 %v425
      %2151 = vmatmul.mubr.f32.gmra.mxu0 %v249
      %v2152 = vpop.f32.mrf.mxu0
      %v2153 = vadd.f32 %v1928, %v2152
      %v2154 = vpop.f32.mrf.mxu0
      %2155 = vmatprep.mubr.f32.mxu0 %v479
      %2156 = vmatmul.mubr.f32.gmra.mxu0 %v250
      %v2157 = vpop.f32.mrf.mxu0
      %v2158 = vadd.f32 %v1933, %v2157
      %v2159 = vpop.f32.mrf.mxu0
      %2160 = vmatprep.mubr.f32.mxu0 %v428
      %2161 = vmatmul.mubr.f32.gmra.mxu0 %v251
      %v2162 = vpop.f32.mrf.mxu0
      %v2163 = vadd.f32 %v1938, %v2162
      %v2164 = vpop.f32.mrf.mxu0
      %2165 = vmatprep.mubr.f32.mxu0 %v480
      %2166 = vmatmul.mubr.f32.gmra.mxu0 %v252
      %v2167 = vpop.f32.mrf.mxu0
      %v2168 = vadd.f32 %v1943, %v2167
      %v2169 = vpop.f32.mrf.mxu0
      %2170 = vmatprep.mubr.f32.mxu0 %v431
      %2171 = vmatmul.mubr.f32.gmra.mxu0 %v253
      %v2172 = vpop.f32.mrf.mxu0
      %v2173 = vadd.f32 %v1948, %v2172
      %v2174 = vpop.f32.mrf.mxu0
      %2175 = vmatprep.mubr.f32.mxu0 %v481
      %2176 = vmatmul.mubr.f32.gmra.mxu0 %v254
      %v2177 = vpop.f32.mrf.mxu0
      %v2178 = vadd.f32 %v1953, %v2177
      %v2179 = vpop.f32.mrf.mxu0
      %2180 = vmatprep.mubr.f32.mxu0 %v434
      %2181 = vmatmul.mubr.f32.gmra.mxu0 %v255
      %v2182 = vpop.f32.mrf.mxu0
      %v2183 = vadd.f32 %v1958, %v2182
      %v2184 = vpop.f32.mrf.mxu0
      %2185 = vmatprep.mubr.f32.mxu0 %v482
      %2186 = vmatmul.mubr.f32.gmra.mxu0 %v256
      %v2187 = vpop.f32.mrf.mxu0
      %v2188 = vadd.f32 %v1963, %v2187
      %v2189 = vpop.f32.mrf.mxu0
      %2190 = vdwg.mxu0
      %v2191 = vsub.f32 0.0, %v2033
      %v2192 = vsub.f32 0.0, %v2038
      %v2193 = vsub.f32 0.0, %v2043
      %v2194 = vsub.f32 0.0, %v2048
      %v2195 = vsub.f32 0.0, %v2053
      %v2196 = vsub.f32 0.0, %v2058
      %v2197 = vsub.f32 0.0, %v2063
      %v2198 = vsub.f32 0.0, %v2068
      %v2199 = vsub.f32 0.0, %v2073
      %v2200 = vsub.f32 0.0, %v2078
      %v2201 = vsub.f32 0.0, %v2083
      %v2202 = vsub.f32 0.0, %v2088
      %v2203 = vsub.f32 0.0, %v2093
      %v2204 = vsub.f32 0.0, %v2098
      %v2205 = vsub.f32 0.0, %v2103
      %v2206 = vsub.f32 0.0, %v2108
      %v2207 = vsub.f32 0.0, %v2113
      %v2208 = vsub.f32 0.0, %v2118
      %v2209 = vsub.f32 0.0, %v2123
      %v2210 = vsub.f32 0.0, %v2128
      %v2211 = vsub.f32 0.0, %v2133
      %v2212 = vsub.f32 0.0, %v2138
      %v2213 = vsub.f32 0.0, %v2143
      %v2214 = vsub.f32 0.0, %v2148
      %v2215 = vsub.f32 0.0, %v2153
      %v2216 = vsub.f32 0.0, %v2158
      %v2217 = vsub.f32 0.0, %v2163
      %v2218 = vsub.f32 0.0, %v2168
      %v2219 = vsub.f32 0.0, %v2173
      %v2220 = vsub.f32 0.0, %v2178
      %v2221 = vsub.f32 0.0, %v2183
      %v2222 = vsub.f32 0.0, %v2188
      %v2223 = vmul.f32 %v2191, 1.442695
      %v2224 = vpow.pop %v2223
      %v2225 = vmul.f32 %v2192, 1.442695
      %v2226 = vpow.pop %v2225
      %v2227 = vmul.f32 %v2193, 1.442695
      %v2228 = vpow.pop %v2227
      %v2229 = vmul.f32 %v2194, 1.442695
      %v2230 = vpow.pop %v2229
      %v2231 = vmul.f32 %v2195, 1.442695
      %v2232 = vpow.pop %v2231
      %v2233 = vmul.f32 %v2196, 1.442695
      %v2234 = vpow.pop %v2233
      %v2235 = vmul.f32 %v2197, 1.442695
      %v2236 = vpow.pop %v2235
      %v2237 = vmul.f32 %v2198, 1.442695
      %v2238 = vpow.pop %v2237
      %v2239 = vmul.f32 %v2199, 1.442695
      %v2240 = vpow.pop %v2239
      %v2241 = vmul.f32 %v2200, 1.442695
      %v2242 = vpow.pop %v2241
      %v2243 = vmul.f32 %v2201, 1.442695
      %v2244 = vpow.pop %v2243
      %v2245 = vmul.f32 %v2202, 1.442695
      %v2246 = vpow.pop %v2245
      %v2247 = vmul.f32 %v2203, 1.442695
      %v2248 = vpow.pop %v2247
      %v2249 = vmul.f32 %v2204, 1.442695
      %v2250 = vpow.pop %v2249
      %v2251 = vmul.f32 %v2205, 1.442695
      %v2252 = vpow.pop %v2251
      %v2253 = vmul.f32 %v2206, 1.442695
      %v2254 = vpow.pop %v2253
      %v2255 = vmul.f32 %v2207, 1.442695
      %v2256 = vpow.pop %v2255
      %v2257 = vmul.f32 %v2208, 1.442695
      %v2258 = vpow.pop %v2257
      %v2259 = vmul.f32 %v2209, 1.442695
      %v2260 = vpow.pop %v2259
      %v2261 = vmul.f32 %v2210, 1.442695
      %v2262 = vpow.pop %v2261
      %v2263 = vmul.f32 %v2211, 1.442695
      %v2264 = vpow.pop %v2263
      %v2265 = vmul.f32 %v2212, 1.442695
      %v2266 = vpow.pop %v2265
      %v2267 = vmul.f32 %v2213, 1.442695
      %v2268 = vpow.pop %v2267
      %v2269 = vmul.f32 %v2214, 1.442695
      %v2270 = vpow.pop %v2269
      %v2271 = vmul.f32 %v2215, 1.442695
      %v2272 = vpow.pop %v2271
      %v2273 = vmul.f32 %v2216, 1.442695
      %v2274 = vpow.pop %v2273
      %v2275 = vmul.f32 %v2217, 1.442695
      %v2276 = vpow.pop %v2275
      %v2277 = vmul.f32 %v2218, 1.442695
      %v2278 = vpow.pop %v2277
      %v2279 = vmul.f32 %v2219, 1.442695
      %v2280 = vpow.pop %v2279
      %v2281 = vmul.f32 %v2220, 1.442695
      %v2282 = vpow.pop %v2281
      %v2283 = vmul.f32 %v2221, 1.442695
      %v2284 = vpow.pop %v2283
      %v2285 = vmul.f32 %v2222, 1.442695
      %v2286 = vpow.pop %v2285
      %v2287 = vadd.f32 %v2224, 1.0
      %v2288 = vadd.f32 %v2226, 1.0
      %v2289 = vadd.f32 %v2228, 1.0
      %v2290 = vadd.f32 %v2230, 1.0
      %v2291 = vadd.f32 %v2232, 1.0
      %v2292 = vadd.f32 %v2234, 1.0
      %v2293 = vadd.f32 %v2236, 1.0
      %v2294 = vadd.f32 %v2238, 1.0
      %v2295 = vadd.f32 %v2240, 1.0
      %v2296 = vadd.f32 %v2242, 1.0
      %v2297 = vadd.f32 %v2244, 1.0
      %v2298 = vadd.f32 %v2246, 1.0
      %v2299 = vadd.f32 %v2248, 1.0
      %v2300 = vadd.f32 %v2250, 1.0
      %v2301 = vadd.f32 %v2252, 1.0
      %v2302 = vadd.f32 %v2254, 1.0
      %v2303 = vadd.f32 %v2256, 1.0
      %v2304 = vadd.f32 %v2258, 1.0
      %v2305 = vadd.f32 %v2260, 1.0
      %v2306 = vadd.f32 %v2262, 1.0
      %v2307 = vadd.f32 %v2264, 1.0
      %v2308 = vadd.f32 %v2266, 1.0
      %v2309 = vadd.f32 %v2268, 1.0
      %v2310 = vadd.f32 %v2270, 1.0
      %v2311 = vadd.f32 %v2272, 1.0
      %v2312 = vadd.f32 %v2274, 1.0
      %v2313 = vadd.f32 %v2276, 1.0
      %v2314 = vadd.f32 %v2278, 1.0
      %v2315 = vadd.f32 %v2280, 1.0
      %v2316 = vadd.f32 %v2282, 1.0
      %v2317 = vadd.f32 %v2284, 1.0
      %v2318 = vadd.f32 %v2286, 1.0
      %v2319 = vrcp.pop %v2287
      %v2320 = vmul.f32 %v2033, %v2319
      %v2321 = vrcp.pop %v2288
      %v2322 = vmul.f32 %v2038, %v2321
      %v2323 = vrcp.pop %v2289
      %v2324 = vmul.f32 %v2043, %v2323
      %v2325 = vrcp.pop %v2290
      %v2326 = vmul.f32 %v2048, %v2325
      %v2327 = vrcp.pop %v2291
      %v2328 = vmul.f32 %v2053, %v2327
      %v2329 = vrcp.pop %v2292
      %v2330 = vmul.f32 %v2058, %v2329
      %v2331 = vrcp.pop %v2293
      %v2332 = vmul.f32 %v2063, %v2331
      %v2333 = vrcp.pop %v2294
      %v2334 = vmul.f32 %v2068, %v2333
      %v2335 = vrcp.pop %v2295
      %v2336 = vmul.f32 %v2073, %v2335
      %v2337 = vrcp.pop %v2296
      %v2338 = vmul.f32 %v2078, %v2337
      %v2339 = vrcp.pop %v2297
      %v2340 = vmul.f32 %v2083, %v2339
      %v2341 = vrcp.pop %v2298
      %v2342 = vmul.f32 %v2088, %v2341
      %v2343 = vrcp.pop %v2299
      %v2344 = vmul.f32 %v2093, %v2343
      %v2345 = vrcp.pop %v2300
      %v2346 = vmul.f32 %v2098, %v2345
      %v2347 = vrcp.pop %v2301
      %v2348 = vmul.f32 %v2103, %v2347
      %v2349 = vrcp.pop %v2302
      %v2350 = vmul.f32 %v2108, %v2349
      %v2351 = vrcp.pop %v2303
      %v2352 = vmul.f32 %v2113, %v2351
      %v2353 = vrcp.pop %v2304
      %v2354 = vmul.f32 %v2118, %v2353
      %v2355 = vrcp.pop %v2305
      %v2356 = vmul.f32 %v2123, %v2355
      %v2357 = vrcp.pop %v2306
      %v2358 = vmul.f32 %v2128, %v2357
      %v2359 = vrcp.pop %v2307
      %v2360 = vmul.f32 %v2133, %v2359
      %v2361 = vrcp.pop %v2308
      %v2362 = vmul.f32 %v2138, %v2361
      %v2363 = vrcp.pop %v2309
      %v2364 = vmul.f32 %v2143, %v2363
      %v2365 = vrcp.pop %v2310
      %v2366 = vmul.f32 %v2148, %v2365
      %v2367 = vrcp.pop %v2311
      %v2368 = vmul.f32 %v2153, %v2367
      %v2369 = vrcp.pop %v2312
      %v2370 = vmul.f32 %v2158, %v2369
      %v2371 = vrcp.pop %v2313
      %v2372 = vmul.f32 %v2163, %v2371
      %v2373 = vrcp.pop %v2314
      %v2374 = vmul.f32 %v2168, %v2373
      %v2375 = vrcp.pop %v2315
      %v2376 = vmul.f32 %v2173, %v2375
      %v2377 = vrcp.pop %v2316
      %v2378 = vmul.f32 %v2178, %v2377
      %v2379 = vrcp.pop %v2317
      %v2380 = vmul.f32 %v2183, %v2379
      %v2381 = vrcp.pop %v2318
      %v2382 = vmul.f32 %v2188, %v2381
      %v2383 = vld [vmem:[%s3] sm:$0xff]
      %v2384 = vld [vmem:[%s3 + $0x8] sm:$0xff]
      %v2385 = vld [vmem:[%s3 + $0x10] sm:$0xff]
      %v2386 = vld [vmem:[%s3 + $0x18] sm:$0xff]
      %v2387 = vld [vmem:[%s3 + $0x20] sm:$0xff]
      %v2388 = vld [vmem:[%s3 + $0x28] sm:$0xff]
      %v2389 = vld [vmem:[%s3 + $0x30] sm:$0xff]
      %v2390 = vld [vmem:[%s3 + $0x38] sm:$0xff]
      %v2391 = vld [vmem:[%s3 + $0x40] sm:$0xff]
      %v2392 = vld [vmem:[%s3 + $0x48] sm:$0xff]
      %v2393 = vld [vmem:[%s3 + $0x50] sm:$0xff]
      %v2394 = vld [vmem:[%s3 + $0x58] sm:$0xff]
      %v2395 = vld [vmem:[%s3 + $0x60] sm:$0xff]
      %v2396 = vld [vmem:[%s3 + $0x68] sm:$0xff]
      %v2397 = vld [vmem:[%s3 + $0x70] sm:$0xff]
      %v2398 = vld [vmem:[%s3 + $0x78] sm:$0xff]
      %v2399 = vld [vmem:[%s4] sm:$0x1]
      %v2401 = vlaneseq
      %v2402 = vshrl.u32 %v2401, 7
      %v2403 = vsub.s32 0, %v2402
      %v2404 = vrot.slane %v2399, %v2403
      %2406 = vmatprep.subr.mxu0 0.0
      %2407 = vmatpush1.msra.mxu0 %v2398
      %2408 = vmatprep.subr.mxu0 0.0
      %2409 = vmatpush1.msra.mxu0 %v2397
      %2410 = vmatprep.subr.mxu0 0.0
      %2411 = vmatpush1.msra.mxu0 %v2396
      %2412 = vmatprep.subr.mxu0 0.0
      %2413 = vmatpush1.msra.mxu0 %v2395
      %2414 = vmatprep.subr.mxu0 0.0
      %2415 = vmatpush1.msra.mxu0 %v2394
      %2416 = vmatprep.subr.mxu0 0.0
      %2417 = vmatpush1.msra.mxu0 %v2393
      %2418 = vmatprep.subr.mxu0 0.0
      %2419 = vmatpush1.msra.mxu0 %v2392
      %2420 = vmatprep.subr.mxu0 0.0
      %2421 = vmatpush1.msra.mxu0 %v2391
      %2422 = vmatprep.subr.mxu0 0.0
      %2423 = vmatpush1.msra.mxu0 %v2390
      %2424 = vmatprep.subr.mxu0 0.0
      %2425 = vmatpush1.msra.mxu0 %v2389
      %2426 = vmatprep.subr.mxu0 0.0
      %2427 = vmatpush1.msra.mxu0 %v2388
      %2428 = vmatprep.subr.mxu0 0.0
      %2429 = vmatpush1.msra.mxu0 %v2387
      %2430 = vmatprep.subr.mxu0 0.0
      %2431 = vmatpush1.msra.mxu0 %v2386
      %2432 = vmatprep.subr.mxu0 0.0
      %2433 = vmatpush1.msra.mxu0 %v2385
      %2434 = vmatprep.subr.mxu0 0.0
      %2435 = vmatpush1.msra.mxu0 %v2384
      %2436 = vmatprep.subr.mxu0 0.0
      %2437 = vmatpush1.msra.mxu0 %v2383
      %2438 = vmatprep.subr.mxu0 0.0
      %2439 = vmatpush2.msra.mxu0 0.0
      %2440 = vmatprep.subr.mxu0 0.0
      %2441 = vmatpush2.msra.mxu0 0.0
      %2442 = vmatprep.subr.mxu0 0.0
      %2443 = vmatpush2.msra.mxu0 0.0
      %2444 = vmatprep.subr.mxu0 0.0
      %2445 = vmatpush2.msra.mxu0 0.0
      %2446 = vmatprep.subr.mxu0 0.0
      %2447 = vmatpush2.msra.mxu0 0.0
      %2448 = vmatprep.subr.mxu0 0.0
      %2449 = vmatpush2.msra.mxu0 0.0
      %2450 = vmatprep.subr.mxu0 0.0
      %2451 = vmatpush2.msra.mxu0 0.0
      %2452 = vmatprep.subr.mxu0 0.0
      %2453 = vmatpush2.msra.mxu0 0.0
      %2454 = vmatprep.subr.mxu0 0.0
      %2455 = vmatpush2.msra.mxu0 0.0
      %2456 = vmatprep.subr.mxu0 0.0
      %2457 = vmatpush2.msra.mxu0 0.0
      %2458 = vmatprep.subr.mxu0 0.0
      %2459 = vmatpush2.msra.mxu0 0.0
      %2460 = vmatprep.subr.mxu0 0.0
      %2461 = vmatpush2.msra.mxu0 0.0
      %2462 = vmatprep.subr.mxu0 0.0
      %2463 = vmatpush2.msra.mxu0 0.0
      %2464 = vmatprep.subr.mxu0 0.0
      %2465 = vmatpush2.msra.mxu0 0.0
      %2466 = vmatprep.subr.mxu0 0.0
      %2467 = vmatpush2.msra.mxu0 0.0
      %2468 = vmatprep.subr.mxu0 0.0
      %2469 = vmatpush2.msra.mxu0 0.0
      %2470 = vmatprep.mubr.f32.mxu0 0.0
      %2471 = vmatmul.mubr.f32.gmra.mxu0 %v2320
      %v2472 = vpop.f32.mrf.mxu0
      %v2473 = vadd.f32 %v2404, %v2472
      %v2474 = vpop.f32.mrf.mxu0
      %2475 = vmatprep.mubr.f32.mxu0 0.0
      %2476 = vmatmul.mubr.f32.gmra.mxu0 %v2322
      %v2477 = vpop.f32.mrf.mxu0
      %v2478 = vadd.f32 %v2404, %v2477
      %v2479 = vpop.f32.mrf.mxu0
      %2480 = vmatprep.mubr.f32.mxu0 0.0
      %2481 = vmatmul.mubr.f32.gmra.mxu0 %v2324
      %v2482 = vpop.f32.mrf.mxu0
      %v2483 = vadd.f32 %v2404, %v2482
      %v2484 = vpop.f32.mrf.mxu0
      %2485 = vmatprep.mubr.f32.mxu0 0.0
      %2486 = vmatmul.mubr.f32.gmra.mxu0 %v2326
      %v2487 = vpop.f32.mrf.mxu0
      %v2488 = vadd.f32 %v2404, %v2487
      %v2489 = vpop.f32.mrf.mxu0
      %2490 = vmatprep.mubr.f32.mxu0 0.0
      %2491 = vmatmul.mubr.f32.gmra.mxu0 %v2328
      %v2492 = vpop.f32.mrf.mxu0
      %v2493 = vadd.f32 %v2404, %v2492
      %v2494 = vpop.f32.mrf.mxu0
      %2495 = vmatprep.mubr.f32.mxu0 0.0
      %2496 = vmatmul.mubr.f32.gmra.mxu0 %v2330
      %v2497 = vpop.f32.mrf.mxu0
      %v2498 = vadd.f32 %v2404, %v2497
      %v2499 = vpop.f32.mrf.mxu0
      %2500 = vmatprep.mubr.f32.mxu0 0.0
      %2501 = vmatmul.mubr.f32.gmra.mxu0 %v2332
      %v2502 = vpop.f32.mrf.mxu0
      %v2503 = vadd.f32 %v2404, %v2502
      %v2504 = vpop.f32.mrf.mxu0
      %2505 = vmatprep.mubr.f32.mxu0 0.0
      %2506 = vmatmul.mubr.f32.gmra.mxu0 %v2334
      %v2507 = vpop.f32.mrf.mxu0
      %v2508 = vadd.f32 %v2404, %v2507
      %v2509 = vpop.f32.mrf.mxu0
      %2510 = vmatprep.mubr.f32.mxu0 0.0
      %2511 = vmatmul.mubr.f32.gmra.mxu0 %v2336
      %v2512 = vpop.f32.mrf.mxu0
      %v2513 = vadd.f32 %v2404, %v2512
      %v2514 = vpop.f32.mrf.mxu0
      %2515 = vmatprep.mubr.f32.mxu0 0.0
      %2516 = vmatmul.mubr.f32.gmra.mxu0 %v2338
      %v2517 = vpop.f32.mrf.mxu0
      %v2518 = vadd.f32 %v2404, %v2517
      %v2519 = vpop.f32.mrf.mxu0
      %2520 = vmatprep.mubr.f32.mxu0 0.0
      %2521 = vmatmul.mubr.f32.gmra.mxu0 %v2340
      %v2522 = vpop.f32.mrf.mxu0
      %v2523 = vadd.f32 %v2404, %v2522
      %v2524 = vpop.f32.mrf.mxu0
      %2525 = vmatprep.mubr.f32.mxu0 0.0
      %2526 = vmatmul.mubr.f32.gmra.mxu0 %v2342
      %v2527 = vpop.f32.mrf.mxu0
      %v2528 = vadd.f32 %v2404, %v2527
      %v2529 = vpop.f32.mrf.mxu0
      %2530 = vmatprep.mubr.f32.mxu0 0.0
      %2531 = vmatmul.mubr.f32.gmra.mxu0 %v2344
      %v2532 = vpop.f32.mrf.mxu0
      %v2533 = vadd.f32 %v2404, %v2532
      %v2534 = vpop.f32.mrf.mxu0
      %2535 = vmatprep.mubr.f32.mxu0 0.0
      %2536 = vmatmul.mubr.f32.gmra.mxu0 %v2346
      %v2537 = vpop.f32.mrf.mxu0
      %v2538 = vadd.f32 %v2404, %v2537
      %v2539 = vpop.f32.mrf.mxu0
      %2540 = vmatprep.mubr.f32.mxu0 0.0
      %2541 = vmatmul.mubr.f32.gmra.mxu0 %v2348
      %v2542 = vpop.f32.mrf.mxu0
      %v2543 = vadd.f32 %v2404, %v2542
      %v2544 = vpop.f32.mrf.mxu0
      %2545 = vmatprep.mubr.f32.mxu0 0.0
      %2546 = vmatmul.mubr.f32.gmra.mxu0 %v2350
      %v2547 = vpop.f32.mrf.mxu0
      %v2548 = vadd.f32 %v2404, %v2547
      %v2549 = vpop.f32.mrf.mxu0
      %2550 = vmatprep.mubr.f32.mxu0 0.0
      %2551 = vmatmul.mubr.f32.gmra.mxu0 %v2352
      %v2552 = vpop.f32.mrf.mxu0
      %v2553 = vadd.f32 %v2404, %v2552
      %v2554 = vpop.f32.mrf.mxu0
      %2555 = vmatprep.mubr.f32.mxu0 0.0
      %2556 = vmatmul.mubr.f32.gmra.mxu0 %v2354
      %v2557 = vpop.f32.mrf.mxu0
      %v2558 = vadd.f32 %v2404, %v2557
      %v2559 = vpop.f32.mrf.mxu0
      %2560 = vmatprep.mubr.f32.mxu0 0.0
      %2561 = vmatmul.mubr.f32.gmra.mxu0 %v2356
      %v2562 = vpop.f32.mrf.mxu0
      %v2563 = vadd.f32 %v2404, %v2562
      %v2564 = vpop.f32.mrf.mxu0
      %2565 = vmatprep.mubr.f32.mxu0 0.0
      %2566 = vmatmul.mubr.f32.gmra.mxu0 %v2358
      %v2567 = vpop.f32.mrf.mxu0
      %v2568 = vadd.f32 %v2404, %v2567
      %v2569 = vpop.f32.mrf.mxu0
      %2570 = vmatprep.mubr.f32.mxu0 0.0
      %2571 = vmatmul.mubr.f32.gmra.mxu0 %v2360
      %v2572 = vpop.f32.mrf.mxu0
      %v2573 = vadd.f32 %v2404, %v2572
      %v2574 = vpop.f32.mrf.mxu0
      %2575 = vmatprep.mubr.f32.mxu0 0.0
      %2576 = vmatmul.mubr.f32.gmra.mxu0 %v2362
      %v2577 = vpop.f32.mrf.mxu0
      %v2578 = vadd.f32 %v2404, %v2577
      %v2579 = vpop.f32.mrf.mxu0
      %2580 = vmatprep.mubr.f32.mxu0 0.0
      %2581 = vmatmul.mubr.f32.gmra.mxu0 %v2364
      %v2582 = vpop.f32.mrf.mxu0
      %v2583 = vadd.f32 %v2404, %v2582
      %v2584 = vpop.f32.mrf.mxu0
      %2585 = vmatprep.mubr.f32.mxu0 0.0
      %2586 = vmatmul.mubr.f32.gmra.mxu0 %v2366
      %v2587 = vpop.f32.mrf.mxu0
      %v2588 = vadd.f32 %v2404, %v2587
      %v2589 = vpop.f32.mrf.mxu0
      %2590 = vmatprep.mubr.f32.mxu0 0.0
      %2591 = vmatmul.mubr.f32.gmra.mxu0 %v2368
      %v2592 = vpop.f32.mrf.mxu0
      %v2593 = vadd.f32 %v2404, %v2592
      %v2594 = vpop.f32.mrf.mxu0
      %2595 = vmatprep.mubr.f32.mxu0 0.0
      %2596 = vmatmul.mubr.f32.gmra.mxu0 %v2370
      %v2597 = vpop.f32.mrf.mxu0
      %v2598 = vadd.f32 %v2404, %v2597
      %v2599 = vpop.f32.mrf.mxu0
      %2600 = vmatprep.mubr.f32.mxu0 0.0
      %2601 = vmatmul.mubr.f32.gmra.mxu0 %v2372
      %v2602 = vpop.f32.mrf.mxu0
      %v2603 = vadd.f32 %v2404, %v2602
      %v2604 = vpop.f32.mrf.mxu0
      %2605 = vmatprep.mubr.f32.mxu0 0.0
      %2606 = vmatmul.mubr.f32.gmra.mxu0 %v2374
      %v2607 = vpop.f32.mrf.mxu0
      %v2608 = vadd.f32 %v2404, %v2607
      %v2609 = vpop.f32.mrf.mxu0
      %2610 = vmatprep.mubr.f32.mxu0 0.0
      %2611 = vmatmul.mubr.f32.gmra.mxu0 %v2376
      %v2612 = vpop.f32.mrf.mxu0
      %v2613 = vadd.f32 %v2404, %v2612
      %v2614 = vpop.f32.mrf.mxu0
      %2615 = vmatprep.mubr.f32.mxu0 0.0
      %2616 = vmatmul.mubr.f32.gmra.mxu0 %v2378
      %v2617 = vpop.f32.mrf.mxu0
      %v2618 = vadd.f32 %v2404, %v2617
      %v2619 = vpop.f32.mrf.mxu0
      %2620 = vmatprep.mubr.f32.mxu0 0.0
      %2621 = vmatmul.mubr.f32.gmra.mxu0 %v2380
      %v2622 = vpop.f32.mrf.mxu0
      %v2623 = vadd.f32 %v2404, %v2622
      %v2624 = vpop.f32.mrf.mxu0
      %2625 = vmatprep.mubr.f32.mxu0 0.0
      %2626 = vmatmul.mubr.f32.gmra.mxu0 %v2382
      %v2627 = vpop.f32.mrf.mxu0
      %v2628 = vadd.f32 %v2404, %v2627
      %v2629 = vpop.f32.mrf.mxu0
      %2630 = vdwg.mxu0
      %v2631 = vsub.f32 0.0, %v2473
      %v2632 = vsub.f32 0.0, %v2478
      %v2633 = vsub.f32 0.0, %v2483
      %v2634 = vsub.f32 0.0, %v2488
      %v2635 = vsub.f32 0.0, %v2493
      %v2636 = vsub.f32 0.0, %v2498
      %v2637 = vsub.f32 0.0, %v2503
      %v2638 = vsub.f32 0.0, %v2508
      %v2639 = vsub.f32 0.0, %v2513
      %v2640 = vsub.f32 0.0, %v2518
      %v2641 = vsub.f32 0.0, %v2523
      %v2642 = vsub.f32 0.0, %v2528
      %v2643 = vsub.f32 0.0, %v2533
      %v2644 = vsub.f32 0.0, %v2538
      %v2645 = vsub.f32 0.0, %v2543
      %v2646 = vsub.f32 0.0, %v2548
      %v2647 = vsub.f32 0.0, %v2553
      %v2648 = vsub.f32 0.0, %v2558
      %v2649 = vsub.f32 0.0, %v2563
      %v2650 = vsub.f32 0.0, %v2568
      %v2651 = vsub.f32 0.0, %v2573
      %v2652 = vsub.f32 0.0, %v2578
      %v2653 = vsub.f32 0.0, %v2583
      %v2654 = vsub.f32 0.0, %v2588
      %v2655 = vsub.f32 0.0, %v2593
      %v2656 = vsub.f32 0.0, %v2598
      %v2657 = vsub.f32 0.0, %v2603
      %v2658 = vsub.f32 0.0, %v2608
      %v2659 = vsub.f32 0.0, %v2613
      %v2660 = vsub.f32 0.0, %v2618
      %v2661 = vsub.f32 0.0, %v2623
      %v2662 = vsub.f32 0.0, %v2628
      %v2663 = vmul.f32 %v2631, 1.442695
      %v2664 = vpow.pop %v2663
      %v2665 = vmul.f32 %v2632, 1.442695
      %v2666 = vpow.pop %v2665
      %v2667 = vmul.f32 %v2633, 1.442695
      %v2668 = vpow.pop %v2667
      %v2669 = vmul.f32 %v2634, 1.442695
      %v2670 = vpow.pop %v2669
      %v2671 = vmul.f32 %v2635, 1.442695
      %v2672 = vpow.pop %v2671
      %v2673 = vmul.f32 %v2636, 1.442695
      %v2674 = vpow.pop %v2673
      %v2675 = vmul.f32 %v2637, 1.442695
      %v2676 = vpow.pop %v2675
      %v2677 = vmul.f32 %v2638, 1.442695
      %v2678 = vpow.pop %v2677
      %v2679 = vmul.f32 %v2639, 1.442695
      %v2680 = vpow.pop %v2679
      %v2681 = vmul.f32 %v2640, 1.442695
      %v2682 = vpow.pop %v2681
      %v2683 = vmul.f32 %v2641, 1.442695
      %v2684 = vpow.pop %v2683
      %v2685 = vmul.f32 %v2642, 1.442695
      %v2686 = vpow.pop %v2685
      %v2687 = vmul.f32 %v2643, 1.442695
      %v2688 = vpow.pop %v2687
      %v2689 = vmul.f32 %v2644, 1.442695
      %v2690 = vpow.pop %v2689
      %v2691 = vmul.f32 %v2645, 1.442695
      %v2692 = vpow.pop %v2691
      %v2693 = vmul.f32 %v2646, 1.442695
      %v2694 = vpow.pop %v2693
      %v2695 = vmul.f32 %v2647, 1.442695
      %v2696 = vpow.pop %v2695
      %v2697 = vmul.f32 %v2648, 1.442695
      %v2698 = vpow.pop %v2697
      %v2699 = vmul.f32 %v2649, 1.442695
      %v2700 = vpow.pop %v2699
      %v2701 = vmul.f32 %v2650, 1.442695
      %v2702 = vpow.pop %v2701
      %v2703 = vmul.f32 %v2651, 1.442695
      %v2704 = vpow.pop %v2703
      %v2705 = vmul.f32 %v2652, 1.442695
      %v2706 = vpow.pop %v2705
      %v2707 = vmul.f32 %v2653, 1.442695
      %v2708 = vpow.pop %v2707
      %v2709 = vmul.f32 %v2654, 1.442695
      %v2710 = vpow.pop %v2709
      %v2711 = vmul.f32 %v2655, 1.442695
      %v2712 = vpow.pop %v2711
      %v2713 = vmul.f32 %v2656, 1.442695
      %v2714 = vpow.pop %v2713
      %v2715 = vmul.f32 %v2657, 1.442695
      %v2716 = vpow.pop %v2715
      %v2717 = vmul.f32 %v2658, 1.442695
      %v2718 = vpow.pop %v2717
      %v2719 = vmul.f32 %v2659, 1.442695
      %v2720 = vpow.pop %v2719
      %v2721 = vmul.f32 %v2660, 1.442695
      %v2722 = vpow.pop %v2721
      %v2723 = vmul.f32 %v2661, 1.442695
      %v2724 = vpow.pop %v2723
      %v2725 = vmul.f32 %v2662, 1.442695
      %v2726 = vpow.pop %v2725
      %v2727 = vadd.f32 %v2664, 1.0
      %v2728 = vadd.f32 %v2666, 1.0
      %v2729 = vadd.f32 %v2668, 1.0
      %v2730 = vadd.f32 %v2670, 1.0
      %v2731 = vadd.f32 %v2672, 1.0
      %v2732 = vadd.f32 %v2674, 1.0
      %v2733 = vadd.f32 %v2676, 1.0
      %v2734 = vadd.f32 %v2678, 1.0
      %v2735 = vadd.f32 %v2680, 1.0
      %v2736 = vadd.f32 %v2682, 1.0
      %v2737 = vadd.f32 %v2684, 1.0
      %v2738 = vadd.f32 %v2686, 1.0
      %v2739 = vadd.f32 %v2688, 1.0
      %v2740 = vadd.f32 %v2690, 1.0
      %v2741 = vadd.f32 %v2692, 1.0
      %v2742 = vadd.f32 %v2694, 1.0
      %v2743 = vadd.f32 %v2696, 1.0
      %v2744 = vadd.f32 %v2698, 1.0
      %v2745 = vadd.f32 %v2700, 1.0
      %v2746 = vadd.f32 %v2702, 1.0
      %v2747 = vadd.f32 %v2704, 1.0
      %v2748 = vadd.f32 %v2706, 1.0
      %v2749 = vadd.f32 %v2708, 1.0
      %v2750 = vadd.f32 %v2710, 1.0
      %v2751 = vadd.f32 %v2712, 1.0
      %v2752 = vadd.f32 %v2714, 1.0
      %v2753 = vadd.f32 %v2716, 1.0
      %v2754 = vadd.f32 %v2718, 1.0
      %v2755 = vadd.f32 %v2720, 1.0
      %v2756 = vadd.f32 %v2722, 1.0
      %v2757 = vadd.f32 %v2724, 1.0
      %v2758 = vadd.f32 %v2726, 1.0
      %v2759 = vrcp.pop %v2727
      %v2760 = vmul.f32 %v2473, %v2759
      %v2761 = vrcp.pop %v2728
      %v2762 = vmul.f32 %v2478, %v2761
      %v2763 = vrcp.pop %v2729
      %v2764 = vmul.f32 %v2483, %v2763
      %v2765 = vrcp.pop %v2730
      %v2766 = vmul.f32 %v2488, %v2765
      %v2767 = vrcp.pop %v2731
      %v2768 = vmul.f32 %v2493, %v2767
      %v2769 = vrcp.pop %v2732
      %v2770 = vmul.f32 %v2498, %v2769
      %v2771 = vrcp.pop %v2733
      %v2772 = vmul.f32 %v2503, %v2771
      %v2773 = vrcp.pop %v2734
      %v2774 = vmul.f32 %v2508, %v2773
      %v2775 = vrcp.pop %v2735
      %v2776 = vmul.f32 %v2513, %v2775
      %v2777 = vrcp.pop %v2736
      %v2778 = vmul.f32 %v2518, %v2777
      %v2779 = vrcp.pop %v2737
      %v2780 = vmul.f32 %v2523, %v2779
      %v2781 = vrcp.pop %v2738
      %v2782 = vmul.f32 %v2528, %v2781
      %v2783 = vrcp.pop %v2739
      %v2784 = vmul.f32 %v2533, %v2783
      %v2785 = vrcp.pop %v2740
      %v2786 = vmul.f32 %v2538, %v2785
      %v2787 = vrcp.pop %v2741
      %v2788 = vmul.f32 %v2543, %v2787
      %v2789 = vrcp.pop %v2742
      %v2790 = vmul.f32 %v2548, %v2789
      %v2791 = vrcp.pop %v2743
      %v2792 = vmul.f32 %v2553, %v2791
      %v2793 = vrcp.pop %v2744
      %v2794 = vmul.f32 %v2558, %v2793
      %v2795 = vrcp.pop %v2745
      %v2796 = vmul.f32 %v2563, %v2795
      %v2797 = vrcp.pop %v2746
      %v2798 = vmul.f32 %v2568, %v2797
      %v2799 = vrcp.pop %v2747
      %v2800 = vmul.f32 %v2573, %v2799
      %v2801 = vrcp.pop %v2748
      %v2802 = vmul.f32 %v2578, %v2801
      %v2803 = vrcp.pop %v2749
      %v2804 = vmul.f32 %v2583, %v2803
      %v2805 = vrcp.pop %v2750
      %v2806 = vmul.f32 %v2588, %v2805
      %v2807 = vrcp.pop %v2751
      %v2808 = vmul.f32 %v2593, %v2807
      %v2809 = vrcp.pop %v2752
      %v2810 = vmul.f32 %v2598, %v2809
      %v2811 = vrcp.pop %v2753
      %v2812 = vmul.f32 %v2603, %v2811
      %v2813 = vrcp.pop %v2754
      %v2814 = vmul.f32 %v2608, %v2813
      %v2815 = vrcp.pop %v2755
      %v2816 = vmul.f32 %v2613, %v2815
      %v2817 = vrcp.pop %v2756
      %v2818 = vmul.f32 %v2618, %v2817
      %v2819 = vrcp.pop %v2757
      %v2820 = vmul.f32 %v2623, %v2819
      %v2821 = vrcp.pop %v2758
      %v2822 = vmul.f32 %v2628, %v2821
      %s2823 = scalar_lea.vmem %s224, 256
      %2824 = vst.msk [vmem:[%s2823] sm:$0xff] %vm1636, %v2760
      %2825 = vst.msk [vmem:[%s2823 + $0x8] sm:$0xff] %vm1636, %v2762
      %2826 = vst.msk [vmem:[%s2823 + $0x10] sm:$0xff] %vm1636, %v2764
      %2827 = vst.msk [vmem:[%s2823 + $0x18] sm:$0xff] %vm1636, %v2766
      %2828 = vst.msk [vmem:[%s2823 + $0x20] sm:$0xff] %vm1636, %v2768
      %2829 = vst.msk [vmem:[%s2823 + $0x28] sm:$0xff] %vm1636, %v2770
      %2830 = vst.msk [vmem:[%s2823 + $0x30] sm:$0xff] %vm1636, %v2772
      %2831 = vst.msk [vmem:[%s2823 + $0x38] sm:$0xff] %vm1636, %v2774
      %2832 = vst.msk [vmem:[%s2823 + $0x40] sm:$0xff] %vm1636, %v2776
      %2833 = vst.msk [vmem:[%s2823 + $0x48] sm:$0xff] %vm1636, %v2778
      %2834 = vst.msk [vmem:[%s2823 + $0x50] sm:$0xff] %vm1636, %v2780
      %2835 = vst.msk [vmem:[%s2823 + $0x58] sm:$0xff] %vm1636, %v2782
      %2836 = vst.msk [vmem:[%s2823 + $0x60] sm:$0xff] %vm1636, %v2784
      %2837 = vst.msk [vmem:[%s2823 + $0x68] sm:$0xff] %vm1636, %v2786
      %2838 = vst.msk [vmem:[%s2823 + $0x70] sm:$0xff] %vm1636, %v2788
      %2839 = vst.msk [vmem:[%s2823 + $0x78] sm:$0xff] %vm1636, %v2790
      %2840 = vst.msk [vmem:[%s2823 + $0x80] sm:$0xff] %vm1636, %v2792
      %2841 = vst.msk [vmem:[%s2823 + $0x88] sm:$0xff] %vm1636, %v2794
      %2842 = vst.msk [vmem:[%s2823 + $0x90] sm:$0xff] %vm1636, %v2796
      %2843 = vst.msk [vmem:[%s2823 + $0x98] sm:$0xff] %vm1636, %v2798
      %2844 = vst.msk [vmem:[%s2823 + $0xa0] sm:$0xff] %vm1636, %v2800
      %2845 = vst.msk [vmem:[%s2823 + $0xa8] sm:$0xff] %vm1636, %v2802
      %2846 = vst.msk [vmem:[%s2823 + $0xb0] sm:$0xff] %vm1636, %v2804
      %2847 = vst.msk [vmem:[%s2823 + $0xb8] sm:$0xff] %vm1636, %v2806
      %2848 = vst.msk [vmem:[%s2823 + $0xc0] sm:$0xff] %vm1636, %v2808
      %2849 = vst.msk [vmem:[%s2823 + $0xc8] sm:$0xff] %vm1636, %v2810
      %2850 = vst.msk [vmem:[%s2823 + $0xd0] sm:$0xff] %vm1636, %v2812
      %2851 = vst.msk [vmem:[%s2823 + $0xd8] sm:$0xff] %vm1636, %v2814
      %2852 = vst.msk [vmem:[%s2823 + $0xe0] sm:$0xff] %vm1636, %v2816
      %2853 = vst.msk [vmem:[%s2823 + $0xe8] sm:$0xff] %vm1636, %v2818
      %2854 = vst.msk [vmem:[%s2823 + $0xf0] sm:$0xff] %vm1636, %v2820
      %2855 = vst.msk [vmem:[%s2823 + $0xf8] sm:$0xff] %vm1636, %v2822
      %s2856 = scalar_lea.vmem %s1, 1024
      %v2857 = vld [vmem:[%s2856] sm:$0xff]
      %v2858 = vld [vmem:[%s2856 + $0x8] sm:$0xff]
      %v2859 = vld [vmem:[%s2856 + $0x10] sm:$0xff]
      %v2860 = vld [vmem:[%s2856 + $0x18] sm:$0xff]
      %v2861 = vld [vmem:[%s2856 + $0x20] sm:$0xff]
      %v2862 = vld [vmem:[%s2856 + $0x28] sm:$0xff]
      %v2863 = vld [vmem:[%s2856 + $0x30] sm:$0xff]
      %v2864 = vld [vmem:[%s2856 + $0x38] sm:$0xff]
      %v2865 = vld [vmem:[%s2856 + $0x40] sm:$0xff]
      %v2866 = vld [vmem:[%s2856 + $0x48] sm:$0xff]
      %v2867 = vld [vmem:[%s2856 + $0x50] sm:$0xff]
      %v2868 = vld [vmem:[%s2856 + $0x58] sm:$0xff]
      %v2869 = vld [vmem:[%s2856 + $0x60] sm:$0xff]
      %v2870 = vld [vmem:[%s2856 + $0x68] sm:$0xff]
      %v2871 = vld [vmem:[%s2856 + $0x70] sm:$0xff]
      %v2872 = vld [vmem:[%s2856 + $0x78] sm:$0xff]
      %v2873 = vld [vmem:[%s2856 + $0x80] sm:$0xff]
      %v2874 = vld [vmem:[%s2856 + $0x88] sm:$0xff]
      %v2875 = vld [vmem:[%s2856 + $0x90] sm:$0xff]
      %v2876 = vld [vmem:[%s2856 + $0x98] sm:$0xff]
      %v2877 = vld [vmem:[%s2856 + $0xa0] sm:$0xff]
      %v2878 = vld [vmem:[%s2856 + $0xa8] sm:$0xff]
      %v2879 = vld [vmem:[%s2856 + $0xb0] sm:$0xff]
      %v2880 = vld [vmem:[%s2856 + $0xb8] sm:$0xff]
      %v2881 = vld [vmem:[%s2856 + $0xc0] sm:$0xff]
      %v2882 = vld [vmem:[%s2856 + $0xc8] sm:$0xff]
      %v2883 = vld [vmem:[%s2856 + $0xd0] sm:$0xff]
      %v2884 = vld [vmem:[%s2856 + $0xd8] sm:$0xff]
      %v2885 = vld [vmem:[%s2856 + $0xe0] sm:$0xff]
      %v2886 = vld [vmem:[%s2856 + $0xe8] sm:$0xff]
      %v2887 = vld [vmem:[%s2856 + $0xf0] sm:$0xff]
      %v2888 = vld [vmem:[%s2856 + $0xf8] sm:$0xff]
      %v2889 = vld [vmem:[%s2856 + $0x100] sm:$0xff]
      %v2890 = vld [vmem:[%s2856 + $0x108] sm:$0xff]
      %v2891 = vld [vmem:[%s2856 + $0x110] sm:$0xff]
      %v2892 = vld [vmem:[%s2856 + $0x118] sm:$0xff]
      %v2893 = vld [vmem:[%s2856 + $0x120] sm:$0xff]
      %v2894 = vld [vmem:[%s2856 + $0x128] sm:$0xff]
      %v2895 = vld [vmem:[%s2856 + $0x130] sm:$0xff]
      %v2896 = vld [vmem:[%s2856 + $0x138] sm:$0xff]
      %v2897 = vld [vmem:[%s2856 + $0x140] sm:$0xff]
      %v2898 = vld [vmem:[%s2856 + $0x148] sm:$0xff]
      %v2899 = vld [vmem:[%s2856 + $0x150] sm:$0xff]
      %v2900 = vld [vmem:[%s2856 + $0x158] sm:$0xff]
      %v2901 = vld [vmem:[%s2856 + $0x160] sm:$0xff]
      %v2902 = vld [vmem:[%s2856 + $0x168] sm:$0xff]
      %v2903 = vld [vmem:[%s2856 + $0x170] sm:$0xff]
      %v2904 = vld [vmem:[%s2856 + $0x178] sm:$0xff]
      %v2905 = vld [vmem:[%s2856 + $0x180] sm:$0xff]
      %v2906 = vld [vmem:[%s2856 + $0x188] sm:$0xff]
      %v2907 = vld [vmem:[%s2856 + $0x190] sm:$0xff]
      %v2908 = vld [vmem:[%s2856 + $0x198] sm:$0xff]
      %v2909 = vld [vmem:[%s2856 + $0x1a0] sm:$0xff]
      %v2910 = vld [vmem:[%s2856 + $0x1a8] sm:$0xff]
      %v2911 = vld [vmem:[%s2856 + $0x1b0] sm:$0xff]
      %v2912 = vld [vmem:[%s2856 + $0x1b8] sm:$0xff]
      %v2913 = vld [vmem:[%s2856 + $0x1c0] sm:$0xff]
      %v2914 = vld [vmem:[%s2856 + $0x1c8] sm:$0xff]
      %v2915 = vld [vmem:[%s2856 + $0x1d0] sm:$0xff]
      %v2916 = vld [vmem:[%s2856 + $0x1d8] sm:$0xff]
      %v2917 = vld [vmem:[%s2856 + $0x1e0] sm:$0xff]
      %v2918 = vld [vmem:[%s2856 + $0x1e8] sm:$0xff]
      %v2919 = vld [vmem:[%s2856 + $0x1f0] sm:$0xff]
      %v2920 = vld [vmem:[%s2856 + $0x1f8] sm:$0xff]
      %v2921 = vld [vmem:[%s2] sm:$0x1]
      %v2923 = vlaneseq
      %v2924 = vshrl.u32 %v2923, 7
      %v2925 = vsub.s32 0, %v2924
      %v2926 = vrot.slane %v2921, %v2925
      %2928 = vmatprep.subr.mxu0 0.0
      %2929 = vmatpush1.msra.mxu0 %v2872
      %2930 = vmatprep.subr.mxu0 0.0
      %2931 = vmatpush1.msra.mxu0 %v2871
      %2932 = vmatprep.subr.mxu0 0.0
      %2933 = vmatpush1.msra.mxu0 %v2870
      %2934 = vmatprep.subr.mxu0 0.0
      %2935 = vmatpush1.msra.mxu0 %v2869
      %2936 = vmatprep.subr.mxu0 0.0
      %2937 = vmatpush1.msra.mxu0 %v2868
      %2938 = vmatprep.subr.mxu0 0.0
      %2939 = vmatpush1.msra.mxu0 %v2867
      %2940 = vmatprep.subr.mxu0 0.0
      %2941 = vmatpush1.msra.mxu0 %v2866
      %2942 = vmatprep.subr.mxu0 0.0
      %2943 = vmatpush1.msra.mxu0 %v2865
      %2944 = vmatprep.subr.mxu0 0.0
      %2945 = vmatpush1.msra.mxu0 %v2864
      %2946 = vmatprep.subr.mxu0 0.0
      %2947 = vmatpush1.msra.mxu0 %v2863
      %2948 = vmatprep.subr.mxu0 0.0
      %2949 = vmatpush1.msra.mxu0 %v2862
      %2950 = vmatprep.subr.mxu0 0.0
      %2951 = vmatpush1.msra.mxu0 %v2861
      %2952 = vmatprep.subr.mxu0 0.0
      %2953 = vmatpush1.msra.mxu0 %v2860
      %2954 = vmatprep.subr.mxu0 0.0
      %2955 = vmatpush1.msra.mxu0 %v2859
      %2956 = vmatprep.subr.mxu0 0.0
      %2957 = vmatpush1.msra.mxu0 %v2858
      %2958 = vmatprep.subr.mxu0 0.0
      %2959 = vmatpush1.msra.mxu0 %v2857
      %2960 = vmatprep.subr.mxu0 0.0
      %2961 = vmatpush2.msra.mxu0 %v2888
      %2962 = vmatprep.subr.mxu0 0.0
      %2963 = vmatpush2.msra.mxu0 %v2887
      %2964 = vmatprep.subr.mxu0 0.0
      %2965 = vmatpush2.msra.mxu0 %v2886
      %2966 = vmatprep.subr.mxu0 0.0
      %2967 = vmatpush2.msra.mxu0 %v2885
      %2968 = vmatprep.subr.mxu0 0.0
      %2969 = vmatpush2.msra.mxu0 %v2884
      %2970 = vmatprep.subr.mxu0 0.0
      %2971 = vmatpush2.msra.mxu0 %v2883
      %2972 = vmatprep.subr.mxu0 0.0
      %2973 = vmatpush2.msra.mxu0 %v2882
      %2974 = vmatprep.subr.mxu0 0.0
      %2975 = vmatpush2.msra.mxu0 %v2881
      %2976 = vmatprep.subr.mxu0 0.0
      %2977 = vmatpush2.msra.mxu0 %v2880
      %2978 = vmatprep.subr.mxu0 0.0
      %2979 = vmatpush2.msra.mxu0 %v2879
      %2980 = vmatprep.subr.mxu0 0.0
      %2981 = vmatpush2.msra.mxu0 %v2878
      %2982 = vmatprep.subr.mxu0 0.0
      %2983 = vmatpush2.msra.mxu0 %v2877
      %2984 = vmatprep.subr.mxu0 0.0
      %2985 = vmatpush2.msra.mxu0 %v2876
      %2986 = vmatprep.subr.mxu0 0.0
      %2987 = vmatpush2.msra.mxu0 %v2875
      %2988 = vmatprep.subr.mxu0 0.0
      %2989 = vmatpush2.msra.mxu0 %v2874
      %2990 = vmatprep.subr.mxu0 0.0
      %2991 = vmatpush2.msra.mxu0 %v2873
      %2992 = vmatprep.mubr.f32.mxu0 %v225
      %2993 = vmatmul.mubr.f32.gmra.mxu0 %v370
      %v2994 = vpop.f32.mrf.mxu0
      %v2995 = vadd.f32 %v2926, %v2994
      %v2996 = vpop.f32.mrf.mxu0
      %2997 = vmatprep.mubr.f32.mxu0 %v226
      %2998 = vmatmul.mubr.f32.gmra.mxu0 %v292
      %v2999 = vpop.f32.mrf.mxu0
      %v3000 = vadd.f32 %v2926, %v2999
      %v3001 = vpop.f32.mrf.mxu0
      %3002 = vmatprep.mubr.f32.mxu0 %v227
      %3003 = vmatmul.mubr.f32.gmra.mxu0 %v371
      %v3004 = vpop.f32.mrf.mxu0
      %v3005 = vadd.f32 %v2926, %v3004
      %v3006 = vpop.f32.mrf.mxu0
      %3007 = vmatprep.mubr.f32.mxu0 %v228
      %3008 = vmatmul.mubr.f32.gmra.mxu0 %v295
      %v3009 = vpop.f32.mrf.mxu0
      %v3010 = vadd.f32 %v2926, %v3009
      %v3011 = vpop.f32.mrf.mxu0
      %3012 = vmatprep.mubr.f32.mxu0 %v229
      %3013 = vmatmul.mubr.f32.gmra.mxu0 %v372
      %v3014 = vpop.f32.mrf.mxu0
      %v3015 = vadd.f32 %v2926, %v3014
      %v3016 = vpop.f32.mrf.mxu0
      %3017 = vmatprep.mubr.f32.mxu0 %v230
      %3018 = vmatmul.mubr.f32.gmra.mxu0 %v298
      %v3019 = vpop.f32.mrf.mxu0
      %v3020 = vadd.f32 %v2926, %v3019
      %v3021 = vpop.f32.mrf.mxu0
      %3022 = vmatprep.mubr.f32.mxu0 %v231
      %3023 = vmatmul.mubr.f32.gmra.mxu0 %v373
      %v3024 = vpop.f32.mrf.mxu0
      %v3025 = vadd.f32 %v2926, %v3024
      %v3026 = vpop.f32.mrf.mxu0
      %3027 = vmatprep.mubr.f32.mxu0 %v232
      %3028 = vmatmul.mubr.f32.gmra.mxu0 %v301
      %v3029 = vpop.f32.mrf.mxu0
      %v3030 = vadd.f32 %v2926, %v3029
      %v3031 = vpop.f32.mrf.mxu0
      %3032 = vmatprep.mubr.f32.mxu0 %v233
      %3033 = vmatmul.mubr.f32.gmra.mxu0 %v374
      %v3034 = vpop.f32.mrf.mxu0
      %v3035 = vadd.f32 %v2926, %v3034
      %v3036 = vpop.f32.mrf.mxu0
      %3037 = vmatprep.mubr.f32.mxu0 %v234
      %3038 = vmatmul.mubr.f32.gmra.mxu0 %v304
      %v3039 = vpop.f32.mrf.mxu0
      %v3040 = vadd.f32 %v2926, %v3039
      %v3041 = vpop.f32.mrf.mxu0
      %3042 = vmatprep.mubr.f32.mxu0 %v235
      %3043 = vmatmul.mubr.f32.gmra.mxu0 %v375
      %v3044 = vpop.f32.mrf.mxu0
      %v3045 = vadd.f32 %v2926, %v3044
      %v3046 = vpop.f32.mrf.mxu0
      %3047 = vmatprep.mubr.f32.mxu0 %v236
      %3048 = vmatmul.mubr.f32.gmra.mxu0 %v307
      %v3049 = vpop.f32.mrf.mxu0
      %v3050 = vadd.f32 %v2926, %v3049
      %v3051 = vpop.f32.mrf.mxu0
      %3052 = vmatprep.mubr.f32.mxu0 %v237
      %3053 = vmatmul.mubr.f32.gmra.mxu0 %v376
      %v3054 = vpop.f32.mrf.mxu0
      %v3055 = vadd.f32 %v2926, %v3054
      %v3056 = vpop.f32.mrf.mxu0
      %3057 = vmatprep.mubr.f32.mxu0 %v238
      %3058 = vmatmul.mubr.f32.gmra.mxu0 %v310
      %v3059 = vpop.f32.mrf.mxu0
      %v3060 = vadd.f32 %v2926, %v3059
      %v3061 = vpop.f32.mrf.mxu0
      %3062 = vmatprep.mubr.f32.mxu0 %v239
      %3063 = vmatmul.mubr.f32.gmra.mxu0 %v377
      %v3064 = vpop.f32.mrf.mxu0
      %v3065 = vadd.f32 %v2926, %v3064
      %v3066 = vpop.f32.mrf.mxu0
      %3067 = vmatprep.mubr.f32.mxu0 %v240
      %3068 = vmatmul.mubr.f32.gmra.mxu0 %v313
      %v3069 = vpop.f32.mrf.mxu0
      %v3070 = vadd.f32 %v2926, %v3069
      %v3071 = vpop.f32.mrf.mxu0
      %3072 = vmatprep.mubr.f32.mxu0 %v241
      %3073 = vmatmul.mubr.f32.gmra.mxu0 %v378
      %v3074 = vpop.f32.mrf.mxu0
      %v3075 = vadd.f32 %v2926, %v3074
      %v3076 = vpop.f32.mrf.mxu0
      %3077 = vmatprep.mubr.f32.mxu0 %v242
      %3078 = vmatmul.mubr.f32.gmra.mxu0 %v316
      %v3079 = vpop.f32.mrf.mxu0
      %v3080 = vadd.f32 %v2926, %v3079
      %v3081 = vpop.f32.mrf.mxu0
      %3082 = vmatprep.mubr.f32.mxu0 %v243
      %3083 = vmatmul.mubr.f32.gmra.mxu0 %v379
      %v3084 = vpop.f32.mrf.mxu0
      %v3085 = vadd.f32 %v2926, %v3084
      %v3086 = vpop.f32.mrf.mxu0
      %3087 = vmatprep.mubr.f32.mxu0 %v244
      %3088 = vmatmul.mubr.f32.gmra.mxu0 %v319
      %v3089 = vpop.f32.mrf.mxu0
      %v3090 = vadd.f32 %v2926, %v3089
      %v3091 = vpop.f32.mrf.mxu0
      %3092 = vmatprep.mubr.f32.mxu0 %v245
      %3093 = vmatmul.mubr.f32.gmra.mxu0 %v380
      %v3094 = vpop.f32.mrf.mxu0
      %v3095 = vadd.f32 %v2926, %v3094
      %v3096 = vpop.f32.mrf.mxu0
      %3097 = vmatprep.mubr.f32.mxu0 %v246
      %3098 = vmatmul.mubr.f32.gmra.mxu0 %v322
      %v3099 = vpop.f32.mrf.mxu0
      %v3100 = vadd.f32 %v2926, %v3099
      %v3101 = vpop.f32.mrf.mxu0
      %3102 = vmatprep.mubr.f32.mxu0 %v247
      %3103 = vmatmul.mubr.f32.gmra.mxu0 %v381
      %v3104 = vpop.f32.mrf.mxu0
      %v3105 = vadd.f32 %v2926, %v3104
      %v3106 = vpop.f32.mrf.mxu0
      %3107 = vmatprep.mubr.f32.mxu0 %v248
      %3108 = vmatmul.mubr.f32.gmra.mxu0 %v325
      %v3109 = vpop.f32.mrf.mxu0
      %v3110 = vadd.f32 %v2926, %v3109
      %v3111 = vpop.f32.mrf.mxu0
      %3112 = vmatprep.mubr.f32.mxu0 %v249
      %3113 = vmatmul.mubr.f32.gmra.mxu0 %v382
      %v3114 = vpop.f32.mrf.mxu0
      %v3115 = vadd.f32 %v2926, %v3114
      %v3116 = vpop.f32.mrf.mxu0
      %3117 = vmatprep.mubr.f32.mxu0 %v250
      %3118 = vmatmul.mubr.f32.gmra.mxu0 %v328
      %v3119 = vpop.f32.mrf.mxu0
      %v3120 = vadd.f32 %v2926, %v3119
      %v3121 = vpop.f32.mrf.mxu0
      %3122 = vmatprep.mubr.f32.mxu0 %v251
      %3123 = vmatmul.mubr.f32.gmra.mxu0 %v383
      %v3124 = vpop.f32.mrf.mxu0
      %v3125 = vadd.f32 %v2926, %v3124
      %v3126 = vpop.f32.mrf.mxu0
      %3127 = vmatprep.mubr.f32.mxu0 %v252
      %3128 = vmatmul.mubr.f32.gmra.mxu0 %v331
      %v3129 = vpop.f32.mrf.mxu0
      %v3130 = vadd.f32 %v2926, %v3129
      %v3131 = vpop.f32.mrf.mxu0
      %3132 = vmatprep.mubr.f32.mxu0 %v253
      %3133 = vmatmul.mubr.f32.gmra.mxu0 %v384
      %v3134 = vpop.f32.mrf.mxu0
      %v3135 = vadd.f32 %v2926, %v3134
      %v3136 = vpop.f32.mrf.mxu0
      %3137 = vmatprep.mubr.f32.mxu0 %v254
      %3138 = vmatmul.mubr.f32.gmra.mxu0 %v334
      %v3139 = vpop.f32.mrf.mxu0
      %v3140 = vadd.f32 %v2926, %v3139
      %v3141 = vpop.f32.mrf.mxu0
      %3142 = vmatprep.mubr.f32.mxu0 %v255
      %3143 = vmatmul.mubr.f32.gmra.mxu0 %v385
      %v3144 = vpop.f32.mrf.mxu0
      %v3145 = vadd.f32 %v2926, %v3144
      %v3146 = vpop.f32.mrf.mxu0
      %3147 = vmatprep.mubr.f32.mxu0 %v256
      %3148 = vmatmul.mubr.f32.gmra.mxu0 %v337
      %v3149 = vpop.f32.mrf.mxu0
      %v3150 = vadd.f32 %v2926, %v3149
      %v3151 = vpop.f32.mrf.mxu0
      %3152 = vdwg.mxu0
      %3153 = vmatprep.subr.mxu0 0.0
      %3154 = vmatpush1.msra.mxu0 %v2904
      %3155 = vmatprep.subr.mxu0 0.0
      %3156 = vmatpush1.msra.mxu0 %v2903
      %3157 = vmatprep.subr.mxu0 0.0
      %3158 = vmatpush1.msra.mxu0 %v2902
      %3159 = vmatprep.subr.mxu0 0.0
      %3160 = vmatpush1.msra.mxu0 %v2901
      %3161 = vmatprep.subr.mxu0 0.0
      %3162 = vmatpush1.msra.mxu0 %v2900
      %3163 = vmatprep.subr.mxu0 0.0
      %3164 = vmatpush1.msra.mxu0 %v2899
      %3165 = vmatprep.subr.mxu0 0.0
      %3166 = vmatpush1.msra.mxu0 %v2898
      %3167 = vmatprep.subr.mxu0 0.0
      %3168 = vmatpush1.msra.mxu0 %v2897
      %3169 = vmatprep.subr.mxu0 0.0
      %3170 = vmatpush1.msra.mxu0 %v2896
      %3171 = vmatprep.subr.mxu0 0.0
      %3172 = vmatpush1.msra.mxu0 %v2895
      %3173 = vmatprep.subr.mxu0 0.0
      %3174 = vmatpush1.msra.mxu0 %v2894
      %3175 = vmatprep.subr.mxu0 0.0
      %3176 = vmatpush1.msra.mxu0 %v2893
      %3177 = vmatprep.subr.mxu0 0.0
      %3178 = vmatpush1.msra.mxu0 %v2892
      %3179 = vmatprep.subr.mxu0 0.0
      %3180 = vmatpush1.msra.mxu0 %v2891
      %3181 = vmatprep.subr.mxu0 0.0
      %3182 = vmatpush1.msra.mxu0 %v2890
      %3183 = vmatprep.subr.mxu0 0.0
      %3184 = vmatpush1.msra.mxu0 %v2889
      %3185 = vmatprep.subr.mxu0 0.0
      %3186 = vmatpush2.msra.mxu0 %v2920
      %3187 = vmatprep.subr.mxu0 0.0
      %3188 = vmatpush2.msra.mxu0 %v2919
      %3189 = vmatprep.subr.mxu0 0.0
      %3190 = vmatpush2.msra.mxu0 %v2918
      %3191 = vmatprep.subr.mxu0 0.0
      %3192 = vmatpush2.msra.mxu0 %v2917
      %3193 = vmatprep.subr.mxu0 0.0
      %3194 = vmatpush2.msra.mxu0 %v2916
      %3195 = vmatprep.subr.mxu0 0.0
      %3196 = vmatpush2.msra.mxu0 %v2915
      %3197 = vmatprep.subr.mxu0 0.0
      %3198 = vmatpush2.msra.mxu0 %v2914
      %3199 = vmatprep.subr.mxu0 0.0
      %3200 = vmatpush2.msra.mxu0 %v2913
      %3201 = vmatprep.subr.mxu0 0.0
      %3202 = vmatpush2.msra.mxu0 %v2912
      %3203 = vmatprep.subr.mxu0 0.0
      %3204 = vmatpush2.msra.mxu0 %v2911
      %3205 = vmatprep.subr.mxu0 0.0
      %3206 = vmatpush2.msra.mxu0 %v2910
      %3207 = vmatprep.subr.mxu0 0.0
      %3208 = vmatpush2.msra.mxu0 %v2909
      %3209 = vmatprep.subr.mxu0 0.0
      %3210 = vmatpush2.msra.mxu0 %v2908
      %3211 = vmatprep.subr.mxu0 0.0
      %3212 = vmatpush2.msra.mxu0 %v2907
      %3213 = vmatprep.subr.mxu0 0.0
      %3214 = vmatpush2.msra.mxu0 %v2906
      %3215 = vmatprep.subr.mxu0 0.0
      %3216 = vmatpush2.msra.mxu0 %v2905
      %3217 = vmatprep.mubr.f32.mxu0 %v227
      %3218 = vmatmul.mubr.f32.gmra.mxu0 %v371
      %v3219 = vpop.f32.mrf.mxu0
      %v3220 = vadd.f32 %v2995, %v3219
      %v3221 = vpop.f32.mrf.mxu0
      %3222 = vmatprep.mubr.f32.mxu0 %v228
      %3223 = vmatmul.mubr.f32.gmra.mxu0 %v295
      %v3224 = vpop.f32.mrf.mxu0
      %v3225 = vadd.f32 %v3000, %v3224
      %v3226 = vpop.f32.mrf.mxu0
      %3227 = vmatprep.mubr.f32.mxu0 %v229
      %3228 = vmatmul.mubr.f32.gmra.mxu0 %v372
      %v3229 = vpop.f32.mrf.mxu0
      %v3230 = vadd.f32 %v3005, %v3229
      %v3231 = vpop.f32.mrf.mxu0
      %3232 = vmatprep.mubr.f32.mxu0 %v230
      %3233 = vmatmul.mubr.f32.gmra.mxu0 %v298
      %v3234 = vpop.f32.mrf.mxu0
      %v3235 = vadd.f32 %v3010, %v3234
      %v3236 = vpop.f32.mrf.mxu0
      %3237 = vmatprep.mubr.f32.mxu0 %v231
      %3238 = vmatmul.mubr.f32.gmra.mxu0 %v373
      %v3239 = vpop.f32.mrf.mxu0
      %v3240 = vadd.f32 %v3015, %v3239
      %v3241 = vpop.f32.mrf.mxu0
      %3242 = vmatprep.mubr.f32.mxu0 %v232
      %3243 = vmatmul.mubr.f32.gmra.mxu0 %v301
      %v3244 = vpop.f32.mrf.mxu0
      %v3245 = vadd.f32 %v3020, %v3244
      %v3246 = vpop.f32.mrf.mxu0
      %3247 = vmatprep.mubr.f32.mxu0 %v233
      %3248 = vmatmul.mubr.f32.gmra.mxu0 %v374
      %v3249 = vpop.f32.mrf.mxu0
      %v3250 = vadd.f32 %v3025, %v3249
      %v3251 = vpop.f32.mrf.mxu0
      %3252 = vmatprep.mubr.f32.mxu0 %v234
      %3253 = vmatmul.mubr.f32.gmra.mxu0 %v304
      %v3254 = vpop.f32.mrf.mxu0
      %v3255 = vadd.f32 %v3030, %v3254
      %v3256 = vpop.f32.mrf.mxu0
      %3257 = vmatprep.mubr.f32.mxu0 %v235
      %3258 = vmatmul.mubr.f32.gmra.mxu0 %v375
      %v3259 = vpop.f32.mrf.mxu0
      %v3260 = vadd.f32 %v3035, %v3259
      %v3261 = vpop.f32.mrf.mxu0
      %3262 = vmatprep.mubr.f32.mxu0 %v236
      %3263 = vmatmul.mubr.f32.gmra.mxu0 %v307
      %v3264 = vpop.f32.mrf.mxu0
      %v3265 = vadd.f32 %v3040, %v3264
      %v3266 = vpop.f32.mrf.mxu0
      %3267 = vmatprep.mubr.f32.mxu0 %v237
      %3268 = vmatmul.mubr.f32.gmra.mxu0 %v376
      %v3269 = vpop.f32.mrf.mxu0
      %v3270 = vadd.f32 %v3045, %v3269
      %v3271 = vpop.f32.mrf.mxu0
      %3272 = vmatprep.mubr.f32.mxu0 %v238
      %3273 = vmatmul.mubr.f32.gmra.mxu0 %v310
      %v3274 = vpop.f32.mrf.mxu0
      %v3275 = vadd.f32 %v3050, %v3274
      %v3276 = vpop.f32.mrf.mxu0
      %3277 = vmatprep.mubr.f32.mxu0 %v239
      %3278 = vmatmul.mubr.f32.gmra.mxu0 %v377
      %v3279 = vpop.f32.mrf.mxu0
      %v3280 = vadd.f32 %v3055, %v3279
      %v3281 = vpop.f32.mrf.mxu0
      %3282 = vmatprep.mubr.f32.mxu0 %v240
      %3283 = vmatmul.mubr.f32.gmra.mxu0 %v313
      %v3284 = vpop.f32.mrf.mxu0
      %v3285 = vadd.f32 %v3060, %v3284
      %v3286 = vpop.f32.mrf.mxu0
      %3287 = vmatprep.mubr.f32.mxu0 %v241
      %3288 = vmatmul.mubr.f32.gmra.mxu0 %v378
      %v3289 = vpop.f32.mrf.mxu0
      %v3290 = vadd.f32 %v3065, %v3289
      %v3291 = vpop.f32.mrf.mxu0
      %3292 = vmatprep.mubr.f32.mxu0 %v242
      %3293 = vmatmul.mubr.f32.gmra.mxu0 %v316
      %v3294 = vpop.f32.mrf.mxu0
      %v3295 = vadd.f32 %v3070, %v3294
      %v3296 = vpop.f32.mrf.mxu0
      %3297 = vmatprep.mubr.f32.mxu0 %v243
      %3298 = vmatmul.mubr.f32.gmra.mxu0 %v379
      %v3299 = vpop.f32.mrf.mxu0
      %v3300 = vadd.f32 %v3075, %v3299
      %v3301 = vpop.f32.mrf.mxu0
      %3302 = vmatprep.mubr.f32.mxu0 %v244
      %3303 = vmatmul.mubr.f32.gmra.mxu0 %v319
      %v3304 = vpop.f32.mrf.mxu0
      %v3305 = vadd.f32 %v3080, %v3304
      %v3306 = vpop.f32.mrf.mxu0
      %3307 = vmatprep.mubr.f32.mxu0 %v245
      %3308 = vmatmul.mubr.f32.gmra.mxu0 %v380
      %v3309 = vpop.f32.mrf.mxu0
      %v3310 = vadd.f32 %v3085, %v3309
      %v3311 = vpop.f32.mrf.mxu0
      %3312 = vmatprep.mubr.f32.mxu0 %v246
      %3313 = vmatmul.mubr.f32.gmra.mxu0 %v322
      %v3314 = vpop.f32.mrf.mxu0
      %v3315 = vadd.f32 %v3090, %v3314
      %v3316 = vpop.f32.mrf.mxu0
      %3317 = vmatprep.mubr.f32.mxu0 %v247
      %3318 = vmatmul.mubr.f32.gmra.mxu0 %v381
      %v3319 = vpop.f32.mrf.mxu0
      %v3320 = vadd.f32 %v3095, %v3319
      %v3321 = vpop.f32.mrf.mxu0
      %3322 = vmatprep.mubr.f32.mxu0 %v248
      %3323 = vmatmul.mubr.f32.gmra.mxu0 %v325
      %v3324 = vpop.f32.mrf.mxu0
      %v3325 = vadd.f32 %v3100, %v3324
      %v3326 = vpop.f32.mrf.mxu0
      %3327 = vmatprep.mubr.f32.mxu0 %v249
      %3328 = vmatmul.mubr.f32.gmra.mxu0 %v382
      %v3329 = vpop.f32.mrf.mxu0
      %v3330 = vadd.f32 %v3105, %v3329
      %v3331 = vpop.f32.mrf.mxu0
      %3332 = vmatprep.mubr.f32.mxu0 %v250
      %3333 = vmatmul.mubr.f32.gmra.mxu0 %v328
      %v3334 = vpop.f32.mrf.mxu0
      %v3335 = vadd.f32 %v3110, %v3334
      %v3336 = vpop.f32.mrf.mxu0
      %3337 = vmatprep.mubr.f32.mxu0 %v251
      %3338 = vmatmul.mubr.f32.gmra.mxu0 %v383
      %v3339 = vpop.f32.mrf.mxu0
      %v3340 = vadd.f32 %v3115, %v3339
      %v3341 = vpop.f32.mrf.mxu0
      %3342 = vmatprep.mubr.f32.mxu0 %v252
      %3343 = vmatmul.mubr.f32.gmra.mxu0 %v331
      %v3344 = vpop.f32.mrf.mxu0
      %v3345 = vadd.f32 %v3120, %v3344
      %v3346 = vpop.f32.mrf.mxu0
      %3347 = vmatprep.mubr.f32.mxu0 %v253
      %3348 = vmatmul.mubr.f32.gmra.mxu0 %v384
      %v3349 = vpop.f32.mrf.mxu0
      %v3350 = vadd.f32 %v3125, %v3349
      %v3351 = vpop.f32.mrf.mxu0
      %3352 = vmatprep.mubr.f32.mxu0 %v254
      %3353 = vmatmul.mubr.f32.gmra.mxu0 %v334
      %v3354 = vpop.f32.mrf.mxu0
      %v3355 = vadd.f32 %v3130, %v3354
      %v3356 = vpop.f32.mrf.mxu0
      %3357 = vmatprep.mubr.f32.mxu0 %v255
      %3358 = vmatmul.mubr.f32.gmra.mxu0 %v385
      %v3359 = vpop.f32.mrf.mxu0
      %v3360 = vadd.f32 %v3135, %v3359
      %v3361 = vpop.f32.mrf.mxu0
      %3362 = vmatprep.mubr.f32.mxu0 %v256
      %3363 = vmatmul.mubr.f32.gmra.mxu0 %v337
      %v3364 = vpop.f32.mrf.mxu0
      %v3365 = vadd.f32 %v3140, %v3364
      %v3366 = vpop.f32.mrf.mxu0
      %3367 = vmatprep.mubr.f32.mxu0 0.0
      %3368 = vmatmul.mubr.f32.gmra.mxu0 0.0
      %v3369 = vpop.f32.mrf.mxu0
      %v3370 = vadd.f32 %v3145, %v3369
      %v3371 = vpop.f32.mrf.mxu0
      %3372 = vmatprep.mubr.f32.mxu0 0.0
      %3373 = vmatmul.mubr.f32.gmra.mxu0 0.0
      %v3374 = vpop.f32.mrf.mxu0
      %v3375 = vadd.f32 %v3150, %v3374
      %v3376 = vpop.f32.mrf.mxu0
      %3377 = vdwg.mxu0
      %v3378 = vsub.f32 0.0, %v3220
      %v3379 = vsub.f32 0.0, %v3225
      %v3380 = vsub.f32 0.0, %v3230
      %v3381 = vsub.f32 0.0, %v3235
      %v3382 = vsub.f32 0.0, %v3240
      %v3383 = vsub.f32 0.0, %v3245
      %v3384 = vsub.f32 0.0, %v3250
      %v3385 = vsub.f32 0.0, %v3255
      %v3386 = vsub.f32 0.0, %v3260
      %v3387 = vsub.f32 0.0, %v3265
      %v3388 = vsub.f32 0.0, %v3270
      %v3389 = vsub.f32 0.0, %v3275
      %v3390 = vsub.f32 0.0, %v3280
      %v3391 = vsub.f32 0.0, %v3285
      %v3392 = vsub.f32 0.0, %v3290
      %v3393 = vsub.f32 0.0, %v3295
      %v3394 = vsub.f32 0.0, %v3300
      %v3395 = vsub.f32 0.0, %v3305
      %v3396 = vsub.f32 0.0, %v3310
      %v3397 = vsub.f32 0.0, %v3315
      %v3398 = vsub.f32 0.0, %v3320
      %v3399 = vsub.f32 0.0, %v3325
      %v3400 = vsub.f32 0.0, %v3330
      %v3401 = vsub.f32 0.0, %v3335
      %v3402 = vsub.f32 0.0, %v3340
      %v3403 = vsub.f32 0.0, %v3345
      %v3404 = vsub.f32 0.0, %v3350
      %v3405 = vsub.f32 0.0, %v3355
      %v3406 = vsub.f32 0.0, %v3360
      %v3407 = vsub.f32 0.0, %v3365
      %v3408 = vsub.f32 0.0, %v3370
      %v3409 = vsub.f32 0.0, %v3375
      %v3410 = vmul.f32 %v3378, 1.442695
      %v3411 = vpow.pop %v3410
      %v3412 = vmul.f32 %v3379, 1.442695
      %v3413 = vpow.pop %v3412
      %v3414 = vmul.f32 %v3380, 1.442695
      %v3415 = vpow.pop %v3414
      %v3416 = vmul.f32 %v3381, 1.442695
      %v3417 = vpow.pop %v3416
      %v3418 = vmul.f32 %v3382, 1.442695
      %v3419 = vpow.pop %v3418
      %v3420 = vmul.f32 %v3383, 1.442695
      %v3421 = vpow.pop %v3420
      %v3422 = vmul.f32 %v3384, 1.442695
      %v3423 = vpow.pop %v3422
      %v3424 = vmul.f32 %v3385, 1.442695
      %v3425 = vpow.pop %v3424
      %v3426 = vmul.f32 %v3386, 1.442695
      %v3427 = vpow.pop %v3426
      %v3428 = vmul.f32 %v3387, 1.442695
      %v3429 = vpow.pop %v3428
      %v3430 = vmul.f32 %v3388, 1.442695
      %v3431 = vpow.pop %v3430
      %v3432 = vmul.f32 %v3389, 1.442695
      %v3433 = vpow.pop %v3432
      %v3434 = vmul.f32 %v3390, 1.442695
      %v3435 = vpow.pop %v3434
      %v3436 = vmul.f32 %v3391, 1.442695
      %v3437 = vpow.pop %v3436
      %v3438 = vmul.f32 %v3392, 1.442695
      %v3439 = vpow.pop %v3438
      %v3440 = vmul.f32 %v3393, 1.442695
      %v3441 = vpow.pop %v3440
      %v3442 = vmul.f32 %v3394, 1.442695
      %v3443 = vpow.pop %v3442
      %v3444 = vmul.f32 %v3395, 1.442695
      %v3445 = vpow.pop %v3444
      %v3446 = vmul.f32 %v3396, 1.442695
      %v3447 = vpow.pop %v3446
      %v3448 = vmul.f32 %v3397, 1.442695
      %v3449 = vpow.pop %v3448
      %v3450 = vmul.f32 %v3398, 1.442695
      %v3451 = vpow.pop %v3450
      %v3452 = vmul.f32 %v3399, 1.442695
      %v3453 = vpow.pop %v3452
      %v3454 = vmul.f32 %v3400, 1.442695
      %v3455 = vpow.pop %v3454
      %v3456 = vmul.f32 %v3401, 1.442695
      %v3457 = vpow.pop %v3456
      %v3458 = vmul.f32 %v3402, 1.442695
      %v3459 = vpow.pop %v3458
      %v3460 = vmul.f32 %v3403, 1.442695
      %v3461 = vpow.pop %v3460
      %v3462 = vmul.f32 %v3404, 1.442695
      %v3463 = vpow.pop %v3462
      %v3464 = vmul.f32 %v3405, 1.442695
      %v3465 = vpow.pop %v3464
      %v3466 = vmul.f32 %v3406, 1.442695
      %v3467 = vpow.pop %v3466
      %v3468 = vmul.f32 %v3407, 1.442695
      %v3469 = vpow.pop %v3468
      %v3470 = vmul.f32 %v3408, 1.442695
      %v3471 = vpow.pop %v3470
      %v3472 = vmul.f32 %v3409, 1.442695
      %v3473 = vpow.pop %v3472
      %v3474 = vadd.f32 %v3411, 1.0
      %v3475 = vadd.f32 %v3413, 1.0
      %v3476 = vadd.f32 %v3415, 1.0
      %v3477 = vadd.f32 %v3417, 1.0
      %v3478 = vadd.f32 %v3419, 1.0
      %v3479 = vadd.f32 %v3421, 1.0
      %v3480 = vadd.f32 %v3423, 1.0
      %v3481 = vadd.f32 %v3425, 1.0
      %v3482 = vadd.f32 %v3427, 1.0
      %v3483 = vadd.f32 %v3429, 1.0
      %v3484 = vadd.f32 %v3431, 1.0
      %v3485 = vadd.f32 %v3433, 1.0
      %v3486 = vadd.f32 %v3435, 1.0
      %v3487 = vadd.f32 %v3437, 1.0
      %v3488 = vadd.f32 %v3439, 1.0
      %v3489 = vadd.f32 %v3441, 1.0
      %v3490 = vadd.f32 %v3443, 1.0
      %v3491 = vadd.f32 %v3445, 1.0
      %v3492 = vadd.f32 %v3447, 1.0
      %v3493 = vadd.f32 %v3449, 1.0
      %v3494 = vadd.f32 %v3451, 1.0
      %v3495 = vadd.f32 %v3453, 1.0
      %v3496 = vadd.f32 %v3455, 1.0
      %v3497 = vadd.f32 %v3457, 1.0
      %v3498 = vadd.f32 %v3459, 1.0
      %v3499 = vadd.f32 %v3461, 1.0
      %v3500 = vadd.f32 %v3463, 1.0
      %v3501 = vadd.f32 %v3465, 1.0
      %v3502 = vadd.f32 %v3467, 1.0
      %v3503 = vadd.f32 %v3469, 1.0
      %v3504 = vadd.f32 %v3471, 1.0
      %v3505 = vadd.f32 %v3473, 1.0
      %v3506 = vrcp.pop %v3474
      %v3507 = vmul.f32 %v3220, %v3506
      %v3508 = vrcp.pop %v3475
      %v3509 = vmul.f32 %v3225, %v3508
      %v3510 = vrcp.pop %v3476
      %v3511 = vmul.f32 %v3230, %v3510
      %v3512 = vrcp.pop %v3477
      %v3513 = vmul.f32 %v3235, %v3512
      %v3514 = vrcp.pop %v3478
      %v3515 = vmul.f32 %v3240, %v3514
      %v3516 = vrcp.pop %v3479
      %v3517 = vmul.f32 %v3245, %v3516
      %v3518 = vrcp.pop %v3480
      %v3519 = vmul.f32 %v3250, %v3518
      %v3520 = vrcp.pop %v3481
      %v3521 = vmul.f32 %v3255, %v3520
      %v3522 = vrcp.pop %v3482
      %v3523 = vmul.f32 %v3260, %v3522
      %v3524 = vrcp.pop %v3483
      %v3525 = vmul.f32 %v3265, %v3524
      %v3526 = vrcp.pop %v3484
      %v3527 = vmul.f32 %v3270, %v3526
      %v3528 = vrcp.pop %v3485
      %v3529 = vmul.f32 %v3275, %v3528
      %v3530 = vrcp.pop %v3486
      %v3531 = vmul.f32 %v3280, %v3530
      %v3532 = vrcp.pop %v3487
      %v3533 = vmul.f32 %v3285, %v3532
      %v3534 = vrcp.pop %v3488
      %v3535 = vmul.f32 %v3290, %v3534
      %v3536 = vrcp.pop %v3489
      %v3537 = vmul.f32 %v3295, %v3536
      %v3538 = vrcp.pop %v3490
      %v3539 = vmul.f32 %v3300, %v3538
      %v3540 = vrcp.pop %v3491
      %v3541 = vmul.f32 %v3305, %v3540
      %v3542 = vrcp.pop %v3492
      %v3543 = vmul.f32 %v3310, %v3542
      %v3544 = vrcp.pop %v3493
      %v3545 = vmul.f32 %v3315, %v3544
      %v3546 = vrcp.pop %v3494
      %v3547 = vmul.f32 %v3320, %v3546
      %v3548 = vrcp.pop %v3495
      %v3549 = vmul.f32 %v3325, %v3548
      %v3550 = vrcp.pop %v3496
      %v3551 = vmul.f32 %v3330, %v3550
      %v3552 = vrcp.pop %v3497
      %v3553 = vmul.f32 %v3335, %v3552
      %v3554 = vrcp.pop %v3498
      %v3555 = vmul.f32 %v3340, %v3554
      %v3556 = vrcp.pop %v3499
      %v3557 = vmul.f32 %v3345, %v3556
      %v3558 = vrcp.pop %v3500
      %v3559 = vmul.f32 %v3350, %v3558
      %v3560 = vrcp.pop %v3501
      %v3561 = vmul.f32 %v3355, %v3560
      %v3562 = vrcp.pop %v3502
      %v3563 = vmul.f32 %v3360, %v3562
      %v3564 = vrcp.pop %v3503
      %v3565 = vmul.f32 %v3365, %v3564
      %v3566 = vrcp.pop %v3504
      %v3567 = vmul.f32 %v3370, %v3566
      %v3568 = vrcp.pop %v3505
      %v3569 = vmul.f32 %v3375, %v3568
      %v3570 = vld [vmem:[%s3] sm:$0xff]
      %v3571 = vld [vmem:[%s3 + $0x8] sm:$0xff]
      %v3572 = vld [vmem:[%s3 + $0x10] sm:$0xff]
      %v3573 = vld [vmem:[%s3 + $0x18] sm:$0xff]
      %v3574 = vld [vmem:[%s3 + $0x20] sm:$0xff]
      %v3575 = vld [vmem:[%s3 + $0x28] sm:$0xff]
      %v3576 = vld [vmem:[%s3 + $0x30] sm:$0xff]
      %v3577 = vld [vmem:[%s3 + $0x38] sm:$0xff]
      %v3578 = vld [vmem:[%s3 + $0x40] sm:$0xff]
      %v3579 = vld [vmem:[%s3 + $0x48] sm:$0xff]
      %v3580 = vld [vmem:[%s3 + $0x50] sm:$0xff]
      %v3581 = vld [vmem:[%s3 + $0x58] sm:$0xff]
      %v3582 = vld [vmem:[%s3 + $0x60] sm:$0xff]
      %v3583 = vld [vmem:[%s3 + $0x68] sm:$0xff]
      %v3584 = vld [vmem:[%s3 + $0x70] sm:$0xff]
      %v3585 = vld [vmem:[%s3 + $0x78] sm:$0xff]
      %v3586 = vld [vmem:[%s4] sm:$0x1]
      %v3588 = vlaneseq
      %v3589 = vshrl.u32 %v3588, 7
      %v3590 = vsub.s32 0, %v3589
      %v3591 = vrot.slane %v3586, %v3590
      %3593 = vmatprep.subr.mxu0 0.0
      %3594 = vmatpush1.msra.mxu0 %v3585
      %3595 = vmatprep.subr.mxu0 0.0
      %3596 = vmatpush1.msra.mxu0 %v3584
      %3597 = vmatprep.subr.mxu0 0.0
      %3598 = vmatpush1.msra.mxu0 %v3583
      %3599 = vmatprep.subr.mxu0 0.0
      %3600 = vmatpush1.msra.mxu0 %v3582
      %3601 = vmatprep.subr.mxu0 0.0
      %3602 = vmatpush1.msra.mxu0 %v3581
      %3603 = vmatprep.subr.mxu0 0.0
      %3604 = vmatpush1.msra.mxu0 %v3580
      %3605 = vmatprep.subr.mxu0 0.0
      %3606 = vmatpush1.msra.mxu0 %v3579
      %3607 = vmatprep.subr.mxu0 0.0
      %3608 = vmatpush1.msra.mxu0 %v3578
      %3609 = vmatprep.subr.mxu0 0.0
      %3610 = vmatpush1.msra.mxu0 %v3577
      %3611 = vmatprep.subr.mxu0 0.0
      %3612 = vmatpush1.msra.mxu0 %v3576
      %3613 = vmatprep.subr.mxu0 0.0
      %3614 = vmatpush1.msra.mxu0 %v3575
      %3615 = vmatprep.subr.mxu0 0.0
      %3616 = vmatpush1.msra.mxu0 %v3574
      %3617 = vmatprep.subr.mxu0 0.0
      %3618 = vmatpush1.msra.mxu0 %v3573
      %3619 = vmatprep.subr.mxu0 0.0
      %3620 = vmatpush1.msra.mxu0 %v3572
      %3621 = vmatprep.subr.mxu0 0.0
      %3622 = vmatpush1.msra.mxu0 %v3571
      %3623 = vmatprep.subr.mxu0 0.0
      %3624 = vmatpush1.msra.mxu0 %v3570
      %3625 = vmatprep.subr.mxu0 0.0
      %3626 = vmatpush2.msra.mxu0 0.0
      %3627 = vmatprep.subr.mxu0 0.0
      %3628 = vmatpush2.msra.mxu0 0.0
      %3629 = vmatprep.subr.mxu0 0.0
      %3630 = vmatpush2.msra.mxu0 0.0
      %3631 = vmatprep.subr.mxu0 0.0
      %3632 = vmatpush2.msra.mxu0 0.0
      %3633 = vmatprep.subr.mxu0 0.0
      %3634 = vmatpush2.msra.mxu0 0.0
      %3635 = vmatprep.subr.mxu0 0.0
      %3636 = vmatpush2.msra.mxu0 0.0
      %3637 = vmatprep.subr.mxu0 0.0
      %3638 = vmatpush2.msra.mxu0 0.0
      %3639 = vmatprep.subr.mxu0 0.0
      %3640 = vmatpush2.msra.mxu0 0.0
      %3641 = vmatprep.subr.mxu0 0.0
      %3642 = vmatpush2.msra.mxu0 0.0
      %3643 = vmatprep.subr.mxu0 0.0
      %3644 = vmatpush2.msra.mxu0 0.0
      %3645 = vmatprep.subr.mxu0 0.0
      %3646 = vmatpush2.msra.mxu0 0.0
      %3647 = vmatprep.subr.mxu0 0.0
      %3648 = vmatpush2.msra.mxu0 0.0
      %3649 = vmatprep.subr.mxu0 0.0
      %3650 = vmatpush2.msra.mxu0 0.0
      %3651 = vmatprep.subr.mxu0 0.0
      %3652 = vmatpush2.msra.mxu0 0.0
      %3653 = vmatprep.subr.mxu0 0.0
      %3654 = vmatpush2.msra.mxu0 0.0
      %3655 = vmatprep.subr.mxu0 0.0
      %3656 = vmatpush2.msra.mxu0 0.0
      %3657 = vmatprep.mubr.f32.mxu0 0.0
      %3658 = vmatmul.mubr.f32.gmra.mxu0 %v3507
      %v3659 = vpop.f32.mrf.mxu0
      %v3660 = vadd.f32 %v3591, %v3659
      %v3661 = vpop.f32.mrf.mxu0
      %3662 = vmatprep.mubr.f32.mxu0 0.0
      %3663 = vmatmul.mubr.f32.gmra.mxu0 %v3509
      %v3664 = vpop.f32.mrf.mxu0
      %v3665 = vadd.f32 %v3591, %v3664
      %v3666 = vpop.f32.mrf.mxu0
      %3667 = vmatprep.mubr.f32.mxu0 0.0
      %3668 = vmatmul.mubr.f32.gmra.mxu0 %v3511
      %v3669 = vpop.f32.mrf.mxu0
      %v3670 = vadd.f32 %v3591, %v3669
      %v3671 = vpop.f32.mrf.mxu0
      %3672 = vmatprep.mubr.f32.mxu0 0.0
      %3673 = vmatmul.mubr.f32.gmra.mxu0 %v3513
      %v3674 = vpop.f32.mrf.mxu0
      %v3675 = vadd.f32 %v3591, %v3674
      %v3676 = vpop.f32.mrf.mxu0
      %3677 = vmatprep.mubr.f32.mxu0 0.0
      %3678 = vmatmul.mubr.f32.gmra.mxu0 %v3515
      %v3679 = vpop.f32.mrf.mxu0
      %v3680 = vadd.f32 %v3591, %v3679
      %v3681 = vpop.f32.mrf.mxu0
      %3682 = vmatprep.mubr.f32.mxu0 0.0
      %3683 = vmatmul.mubr.f32.gmra.mxu0 %v3517
      %v3684 = vpop.f32.mrf.mxu0
      %v3685 = vadd.f32 %v3591, %v3684
      %v3686 = vpop.f32.mrf.mxu0
      %3687 = vmatprep.mubr.f32.mxu0 0.0
      %3688 = vmatmul.mubr.f32.gmra.mxu0 %v3519
      %v3689 = vpop.f32.mrf.mxu0
      %v3690 = vadd.f32 %v3591, %v3689
      %v3691 = vpop.f32.mrf.mxu0
      %3692 = vmatprep.mubr.f32.mxu0 0.0
      %3693 = vmatmul.mubr.f32.gmra.mxu0 %v3521
      %v3694 = vpop.f32.mrf.mxu0
      %v3695 = vadd.f32 %v3591, %v3694
      %v3696 = vpop.f32.mrf.mxu0
      %3697 = vmatprep.mubr.f32.mxu0 0.0
      %3698 = vmatmul.mubr.f32.gmra.mxu0 %v3523
      %v3699 = vpop.f32.mrf.mxu0
      %v3700 = vadd.f32 %v3591, %v3699
      %v3701 = vpop.f32.mrf.mxu0
      %3702 = vmatprep.mubr.f32.mxu0 0.0
      %3703 = vmatmul.mubr.f32.gmra.mxu0 %v3525
      %v3704 = vpop.f32.mrf.mxu0
      %v3705 = vadd.f32 %v3591, %v3704
      %v3706 = vpop.f32.mrf.mxu0
      %3707 = vmatprep.mubr.f32.mxu0 0.0
      %3708 = vmatmul.mubr.f32.gmra.mxu0 %v3527
      %v3709 = vpop.f32.mrf.mxu0
      %v3710 = vadd.f32 %v3591, %v3709
      %v3711 = vpop.f32.mrf.mxu0
      %3712 = vmatprep.mubr.f32.mxu0 0.0
      %3713 = vmatmul.mubr.f32.gmra.mxu0 %v3529
      %v3714 = vpop.f32.mrf.mxu0
      %v3715 = vadd.f32 %v3591, %v3714
      %v3716 = vpop.f32.mrf.mxu0
      %3717 = vmatprep.mubr.f32.mxu0 0.0
      %3718 = vmatmul.mubr.f32.gmra.mxu0 %v3531
      %v3719 = vpop.f32.mrf.mxu0
      %v3720 = vadd.f32 %v3591, %v3719
      %v3721 = vpop.f32.mrf.mxu0
      %3722 = vmatprep.mubr.f32.mxu0 0.0
      %3723 = vmatmul.mubr.f32.gmra.mxu0 %v3533
      %v3724 = vpop.f32.mrf.mxu0
      %v3725 = vadd.f32 %v3591, %v3724
      %v3726 = vpop.f32.mrf.mxu0
      %3727 = vmatprep.mubr.f32.mxu0 0.0
      %3728 = vmatmul.mubr.f32.gmra.mxu0 %v3535
      %v3729 = vpop.f32.mrf.mxu0
      %v3730 = vadd.f32 %v3591, %v3729
      %v3731 = vpop.f32.mrf.mxu0
      %3732 = vmatprep.mubr.f32.mxu0 0.0
      %3733 = vmatmul.mubr.f32.gmra.mxu0 %v3537
      %v3734 = vpop.f32.mrf.mxu0
      %v3735 = vadd.f32 %v3591, %v3734
      %v3736 = vpop.f32.mrf.mxu0
      %3737 = vmatprep.mubr.f32.mxu0 0.0
      %3738 = vmatmul.mubr.f32.gmra.mxu0 %v3539
      %v3739 = vpop.f32.mrf.mxu0
      %v3740 = vadd.f32 %v3591, %v3739
      %v3741 = vpop.f32.mrf.mxu0
      %3742 = vmatprep.mubr.f32.mxu0 0.0
      %3743 = vmatmul.mubr.f32.gmra.mxu0 %v3541
      %v3744 = vpop.f32.mrf.mxu0
      %v3745 = vadd.f32 %v3591, %v3744
      %v3746 = vpop.f32.mrf.mxu0
      %3747 = vmatprep.mubr.f32.mxu0 0.0
      %3748 = vmatmul.mubr.f32.gmra.mxu0 %v3543
      %v3749 = vpop.f32.mrf.mxu0
      %v3750 = vadd.f32 %v3591, %v3749
      %v3751 = vpop.f32.mrf.mxu0
      %3752 = vmatprep.mubr.f32.mxu0 0.0
      %3753 = vmatmul.mubr.f32.gmra.mxu0 %v3545
      %v3754 = vpop.f32.mrf.mxu0
      %v3755 = vadd.f32 %v3591, %v3754
      %v3756 = vpop.f32.mrf.mxu0
      %3757 = vmatprep.mubr.f32.mxu0 0.0
      %3758 = vmatmul.mubr.f32.gmra.mxu0 %v3547
      %v3759 = vpop.f32.mrf.mxu0
      %v3760 = vadd.f32 %v3591, %v3759
      %v3761 = vpop.f32.mrf.mxu0
      %3762 = vmatprep.mubr.f32.mxu0 0.0
      %3763 = vmatmul.mubr.f32.gmra.mxu0 %v3549
      %v3764 = vpop.f32.mrf.mxu0
      %v3765 = vadd.f32 %v3591, %v3764
      %v3766 = vpop.f32.mrf.mxu0
      %3767 = vmatprep.mubr.f32.mxu0 0.0
      %3768 = vmatmul.mubr.f32.gmra.mxu0 %v3551
      %v3769 = vpop.f32.mrf.mxu0
      %v3770 = vadd.f32 %v3591, %v3769
      %v3771 = vpop.f32.mrf.mxu0
      %3772 = vmatprep.mubr.f32.mxu0 0.0
      %3773 = vmatmul.mubr.f32.gmra.mxu0 %v3553
      %v3774 = vpop.f32.mrf.mxu0
      %v3775 = vadd.f32 %v3591, %v3774
      %v3776 = vpop.f32.mrf.mxu0
      %3777 = vmatprep.mubr.f32.mxu0 0.0
      %3778 = vmatmul.mubr.f32.gmra.mxu0 %v3555
      %v3779 = vpop.f32.mrf.mxu0
      %v3780 = vadd.f32 %v3591, %v3779
      %v3781 = vpop.f32.mrf.mxu0
      %3782 = vmatprep.mubr.f32.mxu0 0.0
      %3783 = vmatmul.mubr.f32.gmra.mxu0 %v3557
      %v3784 = vpop.f32.mrf.mxu0
      %v3785 = vadd.f32 %v3591, %v3784
      %v3786 = vpop.f32.mrf.mxu0
      %3787 = vmatprep.mubr.f32.mxu0 0.0
      %3788 = vmatmul.mubr.f32.gmra.mxu0 %v3559
      %v3789 = vpop.f32.mrf.mxu0
      %v3790 = vadd.f32 %v3591, %v3789
      %v3791 = vpop.f32.mrf.mxu0
      %3792 = vmatprep.mubr.f32.mxu0 0.0
      %3793 = vmatmul.mubr.f32.gmra.mxu0 %v3561
      %v3794 = vpop.f32.mrf.mxu0
      %v3795 = vadd.f32 %v3591, %v3794
      %v3796 = vpop.f32.mrf.mxu0
      %3797 = vmatprep.mubr.f32.mxu0 0.0
      %3798 = vmatmul.mubr.f32.gmra.mxu0 %v3563
      %v3799 = vpop.f32.mrf.mxu0
      %v3800 = vadd.f32 %v3591, %v3799
      %v3801 = vpop.f32.mrf.mxu0
      %3802 = vmatprep.mubr.f32.mxu0 0.0
      %3803 = vmatmul.mubr.f32.gmra.mxu0 %v3565
      %v3804 = vpop.f32.mrf.mxu0
      %v3805 = vadd.f32 %v3591, %v3804
      %v3806 = vpop.f32.mrf.mxu0
      %3807 = vmatprep.mubr.f32.mxu0 0.0
      %3808 = vmatmul.mubr.f32.gmra.mxu0 %v3567
      %v3809 = vpop.f32.mrf.mxu0
      %v3810 = vadd.f32 %v3591, %v3809
      %v3811 = vpop.f32.mrf.mxu0
      %3812 = vmatprep.mubr.f32.mxu0 0.0
      %3813 = vmatmul.mubr.f32.gmra.mxu0 %v3569
      %v3814 = vpop.f32.mrf.mxu0
      %v3815 = vadd.f32 %v3591, %v3814
      %v3816 = vpop.f32.mrf.mxu0
      %3817 = vdwg.mxu0
      %v3818 = vsub.f32 0.0, %v3660
      %v3819 = vsub.f32 0.0, %v3665
      %v3820 = vsub.f32 0.0, %v3670
      %v3821 = vsub.f32 0.0, %v3675
      %v3822 = vsub.f32 0.0, %v3680
      %v3823 = vsub.f32 0.0, %v3685
      %v3824 = vsub.f32 0.0, %v3690
      %v3825 = vsub.f32 0.0, %v3695
      %v3826 = vsub.f32 0.0, %v3700
      %v3827 = vsub.f32 0.0, %v3705
      %v3828 = vsub.f32 0.0, %v3710
      %v3829 = vsub.f32 0.0, %v3715
      %v3830 = vsub.f32 0.0, %v3720
      %v3831 = vsub.f32 0.0, %v3725
      %v3832 = vsub.f32 0.0, %v3730
      %v3833 = vsub.f32 0.0, %v3735
      %v3834 = vsub.f32 0.0, %v3740
      %v3835 = vsub.f32 0.0, %v3745
      %v3836 = vsub.f32 0.0, %v3750
      %v3837 = vsub.f32 0.0, %v3755
      %v3838 = vsub.f32 0.0, %v3760
      %v3839 = vsub.f32 0.0, %v3765
      %v3840 = vsub.f32 0.0, %v3770
      %v3841 = vsub.f32 0.0, %v3775
      %v3842 = vsub.f32 0.0, %v3780
      %v3843 = vsub.f32 0.0, %v3785
      %v3844 = vsub.f32 0.0, %v3790
      %v3845 = vsub.f32 0.0, %v3795
      %v3846 = vsub.f32 0.0, %v3800
      %v3847 = vsub.f32 0.0, %v3805
      %v3848 = vsub.f32 0.0, %v3810
      %v3849 = vsub.f32 0.0, %v3815
      %v3850 = vmul.f32 %v3818, 1.442695
      %v3851 = vpow.pop %v3850
      %v3852 = vmul.f32 %v3819, 1.442695
      %v3853 = vpow.pop %v3852
      %v3854 = vmul.f32 %v3820, 1.442695
      %v3855 = vpow.pop %v3854
      %v3856 = vmul.f32 %v3821, 1.442695
      %v3857 = vpow.pop %v3856
      %v3858 = vmul.f32 %v3822, 1.442695
      %v3859 = vpow.pop %v3858
      %v3860 = vmul.f32 %v3823, 1.442695
      %v3861 = vpow.pop %v3860
      %v3862 = vmul.f32 %v3824, 1.442695
      %v3863 = vpow.pop %v3862
      %v3864 = vmul.f32 %v3825, 1.442695
      %v3865 = vpow.pop %v3864
      %v3866 = vmul.f32 %v3826, 1.442695
      %v3867 = vpow.pop %v3866
      %v3868 = vmul.f32 %v3827, 1.442695
      %v3869 = vpow.pop %v3868
      %v3870 = vmul.f32 %v3828, 1.442695
      %v3871 = vpow.pop %v3870
      %v3872 = vmul.f32 %v3829, 1.442695
      %v3873 = vpow.pop %v3872
      %v3874 = vmul.f32 %v3830, 1.442695
      %v3875 = vpow.pop %v3874
      %v3876 = vmul.f32 %v3831, 1.442695
      %v3877 = vpow.pop %v3876
      %v3878 = vmul.f32 %v3832, 1.442695
      %v3879 = vpow.pop %v3878
      %v3880 = vmul.f32 %v3833, 1.442695
      %v3881 = vpow.pop %v3880
      %v3882 = vmul.f32 %v3834, 1.442695
      %v3883 = vpow.pop %v3882
      %v3884 = vmul.f32 %v3835, 1.442695
      %v3885 = vpow.pop %v3884
      %v3886 = vmul.f32 %v3836, 1.442695
      %v3887 = vpow.pop %v3886
      %v3888 = vmul.f32 %v3837, 1.442695
      %v3889 = vpow.pop %v3888
      %v3890 = vmul.f32 %v3838, 1.442695
      %v3891 = vpow.pop %v3890
      %v3892 = vmul.f32 %v3839, 1.442695
      %v3893 = vpow.pop %v3892
      %v3894 = vmul.f32 %v3840, 1.442695
      %v3895 = vpow.pop %v3894
      %v3896 = vmul.f32 %v3841, 1.442695
      %v3897 = vpow.pop %v3896
      %v3898 = vmul.f32 %v3842, 1.442695
      %v3899 = vpow.pop %v3898
      %v3900 = vmul.f32 %v3843, 1.442695
      %v3901 = vpow.pop %v3900
      %v3902 = vmul.f32 %v3844, 1.442695
      %v3903 = vpow.pop %v3902
      %v3904 = vmul.f32 %v3845, 1.442695
      %v3905 = vpow.pop %v3904
      %v3906 = vmul.f32 %v3846, 1.442695
      %v3907 = vpow.pop %v3906
      %v3908 = vmul.f32 %v3847, 1.442695
      %v3909 = vpow.pop %v3908
      %v3910 = vmul.f32 %v3848, 1.442695
      %v3911 = vpow.pop %v3910
      %v3912 = vmul.f32 %v3849, 1.442695
      %v3913 = vpow.pop %v3912
      %v3914 = vadd.f32 %v3851, 1.0
      %v3915 = vadd.f32 %v3853, 1.0
      %v3916 = vadd.f32 %v3855, 1.0
      %v3917 = vadd.f32 %v3857, 1.0
      %v3918 = vadd.f32 %v3859, 1.0
      %v3919 = vadd.f32 %v3861, 1.0
      %v3920 = vadd.f32 %v3863, 1.0
      %v3921 = vadd.f32 %v3865, 1.0
      %v3922 = vadd.f32 %v3867, 1.0
      %v3923 = vadd.f32 %v3869, 1.0
      %v3924 = vadd.f32 %v3871, 1.0
      %v3925 = vadd.f32 %v3873, 1.0
      %v3926 = vadd.f32 %v3875, 1.0
      %v3927 = vadd.f32 %v3877, 1.0
      %v3928 = vadd.f32 %v3879, 1.0
      %v3929 = vadd.f32 %v3881, 1.0
      %v3930 = vadd.f32 %v3883, 1.0
      %v3931 = vadd.f32 %v3885, 1.0
      %v3932 = vadd.f32 %v3887, 1.0
      %v3933 = vadd.f32 %v3889, 1.0
      %v3934 = vadd.f32 %v3891, 1.0
      %v3935 = vadd.f32 %v3893, 1.0
      %v3936 = vadd.f32 %v3895, 1.0
      %v3937 = vadd.f32 %v3897, 1.0
      %v3938 = vadd.f32 %v3899, 1.0
      %v3939 = vadd.f32 %v3901, 1.0
      %v3940 = vadd.f32 %v3903, 1.0
      %v3941 = vadd.f32 %v3905, 1.0
      %v3942 = vadd.f32 %v3907, 1.0
      %v3943 = vadd.f32 %v3909, 1.0
      %v3944 = vadd.f32 %v3911, 1.0
      %v3945 = vadd.f32 %v3913, 1.0
      %v3946 = vrcp.pop %v3914
      %v3947 = vmul.f32 %v3660, %v3946
      %v3948 = vrcp.pop %v3915
      %v3949 = vmul.f32 %v3665, %v3948
      %v3950 = vrcp.pop %v3916
      %v3951 = vmul.f32 %v3670, %v3950
      %v3952 = vrcp.pop %v3917
      %v3953 = vmul.f32 %v3675, %v3952
      %v3954 = vrcp.pop %v3918
      %v3955 = vmul.f32 %v3680, %v3954
      %v3956 = vrcp.pop %v3919
      %v3957 = vmul.f32 %v3685, %v3956
      %v3958 = vrcp.pop %v3920
      %v3959 = vmul.f32 %v3690, %v3958
      %v3960 = vrcp.pop %v3921
      %v3961 = vmul.f32 %v3695, %v3960
      %v3962 = vrcp.pop %v3922
      %v3963 = vmul.f32 %v3700, %v3962
      %v3964 = vrcp.pop %v3923
      %v3965 = vmul.f32 %v3705, %v3964
      %v3966 = vrcp.pop %v3924
      %v3967 = vmul.f32 %v3710, %v3966
      %v3968 = vrcp.pop %v3925
      %v3969 = vmul.f32 %v3715, %v3968
      %v3970 = vrcp.pop %v3926
      %v3971 = vmul.f32 %v3720, %v3970
      %v3972 = vrcp.pop %v3927
      %v3973 = vmul.f32 %v3725, %v3972
      %v3974 = vrcp.pop %v3928
      %v3975 = vmul.f32 %v3730, %v3974
      %v3976 = vrcp.pop %v3929
      %v3977 = vmul.f32 %v3735, %v3976
      %v3978 = vrcp.pop %v3930
      %v3979 = vmul.f32 %v3740, %v3978
      %v3980 = vrcp.pop %v3931
      %v3981 = vmul.f32 %v3745, %v3980
      %v3982 = vrcp.pop %v3932
      %v3983 = vmul.f32 %v3750, %v3982
      %v3984 = vrcp.pop %v3933
      %v3985 = vmul.f32 %v3755, %v3984
      %v3986 = vrcp.pop %v3934
      %v3987 = vmul.f32 %v3760, %v3986
      %v3988 = vrcp.pop %v3935
      %v3989 = vmul.f32 %v3765, %v3988
      %v3990 = vrcp.pop %v3936
      %v3991 = vmul.f32 %v3770, %v3990
      %v3992 = vrcp.pop %v3937
      %v3993 = vmul.f32 %v3775, %v3992
      %v3994 = vrcp.pop %v3938
      %v3995 = vmul.f32 %v3780, %v3994
      %v3996 = vrcp.pop %v3939
      %v3997 = vmul.f32 %v3785, %v3996
      %v3998 = vrcp.pop %v3940
      %v3999 = vmul.f32 %v3790, %v3998
      %v4000 = vrcp.pop %v3941
      %v4001 = vmul.f32 %v3795, %v4000
      %v4002 = vrcp.pop %v3942
      %v4003 = vmul.f32 %v3800, %v4002
      %v4004 = vrcp.pop %v3943
      %v4005 = vmul.f32 %v3805, %v4004
      %v4006 = vrcp.pop %v3944
      %v4007 = vmul.f32 %v3810, %v4006
      %v4008 = vrcp.pop %v3945
      %v4009 = vmul.f32 %v3815, %v4008
      %s4010 = scalar_lea.vmem %s224, 512
      %4011 = vst.msk [vmem:[%s4010] sm:$0xff] %vm1636, %v3947
      %4012 = vst.msk [vmem:[%s4010 + $0x8] sm:$0xff] %vm1636, %v3949
      %4013 = vst.msk [vmem:[%s4010 + $0x10] sm:$0xff] %vm1636, %v3951
      %4014 = vst.msk [vmem:[%s4010 + $0x18] sm:$0xff] %vm1636, %v3953
      %4015 = vst.msk [vmem:[%s4010 + $0x20] sm:$0xff] %vm1636, %v3955
      %4016 = vst.msk [vmem:[%s4010 + $0x28] sm:$0xff] %vm1636, %v3957
      %4017 = vst.msk [vmem:[%s4010 + $0x30] sm:$0xff] %vm1636, %v3959
      %4018 = vst.msk [vmem:[%s4010 + $0x38] sm:$0xff] %vm1636, %v3961
      %4019 = vst.msk [vmem:[%s4010 + $0x40] sm:$0xff] %vm1636, %v3963
      %4020 = vst.msk [vmem:[%s4010 + $0x48] sm:$0xff] %vm1636, %v3965
      %4021 = vst.msk [vmem:[%s4010 + $0x50] sm:$0xff] %vm1636, %v3967
      %4022 = vst.msk [vmem:[%s4010 + $0x58] sm:$0xff] %vm1636, %v3969
      %4023 = vst.msk [vmem:[%s4010 + $0x60] sm:$0xff] %vm1636, %v3971
      %4024 = vst.msk [vmem:[%s4010 + $0x68] sm:$0xff] %vm1636, %v3973
      %4025 = vst.msk [vmem:[%s4010 + $0x70] sm:$0xff] %vm1636, %v3975
      %4026 = vst.msk [vmem:[%s4010 + $0x78] sm:$0xff] %vm1636, %v3977
      %4027 = vst.msk [vmem:[%s4010 + $0x80] sm:$0xff] %vm1636, %v3979
      %4028 = vst.msk [vmem:[%s4010 + $0x88] sm:$0xff] %vm1636, %v3981
      %4029 = vst.msk [vmem:[%s4010 + $0x90] sm:$0xff] %vm1636, %v3983
      %4030 = vst.msk [vmem:[%s4010 + $0x98] sm:$0xff] %vm1636, %v3985
      %4031 = vst.msk [vmem:[%s4010 + $0xa0] sm:$0xff] %vm1636, %v3987
      %4032 = vst.msk [vmem:[%s4010 + $0xa8] sm:$0xff] %vm1636, %v3989
      %4033 = vst.msk [vmem:[%s4010 + $0xb0] sm:$0xff] %vm1636, %v3991
      %4034 = vst.msk [vmem:[%s4010 + $0xb8] sm:$0xff] %vm1636, %v3993
      %4035 = vst.msk [vmem:[%s4010 + $0xc0] sm:$0xff] %vm1636, %v3995
      %4036 = vst.msk [vmem:[%s4010 + $0xc8] sm:$0xff] %vm1636, %v3997
      %4037 = vst.msk [vmem:[%s4010 + $0xd0] sm:$0xff] %vm1636, %v3999
      %4038 = vst.msk [vmem:[%s4010 + $0xd8] sm:$0xff] %vm1636, %v4001
      %4039 = vst.msk [vmem:[%s4010 + $0xe0] sm:$0xff] %vm1636, %v4003
      %4040 = vst.msk [vmem:[%s4010 + $0xe8] sm:$0xff] %vm1636, %v4005
      %4041 = vst.msk [vmem:[%s4010 + $0xf0] sm:$0xff] %vm1636, %v4007
      %4042 = vst.msk [vmem:[%s4010 + $0xf8] sm:$0xff] %vm1636, %v4009
      %s4043 = scalar_lea.vmem %s1, 1536
      %v4044 = vld [vmem:[%s4043] sm:$0xff]
      %v4045 = vld [vmem:[%s4043 + $0x8] sm:$0xff]
      %v4046 = vld [vmem:[%s4043 + $0x10] sm:$0xff]
      %v4047 = vld [vmem:[%s4043 + $0x18] sm:$0xff]
      %v4048 = vld [vmem:[%s4043 + $0x20] sm:$0xff]
      %v4049 = vld [vmem:[%s4043 + $0x28] sm:$0xff]
      %v4050 = vld [vmem:[%s4043 + $0x30] sm:$0xff]
      %v4051 = vld [vmem:[%s4043 + $0x38] sm:$0xff]
      %v4052 = vld [vmem:[%s4043 + $0x40] sm:$0xff]
      %v4053 = vld [vmem:[%s4043 + $0x48] sm:$0xff]
      %v4054 = vld [vmem:[%s4043 + $0x50] sm:$0xff]
      %v4055 = vld [vmem:[%s4043 + $0x58] sm:$0xff]
      %v4056 = vld [vmem:[%s4043 + $0x60] sm:$0xff]
      %v4057 = vld [vmem:[%s4043 + $0x68] sm:$0xff]
      %v4058 = vld [vmem:[%s4043 + $0x70] sm:$0xff]
      %v4059 = vld [vmem:[%s4043 + $0x78] sm:$0xff]
      %v4060 = vld [vmem:[%s4043 + $0x80] sm:$0xff]
      %v4061 = vld [vmem:[%s4043 + $0x88] sm:$0xff]
      %v4062 = vld [vmem:[%s4043 + $0x90] sm:$0xff]
      %v4063 = vld [vmem:[%s4043 + $0x98] sm:$0xff]
      %v4064 = vld [vmem:[%s4043 + $0xa0] sm:$0xff]
      %v4065 = vld [vmem:[%s4043 + $0xa8] sm:$0xff]
      %v4066 = vld [vmem:[%s4043 + $0xb0] sm:$0xff]
      %v4067 = vld [vmem:[%s4043 + $0xb8] sm:$0xff]
      %v4068 = vld [vmem:[%s4043 + $0xc0] sm:$0xff]
      %v4069 = vld [vmem:[%s4043 + $0xc8] sm:$0xff]
      %v4070 = vld [vmem:[%s4043 + $0xd0] sm:$0xff]
      %v4071 = vld [vmem:[%s4043 + $0xd8] sm:$0xff]
      %v4072 = vld [vmem:[%s4043 + $0xe0] sm:$0xff]
      %v4073 = vld [vmem:[%s4043 + $0xe8] sm:$0xff]
      %v4074 = vld [vmem:[%s4043 + $0xf0] sm:$0xff]
      %v4075 = vld [vmem:[%s4043 + $0xf8] sm:$0xff]
      %v4076 = vld [vmem:[%s4043 + $0x100] sm:$0xff]
      %v4077 = vld [vmem:[%s4043 + $0x108] sm:$0xff]
      %v4078 = vld [vmem:[%s4043 + $0x110] sm:$0xff]
      %v4079 = vld [vmem:[%s4043 + $0x118] sm:$0xff]
      %v4080 = vld [vmem:[%s4043 + $0x120] sm:$0xff]
      %v4081 = vld [vmem:[%s4043 + $0x128] sm:$0xff]
      %v4082 = vld [vmem:[%s4043 + $0x130] sm:$0xff]
      %v4083 = vld [vmem:[%s4043 + $0x138] sm:$0xff]
      %v4084 = vld [vmem:[%s4043 + $0x140] sm:$0xff]
      %v4085 = vld [vmem:[%s4043 + $0x148] sm:$0xff]
      %v4086 = vld [vmem:[%s4043 + $0x150] sm:$0xff]
      %v4087 = vld [vmem:[%s4043 + $0x158] sm:$0xff]
      %v4088 = vld [vmem:[%s4043 + $0x160] sm:$0xff]
      %v4089 = vld [vmem:[%s4043 + $0x168] sm:$0xff]
      %v4090 = vld [vmem:[%s4043 + $0x170] sm:$0xff]
      %v4091 = vld [vmem:[%s4043 + $0x178] sm:$0xff]
      %v4092 = vld [vmem:[%s4043 + $0x180] sm:$0xff]
      %v4093 = vld [vmem:[%s4043 + $0x188] sm:$0xff]
      %v4094 = vld [vmem:[%s4043 + $0x190] sm:$0xff]
      %v4095 = vld [vmem:[%s4043 + $0x198] sm:$0xff]
      %v4096 = vld [vmem:[%s4043 + $0x1a0] sm:$0xff]
      %v4097 = vld [vmem:[%s4043 + $0x1a8] sm:$0xff]
      %v4098 = vld [vmem:[%s4043 + $0x1b0] sm:$0xff]
      %v4099 = vld [vmem:[%s4043 + $0x1b8] sm:$0xff]
      %v4100 = vld [vmem:[%s4043 + $0x1c0] sm:$0xff]
      %v4101 = vld [vmem:[%s4043 + $0x1c8] sm:$0xff]
      %v4102 = vld [vmem:[%s4043 + $0x1d0] sm:$0xff]
      %v4103 = vld [vmem:[%s4043 + $0x1d8] sm:$0xff]
      %v4104 = vld [vmem:[%s4043 + $0x1e0] sm:$0xff]
      %v4105 = vld [vmem:[%s4043 + $0x1e8] sm:$0xff]
      %v4106 = vld [vmem:[%s4043 + $0x1f0] sm:$0xff]
      %v4107 = vld [vmem:[%s4043 + $0x1f8] sm:$0xff]
      %v4108 = vld [vmem:[%s2] sm:$0x1]
      %v4110 = vlaneseq
      %v4111 = vshrl.u32 %v4110, 7
      %v4112 = vsub.s32 0, %v4111
      %v4113 = vrot.slane %v4108, %v4112
      %4115 = vmatprep.subr.mxu0 0.0
      %4116 = vmatpush1.msra.mxu0 %v4059
      %4117 = vmatprep.subr.mxu0 0.0
      %4118 = vmatpush1.msra.mxu0 %v4058
      %4119 = vmatprep.subr.mxu0 0.0
      %4120 = vmatpush1.msra.mxu0 %v4057
      %4121 = vmatprep.subr.mxu0 0.0
      %4122 = vmatpush1.msra.mxu0 %v4056
      %4123 = vmatprep.subr.mxu0 0.0
      %4124 = vmatpush1.msra.mxu0 %v4055
      %4125 = vmatprep.subr.mxu0 0.0
      %4126 = vmatpush1.msra.mxu0 %v4054
      %4127 = vmatprep.subr.mxu0 0.0
      %4128 = vmatpush1.msra.mxu0 %v4053
      %4129 = vmatprep.subr.mxu0 0.0
      %4130 = vmatpush1.msra.mxu0 %v4052
      %4131 = vmatprep.subr.mxu0 0.0
      %4132 = vmatpush1.msra.mxu0 %v4051
      %4133 = vmatprep.subr.mxu0 0.0
      %4134 = vmatpush1.msra.mxu0 %v4050
      %4135 = vmatprep.subr.mxu0 0.0
      %4136 = vmatpush1.msra.mxu0 %v4049
      %4137 = vmatprep.subr.mxu0 0.0
      %4138 = vmatpush1.msra.mxu0 %v4048
      %4139 = vmatprep.subr.mxu0 0.0
      %4140 = vmatpush1.msra.mxu0 %v4047
      %4141 = vmatprep.subr.mxu0 0.0
      %4142 = vmatpush1.msra.mxu0 %v4046
      %4143 = vmatprep.subr.mxu0 0.0
      %4144 = vmatpush1.msra.mxu0 %v4045
      %4145 = vmatprep.subr.mxu0 0.0
      %4146 = vmatpush1.msra.mxu0 %v4044
      %4147 = vmatprep.subr.mxu0 0.0
      %4148 = vmatpush2.msra.mxu0 %v4075
      %4149 = vmatprep.subr.mxu0 0.0
      %4150 = vmatpush2.msra.mxu0 %v4074
      %4151 = vmatprep.subr.mxu0 0.0
      %4152 = vmatpush2.msra.mxu0 %v4073
      %4153 = vmatprep.subr.mxu0 0.0
      %4154 = vmatpush2.msra.mxu0 %v4072
      %4155 = vmatprep.subr.mxu0 0.0
      %4156 = vmatpush2.msra.mxu0 %v4071
      %4157 = vmatprep.subr.mxu0 0.0
      %4158 = vmatpush2.msra.mxu0 %v4070
      %4159 = vmatprep.subr.mxu0 0.0
      %4160 = vmatpush2.msra.mxu0 %v4069
      %4161 = vmatprep.subr.mxu0 0.0
      %4162 = vmatpush2.msra.mxu0 %v4068
      %4163 = vmatprep.subr.mxu0 0.0
      %4164 = vmatpush2.msra.mxu0 %v4067
      %4165 = vmatprep.subr.mxu0 0.0
      %4166 = vmatpush2.msra.mxu0 %v4066
      %4167 = vmatprep.subr.mxu0 0.0
      %4168 = vmatpush2.msra.mxu0 %v4065
      %4169 = vmatprep.subr.mxu0 0.0
      %4170 = vmatpush2.msra.mxu0 %v4064
      %4171 = vmatprep.subr.mxu0 0.0
      %4172 = vmatpush2.msra.mxu0 %v4063
      %4173 = vmatprep.subr.mxu0 0.0
      %4174 = vmatpush2.msra.mxu0 %v4062
      %4175 = vmatprep.subr.mxu0 0.0
      %4176 = vmatpush2.msra.mxu0 %v4061
      %4177 = vmatprep.subr.mxu0 0.0
      %4178 = vmatpush2.msra.mxu0 %v4060
      %4179 = vmatprep.mubr.f32.mxu0 %v389
      %4180 = vmatmul.mubr.f32.gmra.mxu0 %v225
      %v4181 = vpop.f32.mrf.mxu0
      %v4182 = vadd.f32 %v4113, %v4181
      %v4183 = vpop.f32.mrf.mxu0
      %4184 = vmatprep.mubr.f32.mxu0 %v467
      %4185 = vmatmul.mubr.f32.gmra.mxu0 %v226
      %v4186 = vpop.f32.mrf.mxu0
      %v4187 = vadd.f32 %v4113, %v4186
      %v4188 = vpop.f32.mrf.mxu0
      %4189 = vmatprep.mubr.f32.mxu0 %v392
      %4190 = vmatmul.mubr.f32.gmra.mxu0 %v227
      %v4191 = vpop.f32.mrf.mxu0
      %v4192 = vadd.f32 %v4113, %v4191
      %v4193 = vpop.f32.mrf.mxu0
      %4194 = vmatprep.mubr.f32.mxu0 %v468
      %4195 = vmatmul.mubr.f32.gmra.mxu0 %v228
      %v4196 = vpop.f32.mrf.mxu0
      %v4197 = vadd.f32 %v4113, %v4196
      %v4198 = vpop.f32.mrf.mxu0
      %4199 = vmatprep.mubr.f32.mxu0 %v395
      %4200 = vmatmul.mubr.f32.gmra.mxu0 %v229
      %v4201 = vpop.f32.mrf.mxu0
      %v4202 = vadd.f32 %v4113, %v4201
      %v4203 = vpop.f32.mrf.mxu0
      %4204 = vmatprep.mubr.f32.mxu0 %v469
      %4205 = vmatmul.mubr.f32.gmra.mxu0 %v230
      %v4206 = vpop.f32.mrf.mxu0
      %v4207 = vadd.f32 %v4113, %v4206
      %v4208 = vpop.f32.mrf.mxu0
      %4209 = vmatprep.mubr.f32.mxu0 %v398
      %4210 = vmatmul.mubr.f32.gmra.mxu0 %v231
      %v4211 = vpop.f32.mrf.mxu0
      %v4212 = vadd.f32 %v4113, %v4211
      %v4213 = vpop.f32.mrf.mxu0
      %4214 = vmatprep.mubr.f32.mxu0 %v470
      %4215 = vmatmul.mubr.f32.gmra.mxu0 %v232
      %v4216 = vpop.f32.mrf.mxu0
      %v4217 = vadd.f32 %v4113, %v4216
      %v4218 = vpop.f32.mrf.mxu0
      %4219 = vmatprep.mubr.f32.mxu0 %v401
      %4220 = vmatmul.mubr.f32.gmra.mxu0 %v233
      %v4221 = vpop.f32.mrf.mxu0
      %v4222 = vadd.f32 %v4113, %v4221
      %v4223 = vpop.f32.mrf.mxu0
      %4224 = vmatprep.mubr.f32.mxu0 %v471
      %4225 = vmatmul.mubr.f32.gmra.mxu0 %v234
      %v4226 = vpop.f32.mrf.mxu0
      %v4227 = vadd.f32 %v4113, %v4226
      %v4228 = vpop.f32.mrf.mxu0
      %4229 = vmatprep.mubr.f32.mxu0 %v404
      %4230 = vmatmul.mubr.f32.gmra.mxu0 %v235
      %v4231 = vpop.f32.mrf.mxu0
      %v4232 = vadd.f32 %v4113, %v4231
      %v4233 = vpop.f32.mrf.mxu0
      %4234 = vmatprep.mubr.f32.mxu0 %v472
      %4235 = vmatmul.mubr.f32.gmra.mxu0 %v236
      %v4236 = vpop.f32.mrf.mxu0
      %v4237 = vadd.f32 %v4113, %v4236
      %v4238 = vpop.f32.mrf.mxu0
      %4239 = vmatprep.mubr.f32.mxu0 %v407
      %4240 = vmatmul.mubr.f32.gmra.mxu0 %v237
      %v4241 = vpop.f32.mrf.mxu0
      %v4242 = vadd.f32 %v4113, %v4241
      %v4243 = vpop.f32.mrf.mxu0
      %4244 = vmatprep.mubr.f32.mxu0 %v473
      %4245 = vmatmul.mubr.f32.gmra.mxu0 %v238
      %v4246 = vpop.f32.mrf.mxu0
      %v4247 = vadd.f32 %v4113, %v4246
      %v4248 = vpop.f32.mrf.mxu0
      %4249 = vmatprep.mubr.f32.mxu0 %v410
      %4250 = vmatmul.mubr.f32.gmra.mxu0 %v239
      %v4251 = vpop.f32.mrf.mxu0
      %v4252 = vadd.f32 %v4113, %v4251
      %v4253 = vpop.f32.mrf.mxu0
      %4254 = vmatprep.mubr.f32.mxu0 %v474
      %4255 = vmatmul.mubr.f32.gmra.mxu0 %v240
      %v4256 = vpop.f32.mrf.mxu0
      %v4257 = vadd.f32 %v4113, %v4256
      %v4258 = vpop.f32.mrf.mxu0
      %4259 = vmatprep.mubr.f32.mxu0 %v413
      %4260 = vmatmul.mubr.f32.gmra.mxu0 %v241
      %v4261 = vpop.f32.mrf.mxu0
      %v4262 = vadd.f32 %v4113, %v4261
      %v4263 = vpop.f32.mrf.mxu0
      %4264 = vmatprep.mubr.f32.mxu0 %v475
      %4265 = vmatmul.mubr.f32.gmra.mxu0 %v242
      %v4266 = vpop.f32.mrf.mxu0
      %v4267 = vadd.f32 %v4113, %v4266
      %v4268 = vpop.f32.mrf.mxu0
      %4269 = vmatprep.mubr.f32.mxu0 %v416
      %4270 = vmatmul.mubr.f32.gmra.mxu0 %v243
      %v4271 = vpop.f32.mrf.mxu0
      %v4272 = vadd.f32 %v4113, %v4271
      %v4273 = vpop.f32.mrf.mxu0
      %4274 = vmatprep.mubr.f32.mxu0 %v476
      %4275 = vmatmul.mubr.f32.gmra.mxu0 %v244
      %v4276 = vpop.f32.mrf.mxu0
      %v4277 = vadd.f32 %v4113, %v4276
      %v4278 = vpop.f32.mrf.mxu0
      %4279 = vmatprep.mubr.f32.mxu0 %v419
      %4280 = vmatmul.mubr.f32.gmra.mxu0 %v245
      %v4281 = vpop.f32.mrf.mxu0
      %v4282 = vadd.f32 %v4113, %v4281
      %v4283 = vpop.f32.mrf.mxu0
      %4284 = vmatprep.mubr.f32.mxu0 %v477
      %4285 = vmatmul.mubr.f32.gmra.mxu0 %v246
      %v4286 = vpop.f32.mrf.mxu0
      %v4287 = vadd.f32 %v4113, %v4286
      %v4288 = vpop.f32.mrf.mxu0
      %4289 = vmatprep.mubr.f32.mxu0 %v422
      %4290 = vmatmul.mubr.f32.gmra.mxu0 %v247
      %v4291 = vpop.f32.mrf.mxu0
      %v4292 = vadd.f32 %v4113, %v4291
      %v4293 = vpop.f32.mrf.mxu0
      %4294 = vmatprep.mubr.f32.mxu0 %v478
      %4295 = vmatmul.mubr.f32.gmra.mxu0 %v248
      %v4296 = vpop.f32.mrf.mxu0
      %v4297 = vadd.f32 %v4113, %v4296
      %v4298 = vpop.f32.mrf.mxu0
      %4299 = vmatprep.mubr.f32.mxu0 %v425
      %4300 = vmatmul.mubr.f32.gmra.mxu0 %v249
      %v4301 = vpop.f32.mrf.mxu0
      %v4302 = vadd.f32 %v4113, %v4301
      %v4303 = vpop.f32.mrf.mxu0
      %4304 = vmatprep.mubr.f32.mxu0 %v479
      %4305 = vmatmul.mubr.f32.gmra.mxu0 %v250
      %v4306 = vpop.f32.mrf.mxu0
      %v4307 = vadd.f32 %v4113, %v4306
      %v4308 = vpop.f32.mrf.mxu0
      %4309 = vmatprep.mubr.f32.mxu0 %v428
      %4310 = vmatmul.mubr.f32.gmra.mxu0 %v251
      %v4311 = vpop.f32.mrf.mxu0
      %v4312 = vadd.f32 %v4113, %v4311
      %v4313 = vpop.f32.mrf.mxu0
      %4314 = vmatprep.mubr.f32.mxu0 %v480
      %4315 = vmatmul.mubr.f32.gmra.mxu0 %v252
      %v4316 = vpop.f32.mrf.mxu0
      %v4317 = vadd.f32 %v4113, %v4316
      %v4318 = vpop.f32.mrf.mxu0
      %4319 = vmatprep.mubr.f32.mxu0 %v431
      %4320 = vmatmul.mubr.f32.gmra.mxu0 %v253
      %v4321 = vpop.f32.mrf.mxu0
      %v4322 = vadd.f32 %v4113, %v4321
      %v4323 = vpop.f32.mrf.mxu0
      %4324 = vmatprep.mubr.f32.mxu0 %v481
      %4325 = vmatmul.mubr.f32.gmra.mxu0 %v254
      %v4326 = vpop.f32.mrf.mxu0
      %v4327 = vadd.f32 %v4113, %v4326
      %v4328 = vpop.f32.mrf.mxu0
      %4329 = vmatprep.mubr.f32.mxu0 %v434
      %4330 = vmatmul.mubr.f32.gmra.mxu0 %v255
      %v4331 = vpop.f32.mrf.mxu0
      %v4332 = vadd.f32 %v4113, %v4331
      %v4333 = vpop.f32.mrf.mxu0
      %4334 = vmatprep.mubr.f32.mxu0 %v482
      %4335 = vmatmul.mubr.f32.gmra.mxu0 %v256
      %v4336 = vpop.f32.mrf.mxu0
      %v4337 = vadd.f32 %v4113, %v4336
      %v4338 = vpop.f32.mrf.mxu0
      %4339 = vdwg.mxu0
      %4340 = vmatprep.subr.mxu0 0.0
      %4341 = vmatpush1.msra.mxu0 %v4091
      %4342 = vmatprep.subr.mxu0 0.0
      %4343 = vmatpush1.msra.mxu0 %v4090
      %4344 = vmatprep.subr.mxu0 0.0
      %4345 = vmatpush1.msra.mxu0 %v4089
      %4346 = vmatprep.subr.mxu0 0.0
      %4347 = vmatpush1.msra.mxu0 %v4088
      %4348 = vmatprep.subr.mxu0 0.0
      %4349 = vmatpush1.msra.mxu0 %v4087
      %4350 = vmatprep.subr.mxu0 0.0
      %4351 = vmatpush1.msra.mxu0 %v4086
      %4352 = vmatprep.subr.mxu0 0.0
      %4353 = vmatpush1.msra.mxu0 %v4085
      %4354 = vmatprep.subr.mxu0 0.0
      %4355 = vmatpush1.msra.mxu0 %v4084
      %4356 = vmatprep.subr.mxu0 0.0
      %4357 = vmatpush1.msra.mxu0 %v4083
      %4358 = vmatprep.subr.mxu0 0.0
      %4359 = vmatpush1.msra.mxu0 %v4082
      %4360 = vmatprep.subr.mxu0 0.0
      %4361 = vmatpush1.msra.mxu0 %v4081
      %4362 = vmatprep.subr.mxu0 0.0
      %4363 = vmatpush1.msra.mxu0 %v4080
      %4364 = vmatprep.subr.mxu0 0.0
      %4365 = vmatpush1.msra.mxu0 %v4079
      %4366 = vmatprep.subr.mxu0 0.0
      %4367 = vmatpush1.msra.mxu0 %v4078
      %4368 = vmatprep.subr.mxu0 0.0
      %4369 = vmatpush1.msra.mxu0 %v4077
      %4370 = vmatprep.subr.mxu0 0.0
      %4371 = vmatpush1.msra.mxu0 %v4076
      %4372 = vmatprep.subr.mxu0 0.0
      %4373 = vmatpush2.msra.mxu0 %v4107
      %4374 = vmatprep.subr.mxu0 0.0
      %4375 = vmatpush2.msra.mxu0 %v4106
      %4376 = vmatprep.subr.mxu0 0.0
      %4377 = vmatpush2.msra.mxu0 %v4105
      %4378 = vmatprep.subr.mxu0 0.0
      %4379 = vmatpush2.msra.mxu0 %v4104
      %4380 = vmatprep.subr.mxu0 0.0
      %4381 = vmatpush2.msra.mxu0 %v4103
      %4382 = vmatprep.subr.mxu0 0.0
      %4383 = vmatpush2.msra.mxu0 %v4102
      %4384 = vmatprep.subr.mxu0 0.0
      %4385 = vmatpush2.msra.mxu0 %v4101
      %4386 = vmatprep.subr.mxu0 0.0
      %4387 = vmatpush2.msra.mxu0 %v4100
      %4388 = vmatprep.subr.mxu0 0.0
      %4389 = vmatpush2.msra.mxu0 %v4099
      %4390 = vmatprep.subr.mxu0 0.0
      %4391 = vmatpush2.msra.mxu0 %v4098
      %4392 = vmatprep.subr.mxu0 0.0
      %4393 = vmatpush2.msra.mxu0 %v4097
      %4394 = vmatprep.subr.mxu0 0.0
      %4395 = vmatpush2.msra.mxu0 %v4096
      %4396 = vmatprep.subr.mxu0 0.0
      %4397 = vmatpush2.msra.mxu0 %v4095
      %4398 = vmatprep.subr.mxu0 0.0
      %4399 = vmatpush2.msra.mxu0 %v4094
      %4400 = vmatprep.subr.mxu0 0.0
      %4401 = vmatpush2.msra.mxu0 %v4093
      %4402 = vmatprep.subr.mxu0 0.0
      %4403 = vmatpush2.msra.mxu0 %v4092
      %4404 = vmatprep.mubr.f32.mxu0 %v392
      %4405 = vmatmul.mubr.f32.gmra.mxu0 %v227
      %v4406 = vpop.f32.mrf.mxu0
      %v4407 = vadd.f32 %v4182, %v4406
      %v4408 = vpop.f32.mrf.mxu0
      %4409 = vmatprep.mubr.f32.mxu0 %v468
      %4410 = vmatmul.mubr.f32.gmra.mxu0 %v228
      %v4411 = vpop.f32.mrf.mxu0
      %v4412 = vadd.f32 %v4187, %v4411
      %v4413 = vpop.f32.mrf.mxu0
      %4414 = vmatprep.mubr.f32.mxu0 %v395
      %4415 = vmatmul.mubr.f32.gmra.mxu0 %v229
      %v4416 = vpop.f32.mrf.mxu0
      %v4417 = vadd.f32 %v4192, %v4416
      %v4418 = vpop.f32.mrf.mxu0
      %4419 = vmatprep.mubr.f32.mxu0 %v469
      %4420 = vmatmul.mubr.f32.gmra.mxu0 %v230
      %v4421 = vpop.f32.mrf.mxu0
      %v4422 = vadd.f32 %v4197, %v4421
      %v4423 = vpop.f32.mrf.mxu0
      %4424 = vmatprep.mubr.f32.mxu0 %v398
      %4425 = vmatmul.mubr.f32.gmra.mxu0 %v231
      %v4426 = vpop.f32.mrf.mxu0
      %v4427 = vadd.f32 %v4202, %v4426
      %v4428 = vpop.f32.mrf.mxu0
      %4429 = vmatprep.mubr.f32.mxu0 %v470
      %4430 = vmatmul.mubr.f32.gmra.mxu0 %v232
      %v4431 = vpop.f32.mrf.mxu0
      %v4432 = vadd.f32 %v4207, %v4431
      %v4433 = vpop.f32.mrf.mxu0
      %4434 = vmatprep.mubr.f32.mxu0 %v401
      %4435 = vmatmul.mubr.f32.gmra.mxu0 %v233
      %v4436 = vpop.f32.mrf.mxu0
      %v4437 = vadd.f32 %v4212, %v4436
      %v4438 = vpop.f32.mrf.mxu0
      %4439 = vmatprep.mubr.f32.mxu0 %v471
      %4440 = vmatmul.mubr.f32.gmra.mxu0 %v234
      %v4441 = vpop.f32.mrf.mxu0
      %v4442 = vadd.f32 %v4217, %v4441
      %v4443 = vpop.f32.mrf.mxu0
      %4444 = vmatprep.mubr.f32.mxu0 %v404
      %4445 = vmatmul.mubr.f32.gmra.mxu0 %v235
      %v4446 = vpop.f32.mrf.mxu0
      %v4447 = vadd.f32 %v4222, %v4446
      %v4448 = vpop.f32.mrf.mxu0
      %4449 = vmatprep.mubr.f32.mxu0 %v472
      %4450 = vmatmul.mubr.f32.gmra.mxu0 %v236
      %v4451 = vpop.f32.mrf.mxu0
      %v4452 = vadd.f32 %v4227, %v4451
      %v4453 = vpop.f32.mrf.mxu0
      %4454 = vmatprep.mubr.f32.mxu0 %v407
      %4455 = vmatmul.mubr.f32.gmra.mxu0 %v237
      %v4456 = vpop.f32.mrf.mxu0
      %v4457 = vadd.f32 %v4232, %v4456
      %v4458 = vpop.f32.mrf.mxu0
      %4459 = vmatprep.mubr.f32.mxu0 %v473
      %4460 = vmatmul.mubr.f32.gmra.mxu0 %v238
      %v4461 = vpop.f32.mrf.mxu0
      %v4462 = vadd.f32 %v4237, %v4461
      %v4463 = vpop.f32.mrf.mxu0
      %4464 = vmatprep.mubr.f32.mxu0 %v410
      %4465 = vmatmul.mubr.f32.gmra.mxu0 %v239
      %v4466 = vpop.f32.mrf.mxu0
      %v4467 = vadd.f32 %v4242, %v4466
      %v4468 = vpop.f32.mrf.mxu0
      %4469 = vmatprep.mubr.f32.mxu0 %v474
      %4470 = vmatmul.mubr.f32.gmra.mxu0 %v240
      %v4471 = vpop.f32.mrf.mxu0
      %v4472 = vadd.f32 %v4247, %v4471
      %v4473 = vpop.f32.mrf.mxu0
      %4474 = vmatprep.mubr.f32.mxu0 %v413
      %4475 = vmatmul.mubr.f32.gmra.mxu0 %v241
      %v4476 = vpop.f32.mrf.mxu0
      %v4477 = vadd.f32 %v4252, %v4476
      %v4478 = vpop.f32.mrf.mxu0
      %4479 = vmatprep.mubr.f32.mxu0 %v475
      %4480 = vmatmul.mubr.f32.gmra.mxu0 %v242
      %v4481 = vpop.f32.mrf.mxu0
      %v4482 = vadd.f32 %v4257, %v4481
      %v4483 = vpop.f32.mrf.mxu0
      %4484 = vmatprep.mubr.f32.mxu0 %v416
      %4485 = vmatmul.mubr.f32.gmra.mxu0 %v243
      %v4486 = vpop.f32.mrf.mxu0
      %v4487 = vadd.f32 %v4262, %v4486
      %v4488 = vpop.f32.mrf.mxu0
      %4489 = vmatprep.mubr.f32.mxu0 %v476
      %4490 = vmatmul.mubr.f32.gmra.mxu0 %v244
      %v4491 = vpop.f32.mrf.mxu0
      %v4492 = vadd.f32 %v4267, %v4491
      %v4493 = vpop.f32.mrf.mxu0
      %4494 = vmatprep.mubr.f32.mxu0 %v419
      %4495 = vmatmul.mubr.f32.gmra.mxu0 %v245
      %v4496 = vpop.f32.mrf.mxu0
      %v4497 = vadd.f32 %v4272, %v4496
      %v4498 = vpop.f32.mrf.mxu0
      %4499 = vmatprep.mubr.f32.mxu0 %v477
      %4500 = vmatmul.mubr.f32.gmra.mxu0 %v246
      %v4501 = vpop.f32.mrf.mxu0
      %v4502 = vadd.f32 %v4277, %v4501
      %v4503 = vpop.f32.mrf.mxu0
      %4504 = vmatprep.mubr.f32.mxu0 %v422
      %4505 = vmatmul.mubr.f32.gmra.mxu0 %v247
      %v4506 = vpop.f32.mrf.mxu0
      %v4507 = vadd.f32 %v4282, %v4506
      %v4508 = vpop.f32.mrf.mxu0
      %4509 = vmatprep.mubr.f32.mxu0 %v478
      %4510 = vmatmul.mubr.f32.gmra.mxu0 %v248
      %v4511 = vpop.f32.mrf.mxu0
      %v4512 = vadd.f32 %v4287, %v4511
      %v4513 = vpop.f32.mrf.mxu0
      %4514 = vmatprep.mubr.f32.mxu0 %v425
      %4515 = vmatmul.mubr.f32.gmra.mxu0 %v249
      %v4516 = vpop.f32.mrf.mxu0
      %v4517 = vadd.f32 %v4292, %v4516
      %v4518 = vpop.f32.mrf.mxu0
      %4519 = vmatprep.mubr.f32.mxu0 %v479
      %4520 = vmatmul.mubr.f32.gmra.mxu0 %v250
      %v4521 = vpop.f32.mrf.mxu0
      %v4522 = vadd.f32 %v4297, %v4521
      %v4523 = vpop.f32.mrf.mxu0
      %4524 = vmatprep.mubr.f32.mxu0 %v428
      %4525 = vmatmul.mubr.f32.gmra.mxu0 %v251
      %v4526 = vpop.f32.mrf.mxu0
      %v4527 = vadd.f32 %v4302, %v4526
      %v4528 = vpop.f32.mrf.mxu0
      %4529 = vmatprep.mubr.f32.mxu0 %v480
      %4530 = vmatmul.mubr.f32.gmra.mxu0 %v252
      %v4531 = vpop.f32.mrf.mxu0
      %v4532 = vadd.f32 %v4307, %v4531
      %v4533 = vpop.f32.mrf.mxu0
      %4534 = vmatprep.mubr.f32.mxu0 %v431
      %4535 = vmatmul.mubr.f32.gmra.mxu0 %v253
      %v4536 = vpop.f32.mrf.mxu0
      %v4537 = vadd.f32 %v4312, %v4536
      %v4538 = vpop.f32.mrf.mxu0
      %4539 = vmatprep.mubr.f32.mxu0 %v481
      %4540 = vmatmul.mubr.f32.gmra.mxu0 %v254
      %v4541 = vpop.f32.mrf.mxu0
      %v4542 = vadd.f32 %v4317, %v4541
      %v4543 = vpop.f32.mrf.mxu0
      %4544 = vmatprep.mubr.f32.mxu0 %v434
      %4545 = vmatmul.mubr.f32.gmra.mxu0 %v255
      %v4546 = vpop.f32.mrf.mxu0
      %v4547 = vadd.f32 %v4322, %v4546
      %v4548 = vpop.f32.mrf.mxu0
      %4549 = vmatprep.mubr.f32.mxu0 %v482
      %4550 = vmatmul.mubr.f32.gmra.mxu0 %v256
      %v4551 = vpop.f32.mrf.mxu0
      %v4552 = vadd.f32 %v4327, %v4551
      %v4553 = vpop.f32.mrf.mxu0
      %4554 = vmatprep.mubr.f32.mxu0 0.0
      %4555 = vmatmul.mubr.f32.gmra.mxu0 0.0
      %v4556 = vpop.f32.mrf.mxu0
      %v4557 = vadd.f32 %v4332, %v4556
      %v4558 = vpop.f32.mrf.mxu0
      %4559 = vmatprep.mubr.f32.mxu0 0.0
      %4560 = vmatmul.mubr.f32.gmra.mxu0 0.0
      %v4561 = vpop.f32.mrf.mxu0
      %v4562 = vadd.f32 %v4337, %v4561
      %v4563 = vpop.f32.mrf.mxu0
      %4564 = vdwg.mxu0
      %v4565 = vsub.f32 0.0, %v4407
      %v4566 = vsub.f32 0.0, %v4412
      %v4567 = vsub.f32 0.0, %v4417
      %v4568 = vsub.f32 0.0, %v4422
      %v4569 = vsub.f32 0.0, %v4427
      %v4570 = vsub.f32 0.0, %v4432
      %v4571 = vsub.f32 0.0, %v4437
      %v4572 = vsub.f32 0.0, %v4442
      %v4573 = vsub.f32 0.0, %v4447
      %v4574 = vsub.f32 0.0, %v4452
      %v4575 = vsub.f32 0.0, %v4457
      %v4576 = vsub.f32 0.0, %v4462
      %v4577 = vsub.f32 0.0, %v4467
      %v4578 = vsub.f32 0.0, %v4472
      %v4579 = vsub.f32 0.0, %v4477
      %v4580 = vsub.f32 0.0, %v4482
      %v4581 = vsub.f32 0.0, %v4487
      %v4582 = vsub.f32 0.0, %v4492
      %v4583 = vsub.f32 0.0, %v4497
      %v4584 = vsub.f32 0.0, %v4502
      %v4585 = vsub.f32 0.0, %v4507
      %v4586 = vsub.f32 0.0, %v4512
      %v4587 = vsub.f32 0.0, %v4517
      %v4588 = vsub.f32 0.0, %v4522
      %v4589 = vsub.f32 0.0, %v4527
      %v4590 = vsub.f32 0.0, %v4532
      %v4591 = vsub.f32 0.0, %v4537
      %v4592 = vsub.f32 0.0, %v4542
      %v4593 = vsub.f32 0.0, %v4547
      %v4594 = vsub.f32 0.0, %v4552
      %v4595 = vsub.f32 0.0, %v4557
      %v4596 = vsub.f32 0.0, %v4562
      %v4597 = vmul.f32 %v4565, 1.442695
      %v4598 = vpow.pop %v4597
      %v4599 = vmul.f32 %v4566, 1.442695
      %v4600 = vpow.pop %v4599
      %v4601 = vmul.f32 %v4567, 1.442695
      %v4602 = vpow.pop %v4601
      %v4603 = vmul.f32 %v4568, 1.442695
      %v4604 = vpow.pop %v4603
      %v4605 = vmul.f32 %v4569, 1.442695
      %v4606 = vpow.pop %v4605
      %v4607 = vmul.f32 %v4570, 1.442695
      %v4608 = vpow.pop %v4607
      %v4609 = vmul.f32 %v4571, 1.442695
      %v4610 = vpow.pop %v4609
      %v4611 = vmul.f32 %v4572, 1.442695
      %v4612 = vpow.pop %v4611
      %v4613 = vmul.f32 %v4573, 1.442695
      %v4614 = vpow.pop %v4613
      %v4615 = vmul.f32 %v4574, 1.442695
      %v4616 = vpow.pop %v4615
      %v4617 = vmul.f32 %v4575, 1.442695
      %v4618 = vpow.pop %v4617
      %v4619 = vmul.f32 %v4576, 1.442695
      %v4620 = vpow.pop %v4619
      %v4621 = vmul.f32 %v4577, 1.442695
      %v4622 = vpow.pop %v4621
      %v4623 = vmul.f32 %v4578, 1.442695
      %v4624 = vpow.pop %v4623
      %v4625 = vmul.f32 %v4579, 1.442695
      %v4626 = vpow.pop %v4625
      %v4627 = vmul.f32 %v4580, 1.442695
      %v4628 = vpow.pop %v4627
      %v4629 = vmul.f32 %v4581, 1.442695
      %v4630 = vpow.pop %v4629
      %v4631 = vmul.f32 %v4582, 1.442695
      %v4632 = vpow.pop %v4631
      %v4633 = vmul.f32 %v4583, 1.442695
      %v4634 = vpow.pop %v4633
      %v4635 = vmul.f32 %v4584, 1.442695
      %v4636 = vpow.pop %v4635
      %v4637 = vmul.f32 %v4585, 1.442695
      %v4638 = vpow.pop %v4637
      %v4639 = vmul.f32 %v4586, 1.442695
      %v4640 = vpow.pop %v4639
      %v4641 = vmul.f32 %v4587, 1.442695
      %v4642 = vpow.pop %v4641
      %v4643 = vmul.f32 %v4588, 1.442695
      %v4644 = vpow.pop %v4643
      %v4645 = vmul.f32 %v4589, 1.442695
      %v4646 = vpow.pop %v4645
      %v4647 = vmul.f32 %v4590, 1.442695
      %v4648 = vpow.pop %v4647
      %v4649 = vmul.f32 %v4591, 1.442695
      %v4650 = vpow.pop %v4649
      %v4651 = vmul.f32 %v4592, 1.442695
      %v4652 = vpow.pop %v4651
      %v4653 = vmul.f32 %v4593, 1.442695
      %v4654 = vpow.pop %v4653
      %v4655 = vmul.f32 %v4594, 1.442695
      %v4656 = vpow.pop %v4655
      %v4657 = vmul.f32 %v4595, 1.442695
      %v4658 = vpow.pop %v4657
      %v4659 = vmul.f32 %v4596, 1.442695
      %v4660 = vpow.pop %v4659
      %v4661 = vadd.f32 %v4598, 1.0
      %v4662 = vadd.f32 %v4600, 1.0
      %v4663 = vadd.f32 %v4602, 1.0
      %v4664 = vadd.f32 %v4604, 1.0
      %v4665 = vadd.f32 %v4606, 1.0
      %v4666 = vadd.f32 %v4608, 1.0
      %v4667 = vadd.f32 %v4610, 1.0
      %v4668 = vadd.f32 %v4612, 1.0
      %v4669 = vadd.f32 %v4614, 1.0
      %v4670 = vadd.f32 %v4616, 1.0
      %v4671 = vadd.f32 %v4618, 1.0
      %v4672 = vadd.f32 %v4620, 1.0
      %v4673 = vadd.f32 %v4622, 1.0
      %v4674 = vadd.f32 %v4624, 1.0
      %v4675 = vadd.f32 %v4626, 1.0
      %v4676 = vadd.f32 %v4628, 1.0
      %v4677 = vadd.f32 %v4630, 1.0
      %v4678 = vadd.f32 %v4632, 1.0
      %v4679 = vadd.f32 %v4634, 1.0
      %v4680 = vadd.f32 %v4636, 1.0
      %v4681 = vadd.f32 %v4638, 1.0
      %v4682 = vadd.f32 %v4640, 1.0
      %v4683 = vadd.f32 %v4642, 1.0
      %v4684 = vadd.f32 %v4644, 1.0
      %v4685 = vadd.f32 %v4646, 1.0
      %v4686 = vadd.f32 %v4648, 1.0
      %v4687 = vadd.f32 %v4650, 1.0
      %v4688 = vadd.f32 %v4652, 1.0
      %v4689 = vadd.f32 %v4654, 1.0
      %v4690 = vadd.f32 %v4656, 1.0
      %v4691 = vadd.f32 %v4658, 1.0
      %v4692 = vadd.f32 %v4660, 1.0
      %v4693 = vrcp.pop %v4661
      %v4694 = vmul.f32 %v4407, %v4693
      %v4695 = vrcp.pop %v4662
      %v4696 = vmul.f32 %v4412, %v4695
      %v4697 = vrcp.pop %v4663
      %v4698 = vmul.f32 %v4417, %v4697
      %v4699 = vrcp.pop %v4664
      %v4700 = vmul.f32 %v4422, %v4699
      %v4701 = vrcp.pop %v4665
      %v4702 = vmul.f32 %v4427, %v4701
      %v4703 = vrcp.pop %v4666
      %v4704 = vmul.f32 %v4432, %v4703
      %v4705 = vrcp.pop %v4667
      %v4706 = vmul.f32 %v4437, %v4705
      %v4707 = vrcp.pop %v4668
      %v4708 = vmul.f32 %v4442, %v4707
      %v4709 = vrcp.pop %v4669
      %v4710 = vmul.f32 %v4447, %v4709
      %v4711 = vrcp.pop %v4670
      %v4712 = vmul.f32 %v4452, %v4711
      %v4713 = vrcp.pop %v4671
      %v4714 = vmul.f32 %v4457, %v4713
      %v4715 = vrcp.pop %v4672
      %v4716 = vmul.f32 %v4462, %v4715
      %v4717 = vrcp.pop %v4673
      %v4718 = vmul.f32 %v4467, %v4717
      %v4719 = vrcp.pop %v4674
      %v4720 = vmul.f32 %v4472, %v4719
      %v4721 = vrcp.pop %v4675
      %v4722 = vmul.f32 %v4477, %v4721
      %v4723 = vrcp.pop %v4676
      %v4724 = vmul.f32 %v4482, %v4723
      %v4725 = vrcp.pop %v4677
      %v4726 = vmul.f32 %v4487, %v4725
      %v4727 = vrcp.pop %v4678
      %v4728 = vmul.f32 %v4492, %v4727
      %v4729 = vrcp.pop %v4679
      %v4730 = vmul.f32 %v4497, %v4729
      %v4731 = vrcp.pop %v4680
      %v4732 = vmul.f32 %v4502, %v4731
      %v4733 = vrcp.pop %v4681
      %v4734 = vmul.f32 %v4507, %v4733
      %v4735 = vrcp.pop %v4682
      %v4736 = vmul.f32 %v4512, %v4735
      %v4737 = vrcp.pop %v4683
      %v4738 = vmul.f32 %v4517, %v4737
      %v4739 = vrcp.pop %v4684
      %v4740 = vmul.f32 %v4522, %v4739
      %v4741 = vrcp.pop %v4685
      %v4742 = vmul.f32 %v4527, %v4741
      %v4743 = vrcp.pop %v4686
      %v4744 = vmul.f32 %v4532, %v4743
      %v4745 = vrcp.pop %v4687
      %v4746 = vmul.f32 %v4537, %v4745
      %v4747 = vrcp.pop %v4688
      %v4748 = vmul.f32 %v4542, %v4747
      %v4749 = vrcp.pop %v4689
      %v4750 = vmul.f32 %v4547, %v4749
      %v4751 = vrcp.pop %v4690
      %v4752 = vmul.f32 %v4552, %v4751
      %v4753 = vrcp.pop %v4691
      %v4754 = vmul.f32 %v4557, %v4753
      %v4755 = vrcp.pop %v4692
      %v4756 = vmul.f32 %v4562, %v4755
      %v4757 = vld [vmem:[%s3] sm:$0xff]
      %v4758 = vld [vmem:[%s3 + $0x8] sm:$0xff]
      %v4759 = vld [vmem:[%s3 + $0x10] sm:$0xff]
      %v4760 = vld [vmem:[%s3 + $0x18] sm:$0xff]
      %v4761 = vld [vmem:[%s3 + $0x20] sm:$0xff]
      %v4762 = vld [vmem:[%s3 + $0x28] sm:$0xff]
      %v4763 = vld [vmem:[%s3 + $0x30] sm:$0xff]
      %v4764 = vld [vmem:[%s3 + $0x38] sm:$0xff]
      %v4765 = vld [vmem:[%s3 + $0x40] sm:$0xff]
      %v4766 = vld [vmem:[%s3 + $0x48] sm:$0xff]
      %v4767 = vld [vmem:[%s3 + $0x50] sm:$0xff]
      %v4768 = vld [vmem:[%s3 + $0x58] sm:$0xff]
      %v4769 = vld [vmem:[%s3 + $0x60] sm:$0xff]
      %v4770 = vld [vmem:[%s3 + $0x68] sm:$0xff]
      %v4771 = vld [vmem:[%s3 + $0x70] sm:$0xff]
      %v4772 = vld [vmem:[%s3 + $0x78] sm:$0xff]
      %v4773 = vld [vmem:[%s4] sm:$0x1]
      %v4775 = vlaneseq
      %v4776 = vshrl.u32 %v4775, 7
      %v4777 = vsub.s32 0, %v4776
      %v4778 = vrot.slane %v4773, %v4777
      %4780 = vmatprep.subr.mxu0 0.0
      %4781 = vmatpush1.msra.mxu0 %v4772
      %4782 = vmatprep.subr.mxu0 0.0
      %4783 = vmatpush1.msra.mxu0 %v4771
      %4784 = vmatprep.subr.mxu0 0.0
      %4785 = vmatpush1.msra.mxu0 %v4770
      %4786 = vmatprep.subr.mxu0 0.0
      %4787 = vmatpush1.msra.mxu0 %v4769
      %4788 = vmatprep.subr.mxu0 0.0
      %4789 = vmatpush1.msra.mxu0 %v4768
      %4790 = vmatprep.subr.mxu0 0.0
      %4791 = vmatpush1.msra.mxu0 %v4767
      %4792 = vmatprep.subr.mxu0 0.0
      %4793 = vmatpush1.msra.mxu0 %v4766
      %4794 = vmatprep.subr.mxu0 0.0
      %4795 = vmatpush1.msra.mxu0 %v4765
      %4796 = vmatprep.subr.mxu0 0.0
      %4797 = vmatpush1.msra.mxu0 %v4764
      %4798 = vmatprep.subr.mxu0 0.0
      %4799 = vmatpush1.msra.mxu0 %v4763
      %4800 = vmatprep.subr.mxu0 0.0
      %4801 = vmatpush1.msra.mxu0 %v4762
      %4802 = vmatprep.subr.mxu0 0.0
      %4803 = vmatpush1.msra.mxu0 %v4761
      %4804 = vmatprep.subr.mxu0 0.0
      %4805 = vmatpush1.msra.mxu0 %v4760
      %4806 = vmatprep.subr.mxu0 0.0
      %4807 = vmatpush1.msra.mxu0 %v4759
      %4808 = vmatprep.subr.mxu0 0.0
      %4809 = vmatpush1.msra.mxu0 %v4758
      %4810 = vmatprep.subr.mxu0 0.0
      %4811 = vmatpush1.msra.mxu0 %v4757
      %4812 = vmatprep.subr.mxu0 0.0
      %4813 = vmatpush2.msra.mxu0 0.0
      %4814 = vmatprep.subr.mxu0 0.0
      %4815 = vmatpush2.msra.mxu0 0.0
      %4816 = vmatprep.subr.mxu0 0.0
      %4817 = vmatpush2.msra.mxu0 0.0
      %4818 = vmatprep.subr.mxu0 0.0
      %4819 = vmatpush2.msra.mxu0 0.0
      %4820 = vmatprep.subr.mxu0 0.0
      %4821 = vmatpush2.msra.mxu0 0.0
      %4822 = vmatprep.subr.mxu0 0.0
      %4823 = vmatpush2.msra.mxu0 0.0
      %4824 = vmatprep.subr.mxu0 0.0
      %4825 = vmatpush2.msra.mxu0 0.0
      %4826 = vmatprep.subr.mxu0 0.0
      %4827 = vmatpush2.msra.mxu0 0.0
      %4828 = vmatprep.subr.mxu0 0.0
      %4829 = vmatpush2.msra.mxu0 0.0
      %4830 = vmatprep.subr.mxu0 0.0
      %4831 = vmatpush2.msra.mxu0 0.0
      %4832 = vmatprep.subr.mxu0 0.0
      %4833 = vmatpush2.msra.mxu0 0.0
      %4834 = vmatprep.subr.mxu0 0.0
      %4835 = vmatpush2.msra.mxu0 0.0
      %4836 = vmatprep.subr.mxu0 0.0
      %4837 = vmatpush2.msra.mxu0 0.0
      %4838 = vmatprep.subr.mxu0 0.0
      %4839 = vmatpush2.msra.mxu0 0.0
      %4840 = vmatprep.subr.mxu0 0.0
      %4841 = vmatpush2.msra.mxu0 0.0
      %4842 = vmatprep.subr.mxu0 0.0
      %4843 = vmatpush2.msra.mxu0 0.0
      %4844 = vmatprep.mubr.f32.mxu0 0.0
      %4845 = vmatmul.mubr.f32.gmra.mxu0 %v4694
      %v4846 = vpop.f32.mrf.mxu0
      %v4847 = vadd.f32 %v4778, %v4846
      %v4848 = vpop.f32.mrf.mxu0
      %4849 = vmatprep.mubr.f32.mxu0 0.0
      %4850 = vmatmul.mubr.f32.gmra.mxu0 %v4696
      %v4851 = vpop.f32.mrf.mxu0
      %v4852 = vadd.f32 %v4778, %v4851
      %v4853 = vpop.f32.mrf.mxu0
      %4854 = vmatprep.mubr.f32.mxu0 0.0
      %4855 = vmatmul.mubr.f32.gmra.mxu0 %v4698
      %v4856 = vpop.f32.mrf.mxu0
      %v4857 = vadd.f32 %v4778, %v4856
      %v4858 = vpop.f32.mrf.mxu0
      %4859 = vmatprep.mubr.f32.mxu0 0.0
      %4860 = vmatmul.mubr.f32.gmra.mxu0 %v4700
      %v4861 = vpop.f32.mrf.mxu0
      %v4862 = vadd.f32 %v4778, %v4861
      %v4863 = vpop.f32.mrf.mxu0
      %4864 = vmatprep.mubr.f32.mxu0 0.0
      %4865 = vmatmul.mubr.f32.gmra.mxu0 %v4702
      %v4866 = vpop.f32.mrf.mxu0
      %v4867 = vadd.f32 %v4778, %v4866
      %v4868 = vpop.f32.mrf.mxu0
      %4869 = vmatprep.mubr.f32.mxu0 0.0
      %4870 = vmatmul.mubr.f32.gmra.mxu0 %v4704
      %v4871 = vpop.f32.mrf.mxu0
      %v4872 = vadd.f32 %v4778, %v4871
      %v4873 = vpop.f32.mrf.mxu0
      %4874 = vmatprep.mubr.f32.mxu0 0.0
      %4875 = vmatmul.mubr.f32.gmra.mxu0 %v4706
      %v4876 = vpop.f32.mrf.mxu0
      %v4877 = vadd.f32 %v4778, %v4876
      %v4878 = vpop.f32.mrf.mxu0
      %4879 = vmatprep.mubr.f32.mxu0 0.0
      %4880 = vmatmul.mubr.f32.gmra.mxu0 %v4708
      %v4881 = vpop.f32.mrf.mxu0
      %v4882 = vadd.f32 %v4778, %v4881
      %v4883 = vpop.f32.mrf.mxu0
      %4884 = vmatprep.mubr.f32.mxu0 0.0
      %4885 = vmatmul.mubr.f32.gmra.mxu0 %v4710
      %v4886 = vpop.f32.mrf.mxu0
      %v4887 = vadd.f32 %v4778, %v4886
      %v4888 = vpop.f32.mrf.mxu0
      %4889 = vmatprep.mubr.f32.mxu0 0.0
      %4890 = vmatmul.mubr.f32.gmra.mxu0 %v4712
      %v4891 = vpop.f32.mrf.mxu0
      %v4892 = vadd.f32 %v4778, %v4891
      %v4893 = vpop.f32.mrf.mxu0
      %4894 = vmatprep.mubr.f32.mxu0 0.0
      %4895 = vmatmul.mubr.f32.gmra.mxu0 %v4714
      %v4896 = vpop.f32.mrf.mxu0
      %v4897 = vadd.f32 %v4778, %v4896
      %v4898 = vpop.f32.mrf.mxu0
      %4899 = vmatprep.mubr.f32.mxu0 0.0
      %4900 = vmatmul.mubr.f32.gmra.mxu0 %v4716
      %v4901 = vpop.f32.mrf.mxu0
      %v4902 = vadd.f32 %v4778, %v4901
      %v4903 = vpop.f32.mrf.mxu0
      %4904 = vmatprep.mubr.f32.mxu0 0.0
      %4905 = vmatmul.mubr.f32.gmra.mxu0 %v4718
      %v4906 = vpop.f32.mrf.mxu0
      %v4907 = vadd.f32 %v4778, %v4906
      %v4908 = vpop.f32.mrf.mxu0
      %4909 = vmatprep.mubr.f32.mxu0 0.0
      %4910 = vmatmul.mubr.f32.gmra.mxu0 %v4720
      %v4911 = vpop.f32.mrf.mxu0
      %v4912 = vadd.f32 %v4778, %v4911
      %v4913 = vpop.f32.mrf.mxu0
      %4914 = vmatprep.mubr.f32.mxu0 0.0
      %4915 = vmatmul.mubr.f32.gmra.mxu0 %v4722
      %v4916 = vpop.f32.mrf.mxu0
      %v4917 = vadd.f32 %v4778, %v4916
      %v4918 = vpop.f32.mrf.mxu0
      %4919 = vmatprep.mubr.f32.mxu0 0.0
      %4920 = vmatmul.mubr.f32.gmra.mxu0 %v4724
      %v4921 = vpop.f32.mrf.mxu0
      %v4922 = vadd.f32 %v4778, %v4921
      %v4923 = vpop.f32.mrf.mxu0
      %4924 = vmatprep.mubr.f32.mxu0 0.0
      %4925 = vmatmul.mubr.f32.gmra.mxu0 %v4726
      %v4926 = vpop.f32.mrf.mxu0
      %v4927 = vadd.f32 %v4778, %v4926
      %v4928 = vpop.f32.mrf.mxu0
      %4929 = vmatprep.mubr.f32.mxu0 0.0
      %4930 = vmatmul.mubr.f32.gmra.mxu0 %v4728
      %v4931 = vpop.f32.mrf.mxu0
      %v4932 = vadd.f32 %v4778, %v4931
      %v4933 = vpop.f32.mrf.mxu0
      %4934 = vmatprep.mubr.f32.mxu0 0.0
      %4935 = vmatmul.mubr.f32.gmra.mxu0 %v4730
      %v4936 = vpop.f32.mrf.mxu0
      %v4937 = vadd.f32 %v4778, %v4936
      %v4938 = vpop.f32.mrf.mxu0
      %4939 = vmatprep.mubr.f32.mxu0 0.0
      %4940 = vmatmul.mubr.f32.gmra.mxu0 %v4732
      %v4941 = vpop.f32.mrf.mxu0
      %v4942 = vadd.f32 %v4778, %v4941
      %v4943 = vpop.f32.mrf.mxu0
      %4944 = vmatprep.mubr.f32.mxu0 0.0
      %4945 = vmatmul.mubr.f32.gmra.mxu0 %v4734
      %v4946 = vpop.f32.mrf.mxu0
      %v4947 = vadd.f32 %v4778, %v4946
      %v4948 = vpop.f32.mrf.mxu0
      %4949 = vmatprep.mubr.f32.mxu0 0.0
      %4950 = vmatmul.mubr.f32.gmra.mxu0 %v4736
      %v4951 = vpop.f32.mrf.mxu0
      %v4952 = vadd.f32 %v4778, %v4951
      %v4953 = vpop.f32.mrf.mxu0
      %4954 = vmatprep.mubr.f32.mxu0 0.0
      %4955 = vmatmul.mubr.f32.gmra.mxu0 %v4738
      %v4956 = vpop.f32.mrf.mxu0
      %v4957 = vadd.f32 %v4778, %v4956
      %v4958 = vpop.f32.mrf.mxu0
      %4959 = vmatprep.mubr.f32.mxu0 0.0
      %4960 = vmatmul.mubr.f32.gmra.mxu0 %v4740
      %v4961 = vpop.f32.mrf.mxu0
      %v4962 = vadd.f32 %v4778, %v4961
      %v4963 = vpop.f32.mrf.mxu0
      %4964 = vmatprep.mubr.f32.mxu0 0.0
      %4965 = vmatmul.mubr.f32.gmra.mxu0 %v4742
      %v4966 = vpop.f32.mrf.mxu0
      %v4967 = vadd.f32 %v4778, %v4966
      %v4968 = vpop.f32.mrf.mxu0
      %4969 = vmatprep.mubr.f32.mxu0 0.0
      %4970 = vmatmul.mubr.f32.gmra.mxu0 %v4744
      %v4971 = vpop.f32.mrf.mxu0
      %v4972 = vadd.f32 %v4778, %v4971
      %v4973 = vpop.f32.mrf.mxu0
      %4974 = vmatprep.mubr.f32.mxu0 0.0
      %4975 = vmatmul.mubr.f32.gmra.mxu0 %v4746
      %v4976 = vpop.f32.mrf.mxu0
      %v4977 = vadd.f32 %v4778, %v4976
      %v4978 = vpop.f32.mrf.mxu0
      %4979 = vmatprep.mubr.f32.mxu0 0.0
      %4980 = vmatmul.mubr.f32.gmra.mxu0 %v4748
      %v4981 = vpop.f32.mrf.mxu0
      %v4982 = vadd.f32 %v4778, %v4981
      %v4983 = vpop.f32.mrf.mxu0
      %4984 = vmatprep.mubr.f32.mxu0 0.0
      %4985 = vmatmul.mubr.f32.gmra.mxu0 %v4750
      %v4986 = vpop.f32.mrf.mxu0
      %v4987 = vadd.f32 %v4778, %v4986
      %v4988 = vpop.f32.mrf.mxu0
      %4989 = vmatprep.mubr.f32.mxu0 0.0
      %4990 = vmatmul.mubr.f32.gmra.mxu0 %v4752
      %v4991 = vpop.f32.mrf.mxu0
      %v4992 = vadd.f32 %v4778, %v4991
      %v4993 = vpop.f32.mrf.mxu0
      %4994 = vmatprep.mubr.f32.mxu0 0.0
      %4995 = vmatmul.mubr.f32.gmra.mxu0 %v4754
      %v4996 = vpop.f32.mrf.mxu0
      %v4997 = vadd.f32 %v4778, %v4996
      %v4998 = vpop.f32.mrf.mxu0
      %4999 = vmatprep.mubr.f32.mxu0 0.0
      %5000 = vmatmul.mubr.f32.gmra.mxu0 %v4756
      %v5001 = vpop.f32.mrf.mxu0
      %v5002 = vadd.f32 %v4778, %v5001
      %v5003 = vpop.f32.mrf.mxu0
      %5004 = vdwg.mxu0
      %v5005 = vsub.f32 0.0, %v4847
      %v5006 = vsub.f32 0.0, %v4852
      %v5007 = vsub.f32 0.0, %v4857
      %v5008 = vsub.f32 0.0, %v4862
      %v5009 = vsub.f32 0.0, %v4867
      %v5010 = vsub.f32 0.0, %v4872
      %v5011 = vsub.f32 0.0, %v4877
      %v5012 = vsub.f32 0.0, %v4882
      %v5013 = vsub.f32 0.0, %v4887
      %v5014 = vsub.f32 0.0, %v4892
      %v5015 = vsub.f32 0.0, %v4897
      %v5016 = vsub.f32 0.0, %v4902
      %v5017 = vsub.f32 0.0, %v4907
      %v5018 = vsub.f32 0.0, %v4912
      %v5019 = vsub.f32 0.0, %v4917
      %v5020 = vsub.f32 0.0, %v4922
      %v5021 = vsub.f32 0.0, %v4927
      %v5022 = vsub.f32 0.0, %v4932
      %v5023 = vsub.f32 0.0, %v4937
      %v5024 = vsub.f32 0.0, %v4942
      %v5025 = vsub.f32 0.0, %v4947
      %v5026 = vsub.f32 0.0, %v4952
      %v5027 = vsub.f32 0.0, %v4957
      %v5028 = vsub.f32 0.0, %v4962
      %v5029 = vsub.f32 0.0, %v4967
      %v5030 = vsub.f32 0.0, %v4972
      %v5031 = vsub.f32 0.0, %v4977
      %v5032 = vsub.f32 0.0, %v4982
      %v5033 = vsub.f32 0.0, %v4987
      %v5034 = vsub.f32 0.0, %v4992
      %v5035 = vsub.f32 0.0, %v4997
      %v5036 = vsub.f32 0.0, %v5002
      %v5037 = vmul.f32 %v5005, 1.442695
      %v5038 = vpow.pop %v5037
      %v5039 = vmul.f32 %v5006, 1.442695
      %v5040 = vpow.pop %v5039
      %v5041 = vmul.f32 %v5007, 1.442695
      %v5042 = vpow.pop %v5041
      %v5043 = vmul.f32 %v5008, 1.442695
      %v5044 = vpow.pop %v5043
      %v5045 = vmul.f32 %v5009, 1.442695
      %v5046 = vpow.pop %v5045
      %v5047 = vmul.f32 %v5010, 1.442695
      %v5048 = vpow.pop %v5047
      %v5049 = vmul.f32 %v5011, 1.442695
      %v5050 = vpow.pop %v5049
      %v5051 = vmul.f32 %v5012, 1.442695
      %v5052 = vpow.pop %v5051
      %v5053 = vmul.f32 %v5013, 1.442695
      %v5054 = vpow.pop %v5053
      %v5055 = vmul.f32 %v5014, 1.442695
      %v5056 = vpow.pop %v5055
      %v5057 = vmul.f32 %v5015, 1.442695
      %v5058 = vpow.pop %v5057
      %v5059 = vmul.f32 %v5016, 1.442695
      %v5060 = vpow.pop %v5059
      %v5061 = vmul.f32 %v5017, 1.442695
      %v5062 = vpow.pop %v5061
      %v5063 = vmul.f32 %v5018, 1.442695
      %v5064 = vpow.pop %v5063
      %v5065 = vmul.f32 %v5019, 1.442695
      %v5066 = vpow.pop %v5065
      %v5067 = vmul.f32 %v5020, 1.442695
      %v5068 = vpow.pop %v5067
      %v5069 = vmul.f32 %v5021, 1.442695
      %v5070 = vpow.pop %v5069
      %v5071 = vmul.f32 %v5022, 1.442695
      %v5072 = vpow.pop %v5071
      %v5073 = vmul.f32 %v5023, 1.442695
      %v5074 = vpow.pop %v5073
      %v5075 = vmul.f32 %v5024, 1.442695
      %v5076 = vpow.pop %v5075
      %v5077 = vmul.f32 %v5025, 1.442695
      %v5078 = vpow.pop %v5077
      %v5079 = vmul.f32 %v5026, 1.442695
      %v5080 = vpow.pop %v5079
      %v5081 = vmul.f32 %v5027, 1.442695
      %v5082 = vpow.pop %v5081
      %v5083 = vmul.f32 %v5028, 1.442695
      %v5084 = vpow.pop %v5083
      %v5085 = vmul.f32 %v5029, 1.442695
      %v5086 = vpow.pop %v5085
      %v5087 = vmul.f32 %v5030, 1.442695
      %v5088 = vpow.pop %v5087
      %v5089 = vmul.f32 %v5031, 1.442695
      %v5090 = vpow.pop %v5089
      %v5091 = vmul.f32 %v5032, 1.442695
      %v5092 = vpow.pop %v5091
      %v5093 = vmul.f32 %v5033, 1.442695
      %v5094 = vpow.pop %v5093
      %v5095 = vmul.f32 %v5034, 1.442695
      %v5096 = vpow.pop %v5095
      %v5097 = vmul.f32 %v5035, 1.442695
      %v5098 = vpow.pop %v5097
      %v5099 = vmul.f32 %v5036, 1.442695
      %v5100 = vpow.pop %v5099
      %v5101 = vadd.f32 %v5038, 1.0
      %v5102 = vadd.f32 %v5040, 1.0
      %v5103 = vadd.f32 %v5042, 1.0
      %v5104 = vadd.f32 %v5044, 1.0
      %v5105 = vadd.f32 %v5046, 1.0
      %v5106 = vadd.f32 %v5048, 1.0
      %v5107 = vadd.f32 %v5050, 1.0
      %v5108 = vadd.f32 %v5052, 1.0
      %v5109 = vadd.f32 %v5054, 1.0
      %v5110 = vadd.f32 %v5056, 1.0
      %v5111 = vadd.f32 %v5058, 1.0
      %v5112 = vadd.f32 %v5060, 1.0
      %v5113 = vadd.f32 %v5062, 1.0
      %v5114 = vadd.f32 %v5064, 1.0
      %v5115 = vadd.f32 %v5066, 1.0
      %v5116 = vadd.f32 %v5068, 1.0
      %v5117 = vadd.f32 %v5070, 1.0
      %v5118 = vadd.f32 %v5072, 1.0
      %v5119 = vadd.f32 %v5074, 1.0
      %v5120 = vadd.f32 %v5076, 1.0
      %v5121 = vadd.f32 %v5078, 1.0
      %v5122 = vadd.f32 %v5080, 1.0
      %v5123 = vadd.f32 %v5082, 1.0
      %v5124 = vadd.f32 %v5084, 1.0
      %v5125 = vadd.f32 %v5086, 1.0
      %v5126 = vadd.f32 %v5088, 1.0
      %v5127 = vadd.f32 %v5090, 1.0
      %v5128 = vadd.f32 %v5092, 1.0
      %v5129 = vadd.f32 %v5094, 1.0
      %v5130 = vadd.f32 %v5096, 1.0
      %v5131 = vadd.f32 %v5098, 1.0
      %v5132 = vadd.f32 %v5100, 1.0
      %v5133 = vrcp.pop %v5101
      %v5134 = vmul.f32 %v4847, %v5133
      %v5135 = vrcp.pop %v5102
      %v5136 = vmul.f32 %v4852, %v5135
      %v5137 = vrcp.pop %v5103
      %v5138 = vmul.f32 %v4857, %v5137
      %v5139 = vrcp.pop %v5104
      %v5140 = vmul.f32 %v4862, %v5139
      %v5141 = vrcp.pop %v5105
      %v5142 = vmul.f32 %v4867, %v5141
      %v5143 = vrcp.pop %v5106
      %v5144 = vmul.f32 %v4872, %v5143
      %v5145 = vrcp.pop %v5107
      %v5146 = vmul.f32 %v4877, %v5145
      %v5147 = vrcp.pop %v5108
      %v5148 = vmul.f32 %v4882, %v5147
      %v5149 = vrcp.pop %v5109
      %v5150 = vmul.f32 %v4887, %v5149
      %v5151 = vrcp.pop %v5110
      %v5152 = vmul.f32 %v4892, %v5151
      %v5153 = vrcp.pop %v5111
      %v5154 = vmul.f32 %v4897, %v5153
      %v5155 = vrcp.pop %v5112
      %v5156 = vmul.f32 %v4902, %v5155
      %v5157 = vrcp.pop %v5113
      %v5158 = vmul.f32 %v4907, %v5157
      %v5159 = vrcp.pop %v5114
      %v5160 = vmul.f32 %v4912, %v5159
      %v5161 = vrcp.pop %v5115
      %v5162 = vmul.f32 %v4917, %v5161
      %v5163 = vrcp.pop %v5116
      %v5164 = vmul.f32 %v4922, %v5163
      %v5165 = vrcp.pop %v5117
      %v5166 = vmul.f32 %v4927, %v5165
      %v5167 = vrcp.pop %v5118
      %v5168 = vmul.f32 %v4932, %v5167
      %v5169 = vrcp.pop %v5119
      %v5170 = vmul.f32 %v4937, %v5169
      %v5171 = vrcp.pop %v5120
      %v5172 = vmul.f32 %v4942, %v5171
      %v5173 = vrcp.pop %v5121
      %v5174 = vmul.f32 %v4947, %v5173
      %v5175 = vrcp.pop %v5122
      %v5176 = vmul.f32 %v4952, %v5175
      %v5177 = vrcp.pop %v5123
      %v5178 = vmul.f32 %v4957, %v5177
      %v5179 = vrcp.pop %v5124
      %v5180 = vmul.f32 %v4962, %v5179
      %v5181 = vrcp.pop %v5125
      %v5182 = vmul.f32 %v4967, %v5181
      %v5183 = vrcp.pop %v5126
      %v5184 = vmul.f32 %v4972, %v5183
      %v5185 = vrcp.pop %v5127
      %v5186 = vmul.f32 %v4977, %v5185
      %v5187 = vrcp.pop %v5128
      %v5188 = vmul.f32 %v4982, %v5187
      %v5189 = vrcp.pop %v5129
      %v5190 = vmul.f32 %v4987, %v5189
      %v5191 = vrcp.pop %v5130
      %v5192 = vmul.f32 %v4992, %v5191
      %v5193 = vrcp.pop %v5131
      %v5194 = vmul.f32 %v4997, %v5193
      %v5195 = vrcp.pop %v5132
      %v5196 = vmul.f32 %v5002, %v5195
      %s5197 = scalar_lea.vmem %s224, 768
      %5198 = vst.msk [vmem:[%s5197] sm:$0xff] %vm1636, %v5134
      %5199 = vst.msk [vmem:[%s5197 + $0x8] sm:$0xff] %vm1636, %v5136
      %5200 = vst.msk [vmem:[%s5197 + $0x10] sm:$0xff] %vm1636, %v5138
      %5201 = vst.msk [vmem:[%s5197 + $0x18] sm:$0xff] %vm1636, %v5140
      %5202 = vst.msk [vmem:[%s5197 + $0x20] sm:$0xff] %vm1636, %v5142
      %5203 = vst.msk [vmem:[%s5197 + $0x28] sm:$0xff] %vm1636, %v5144
      %5204 = vst.msk [vmem:[%s5197 + $0x30] sm:$0xff] %vm1636, %v5146
      %5205 = vst.msk [vmem:[%s5197 + $0x38] sm:$0xff] %vm1636, %v5148
      %5206 = vst.msk [vmem:[%s5197 + $0x40] sm:$0xff] %vm1636, %v5150
      %5207 = vst.msk [vmem:[%s5197 + $0x48] sm:$0xff] %vm1636, %v5152
      %5208 = vst.msk [vmem:[%s5197 + $0x50] sm:$0xff] %vm1636, %v5154
      %5209 = vst.msk [vmem:[%s5197 + $0x58] sm:$0xff] %vm1636, %v5156
      %5210 = vst.msk [vmem:[%s5197 + $0x60] sm:$0xff] %vm1636, %v5158
      %5211 = vst.msk [vmem:[%s5197 + $0x68] sm:$0xff] %vm1636, %v5160
      %5212 = vst.msk [vmem:[%s5197 + $0x70] sm:$0xff] %vm1636, %v5162
      %5213 = vst.msk [vmem:[%s5197 + $0x78] sm:$0xff] %vm1636, %v5164
      %5214 = vst.msk [vmem:[%s5197 + $0x80] sm:$0xff] %vm1636, %v5166
      %5215 = vst.msk [vmem:[%s5197 + $0x88] sm:$0xff] %vm1636, %v5168
      %5216 = vst.msk [vmem:[%s5197 + $0x90] sm:$0xff] %vm1636, %v5170
      %5217 = vst.msk [vmem:[%s5197 + $0x98] sm:$0xff] %vm1636, %v5172
      %5218 = vst.msk [vmem:[%s5197 + $0xa0] sm:$0xff] %vm1636, %v5174
      %5219 = vst.msk [vmem:[%s5197 + $0xa8] sm:$0xff] %vm1636, %v5176
      %5220 = vst.msk [vmem:[%s5197 + $0xb0] sm:$0xff] %vm1636, %v5178
      %5221 = vst.msk [vmem:[%s5197 + $0xb8] sm:$0xff] %vm1636, %v5180
      %5222 = vst.msk [vmem:[%s5197 + $0xc0] sm:$0xff] %vm1636, %v5182
      %5223 = vst.msk [vmem:[%s5197 + $0xc8] sm:$0xff] %vm1636, %v5184
      %5224 = vst.msk [vmem:[%s5197 + $0xd0] sm:$0xff] %vm1636, %v5186
      %5225 = vst.msk [vmem:[%s5197 + $0xd8] sm:$0xff] %vm1636, %v5188
      %5226 = vst.msk [vmem:[%s5197 + $0xe0] sm:$0xff] %vm1636, %v5190
      %5227 = vst.msk [vmem:[%s5197 + $0xe8] sm:$0xff] %vm1636, %v5192
      %5228 = vst.msk [vmem:[%s5197 + $0xf0] sm:$0xff] %vm1636, %v5194
      %5229 = vst.msk [vmem:[%s5197 + $0xf8] sm:$0xff] %vm1636, %v5196
      %p5230 = scmp.lt.s32.totalorder %s16, 1
      %s5231 = scalar_select %p5230, %s16, 1
      %s5232 = smul.addr %s5231, 128
      %s5233 = smul.addr %s5232, 8
      %s5234 = scalar_lea.vmem %s5, %s5233
      // Predicated region
      $region41: #{proto_forward.3} parent=39 // pred_check
        %p5235 = pneg %p144
      $region42: #{proto_forward.3} parent=39 // pred_check_branch
        %5237 = sbr.rel (%p5235) target = $region44
      $region43: #{proto_forward.3} parent=39 // pred_region
        _
      $region44: #{proto_forward.3} parent=39 // pred_fallthru
        _
    $region40: #{proto_forward.3} parent=5 // pred_fallthru
      _
    %p5238 = scmp.le.s32.totalorder 2, %s11
    // Predicated region
    $region45: #{proto_forward.3} parent=5 // pred_check
      %p5239 = pneg %p5238
    $region46: #{proto_forward.3} parent=5 // pred_check_branch
      %5241 = sbr.rel (%p5239) target = $region48
    $region47: #{proto_forward.3} parent=5 // pred_region
      %s5242 = ssub.s32 %s11, 2
      // Predicated region
      $region49: #{proto_forward.3} parent=47 // pred_check
        %p5243 = pneg %p150
      $region50: #{proto_forward.3} parent=47 // pred_check_branch
        %5245 = sbr.rel (%p5243) target = $region52
      $region51: #{proto_forward.3} parent=47 // pred_region
        %p5246 = scmp.lt.s32.totalorder %s17, 1
        %s5247 = scalar_select %p5246, %s17, 1
        %s5248 = smul.addr %s5247, 128
        %s5249 = smul.addr %s5248, 8
        %s5250 = scalar_lea.vmem %s5, %s5249
      $region52: #{proto_forward.3} parent=47 // pred_fallthru
        _
    $region48: #{proto_forward.3} parent=5 // pred_fallthru
      _
  $region6: #{proto_forward.3} parent=0 // loop_footer
    %s15 = sadd.s32 1, %s11
  $region7: #{proto_forward.3} parent=0 // loop_footer_branch
    %10 = sbr.rel target = $region3
  $region8: #{proto_forward.3} parent=0 // loop_exit
    _

</llo_original>
